<compile_context>
chip_gen: v6e
topology: v6e:2x2x1
jax: 0.10.0
libtpu: 0.0.40
codegen_flags: <defaults>
</compile_context>

<pallas_src>
import functools

import jax
import jax.numpy as jnp
from jax.experimental import pallas as pl
from jax.experimental.pallas import tpu as pltpu


def _round_up(n: int, m: int) -> int:
    return ((n + m - 1) // m) * m


def mlp_kernel(x_ref, w1_ref, b1_ref, w2_ref, b2_ref, o_ref):
    # fc1: x @ W1 on the MXU with f32 accumulation; bias + ReLU in f32 (VPU).
    h = jnp.dot(x_ref[...], w1_ref[...], preferred_element_type=jnp.float32)
    h = jnp.maximum(h + b1_ref[...], 0.0)
    # fc2: cast activations back to the weight dtype (bf16 path -> native MXU
    # rate; no-op for f32 weights), accumulate in f32, add bias in f32.
    out = jnp.dot(h.astype(w2_ref.dtype), w2_ref[...],
                  preferred_element_type=jnp.float32)
    o_ref[...] = (out + b2_ref[...]).astype(o_ref.dtype)


def prepare_params(w1, b1, w2, b2, *, compute_dtype=jnp.bfloat16):
    """One-time parameter prep (call once, NOT per forward).

    w1: [IN, H]  (PyTorch fc1.weight.T)     b1: [H]
    w2: [H, NC]  (PyTorch fc2.weight.T)     b2: [NC]

    Zero-pads IN/H/NC up to multiples of 128 (numerically exact) and casts the
    weights to `compute_dtype` for the MXU.  Biases stay f32 (added to the f32
    accumulator inside the kernel).
    """
    IN, H = w1.shape
    H2, NC = w2.shape
    assert H2 == H and b1.shape == (H,) and b2.shape == (NC,)

    INp = _round_up(IN, 128)
    Hp = _round_up(H, 128)
    NCp = _round_up(NC, 128)

    w1_p = jnp.pad(w1, ((0, INp - IN), (0, Hp - H))).astype(compute_dtype)
    b1_p = jnp.pad(b1.reshape(1, -1), ((0, 0), (0, Hp - H))).astype(jnp.float32)
    w2_p = jnp.pad(w2, ((0, Hp - H), (0, NCp - NC))).astype(compute_dtype)
    b2_p = jnp.pad(b2.reshape(1, -1), ((0, 0), (0, NCp - NC))).astype(jnp.float32)
    return w1_p, b1_p, w2_p, b2_p


@functools.partial(
    jax.jit,
    static_argnames=("num_classes", "batch_tile", "single_buffer_weights"))
def mlp_forward(x, w1_p, b1_p, w2_p, b2_p, *, num_classes,
                batch_tile: int = 512, single_buffer_weights: bool = True):
    """Fused Linear -> ReLU -> Linear forward on pre-padded params.

    x: [B, IN] float32; params come from prepare_params(). Returns [B, NC] f32.
    """
    B, IN = x.shape
    INp, Hp = w1_p.shape
    Hp2, NCp = w2_p.shape
    assert Hp2 == Hp and IN <= INp and num_classes <= NCp

    # Batch tile: multiple of 16 (bf16 sublane packing). Default 512 keeps the
    # footprint inside v5e's 16 MiB scoped default and v7x's 64 MiB VMEM even
    # with double-buffered x/out tiles; raise to 1024 on v6e for large B.
    TB = _round_up(min(batch_tile, B), 16)
    Bp = _round_up(B, TB)

    # Only x is padded per call (batch rows + contraction cols); the weights
    # were padded once in prepare_params.
    x_p = jnp.pad(x, ((0, Bp - B), (0, INp - IN))).astype(w1_p.dtype)

    grid = (Bp // TB,)

    resident_kwargs = (
        dict(pipeline_mode=pl.Buffered(1)) if single_buffer_weights else {})
    const_map = lambda i: (0, 0)

    in_specs = [
        # x: blocked along batch (double-buffered -> DMA overlaps compute).
        pl.BlockSpec((TB, INp), lambda i: (i, 0)),
        # Weights / biases: constant block -> VMEM-resident across grid steps,
        # single-buffered (no point double-buffering a constant block).
        pl.BlockSpec((INp, Hp), const_map, **resident_kwargs),
        pl.BlockSpec((1, Hp), const_map, **resident_kwargs),
        pl.BlockSpec((Hp, NCp), const_map, **resident_kwargs),
        pl.BlockSpec((1, NCp), const_map, **resident_kwargs),
    ]

    nbytes = lambda a: a.size * a.dtype.itemsize
    cost = pl.CostEstimate(
        flops=2 * Bp * INp * Hp + 2 * Bp * Hp * NCp,
        transcendentals=0,
        bytes_accessed=(nbytes(x_p) + nbytes(w1_p) + nbytes(b1_p)
                        + nbytes(w2_p) + nbytes(b2_p) + Bp * NCp * 4),
    )

    out_padded = pl.pallas_call(
        mlp_kernel,
        out_shape=jax.ShapeDtypeStruct((Bp, NCp), jnp.float32),
        grid=grid,
        in_specs=in_specs,
        out_specs=pl.BlockSpec((TB, NCp), lambda i: (i, 0)),
        compiler_params=pltpu.CompilerParams(
            dimension_semantics=("parallel",),
        ),
        cost_estimate=cost,
    )(x_p, w1_p, b1_p, w2_p, b2_p)

    return out_padded[:B, :num_classes]


def mlp_reference(x, w1, b1, w2, b2):
    h = jnp.maximum(x @ w1 + b1[None, :], 0.0)
    return h @ w2 + b2[None, :]


if __name__ == "__main__":
    # Module shapes (input 784, hidden 1000, classes 10) with a small batch.
    batch = 64
    input_size = 784
    hidden_size = 1000
    num_classes = 10

    key = jax.random.PRNGKey(0)
    kx, kw1, kb1, kw2, kb2 = jax.random.split(key, 5)

    # Mimic PyTorch default Linear init: uniform(-1/sqrt(fan_in), 1/sqrt(fan_in)).
    bound1 = 1.0 / (input_size ** 0.5)
    bound2 = 1.0 / (hidden_size ** 0.5)

    x = jax.random.normal(kx, (batch, input_size), dtype=jnp.float32)
    w1 = jax.random.uniform(kw1, (input_size, hidden_size), jnp.float32, -bound1, bound1)
    b1 = jax.random.uniform(kb1, (hidden_size,), jnp.float32, -bound1, bound1)
    w2 = jax.random.uniform(kw2, (hidden_size, num_classes), jnp.float32, -bound2, bound2)
    b2 = jax.random.uniform(kb2, (num_classes,), jnp.float32, -bound2, bound2)

    ref = mlp_reference(x, w1, b1, w2, b2)

    def run(params, **kw):
        try:
            out = mlp_forward(x, *params, num_classes=num_classes, **kw)
        except Exception:
            # Fallback if this JAX build rejects pipeline_mode=pl.Buffered(1).
            out = mlp_forward(x, *params, num_classes=num_classes,
                              single_buffer_weights=False, **kw)
        return jax.block_until_ready(out)

    # f32-weight path (tight check).  batch_tile=32 exercises a 2-step grid.
    params_f32 = prepare_params(w1, b1, w2, b2, compute_dtype=jnp.float32)
    out_f32 = run(params_f32, batch_tile=32)
    assert out_f32.shape == (batch, num_classes)
    assert jnp.allclose(out_f32, ref, atol=5e-3, rtol=5e-3), "f32 path mismatch"

    # Default bf16 MXU-operand path (looser tolerance vs the f32 reference).
    params_bf16 = prepare_params(w1, b1, w2, b2)
    out_bf16 = run(params_bf16, batch_tile=32)
    assert out_bf16.shape == (batch, num_classes)
    assert jnp.allclose(out_bf16, ref, atol=5e-2, rtol=5e-2), "bf16 path mismatch"

    print("KERNEL_OK")
</pallas_src>

<mosaic_0001>
module attributes {stable_mosaic.version = 11 : i64} {
  func.func @mlp_kernel(%arg0: i32, %arg1: memref<32x896xf32, #tpu.memory_space<vmem>>, %arg2: memref<896x1024xf32, #tpu.memory_space<vmem>>, %arg3: memref<1x1024xf32, #tpu.memory_space<vmem>>, %arg4: memref<1024x128xf32, #tpu.memory_space<vmem>>, %arg5: memref<1x128xf32, #tpu.memory_space<vmem>>, %arg6: memref<32x128xf32, #tpu.memory_space<vmem>>) attributes {dimension_semantics = [#tpu.dimension_semantics<parallel>], iteration_bounds = array<i64: 2>, scalar_prefetch = 0 : i64, scratch_operands = 0 : i64, tpu.core_type = #tpu.core_type<tc>, window_params = [{transform_indices = @transform_0, window_bounds = array<i64: 32, 896>}, {pipeline_mode = #tpu.pipeline_mode<synchronous>, transform_indices = @transform_1, window_bounds = array<i64: 896, 1024>}, {pipeline_mode = #tpu.pipeline_mode<synchronous>, transform_indices = @transform_2, window_bounds = array<i64: 1, 1024>}, {pipeline_mode = #tpu.pipeline_mode<synchronous>, transform_indices = @transform_3, window_bounds = array<i64: 1024, 128>}, {pipeline_mode = #tpu.pipeline_mode<synchronous>, transform_indices = @transform_4, window_bounds = array<i64: 1, 128>}, {transform_indices = @transform_5, window_bounds = array<i64: 32, 128>}]} {
    %c0 = arith.constant 0 : index
    %c0_0 = arith.constant 0 : index
    %0 = vector.load %arg1[%c0, %c0_0] : memref<32x896xf32, #tpu.memory_space<vmem>>, vector<32x896xf32>
    %c0_1 = arith.constant 0 : index
    %c0_2 = arith.constant 0 : index
    %1 = vector.load %arg2[%c0_1, %c0_2] : memref<896x1024xf32, #tpu.memory_space<vmem>>, vector<896x1024xf32>
    %cst = arith.constant dense<0.000000e+00> : vector<32x1024xf32>
    %2 = tpu.matmul %0, %1, %cst {dimension_numbers = #tpu.dot_dimension_numbers<[1], [0], [0], [1], [0, 0, 1, 1], [], []>} : vector<32x896xf32>, vector<896x1024xf32>, vector<32x1024xf32> -> vector<32x1024xf32>
    %c0_3 = arith.constant 0 : index
    %c0_4 = arith.constant 0 : index
    %3 = vector.load %arg3[%c0_3, %c0_4] : memref<1x1024xf32, #tpu.memory_space<vmem>>, vector<1x1024xf32>
    %4 = vector.broadcast %3 : vector<1x1024xf32> to vector<32x1024xf32>
    %5 = arith.addf %2, %4 : vector<32x1024xf32>
    %cst_5 = arith.constant 0.000000e+00 : f32
    %6 = vector.broadcast %cst_5 : f32 to vector<32x1024xf32>
    %7 = arith.maximumf %5, %6 : vector<32x1024xf32>
    %c0_6 = arith.constant 0 : index
    %c0_7 = arith.constant 0 : index
    %8 = vector.load %arg4[%c0_6, %c0_7] : memref<1024x128xf32, #tpu.memory_space<vmem>>, vector<1024x128xf32>
    %cst_8 = arith.constant dense<0.000000e+00> : vector<32x128xf32>
    %9 = tpu.matmul %7, %8, %cst_8 {dimension_numbers = #tpu.dot_dimension_numbers<[1], [0], [0], [1], [0, 0, 1, 1], [], []>} : vector<32x1024xf32>, vector<1024x128xf32>, vector<32x128xf32> -> vector<32x128xf32>
    %c0_9 = arith.constant 0 : index
    %c0_10 = arith.constant 0 : index
    %10 = vector.load %arg5[%c0_9, %c0_10] : memref<1x128xf32, #tpu.memory_space<vmem>>, vector<1x128xf32>
    %11 = vector.broadcast %10 : vector<1x128xf32> to vector<32x128xf32>
    %12 = arith.addf %9, %11 : vector<32x128xf32>
    %c0_11 = arith.constant 0 : index
    %c0_12 = arith.constant 0 : index
    %13 = vector.load %arg6[%c0_11, %c0_12] : memref<32x128xf32, #tpu.memory_space<vmem>>, vector<32x128xf32>
    tpu.vector_store %arg6[%c0_11, %c0_12], %12 {strides = array<i32>} : memref<32x128xf32, #tpu.memory_space<vmem>>, vector<32x128xf32>,
    return
  }
  func.func @transform_0(%arg0: i32) -> (i32, i32) {
    %c0_i32 = arith.constant 0 : i32
    %c0_i32_0 = arith.constant 0 : i32
    return %arg0, %c0_i32 : i32, i32
  }
  func.func @transform_1(%arg0: i32) -> (i32, i32) {
    %c0_i32 = arith.constant 0 : i32
    %c0_i32_0 = arith.constant 0 : i32
    %c0_i32_1 = arith.constant 0 : i32
    return %c0_i32, %c0_i32_0 : i32, i32
  }
  func.func @transform_2(%arg0: i32) -> (i32, i32) {
    %c0_i32 = arith.constant 0 : i32
    %c0_i32_0 = arith.constant 0 : i32
    %c0_i32_1 = arith.constant 0 : i32
    return %c0_i32, %c0_i32_0 : i32, i32
  }
  func.func @transform_3(%arg0: i32) -> (i32, i32) {
    %c0_i32 = arith.constant 0 : i32
    %c0_i32_0 = arith.constant 0 : i32
    %c0_i32_1 = arith.constant 0 : i32
    return %c0_i32, %c0_i32_0 : i32, i32
  }
  func.func @transform_4(%arg0: i32) -> (i32, i32) {
    %c0_i32 = arith.constant 0 : i32
    %c0_i32_0 = arith.constant 0 : i32
    %c0_i32_1 = arith.constant 0 : i32
    return %c0_i32, %c0_i32_0 : i32, i32
  }
  func.func @transform_5(%arg0: i32) -> (i32, i32) {
    %c0_i32 = arith.constant 0 : i32
    %c0_i32_0 = arith.constant 0 : i32
    return %arg0, %c0_i32 : i32, i32
  }
}

module attributes {stable_mosaic.version = 11 : i64} {
  func.func @mlp_kernel(%arg0: i32, %arg1: memref<32x896xf32, #tpu.memory_space<vmem>>, %arg2: memref<896x1024xf32, #tpu.memory_space<vmem>>, %arg3: memref<1x1024xf32, #tpu.memory_space<vmem>>, %arg4: memref<1024x128xf32, #tpu.memory_space<vmem>>, %arg5: memref<1x128xf32, #tpu.memory_space<vmem>>, %arg6: memref<32x128xf32, #tpu.memory_space<vmem>>) attributes {dimension_semantics = [#tpu.dimension_semantics<parallel>], iteration_bounds = array<i64: 2>, scalar_prefetch = 0 : i64, scratch_operands = 0 : i64, tpu.core_type = #tpu.core_type<tc>, window_params = [{transform_indices = @transform_0, window_bounds = array<i64: 32, 896>}, {pipeline_mode = #tpu.pipeline_mode<synchronous>, transform_indices = @transform_1, window_bounds = array<i64: 896, 1024>}, {pipeline_mode = #tpu.pipeline_mode<synchronous>, transform_indices = @transform_2, window_bounds = array<i64: 1, 1024>}, {pipeline_mode = #tpu.pipeline_mode<synchronous>, transform_indices = @transform_3, window_bounds = array<i64: 1024, 128>}, {pipeline_mode = #tpu.pipeline_mode<synchronous>, transform_indices = @transform_4, window_bounds = array<i64: 1, 128>}, {transform_indices = @transform_5, window_bounds = array<i64: 32, 128>}]} {
    %c0 = arith.constant 0 : index
    %c0_0 = arith.constant 0 : index
    %0 = vector.load %arg1[%c0, %c0_0] : memref<32x896xf32, #tpu.memory_space<vmem>>, vector<32x896xf32>
    %c0_1 = arith.constant 0 : index
    %c0_2 = arith.constant 0 : index
    %1 = vector.load %arg2[%c0_1, %c0_2] : memref<896x1024xf32, #tpu.memory_space<vmem>>, vector<896x1024xf32>
    %cst = arith.constant dense<0.000000e+00> : vector<32x1024xf32>
    %2 = tpu.matmul %0, %1, %cst {dimension_numbers = #tpu.dot_dimension_numbers<[1], [0], [0], [1], [0, 0, 1, 1], [], []>} : vector<32x896xf32>, vector<896x1024xf32>, vector<32x1024xf32> -> vector<32x1024xf32>
    %c0_3 = arith.constant 0 : index
    %c0_4 = arith.constant 0 : index
    %3 = vector.load %arg3[%c0_3, %c0_4] : memref<1x1024xf32, #tpu.memory_space<vmem>>, vector<1x1024xf32>
    %4 = vector.broadcast %3 : vector<1x1024xf32> to vector<32x1024xf32>
    %5 = arith.addf %2, %4 : vector<32x1024xf32>
    %cst_5 = arith.constant 0.000000e+00 : f32
    %6 = vector.broadcast %cst_5 : f32 to vector<32x1024xf32>
    %7 = arith.maximumf %5, %6 : vector<32x1024xf32>
    %c0_6 = arith.constant 0 : index
    %c0_7 = arith.constant 0 : index
    %8 = vector.load %arg4[%c0_6, %c0_7] : memref<1024x128xf32, #tpu.memory_space<vmem>>, vector<1024x128xf32>
    %cst_8 = arith.constant dense<0.000000e+00> : vector<32x128xf32>
    %9 = tpu.matmul %7, %8, %cst_8 {dimension_numbers = #tpu.dot_dimension_numbers<[1], [0], [0], [1], [0, 0, 1, 1], [], []>} : vector<32x1024xf32>, vector<1024x128xf32>, vector<32x128xf32> -> vector<32x128xf32>
    %c0_9 = arith.constant 0 : index
    %c0_10 = arith.constant 0 : index
    %10 = vector.load %arg5[%c0_9, %c0_10] : memref<1x128xf32, #tpu.memory_space<vmem>>, vector<1x128xf32>
    %11 = vector.broadcast %10 : vector<1x128xf32> to vector<32x128xf32>
    %12 = arith.addf %9, %11 : vector<32x128xf32>
    %c0_11 = arith.constant 0 : index
    %c0_12 = arith.constant 0 : index
    %13 = vector.load %arg6[%c0_11, %c0_12] : memref<32x128xf32, #tpu.memory_space<vmem>>, vector<32x128xf32>
    tpu.vector_store %arg6[%c0_11, %c0_12], %12 {strides = array<i32>} : memref<32x128xf32, #tpu.memory_space<vmem>>, vector<32x128xf32>,
    return
  }
  func.func @transform_0(%arg0: i32) -> (i32, i32) {
    %c0_i32 = arith.constant 0 : i32
    %c0_i32_0 = arith.constant 0 : i32
    return %arg0, %c0_i32 : i32, i32
  }
  func.func @transform_1(%arg0: i32) -> (i32, i32) {
    %c0_i32 = arith.constant 0 : i32
    %c0_i32_0 = arith.constant 0 : i32
    %c0_i32_1 = arith.constant 0 : i32
    return %c0_i32, %c0_i32_0 : i32, i32
  }
  func.func @transform_2(%arg0: i32) -> (i32, i32) {
    %c0_i32 = arith.constant 0 : i32
    %c0_i32_0 = arith.constant 0 : i32
    %c0_i32_1 = arith.constant 0 : i32
    return %c0_i32, %c0_i32_0 : i32, i32
  }
  func.func @transform_3(%arg0: i32) -> (i32, i32) {
    %c0_i32 = arith.constant 0 : i32
    %c0_i32_0 = arith.constant 0 : i32
    %c0_i32_1 = arith.constant 0 : i32
    return %c0_i32, %c0_i32_0 : i32, i32
  }
  func.func @transform_4(%arg0: i32) -> (i32, i32) {
    %c0_i32 = arith.constant 0 : i32
    %c0_i32_0 = arith.constant 0 : i32
    %c0_i32_1 = arith.constant 0 : i32
    return %c0_i32, %c0_i32_0 : i32, i32
  }
  func.func @transform_5(%arg0: i32) -> (i32, i32) {
    %c0_i32 = arith.constant 0 : i32
    %c0_i32_0 = arith.constant 0 : i32
    return %arg0, %c0_i32 : i32, i32
  }
}

</mosaic_0001>

<llo_original>
// kernel: mlp_forward.1
$region0: #{mlp_forward.1}
  #allocation0 [shape = 'u32[]', space=smem, size = 0x4, offset = 0x4, fixed_abs, tag = 'smem constant byte address 0x4 - core index']
  #allocation1 [shape = 'u32[144,128]{1,0:T(1,128)}', space=vmem, size = 0x12000, scoped, tag = 'internal scratch']
  %s0 = inlined_call_operand.vmem [shape: f32[64,896], index: 0, kind: input, shape index: {}]
  %s1 = inlined_call_operand.hbm [shape: f32[896,1024], index: 1, kind: input, shape index: {}]
  %s2 = inlined_call_operand.hbm [shape: f32[1,1024], index: 2, kind: input, shape index: {}]
  %s3 = inlined_call_operand.hbm [shape: f32[1024,128], index: 3, kind: input, shape index: {}]
  %s4 = inlined_call_operand.hbm [shape: f32[1,128], index: 4, kind: input, shape index: {}]
  %s5 = inlined_call_operand.vmem [shape: f32[64,128], index: 5, kind: output, shape index: {}]
  %s6 = sld [smem:[#allocation0]]
  $region69: #{mlp_forward.1} parent=0
    _
  %s8 = ssub.s32 1, %s6
  %s9 = scalar_select 0, %s8, %s6
  $region1: #{mlp_forward.1} parent=0
    #allocation2 [shape = 'u8[3670016]{0}', space=vmem, size = 0x380000, scoped, tag = 'input window, operand 1, single buffered']
    #allocation3 [shape = 's32[2]{0}', space=sflag, size = 0x8, scoped, tag = 'scoped memory for mlp_forward.1']
    #allocation4 [shape = 'u8[4096]{0}', space=vmem, size = 0x1000, scoped, tag = 'input window, operand 2, single buffered']
    #allocation5 [shape = 's32[1]{0}', space=sflag, size = 0x4, scoped, tag = 'scoped memory for mlp_forward.1']
    #allocation6 [shape = 'u8[524288]{0}', space=vmem, size = 0x80000, scoped, tag = 'input window, operand 3, single buffered']
    #allocation7 [shape = 'u8[512]{0}', space=vmem, size = 0x400, scoped, tag = 'input window, operand 4, single buffered']
    #allocation8 [shape = 's32[1]{0}', space=sflag, size = 0x4, scoped, tag = 'scoped memory for mlp_forward.1']
    %10 = vsyncpa [#allocation3], 0
    %11 = vsyncpa [#allocation5], 0
    %12 = vsyncpa [#allocation8], 0
    loop: start=0, step=1, limit=4
    $region2: #{mlp_forward.1} parent=1 // loop_pre_header
      _
    $region3: #{mlp_forward.1} parent=1 // loop_header
      %s14 = sphi 0, %s18
      %p15 = scmp.ge.s32.totalorder %s14, 4
      %s24 = sphi 0, %s26
      %s27 = sphi 0, %s24
      %s28 = sphi 0, %s27
      %s44 = sphi 0, %s28
      %s48 = sphi 0, %s48
      %s50 = sphi 0, %s48
      %s51 = sphi 0, %s50
      %s65 = sphi 0, %s51
      %s69 = sphi 0, %s69
      %s71 = sphi 0, %s69
      %s72 = sphi 0, %s71
      %s86 = sphi 0, %s72
      %s90 = sphi 0, %s90
      %s92 = sphi 0, %s90
      %s93 = sphi 0, %s92
      %s107 = sphi 0, %s93
      %s111 = sphi 0, %s111
      %s113 = sphi 0, %s111
      %s114 = sphi 0, %s113
      %s128 = sphi 0, %s114
      %s134 = sphi 0, %s136
      %s137 = sphi 0, %s134
      %s138 = sphi 0, %s137
      %s154 = sphi 0, %s138
    $region4: #{mlp_forward.1} parent=1 // loop_header_branch
      %17 = sbr.rel (%p15) target = $region8
    $region5: #{mlp_forward.1} parent=1 // loop_body
      %s19 = ssub.s32 %s14, 1
      %s20 = ssub.s32 %s14, 2
      %s21 = sadd.s32 %s14, 1
      %s22 = ssub.s32 %s14, %s21
      %p23 = scmp.eq.s32.totalorder %s22, 0
      %s25 = sadd.s32 %s24, 1
      %s26 = scalar_select %p23, %s24, %s25
      %p29 = pneg %p23
      %p30 = scmp.eq.s32.totalorder %s14, 1
      %p31 = por %p29, %p30
      %p32 = scmp.ne.s32.totalorder %s24, %s27
      %p33 = scmp.eq.s32.totalorder %s14, 0
      %p34 = por %p32, %p33
      %p35 = scmp.ne.s32.totalorder %s24, %s27
      %p36 = scmp.eq.s32.totalorder %s19, 1
      %p37 = por %p35, %p36
      %p38 = scmp.ne.s32.totalorder %s27, %s28
      %p39 = scmp.eq.s32.totalorder %s19, 0
      %p40 = por %p38, %p39
      %p41 = scmp.ne.s32.totalorder %s27, %s28
      %p42 = scmp.eq.s32.totalorder %s20, 1
      %p43 = por %p41, %p42
      %p45 = scmp.ne.s32.totalorder %s28, %s44
      %p46 = scmp.eq.s32.totalorder %s20, 0
      %p47 = por %p45, %p46
      %s49 = sadd.s32 %s48, 1
      %p52 = scmp.eq.s32.totalorder %s14, 1
      %p53 = scmp.ne.s32.totalorder %s48, %s50
      %p54 = scmp.eq.s32.totalorder %s14, 0
      %p55 = por %p53, %p54
      %p56 = scmp.ne.s32.totalorder %s48, %s50
      %p57 = scmp.eq.s32.totalorder %s19, 1
      %p58 = por %p56, %p57
      %p59 = scmp.ne.s32.totalorder %s50, %s51
      %p60 = scmp.eq.s32.totalorder %s19, 0
      %p61 = por %p59, %p60
      %p62 = scmp.ne.s32.totalorder %s50, %s51
      %p63 = scmp.eq.s32.totalorder %s20, 1
      %p64 = por %p62, %p63
      %p66 = scmp.ne.s32.totalorder %s51, %s65
      %p67 = scmp.eq.s32.totalorder %s20, 0
      %p68 = por %p66, %p67
      %s70 = sadd.s32 %s69, 1
      %p73 = scmp.eq.s32.totalorder %s14, 1
      %p74 = scmp.ne.s32.totalorder %s69, %s71
      %p75 = scmp.eq.s32.totalorder %s14, 0
      %p76 = por %p74, %p75
      %p77 = scmp.ne.s32.totalorder %s69, %s71
      %p78 = scmp.eq.s32.totalorder %s19, 1
      %p79 = por %p77, %p78
      %p80 = scmp.ne.s32.totalorder %s71, %s72
      %p81 = scmp.eq.s32.totalorder %s19, 0
      %p82 = por %p80, %p81
      %p83 = scmp.ne.s32.totalorder %s71, %s72
      %p84 = scmp.eq.s32.totalorder %s20, 1
      %p85 = por %p83, %p84
      %p87 = scmp.ne.s32.totalorder %s72, %s86
      %p88 = scmp.eq.s32.totalorder %s20, 0
      %p89 = por %p87, %p88
      %s91 = sadd.s32 %s90, 1
      %p94 = scmp.eq.s32.totalorder %s14, 1
      %p95 = scmp.ne.s32.totalorder %s90, %s92
      %p96 = scmp.eq.s32.totalorder %s14, 0
      %p97 = por %p95, %p96
      %p98 = scmp.ne.s32.totalorder %s90, %s92
      %p99 = scmp.eq.s32.totalorder %s19, 1
      %p100 = por %p98, %p99
      %p101 = scmp.ne.s32.totalorder %s92, %s93
      %p102 = scmp.eq.s32.totalorder %s19, 0
      %p103 = por %p101, %p102
      %p104 = scmp.ne.s32.totalorder %s92, %s93
      %p105 = scmp.eq.s32.totalorder %s20, 1
      %p106 = por %p104, %p105
      %p108 = scmp.ne.s32.totalorder %s93, %s107
      %p109 = scmp.eq.s32.totalorder %s20, 0
      %p110 = por %p108, %p109
      %s112 = sadd.s32 %s111, 1
      %p115 = scmp.eq.s32.totalorder %s14, 1
      %p116 = scmp.ne.s32.totalorder %s111, %s113
      %p117 = scmp.eq.s32.totalorder %s14, 0
      %p118 = por %p116, %p117
      %p119 = scmp.ne.s32.totalorder %s111, %s113
      %p120 = scmp.eq.s32.totalorder %s19, 1
      %p121 = por %p119, %p120
      %p122 = scmp.ne.s32.totalorder %s113, %s114
      %p123 = scmp.eq.s32.totalorder %s19, 0
      %p124 = por %p122, %p123
      %p125 = scmp.ne.s32.totalorder %s113, %s114
      %p126 = scmp.eq.s32.totalorder %s20, 1
      %p127 = por %p125, %p126
      %p129 = scmp.ne.s32.totalorder %s114, %s128
      %p130 = scmp.eq.s32.totalorder %s20, 0
      %p131 = por %p129, %p130
      %s132 = ssub.s32 %s14, %s21
      %p133 = scmp.eq.s32.totalorder %s132, 0
      %s135 = sadd.s32 %s134, 1
      %s136 = scalar_select %p133, %s134, %s135
      %p139 = pneg %p133
      %p140 = scmp.eq.s32.totalorder %s14, 1
      %p141 = por %p139, %p140
      %p142 = scmp.ne.s32.totalorder %s134, %s137
      %p143 = scmp.eq.s32.totalorder %s14, 0
      %p144 = por %p142, %p143
      %p145 = scmp.ne.s32.totalorder %s134, %s137
      %p146 = scmp.eq.s32.totalorder %s19, 1
      %p147 = por %p145, %p146
      %p148 = scmp.ne.s32.totalorder %s137, %s138
      %p149 = scmp.eq.s32.totalorder %s19, 0
      %p150 = por %p148, %p149
      %p151 = scmp.ne.s32.totalorder %s137, %s138
      %p152 = scmp.eq.s32.totalorder %s20, 1
      %p153 = por %p151, %p152
      %p155 = scmp.ne.s32.totalorder %s138, %s154
      %p156 = scmp.eq.s32.totalorder %s20, 0
      %p157 = por %p155, %p156
      %p158 = scmp.le.s32.totalorder 1, %s14
      %p159 = scmp.lt.s32.totalorder %s14, 3
      %p160 = pnand %p158, %p159
      %p161 = pneg %p160
      // Predicated region
      $region9: #{mlp_forward.1} parent=5 // pred_check
        _
      $region10: #{mlp_forward.1} parent=5 // pred_check_branch
        %163 = sbr.rel (%p160) target = $region12
      $region11: #{mlp_forward.1} parent=5 // pred_region
        %s164 = ssub.s32 %s14, 1
        // Predicated region
        $region13: #{mlp_forward.1} parent=11 // pred_check
          %p165 = pneg %p61
        $region14: #{mlp_forward.1} parent=11 // pred_check_branch
          %167 = sbr.rel (%p165) target = $region16
        $region15: #{mlp_forward.1} parent=11 // pred_region
          %s169 = ssub.s32 114688, 114688
          %170 = vsyncadd [#allocation3], %s169
          %s171 = sshll.u32 [#allocation2], 4
          %s172 = int_to_ptr.vmem [resolvable:$true] %s171
          %177 = dma.hbm_to_vmem [thread:$0]  %s1, 114688, %s172, [#allocation3], 1024, 1024, 64
        $region16: #{mlp_forward.1} parent=11 // pred_fallthru
          _
        // Predicated region
        $region17: #{mlp_forward.1} parent=11 // pred_check
          %p178 = pneg %p82
        $region18: #{mlp_forward.1} parent=11 // pred_check_branch
          %180 = sbr.rel (%p178) target = $region20
        $region19: #{mlp_forward.1} parent=11 // pred_region
          %s182 = ssub.s32 128, 128
          %183 = vsyncadd [#allocation5], %s182
          %s185 = sshll.u32 [#allocation4], 4
          %s186 = int_to_ptr.vmem [resolvable:$true] %s185
          %188 = dma.hbm_to_vmem [thread:$0]  %s2, 128, %s186, [#allocation5]
        $region20: #{mlp_forward.1} parent=11 // pred_fallthru
          _
        // Predicated region
        $region21: #{mlp_forward.1} parent=11 // pred_check
          %p189 = pneg %p103
        $region22: #{mlp_forward.1} parent=11 // pred_check_branch
          %191 = sbr.rel (%p189) target = $region24
        $region23: #{mlp_forward.1} parent=11 // pred_region
          %s193 = ssub.s32 16384, 16384
          %194 = vsyncadd [#allocation5], %s193
          %s195 = sshll.u32 [#allocation6], 4
          %s196 = int_to_ptr.vmem [resolvable:$true] %s195
          %201 = dma.hbm_to_vmem [thread:$0]  %s3, 16384, %s196, [#allocation5], 128, 128, 8
        $region24: #{mlp_forward.1} parent=11 // pred_fallthru
          _
        // Predicated region
        $region25: #{mlp_forward.1} parent=11 // pred_check
          %p202 = pneg %p124
        $region26: #{mlp_forward.1} parent=11 // pred_check_branch
          %204 = sbr.rel (%p202) target = $region28
        $region27: #{mlp_forward.1} parent=11 // pred_region
          %s206 = ssub.s32 16, 16
          %207 = vsyncadd [#allocation8], %s206
          %s209 = sshll.u32 [#allocation7], 4
          %s210 = int_to_ptr.vmem [resolvable:$true] %s209
          %212 = dma.hbm_to_vmem [thread:$0]  %s4, 16, %s210, [#allocation8]
        $region28: #{mlp_forward.1} parent=11 // pred_fallthru
          _
      $region12: #{mlp_forward.1} parent=5 // pred_fallthru
        _
      %p213 = scmp.lt.s32.totalorder %s14, 2
      // Predicated region
      $region29: #{mlp_forward.1} parent=5 // pred_check
        %p214 = pneg %p213
      $region30: #{mlp_forward.1} parent=5 // pred_check_branch
        %216 = sbr.rel (%p214) target = $region32
      $region31: #{mlp_forward.1} parent=5 // pred_region
        // Predicated region
        $region33: #{mlp_forward.1} parent=31 // pred_check
          %p217 = pneg %p34
        $region34: #{mlp_forward.1} parent=31 // pred_check_branch
          %219 = sbr.rel (%p217) target = $region36
        $region35: #{mlp_forward.1} parent=31 // pred_region
          %s220 = smul.u32 4, %s14
          %p221 = scmp.lt.s32.totalorder %s220, 7
          %s222 = scalar_select %p221, %s220, 7
          %s223 = smul.addr %s222, 7
          %s224 = smul.addr %s223, 8
          %s225 = scalar_lea.vmem %s0, %s224
          %s226 = smul.u32 4, %s14
        $region36: #{mlp_forward.1} parent=31 // pred_fallthru
          _
      $region32: #{mlp_forward.1} parent=5 // pred_fallthru
        _
      %p227 = scmp.le.s32.totalorder 1, %s14
      %p228 = scmp.lt.s32.totalorder %s14, 3
      %p229 = pnand %p227, %p228
      %p230 = pneg %p229
      // Predicated region
      $region37: #{mlp_forward.1} parent=5 // pred_check
        _
      $region38: #{mlp_forward.1} parent=5 // pred_check_branch
        %232 = sbr.rel (%p229) target = $region40
      $region39: #{mlp_forward.1} parent=5 // pred_region
        %s233 = ssub.s32 %s14, 1
        // Predicated region
        $region41: #{mlp_forward.1} parent=39 // pred_check
          %p234 = pneg %p61
        $region42: #{mlp_forward.1} parent=39 // pred_check_branch
          %236 = sbr.rel (%p234) target = $region44
        $region43: #{mlp_forward.1} parent=39 // pred_region
          %237 = dma.done [#allocation3], 114688
        $region44: #{mlp_forward.1} parent=39 // pred_fallthru
          _
        // Predicated region
        $region45: #{mlp_forward.1} parent=39 // pred_check
          %p238 = pneg %p82
        $region46: #{mlp_forward.1} parent=39 // pred_check_branch
          %240 = sbr.rel (%p238) target = $region48
        $region47: #{mlp_forward.1} parent=39 // pred_region
          %241 = dma.done [#allocation5], 128
        $region48: #{mlp_forward.1} parent=39 // pred_fallthru
          _
        // Predicated region
        $region49: #{mlp_forward.1} parent=39 // pred_check
          %p242 = pneg %p103
        $region50: #{mlp_forward.1} parent=39 // pred_check_branch
          %244 = sbr.rel (%p242) target = $region52
        $region51: #{mlp_forward.1} parent=39 // pred_region
          %245 = dma.done [#allocation5], 16384
        $region52: #{mlp_forward.1} parent=39 // pred_fallthru
          _
        // Predicated region
        $region53: #{mlp_forward.1} parent=39 // pred_check
          %p246 = pneg %p124
        $region54: #{mlp_forward.1} parent=39 // pred_check_branch
          %248 = sbr.rel (%p246) target = $region56
        $region55: #{mlp_forward.1} parent=39 // pred_region
          %249 = dma.done [#allocation8], 16
        $region56: #{mlp_forward.1} parent=39 // pred_fallthru
          _
        %s250 = smul.u32 4, %s19
        %p251 = scmp.lt.s32.totalorder %s250, 7
        %s252 = scalar_select %p251, %s250, 7
        %s253 = smul.addr %s252, 7
        %s254 = smul.addr %s253, 8
        %s255 = scalar_lea.vmem %s0, %s254
        %p256 = pneg %p40
        %p257 = pneg %p37
        %p258 = pneg %p61
        %p259 = pneg %p58
        %p260 = pneg %p82
        %p261 = pneg %p79
        %p262 = pneg %p103
        %p263 = pneg %p100
        %p264 = pneg %p124
        %p265 = pneg %p121
        %p266 = pneg %p150
        %p267 = pneg %p147
        %s268 = smul.u32 4, %s19
        %p269 = scmp.lt.s32.totalorder %s268, 7
        %s270 = scalar_select %p269, %s268, 7
        %s271 = smul.addr %s270, 8
        %s272 = scalar_lea.vmem %s5, %s271
        %s273 = smul.u32 4, %s19
        %p274 = scmp.lt.s32.totalorder %s273, 7
        %s275 = scalar_select %p274, %s273, 7
        %s276 = smul.addr %s275, 7
        %s277 = smul.addr %s276, 8
        %s278 = scalar_lea.vmem %s0, %s277
        %s279 = smul.u32 4, %s19
        %s280 = smul.u32 4, %s19
        %p281 = scmp.lt.s32.totalorder %s280, 7
        %s282 = scalar_select %p281, %s280, 7
        %s283 = smul.addr %s282, 8
        %s284 = scalar_lea.vmem %s5, %s283
        %s285 = smul.u32 4, %s19
        %v286 = vld [vmem:[%s278] sm:$0xff]
        %v287 = vld [vmem:[%s278 + $0x8] sm:$0xff]
        %v288 = vld [vmem:[%s278 + $0x10] sm:$0xff]
        %v289 = vld [vmem:[%s278 + $0x18] sm:$0xff]
        %v290 = vld [vmem:[%s278 + $0x20] sm:$0xff]
        %v291 = vld [vmem:[%s278 + $0x28] sm:$0xff]
        %v292 = vld [vmem:[%s278 + $0x30] sm:$0xff]
        %v293 = vld [vmem:[%s278 + $0x38] sm:$0xff]
        %v294 = vld [vmem:[%s278 + $0x40] sm:$0xff]
        %v295 = vld [vmem:[%s278 + $0x48] sm:$0xff]
        %v296 = vld [vmem:[%s278 + $0x50] sm:$0xff]
        %v297 = vld [vmem:[%s278 + $0x58] sm:$0xff]
        %v298 = vld [vmem:[%s278 + $0x60] sm:$0xff]
        %v299 = vld [vmem:[%s278 + $0x68] sm:$0xff]
        %v300 = vld [vmem:[%s278 + $0x70] sm:$0xff]
        %v301 = vld [vmem:[%s278 + $0x78] sm:$0xff]
        %v302 = vld [vmem:[%s278 + $0x80] sm:$0xff]
        %v303 = vld [vmem:[%s278 + $0x88] sm:$0xff]
        %v304 = vld [vmem:[%s278 + $0x90] sm:$0xff]
        %v305 = vld [vmem:[%s278 + $0x98] sm:$0xff]
        %v306 = vld [vmem:[%s278 + $0xa0] sm:$0xff]
        %v307 = vld [vmem:[%s278 + $0xa8] sm:$0xff]
        %v308 = vld [vmem:[%s278 + $0xb0] sm:$0xff]
        %v309 = vld [vmem:[%s278 + $0xb8] sm:$0xff]
        %v310 = vld [vmem:[%s278 + $0xc0] sm:$0xff]
        %v311 = vld [vmem:[%s278 + $0xc8] sm:$0xff]
        %v312 = vld [vmem:[%s278 + $0xd0] sm:$0xff]
        %v313 = vld [vmem:[%s278 + $0xd8] sm:$0xff]
        %v314 = vld [vmem:[#allocation2] sm:$0xff]
        %v315 = vld [vmem:[#allocation2 + $0x8] sm:$0xff]
        %v316 = vld [vmem:[#allocation2 + $0x10] sm:$0xff]
        %v317 = vld [vmem:[#allocation2 + $0x18] sm:$0xff]
        %v318 = vld [vmem:[#allocation2 + $0x20] sm:$0xff]
        %v319 = vld [vmem:[#allocation2 + $0x28] sm:$0xff]
        %v320 = vld [vmem:[#allocation2 + $0x30] sm:$0xff]
        %v321 = vld [vmem:[#allocation2 + $0x38] sm:$0xff]
        %v322 = vld [vmem:[#allocation2 + $0x40] sm:$0xff]
        %v323 = vld [vmem:[#allocation2 + $0x48] sm:$0xff]
        %v324 = vld [vmem:[#allocation2 + $0x50] sm:$0xff]
        %v325 = vld [vmem:[#allocation2 + $0x58] sm:$0xff]
        %v326 = vld [vmem:[#allocation2 + $0x60] sm:$0xff]
        %v327 = vld [vmem:[#allocation2 + $0x68] sm:$0xff]
        %v328 = vld [vmem:[#allocation2 + $0x70] sm:$0xff]
        %v329 = vld [vmem:[#allocation2 + $0x78] sm:$0xff]
        %v330 = vld [vmem:[#allocation2 + $0x80] sm:$0xff]
        %v331 = vld [vmem:[#allocation2 + $0x88] sm:$0xff]
        %v332 = vld [vmem:[#allocation2 + $0x90] sm:$0xff]
        %v333 = vld [vmem:[#allocation2 + $0x98] sm:$0xff]
        %v334 = vld [vmem:[#allocation2 + $0xa0] sm:$0xff]
        %v335 = vld [vmem:[#allocation2 + $0xa8] sm:$0xff]
        %v336 = vld [vmem:[#allocation2 + $0xb0] sm:$0xff]
        %v337 = vld [vmem:[#allocation2 + $0xb8] sm:$0xff]
        %v338 = vld [vmem:[#allocation2 + $0xc0] sm:$0xff]
        %v339 = vld [vmem:[#allocation2 + $0xc8] sm:$0xff]
        %v340 = vld [vmem:[#allocation2 + $0xd0] sm:$0xff]
        %v341 = vld [vmem:[#allocation2 + $0xd8] sm:$0xff]
        %v342 = vld [vmem:[#allocation2 + $0xe0] sm:$0xff]
        %v343 = vld [vmem:[#allocation2 + $0xe8] sm:$0xff]
        %v344 = vld [vmem:[#allocation2 + $0xf0] sm:$0xff]
        %v345 = vld [vmem:[#allocation2 + $0xf8] sm:$0xff]
        %v346 = vld [vmem:[#allocation2 + $0x100] sm:$0xff]
        %v347 = vld [vmem:[#allocation2 + $0x108] sm:$0xff]
        %v348 = vld [vmem:[#allocation2 + $0x110] sm:$0xff]
        %v349 = vld [vmem:[#allocation2 + $0x118] sm:$0xff]
        %v350 = vld [vmem:[#allocation2 + $0x120] sm:$0xff]
        %v351 = vld [vmem:[#allocation2 + $0x128] sm:$0xff]
        %v352 = vld [vmem:[#allocation2 + $0x130] sm:$0xff]
        %v353 = vld [vmem:[#allocation2 + $0x138] sm:$0xff]
        %v354 = vld [vmem:[#allocation2 + $0x140] sm:$0xff]
        %v355 = vld [vmem:[#allocation2 + $0x148] sm:$0xff]
        %v356 = vld [vmem:[#allocation2 + $0x150] sm:$0xff]
        %v357 = vld [vmem:[#allocation2 + $0x158] sm:$0xff]
        %v358 = vld [vmem:[#allocation2 + $0x160] sm:$0xff]
        %v359 = vld [vmem:[#allocation2 + $0x168] sm:$0xff]
        %v360 = vld [vmem:[#allocation2 + $0x170] sm:$0xff]
        %v361 = vld [vmem:[#allocation2 + $0x178] sm:$0xff]
        %v362 = vld [vmem:[#allocation2 + $0x180] sm:$0xff]
        %v363 = vld [vmem:[#allocation2 + $0x188] sm:$0xff]
        %v364 = vld [vmem:[#allocation2 + $0x190] sm:$0xff]
        %v365 = vld [vmem:[#allocation2 + $0x198] sm:$0xff]
        %v366 = vld [vmem:[#allocation2 + $0x1a0] sm:$0xff]
        %v367 = vld [vmem:[#allocation2 + $0x1a8] sm:$0xff]
        %v368 = vld [vmem:[#allocation2 + $0x1b0] sm:$0xff]
        %v369 = vld [vmem:[#allocation2 + $0x1b8] sm:$0xff]
        %v370 = vld [vmem:[#allocation2 + $0x1c0] sm:$0xff]
        %v371 = vld [vmem:[#allocation2 + $0x1c8] sm:$0xff]
        %v372 = vld [vmem:[#allocation2 + $0x1d0] sm:$0xff]
        %v373 = vld [vmem:[#allocation2 + $0x1d8] sm:$0xff]
        %v374 = vld [vmem:[#allocation2 + $0x1e0] sm:$0xff]
        %v375 = vld [vmem:[#allocation2 + $0x1e8] sm:$0xff]
        %v376 = vld [vmem:[#allocation2 + $0x1f0] sm:$0xff]
        %v377 = vld [vmem:[#allocation2 + $0x1f8] sm:$0xff]
        %v378 = vld [vmem:[#allocation2 + $0x200] sm:$0xff]
        %v379 = vld [vmem:[#allocation2 + $0x208] sm:$0xff]
        %v380 = vld [vmem:[#allocation2 + $0x210] sm:$0xff]
        %v381 = vld [vmem:[#allocation2 + $0x218] sm:$0xff]
        %v382 = vld [vmem:[#allocation2 + $0x220] sm:$0xff]
        %v383 = vld [vmem:[#allocation2 + $0x228] sm:$0xff]
        %v384 = vld [vmem:[#allocation2 + $0x230] sm:$0xff]
        %v385 = vld [vmem:[#allocation2 + $0x238] sm:$0xff]
        %v386 = vld [vmem:[#allocation2 + $0x240] sm:$0xff]
        %v387 = vld [vmem:[#allocation2 + $0x248] sm:$0xff]
        %v388 = vld [vmem:[#allocation2 + $0x250] sm:$0xff]
        %v389 = vld [vmem:[#allocation2 + $0x258] sm:$0xff]
        %v390 = vld [vmem:[#allocation2 + $0x260] sm:$0xff]
        %v391 = vld [vmem:[#allocation2 + $0x268] sm:$0xff]
        %v392 = vld [vmem:[#allocation2 + $0x270] sm:$0xff]
        %v393 = vld [vmem:[#allocation2 + $0x278] sm:$0xff]
        %v394 = vld [vmem:[#allocation2 + $0x280] sm:$0xff]
        %v395 = vld [vmem:[#allocation2 + $0x288] sm:$0xff]
        %v396 = vld [vmem:[#allocation2 + $0x290] sm:$0xff]
        %v397 = vld [vmem:[#allocation2 + $0x298] sm:$0xff]
        %v398 = vld [vmem:[#allocation2 + $0x2a0] sm:$0xff]
        %v399 = vld [vmem:[#allocation2 + $0x2a8] sm:$0xff]
        %v400 = vld [vmem:[#allocation2 + $0x2b0] sm:$0xff]
        %v401 = vld [vmem:[#allocation2 + $0x2b8] sm:$0xff]
        %v402 = vld [vmem:[#allocation2 + $0x2c0] sm:$0xff]
        %v403 = vld [vmem:[#allocation2 + $0x2c8] sm:$0xff]
        %v404 = vld [vmem:[#allocation2 + $0x2d0] sm:$0xff]
        %v405 = vld [vmem:[#allocation2 + $0x2d8] sm:$0xff]
        %v406 = vld [vmem:[#allocation2 + $0x2e0] sm:$0xff]
        %v407 = vld [vmem:[#allocation2 + $0x2e8] sm:$0xff]
        %v408 = vld [vmem:[#allocation2 + $0x2f0] sm:$0xff]
        %v409 = vld [vmem:[#allocation2 + $0x2f8] sm:$0xff]
        %v410 = vld [vmem:[#allocation2 + $0x300] sm:$0xff]
        %v411 = vld [vmem:[#allocation2 + $0x308] sm:$0xff]
        %v412 = vld [vmem:[#allocation2 + $0x310] sm:$0xff]
        %v413 = vld [vmem:[#allocation2 + $0x318] sm:$0xff]
        %v414 = vld [vmem:[#allocation2 + $0x320] sm:$0xff]
        %v415 = vld [vmem:[#allocation2 + $0x328] sm:$0xff]
        %v416 = vld [vmem:[#allocation2 + $0x330] sm:$0xff]
        %v417 = vld [vmem:[#allocation2 + $0x338] sm:$0xff]
        %v418 = vld [vmem:[#allocation2 + $0x340] sm:$0xff]
        %v419 = vld [vmem:[#allocation2 + $0x348] sm:$0xff]
        %v420 = vld [vmem:[#allocation2 + $0x350] sm:$0xff]
        %v421 = vld [vmem:[#allocation2 + $0x358] sm:$0xff]
        %v422 = vld [vmem:[#allocation2 + $0x360] sm:$0xff]
        %v423 = vld [vmem:[#allocation2 + $0x368] sm:$0xff]
        %v424 = vld [vmem:[#allocation2 + $0x370] sm:$0xff]
        %v425 = vld [vmem:[#allocation2 + $0x378] sm:$0xff]
        %v426 = vld [vmem:[#allocation2 + $0x380] sm:$0xff]
        %v427 = vld [vmem:[#allocation2 + $0x388] sm:$0xff]
        %v428 = vld [vmem:[#allocation2 + $0x390] sm:$0xff]
        %v429 = vld [vmem:[#allocation2 + $0x398] sm:$0xff]
        %v430 = vld [vmem:[#allocation2 + $0x3a0] sm:$0xff]
        %v431 = vld [vmem:[#allocation2 + $0x3a8] sm:$0xff]
        %v432 = vld [vmem:[#allocation2 + $0x3b0] sm:$0xff]
        %v433 = vld [vmem:[#allocation2 + $0x3b8] sm:$0xff]
        %v434 = vld [vmem:[#allocation2 + $0x3c0] sm:$0xff]
        %v435 = vld [vmem:[#allocation2 + $0x3c8] sm:$0xff]
        %v436 = vld [vmem:[#allocation2 + $0x3d0] sm:$0xff]
        %v437 = vld [vmem:[#allocation2 + $0x3d8] sm:$0xff]
        %v438 = vld [vmem:[#allocation2 + $0x3e0] sm:$0xff]
        %v439 = vld [vmem:[#allocation2 + $0x3e8] sm:$0xff]
        %v440 = vld [vmem:[#allocation2 + $0x3f0] sm:$0xff]
        %v441 = vld [vmem:[#allocation2 + $0x3f8] sm:$0xff]
        %v442 = vld [vmem:[#allocation2 + $0x400] sm:$0xff]
        %v443 = vld [vmem:[#allocation2 + $0x408] sm:$0xff]
        %v444 = vld [vmem:[#allocation2 + $0x410] sm:$0xff]
        %v445 = vld [vmem:[#allocation2 + $0x418] sm:$0xff]
        %v446 = vld [vmem:[#allocation2 + $0x420] sm:$0xff]
        %v447 = vld [vmem:[#allocation2 + $0x428] sm:$0xff]
        %v448 = vld [vmem:[#allocation2 + $0x430] sm:$0xff]
        %v449 = vld [vmem:[#allocation2 + $0x438] sm:$0xff]
        %v450 = vld [vmem:[#allocation2 + $0x440] sm:$0xff]
        %v451 = vld [vmem:[#allocation2 + $0x448] sm:$0xff]
        %v452 = vld [vmem:[#allocation2 + $0x450] sm:$0xff]
        %v453 = vld [vmem:[#allocation2 + $0x458] sm:$0xff]
        %v454 = vld [vmem:[#allocation2 + $0x460] sm:$0xff]
        %v455 = vld [vmem:[#allocation2 + $0x468] sm:$0xff]
        %v456 = vld [vmem:[#allocation2 + $0x470] sm:$0xff]
        %v457 = vld [vmem:[#allocation2 + $0x478] sm:$0xff]
        %v458 = vld [vmem:[#allocation2 + $0x480] sm:$0xff]
        %v459 = vld [vmem:[#allocation2 + $0x488] sm:$0xff]
        %v460 = vld [vmem:[#allocation2 + $0x490] sm:$0xff]
        %v461 = vld [vmem:[#allocation2 + $0x498] sm:$0xff]
        %v462 = vld [vmem:[#allocation2 + $0x4a0] sm:$0xff]
        %v463 = vld [vmem:[#allocation2 + $0x4a8] sm:$0xff]
        %v464 = vld [vmem:[#allocation2 + $0x4b0] sm:$0xff]
        %v465 = vld [vmem:[#allocation2 + $0x4b8] sm:$0xff]
        %v466 = vld [vmem:[#allocation2 + $0x4c0] sm:$0xff]
        %v467 = vld [vmem:[#allocation2 + $0x4c8] sm:$0xff]
        %v468 = vld [vmem:[#allocation2 + $0x4d0] sm:$0xff]
        %v469 = vld [vmem:[#allocation2 + $0x4d8] sm:$0xff]
        %v470 = vld [vmem:[#allocation2 + $0x4e0] sm:$0xff]
        %v471 = vld [vmem:[#allocation2 + $0x4e8] sm:$0xff]
        %v472 = vld [vmem:[#allocation2 + $0x4f0] sm:$0xff]
        %v473 = vld [vmem:[#allocation2 + $0x4f8] sm:$0xff]
        %v474 = vld [vmem:[#allocation2 + $0x500] sm:$0xff]
        %v475 = vld [vmem:[#allocation2 + $0x508] sm:$0xff]
        %v476 = vld [vmem:[#allocation2 + $0x510] sm:$0xff]
        %v477 = vld [vmem:[#allocation2 + $0x518] sm:$0xff]
        %v478 = vld [vmem:[#allocation2 + $0x520] sm:$0xff]
        %v479 = vld [vmem:[#allocation2 + $0x528] sm:$0xff]
        %v480 = vld [vmem:[#allocation2 + $0x530] sm:$0xff]
        %v481 = vld [vmem:[#allocation2 + $0x538] sm:$0xff]
        %v482 = vld [vmem:[#allocation2 + $0x540] sm:$0xff]
        %v483 = vld [vmem:[#allocation2 + $0x548] sm:$0xff]
        %v484 = vld [vmem:[#allocation2 + $0x550] sm:$0xff]
        %v485 = vld [vmem:[#allocation2 + $0x558] sm:$0xff]
        %v486 = vld [vmem:[#allocation2 + $0x560] sm:$0xff]
        %v487 = vld [vmem:[#allocation2 + $0x568] sm:$0xff]
        %v488 = vld [vmem:[#allocation2 + $0x570] sm:$0xff]
        %v489 = vld [vmem:[#allocation2 + $0x578] sm:$0xff]
        %v490 = vld [vmem:[#allocation2 + $0x580] sm:$0xff]
        %v491 = vld [vmem:[#allocation2 + $0x588] sm:$0xff]
        %v492 = vld [vmem:[#allocation2 + $0x590] sm:$0xff]
        %v493 = vld [vmem:[#allocation2 + $0x598] sm:$0xff]
        %v494 = vld [vmem:[#allocation2 + $0x5a0] sm:$0xff]
        %v495 = vld [vmem:[#allocation2 + $0x5a8] sm:$0xff]
        %v496 = vld [vmem:[#allocation2 + $0x5b0] sm:$0xff]
        %v497 = vld [vmem:[#allocation2 + $0x5b8] sm:$0xff]
        %v498 = vld [vmem:[#allocation2 + $0x5c0] sm:$0xff]
        %v499 = vld [vmem:[#allocation2 + $0x5c8] sm:$0xff]
        %v500 = vld [vmem:[#allocation2 + $0x5d0] sm:$0xff]
        %v501 = vld [vmem:[#allocation2 + $0x5d8] sm:$0xff]
        %v502 = vld [vmem:[#allocation2 + $0x5e0] sm:$0xff]
        %v503 = vld [vmem:[#allocation2 + $0x5e8] sm:$0xff]
        %v504 = vld [vmem:[#allocation2 + $0x5f0] sm:$0xff]
        %v505 = vld [vmem:[#allocation2 + $0x5f8] sm:$0xff]
        %v506 = vld [vmem:[#allocation2 + $0x600] sm:$0xff]
        %v507 = vld [vmem:[#allocation2 + $0x608] sm:$0xff]
        %v508 = vld [vmem:[#allocation2 + $0x610] sm:$0xff]
        %v509 = vld [vmem:[#allocation2 + $0x618] sm:$0xff]
        %v510 = vld [vmem:[#allocation2 + $0x620] sm:$0xff]
        %v511 = vld [vmem:[#allocation2 + $0x628] sm:$0xff]
        %v512 = vld [vmem:[#allocation2 + $0x630] sm:$0xff]
        %v513 = vld [vmem:[#allocation2 + $0x638] sm:$0xff]
        %v514 = vld [vmem:[#allocation2 + $0x640] sm:$0xff]
        %v515 = vld [vmem:[#allocation2 + $0x648] sm:$0xff]
        %v516 = vld [vmem:[#allocation2 + $0x650] sm:$0xff]
        %v517 = vld [vmem:[#allocation2 + $0x658] sm:$0xff]
        %v518 = vld [vmem:[#allocation2 + $0x660] sm:$0xff]
        %v519 = vld [vmem:[#allocation2 + $0x668] sm:$0xff]
        %v520 = vld [vmem:[#allocation2 + $0x670] sm:$0xff]
        %v521 = vld [vmem:[#allocation2 + $0x678] sm:$0xff]
        %v522 = vld [vmem:[#allocation2 + $0x680] sm:$0xff]
        %v523 = vld [vmem:[#allocation2 + $0x688] sm:$0xff]
        %v524 = vld [vmem:[#allocation2 + $0x690] sm:$0xff]
        %v525 = vld [vmem:[#allocation2 + $0x698] sm:$0xff]
        %v526 = vld [vmem:[#allocation2 + $0x6a0] sm:$0xff]
        %v527 = vld [vmem:[#allocation2 + $0x6a8] sm:$0xff]
        %v528 = vld [vmem:[#allocation2 + $0x6b0] sm:$0xff]
        %v529 = vld [vmem:[#allocation2 + $0x6b8] sm:$0xff]
        %v530 = vld [vmem:[#allocation2 + $0x6c0] sm:$0xff]
        %v531 = vld [vmem:[#allocation2 + $0x6c8] sm:$0xff]
        %v532 = vld [vmem:[#allocation2 + $0x6d0] sm:$0xff]
        %v533 = vld [vmem:[#allocation2 + $0x6d8] sm:$0xff]
        %v534 = vld [vmem:[#allocation2 + $0x6e0] sm:$0xff]
        %v535 = vld [vmem:[#allocation2 + $0x6e8] sm:$0xff]
        %v536 = vld [vmem:[#allocation2 + $0x6f0] sm:$0xff]
        %v537 = vld [vmem:[#allocation2 + $0x6f8] sm:$0xff]
        %v538 = vld [vmem:[#allocation2 + $0x700] sm:$0xff]
        %v539 = vld [vmem:[#allocation2 + $0x708] sm:$0xff]
        %v540 = vld [vmem:[#allocation2 + $0x710] sm:$0xff]
        %v541 = vld [vmem:[#allocation2 + $0x718] sm:$0xff]
        %v542 = vld [vmem:[#allocation2 + $0x720] sm:$0xff]
        %v543 = vld [vmem:[#allocation2 + $0x728] sm:$0xff]
        %v544 = vld [vmem:[#allocation2 + $0x730] sm:$0xff]
        %v545 = vld [vmem:[#allocation2 + $0x738] sm:$0xff]
        %v546 = vld [vmem:[#allocation2 + $0x740] sm:$0xff]
        %v547 = vld [vmem:[#allocation2 + $0x748] sm:$0xff]
        %v548 = vld [vmem:[#allocation2 + $0x750] sm:$0xff]
        %v549 = vld [vmem:[#allocation2 + $0x758] sm:$0xff]
        %v550 = vld [vmem:[#allocation2 + $0x760] sm:$0xff]
        %v551 = vld [vmem:[#allocation2 + $0x768] sm:$0xff]
        %v552 = vld [vmem:[#allocation2 + $0x770] sm:$0xff]
        %v553 = vld [vmem:[#allocation2 + $0x778] sm:$0xff]
        %v554 = vld [vmem:[#allocation2 + $0x780] sm:$0xff]
        %v555 = vld [vmem:[#allocation2 + $0x788] sm:$0xff]
        %v556 = vld [vmem:[#allocation2 + $0x790] sm:$0xff]
        %v557 = vld [vmem:[#allocation2 + $0x798] sm:$0xff]
        %v558 = vld [vmem:[#allocation2 + $0x7a0] sm:$0xff]
        %v559 = vld [vmem:[#allocation2 + $0x7a8] sm:$0xff]
        %v560 = vld [vmem:[#allocation2 + $0x7b0] sm:$0xff]
        %v561 = vld [vmem:[#allocation2 + $0x7b8] sm:$0xff]
        %v562 = vld [vmem:[#allocation2 + $0x7c0] sm:$0xff]
        %v563 = vld [vmem:[#allocation2 + $0x7c8] sm:$0xff]
        %v564 = vld [vmem:[#allocation2 + $0x7d0] sm:$0xff]
        %v565 = vld [vmem:[#allocation2 + $0x7d8] sm:$0xff]
        %v566 = vld [vmem:[#allocation2 + $0x7e0] sm:$0xff]
        %v567 = vld [vmem:[#allocation2 + $0x7e8] sm:$0xff]
        %v568 = vld [vmem:[#allocation2 + $0x7f0] sm:$0xff]
        %v569 = vld [vmem:[#allocation2 + $0x7f8] sm:$0xff]
        %v570 = vld [vmem:[#allocation2 + $0x800] sm:$0xff]
        %v571 = vld [vmem:[#allocation2 + $0x808] sm:$0xff]
        %v572 = vld [vmem:[#allocation2 + $0x810] sm:$0xff]
        %v573 = vld [vmem:[#allocation2 + $0x818] sm:$0xff]
        %v574 = vld [vmem:[#allocation2 + $0x820] sm:$0xff]
        %v575 = vld [vmem:[#allocation2 + $0x828] sm:$0xff]
        %v576 = vld [vmem:[#allocation2 + $0x830] sm:$0xff]
        %v577 = vld [vmem:[#allocation2 + $0x838] sm:$0xff]
        %v578 = vld [vmem:[#allocation2 + $0x840] sm:$0xff]
        %v579 = vld [vmem:[#allocation2 + $0x848] sm:$0xff]
        %v580 = vld [vmem:[#allocation2 + $0x850] sm:$0xff]
        %v581 = vld [vmem:[#allocation2 + $0x858] sm:$0xff]
        %v582 = vld [vmem:[#allocation2 + $0x860] sm:$0xff]
        %v583 = vld [vmem:[#allocation2 + $0x868] sm:$0xff]
        %v584 = vld [vmem:[#allocation2 + $0x870] sm:$0xff]
        %v585 = vld [vmem:[#allocation2 + $0x878] sm:$0xff]
        %v586 = vld [vmem:[#allocation2 + $0x880] sm:$0xff]
        %v587 = vld [vmem:[#allocation2 + $0x888] sm:$0xff]
        %v588 = vld [vmem:[#allocation2 + $0x890] sm:$0xff]
        %v589 = vld [vmem:[#allocation2 + $0x898] sm:$0xff]
        %v590 = vld [vmem:[#allocation2 + $0x8a0] sm:$0xff]
        %v591 = vld [vmem:[#allocation2 + $0x8a8] sm:$0xff]
        %v592 = vld [vmem:[#allocation2 + $0x8b0] sm:$0xff]
        %v593 = vld [vmem:[#allocation2 + $0x8b8] sm:$0xff]
        %v594 = vld [vmem:[#allocation2 + $0x8c0] sm:$0xff]
        %v595 = vld [vmem:[#allocation2 + $0x8c8] sm:$0xff]
        %v596 = vld [vmem:[#allocation2 + $0x8d0] sm:$0xff]
        %v597 = vld [vmem:[#allocation2 + $0x8d8] sm:$0xff]
        %v598 = vld [vmem:[#allocation2 + $0x8e0] sm:$0xff]
        %v599 = vld [vmem:[#allocation2 + $0x8e8] sm:$0xff]
        %v600 = vld [vmem:[#allocation2 + $0x8f0] sm:$0xff]
        %v601 = vld [vmem:[#allocation2 + $0x8f8] sm:$0xff]
        %v602 = vld [vmem:[#allocation2 + $0x900] sm:$0xff]
        %v603 = vld [vmem:[#allocation2 + $0x908] sm:$0xff]
        %v604 = vld [vmem:[#allocation2 + $0x910] sm:$0xff]
        %v605 = vld [vmem:[#allocation2 + $0x918] sm:$0xff]
        %v606 = vld [vmem:[#allocation2 + $0x920] sm:$0xff]
        %v607 = vld [vmem:[#allocation2 + $0x928] sm:$0xff]
        %v608 = vld [vmem:[#allocation2 + $0x930] sm:$0xff]
        %v609 = vld [vmem:[#allocation2 + $0x938] sm:$0xff]
        %v610 = vld [vmem:[#allocation2 + $0x940] sm:$0xff]
        %v611 = vld [vmem:[#allocation2 + $0x948] sm:$0xff]
        %v612 = vld [vmem:[#allocation2 + $0x950] sm:$0xff]
        %v613 = vld [vmem:[#allocation2 + $0x958] sm:$0xff]
        %v614 = vld [vmem:[#allocation2 + $0x960] sm:$0xff]
        %v615 = vld [vmem:[#allocation2 + $0x968] sm:$0xff]
        %v616 = vld [vmem:[#allocation2 + $0x970] sm:$0xff]
        %v617 = vld [vmem:[#allocation2 + $0x978] sm:$0xff]
        %v618 = vld [vmem:[#allocation2 + $0x980] sm:$0xff]
        %v619 = vld [vmem:[#allocation2 + $0x988] sm:$0xff]
        %v620 = vld [vmem:[#allocation2 + $0x990] sm:$0xff]
        %v621 = vld [vmem:[#allocation2 + $0x998] sm:$0xff]
        %v622 = vld [vmem:[#allocation2 + $0x9a0] sm:$0xff]
        %v623 = vld [vmem:[#allocation2 + $0x9a8] sm:$0xff]
        %v624 = vld [vmem:[#allocation2 + $0x9b0] sm:$0xff]
        %v625 = vld [vmem:[#allocation2 + $0x9b8] sm:$0xff]
        %v626 = vld [vmem:[#allocation2 + $0x9c0] sm:$0xff]
        %v627 = vld [vmem:[#allocation2 + $0x9c8] sm:$0xff]
        %v628 = vld [vmem:[#allocation2 + $0x9d0] sm:$0xff]
        %v629 = vld [vmem:[#allocation2 + $0x9d8] sm:$0xff]
        %v630 = vld [vmem:[#allocation2 + $0x9e0] sm:$0xff]
        %v631 = vld [vmem:[#allocation2 + $0x9e8] sm:$0xff]
        %v632 = vld [vmem:[#allocation2 + $0x9f0] sm:$0xff]
        %v633 = vld [vmem:[#allocation2 + $0x9f8] sm:$0xff]
        %v634 = vld [vmem:[#allocation2 + $0xa00] sm:$0xff]
        %v635 = vld [vmem:[#allocation2 + $0xa08] sm:$0xff]
        %v636 = vld [vmem:[#allocation2 + $0xa10] sm:$0xff]
        %v637 = vld [vmem:[#allocation2 + $0xa18] sm:$0xff]
        %v638 = vld [vmem:[#allocation2 + $0xa20] sm:$0xff]
        %v639 = vld [vmem:[#allocation2 + $0xa28] sm:$0xff]
        %v640 = vld [vmem:[#allocation2 + $0xa30] sm:$0xff]
        %v641 = vld [vmem:[#allocation2 + $0xa38] sm:$0xff]
        %v642 = vld [vmem:[#allocation2 + $0xa40] sm:$0xff]
        %v643 = vld [vmem:[#allocation2 + $0xa48] sm:$0xff]
        %v644 = vld [vmem:[#allocation2 + $0xa50] sm:$0xff]
        %v645 = vld [vmem:[#allocation2 + $0xa58] sm:$0xff]
        %v646 = vld [vmem:[#allocation2 + $0xa60] sm:$0xff]
        %v647 = vld [vmem:[#allocation2 + $0xa68] sm:$0xff]
        %v648 = vld [vmem:[#allocation2 + $0xa70] sm:$0xff]
        %v649 = vld [vmem:[#allocation2 + $0xa78] sm:$0xff]
        %v650 = vld [vmem:[#allocation2 + $0xa80] sm:$0xff]
        %v651 = vld [vmem:[#allocation2 + $0xa88] sm:$0xff]
        %v652 = vld [vmem:[#allocation2 + $0xa90] sm:$0xff]
        %v653 = vld [vmem:[#allocation2 + $0xa98] sm:$0xff]
        %v654 = vld [vmem:[#allocation2 + $0xaa0] sm:$0xff]
        %v655 = vld [vmem:[#allocation2 + $0xaa8] sm:$0xff]
        %v656 = vld [vmem:[#allocation2 + $0xab0] sm:$0xff]
        %v657 = vld [vmem:[#allocation2 + $0xab8] sm:$0xff]
        %v658 = vld [vmem:[#allocation2 + $0xac0] sm:$0xff]
        %v659 = vld [vmem:[#allocation2 + $0xac8] sm:$0xff]
        %v660 = vld [vmem:[#allocation2 + $0xad0] sm:$0xff]
        %v661 = vld [vmem:[#allocation2 + $0xad8] sm:$0xff]
        %v662 = vld [vmem:[#allocation2 + $0xae0] sm:$0xff]
        %v663 = vld [vmem:[#allocation2 + $0xae8] sm:$0xff]
        %v664 = vld [vmem:[#allocation2 + $0xaf0] sm:$0xff]
        %v665 = vld [vmem:[#allocation2 + $0xaf8] sm:$0xff]
        %v666 = vld [vmem:[#allocation2 + $0xb00] sm:$0xff]
        %v667 = vld [vmem:[#allocation2 + $0xb08] sm:$0xff]
        %v668 = vld [vmem:[#allocation2 + $0xb10] sm:$0xff]
        %v669 = vld [vmem:[#allocation2 + $0xb18] sm:$0xff]
        %v670 = vld [vmem:[#allocation2 + $0xb20] sm:$0xff]
        %v671 = vld [vmem:[#allocation2 + $0xb28] sm:$0xff]
        %v672 = vld [vmem:[#allocation2 + $0xb30] sm:$0xff]
        %v673 = vld [vmem:[#allocation2 + $0xb38] sm:$0xff]
        %v674 = vld [vmem:[#allocation2 + $0xb40] sm:$0xff]
        %v675 = vld [vmem:[#allocation2 + $0xb48] sm:$0xff]
        %v676 = vld [vmem:[#allocation2 + $0xb50] sm:$0xff]
        %v677 = vld [vmem:[#allocation2 + $0xb58] sm:$0xff]
        %v678 = vld [vmem:[#allocation2 + $0xb60] sm:$0xff]
        %v679 = vld [vmem:[#allocation2 + $0xb68] sm:$0xff]
        %v680 = vld [vmem:[#allocation2 + $0xb70] sm:$0xff]
        %v681 = vld [vmem:[#allocation2 + $0xb78] sm:$0xff]
        %v682 = vld [vmem:[#allocation2 + $0xb80] sm:$0xff]
        %v683 = vld [vmem:[#allocation2 + $0xb88] sm:$0xff]
        %v684 = vld [vmem:[#allocation2 + $0xb90] sm:$0xff]
        %v685 = vld [vmem:[#allocation2 + $0xb98] sm:$0xff]
        %v686 = vld [vmem:[#allocation2 + $0xba0] sm:$0xff]
        %v687 = vld [vmem:[#allocation2 + $0xba8] sm:$0xff]
        %v688 = vld [vmem:[#allocation2 + $0xbb0] sm:$0xff]
        %v689 = vld [vmem:[#allocation2 + $0xbb8] sm:$0xff]
        %v690 = vld [vmem:[#allocation2 + $0xbc0] sm:$0xff]
        %v691 = vld [vmem:[#allocation2 + $0xbc8] sm:$0xff]
        %v692 = vld [vmem:[#allocation2 + $0xbd0] sm:$0xff]
        %v693 = vld [vmem:[#allocation2 + $0xbd8] sm:$0xff]
        %v694 = vld [vmem:[#allocation2 + $0xbe0] sm:$0xff]
        %v695 = vld [vmem:[#allocation2 + $0xbe8] sm:$0xff]
        %v696 = vld [vmem:[#allocation2 + $0xbf0] sm:$0xff]
        %v697 = vld [vmem:[#allocation2 + $0xbf8] sm:$0xff]
        %v698 = vld [vmem:[#allocation2 + $0xc00] sm:$0xff]
        %v699 = vld [vmem:[#allocation2 + $0xc08] sm:$0xff]
        %v700 = vld [vmem:[#allocation2 + $0xc10] sm:$0xff]
        %v701 = vld [vmem:[#allocation2 + $0xc18] sm:$0xff]
        %v702 = vld [vmem:[#allocation2 + $0xc20] sm:$0xff]
        %v703 = vld [vmem:[#allocation2 + $0xc28] sm:$0xff]
        %v704 = vld [vmem:[#allocation2 + $0xc30] sm:$0xff]
        %v705 = vld [vmem:[#allocation2 + $0xc38] sm:$0xff]
        %v706 = vld [vmem:[#allocation2 + $0xc40] sm:$0xff]
        %v707 = vld [vmem:[#allocation2 + $0xc48] sm:$0xff]
        %v708 = vld [vmem:[#allocation2 + $0xc50] sm:$0xff]
        %v709 = vld [vmem:[#allocation2 + $0xc58] sm:$0xff]
        %v710 = vld [vmem:[#allocation2 + $0xc60] sm:$0xff]
        %v711 = vld [vmem:[#allocation2 + $0xc68] sm:$0xff]
        %v712 = vld [vmem:[#allocation2 + $0xc70] sm:$0xff]
        %v713 = vld [vmem:[#allocation2 + $0xc78] sm:$0xff]
        %v714 = vld [vmem:[#allocation2 + $0xc80] sm:$0xff]
        %v715 = vld [vmem:[#allocation2 + $0xc88] sm:$0xff]
        %v716 = vld [vmem:[#allocation2 + $0xc90] sm:$0xff]
        %v717 = vld [vmem:[#allocation2 + $0xc98] sm:$0xff]
        %v718 = vld [vmem:[#allocation2 + $0xca0] sm:$0xff]
        %v719 = vld [vmem:[#allocation2 + $0xca8] sm:$0xff]
        %v720 = vld [vmem:[#allocation2 + $0xcb0] sm:$0xff]
        %v721 = vld [vmem:[#allocation2 + $0xcb8] sm:$0xff]
        %v722 = vld [vmem:[#allocation2 + $0xcc0] sm:$0xff]
        %v723 = vld [vmem:[#allocation2 + $0xcc8] sm:$0xff]
        %v724 = vld [vmem:[#allocation2 + $0xcd0] sm:$0xff]
        %v725 = vld [vmem:[#allocation2 + $0xcd8] sm:$0xff]
        %v726 = vld [vmem:[#allocation2 + $0xce0] sm:$0xff]
        %v727 = vld [vmem:[#allocation2 + $0xce8] sm:$0xff]
        %v728 = vld [vmem:[#allocation2 + $0xcf0] sm:$0xff]
        %v729 = vld [vmem:[#allocation2 + $0xcf8] sm:$0xff]
        %v730 = vld [vmem:[#allocation2 + $0xd00] sm:$0xff]
        %v731 = vld [vmem:[#allocation2 + $0xd08] sm:$0xff]
        %v732 = vld [vmem:[#allocation2 + $0xd10] sm:$0xff]
        %v733 = vld [vmem:[#allocation2 + $0xd18] sm:$0xff]
        %v734 = vld [vmem:[#allocation2 + $0xd20] sm:$0xff]
        %v735 = vld [vmem:[#allocation2 + $0xd28] sm:$0xff]
        %v736 = vld [vmem:[#allocation2 + $0xd30] sm:$0xff]
        %v737 = vld [vmem:[#allocation2 + $0xd38] sm:$0xff]
        %v738 = vld [vmem:[#allocation2 + $0xd40] sm:$0xff]
        %v739 = vld [vmem:[#allocation2 + $0xd48] sm:$0xff]
        %v740 = vld [vmem:[#allocation2 + $0xd50] sm:$0xff]
        %v741 = vld [vmem:[#allocation2 + $0xd58] sm:$0xff]
        %v742 = vld [vmem:[#allocation2 + $0xd60] sm:$0xff]
        %v743 = vld [vmem:[#allocation2 + $0xd68] sm:$0xff]
        %v744 = vld [vmem:[#allocation2 + $0xd70] sm:$0xff]
        %v745 = vld [vmem:[#allocation2 + $0xd78] sm:$0xff]
        %v746 = vld [vmem:[#allocation2 + $0xd80] sm:$0xff]
        %v747 = vld [vmem:[#allocation2 + $0xd88] sm:$0xff]
        %v748 = vld [vmem:[#allocation2 + $0xd90] sm:$0xff]
        %v749 = vld [vmem:[#allocation2 + $0xd98] sm:$0xff]
        %v750 = vld [vmem:[#allocation2 + $0xda0] sm:$0xff]
        %v751 = vld [vmem:[#allocation2 + $0xda8] sm:$0xff]
        %v752 = vld [vmem:[#allocation2 + $0xdb0] sm:$0xff]
        %v753 = vld [vmem:[#allocation2 + $0xdb8] sm:$0xff]
        %v754 = vld [vmem:[#allocation2 + $0xdc0] sm:$0xff]
        %v755 = vld [vmem:[#allocation2 + $0xdc8] sm:$0xff]
        %v756 = vld [vmem:[#allocation2 + $0xdd0] sm:$0xff]
        %v757 = vld [vmem:[#allocation2 + $0xdd8] sm:$0xff]
        %v758 = vld [vmem:[#allocation2 + $0xde0] sm:$0xff]
        %v759 = vld [vmem:[#allocation2 + $0xde8] sm:$0xff]
        %v760 = vld [vmem:[#allocation2 + $0xdf0] sm:$0xff]
        %v761 = vld [vmem:[#allocation2 + $0xdf8] sm:$0xff]
        %v762 = vld [vmem:[#allocation2 + $0xe00] sm:$0xff]
        %v763 = vld [vmem:[#allocation2 + $0xe08] sm:$0xff]
        %v764 = vld [vmem:[#allocation2 + $0xe10] sm:$0xff]
        %v765 = vld [vmem:[#allocation2 + $0xe18] sm:$0xff]
        %v766 = vld [vmem:[#allocation2 + $0xe20] sm:$0xff]
        %v767 = vld [vmem:[#allocation2 + $0xe28] sm:$0xff]
        %v768 = vld [vmem:[#allocation2 + $0xe30] sm:$0xff]
        %v769 = vld [vmem:[#allocation2 + $0xe38] sm:$0xff]
        %v770 = vld [vmem:[#allocation2 + $0xe40] sm:$0xff]
        %v771 = vld [vmem:[#allocation2 + $0xe48] sm:$0xff]
        %v772 = vld [vmem:[#allocation2 + $0xe50] sm:$0xff]
        %v773 = vld [vmem:[#allocation2 + $0xe58] sm:$0xff]
        %v774 = vld [vmem:[#allocation2 + $0xe60] sm:$0xff]
        %v775 = vld [vmem:[#allocation2 + $0xe68] sm:$0xff]
        %v776 = vld [vmem:[#allocation2 + $0xe70] sm:$0xff]
        %v777 = vld [vmem:[#allocation2 + $0xe78] sm:$0xff]
        %v778 = vld [vmem:[#allocation2 + $0xe80] sm:$0xff]
        %v779 = vld [vmem:[#allocation2 + $0xe88] sm:$0xff]
        %v780 = vld [vmem:[#allocation2 + $0xe90] sm:$0xff]
        %v781 = vld [vmem:[#allocation2 + $0xe98] sm:$0xff]
        %v782 = vld [vmem:[#allocation2 + $0xea0] sm:$0xff]
        %v783 = vld [vmem:[#allocation2 + $0xea8] sm:$0xff]
        %v784 = vld [vmem:[#allocation2 + $0xeb0] sm:$0xff]
        %v785 = vld [vmem:[#allocation2 + $0xeb8] sm:$0xff]
        %v786 = vld [vmem:[#allocation2 + $0xec0] sm:$0xff]
        %v787 = vld [vmem:[#allocation2 + $0xec8] sm:$0xff]
        %v788 = vld [vmem:[#allocation2 + $0xed0] sm:$0xff]
        %v789 = vld [vmem:[#allocation2 + $0xed8] sm:$0xff]
        %v790 = vld [vmem:[#allocation2 + $0xee0] sm:$0xff]
        %v791 = vld [vmem:[#allocation2 + $0xee8] sm:$0xff]
        %v792 = vld [vmem:[#allocation2 + $0xef0] sm:$0xff]
        %v793 = vld [vmem:[#allocation2 + $0xef8] sm:$0xff]
        %v794 = vld [vmem:[#allocation2 + $0xf00] sm:$0xff]
        %v795 = vld [vmem:[#allocation2 + $0xf08] sm:$0xff]
        %v796 = vld [vmem:[#allocation2 + $0xf10] sm:$0xff]
        %v797 = vld [vmem:[#allocation2 + $0xf18] sm:$0xff]
        %v798 = vld [vmem:[#allocation2 + $0xf20] sm:$0xff]
        %v799 = vld [vmem:[#allocation2 + $0xf28] sm:$0xff]
        %v800 = vld [vmem:[#allocation2 + $0xf30] sm:$0xff]
        %v801 = vld [vmem:[#allocation2 + $0xf38] sm:$0xff]
        %v802 = vld [vmem:[#allocation2 + $0xf40] sm:$0xff]
        %v803 = vld [vmem:[#allocation2 + $0xf48] sm:$0xff]
        %v804 = vld [vmem:[#allocation2 + $0xf50] sm:$0xff]
        %v805 = vld [vmem:[#allocation2 + $0xf58] sm:$0xff]
        %v806 = vld [vmem:[#allocation2 + $0xf60] sm:$0xff]
        %v807 = vld [vmem:[#allocation2 + $0xf68] sm:$0xff]
        %v808 = vld [vmem:[#allocation2 + $0xf70] sm:$0xff]
        %v809 = vld [vmem:[#allocation2 + $0xf78] sm:$0xff]
        %v810 = vld [vmem:[#allocation2 + $0xf80] sm:$0xff]
        %v811 = vld [vmem:[#allocation2 + $0xf88] sm:$0xff]
        %v812 = vld [vmem:[#allocation2 + $0xf90] sm:$0xff]
        %v813 = vld [vmem:[#allocation2 + $0xf98] sm:$0xff]
        %v814 = vld [vmem:[#allocation2 + $0xfa0] sm:$0xff]
        %v815 = vld [vmem:[#allocation2 + $0xfa8] sm:$0xff]
        %v816 = vld [vmem:[#allocation2 + $0xfb0] sm:$0xff]
        %v817 = vld [vmem:[#allocation2 + $0xfb8] sm:$0xff]
        %v818 = vld [vmem:[#allocation2 + $0xfc0] sm:$0xff]
        %v819 = vld [vmem:[#allocation2 + $0xfc8] sm:$0xff]
        %v820 = vld [vmem:[#allocation2 + $0xfd0] sm:$0xff]
        %v821 = vld [vmem:[#allocation2 + $0xfd8] sm:$0xff]
        %v822 = vld [vmem:[#allocation2 + $0xfe0] sm:$0xff]
        %v823 = vld [vmem:[#allocation2 + $0xfe8] sm:$0xff]
        %v824 = vld [vmem:[#allocation2 + $0xff0] sm:$0xff]
        %v825 = vld [vmem:[#allocation2 + $0xff8] sm:$0xff]
        %v826 = vld [vmem:[#allocation2 + $0x1000] sm:$0xff]
        %v827 = vld [vmem:[#allocation2 + $0x1008] sm:$0xff]
        %v828 = vld [vmem:[#allocation2 + $0x1010] sm:$0xff]
        %v829 = vld [vmem:[#allocation2 + $0x1018] sm:$0xff]
        %v830 = vld [vmem:[#allocation2 + $0x1020] sm:$0xff]
        %v831 = vld [vmem:[#allocation2 + $0x1028] sm:$0xff]
        %v832 = vld [vmem:[#allocation2 + $0x1030] sm:$0xff]
        %v833 = vld [vmem:[#allocation2 + $0x1038] sm:$0xff]
        %v834 = vld [vmem:[#allocation2 + $0x1040] sm:$0xff]
        %v835 = vld [vmem:[#allocation2 + $0x1048] sm:$0xff]
        %v836 = vld [vmem:[#allocation2 + $0x1050] sm:$0xff]
        %v837 = vld [vmem:[#allocation2 + $0x1058] sm:$0xff]
        %v838 = vld [vmem:[#allocation2 + $0x1060] sm:$0xff]
        %v839 = vld [vmem:[#allocation2 + $0x1068] sm:$0xff]
        %v840 = vld [vmem:[#allocation2 + $0x1070] sm:$0xff]
        %v841 = vld [vmem:[#allocation2 + $0x1078] sm:$0xff]
        %v842 = vld [vmem:[#allocation2 + $0x1080] sm:$0xff]
        %v843 = vld [vmem:[#allocation2 + $0x1088] sm:$0xff]
        %v844 = vld [vmem:[#allocation2 + $0x1090] sm:$0xff]
        %v845 = vld [vmem:[#allocation2 + $0x1098] sm:$0xff]
        %v846 = vld [vmem:[#allocation2 + $0x10a0] sm:$0xff]
        %v847 = vld [vmem:[#allocation2 + $0x10a8] sm:$0xff]
        %v848 = vld [vmem:[#allocation2 + $0x10b0] sm:$0xff]
        %v849 = vld [vmem:[#allocation2 + $0x10b8] sm:$0xff]
        %v850 = vld [vmem:[#allocation2 + $0x10c0] sm:$0xff]
        %v851 = vld [vmem:[#allocation2 + $0x10c8] sm:$0xff]
        %v852 = vld [vmem:[#allocation2 + $0x10d0] sm:$0xff]
        %v853 = vld [vmem:[#allocation2 + $0x10d8] sm:$0xff]
        %v854 = vld [vmem:[#allocation2 + $0x10e0] sm:$0xff]
        %v855 = vld [vmem:[#allocation2 + $0x10e8] sm:$0xff]
        %v856 = vld [vmem:[#allocation2 + $0x10f0] sm:$0xff]
        %v857 = vld [vmem:[#allocation2 + $0x10f8] sm:$0xff]
        %v858 = vld [vmem:[#allocation2 + $0x1100] sm:$0xff]
        %v859 = vld [vmem:[#allocation2 + $0x1108] sm:$0xff]
        %v860 = vld [vmem:[#allocation2 + $0x1110] sm:$0xff]
        %v861 = vld [vmem:[#allocation2 + $0x1118] sm:$0xff]
        %v862 = vld [vmem:[#allocation2 + $0x1120] sm:$0xff]
        %v863 = vld [vmem:[#allocation2 + $0x1128] sm:$0xff]
        %v864 = vld [vmem:[#allocation2 + $0x1130] sm:$0xff]
        %v865 = vld [vmem:[#allocation2 + $0x1138] sm:$0xff]
        %v866 = vld [vmem:[#allocation2 + $0x1140] sm:$0xff]
        %v867 = vld [vmem:[#allocation2 + $0x1148] sm:$0xff]
        %v868 = vld [vmem:[#allocation2 + $0x1150] sm:$0xff]
        %v869 = vld [vmem:[#allocation2 + $0x1158] sm:$0xff]
        %v870 = vld [vmem:[#allocation2 + $0x1160] sm:$0xff]
        %v871 = vld [vmem:[#allocation2 + $0x1168] sm:$0xff]
        %v872 = vld [vmem:[#allocation2 + $0x1170] sm:$0xff]
        %v873 = vld [vmem:[#allocation2 + $0x1178] sm:$0xff]
        %v874 = vld [vmem:[#allocation2 + $0x1180] sm:$0xff]
        %v875 = vld [vmem:[#allocation2 + $0x1188] sm:$0xff]
        %v876 = vld [vmem:[#allocation2 + $0x1190] sm:$0xff]
        %v877 = vld [vmem:[#allocation2 + $0x1198] sm:$0xff]
        %v878 = vld [vmem:[#allocation2 + $0x11a0] sm:$0xff]
        %v879 = vld [vmem:[#allocation2 + $0x11a8] sm:$0xff]
        %v880 = vld [vmem:[#allocation2 + $0x11b0] sm:$0xff]
        %v881 = vld [vmem:[#allocation2 + $0x11b8] sm:$0xff]
        %v882 = vld [vmem:[#allocation2 + $0x11c0] sm:$0xff]
        %v883 = vld [vmem:[#allocation2 + $0x11c8] sm:$0xff]
        %v884 = vld [vmem:[#allocation2 + $0x11d0] sm:$0xff]
        %v885 = vld [vmem:[#allocation2 + $0x11d8] sm:$0xff]
        %v886 = vld [vmem:[#allocation2 + $0x11e0] sm:$0xff]
        %v887 = vld [vmem:[#allocation2 + $0x11e8] sm:$0xff]
        %v888 = vld [vmem:[#allocation2 + $0x11f0] sm:$0xff]
        %v889 = vld [vmem:[#allocation2 + $0x11f8] sm:$0xff]
        %v890 = vld [vmem:[#allocation2 + $0x1200] sm:$0xff]
        %v891 = vld [vmem:[#allocation2 + $0x1208] sm:$0xff]
        %v892 = vld [vmem:[#allocation2 + $0x1210] sm:$0xff]
        %v893 = vld [vmem:[#allocation2 + $0x1218] sm:$0xff]
        %v894 = vld [vmem:[#allocation2 + $0x1220] sm:$0xff]
        %v895 = vld [vmem:[#allocation2 + $0x1228] sm:$0xff]
        %v896 = vld [vmem:[#allocation2 + $0x1230] sm:$0xff]
        %v897 = vld [vmem:[#allocation2 + $0x1238] sm:$0xff]
        %v898 = vld [vmem:[#allocation2 + $0x1240] sm:$0xff]
        %v899 = vld [vmem:[#allocation2 + $0x1248] sm:$0xff]
        %v900 = vld [vmem:[#allocation2 + $0x1250] sm:$0xff]
        %v901 = vld [vmem:[#allocation2 + $0x1258] sm:$0xff]
        %v902 = vld [vmem:[#allocation2 + $0x1260] sm:$0xff]
        %v903 = vld [vmem:[#allocation2 + $0x1268] sm:$0xff]
        %v904 = vld [vmem:[#allocation2 + $0x1270] sm:$0xff]
        %v905 = vld [vmem:[#allocation2 + $0x1278] sm:$0xff]
        %v906 = vld [vmem:[#allocation2 + $0x1280] sm:$0xff]
        %v907 = vld [vmem:[#allocation2 + $0x1288] sm:$0xff]
        %v908 = vld [vmem:[#allocation2 + $0x1290] sm:$0xff]
        %v909 = vld [vmem:[#allocation2 + $0x1298] sm:$0xff]
        %v910 = vld [vmem:[#allocation2 + $0x12a0] sm:$0xff]
        %v911 = vld [vmem:[#allocation2 + $0x12a8] sm:$0xff]
        %v912 = vld [vmem:[#allocation2 + $0x12b0] sm:$0xff]
        %v913 = vld [vmem:[#allocation2 + $0x12b8] sm:$0xff]
        %v914 = vld [vmem:[#allocation2 + $0x12c0] sm:$0xff]
        %v915 = vld [vmem:[#allocation2 + $0x12c8] sm:$0xff]
        %v916 = vld [vmem:[#allocation2 + $0x12d0] sm:$0xff]
        %v917 = vld [vmem:[#allocation2 + $0x12d8] sm:$0xff]
        %v918 = vld [vmem:[#allocation2 + $0x12e0] sm:$0xff]
        %v919 = vld [vmem:[#allocation2 + $0x12e8] sm:$0xff]
        %v920 = vld [vmem:[#allocation2 + $0x12f0] sm:$0xff]
        %v921 = vld [vmem:[#allocation2 + $0x12f8] sm:$0xff]
        %v922 = vld [vmem:[#allocation2 + $0x1300] sm:$0xff]
        %v923 = vld [vmem:[#allocation2 + $0x1308] sm:$0xff]
        %v924 = vld [vmem:[#allocation2 + $0x1310] sm:$0xff]
        %v925 = vld [vmem:[#allocation2 + $0x1318] sm:$0xff]
        %v926 = vld [vmem:[#allocation2 + $0x1320] sm:$0xff]
        %v927 = vld [vmem:[#allocation2 + $0x1328] sm:$0xff]
        %v928 = vld [vmem:[#allocation2 + $0x1330] sm:$0xff]
        %v929 = vld [vmem:[#allocation2 + $0x1338] sm:$0xff]
        %v930 = vld [vmem:[#allocation2 + $0x1340] sm:$0xff]
        %v931 = vld [vmem:[#allocation2 + $0x1348] sm:$0xff]
        %v932 = vld [vmem:[#allocation2 + $0x1350] sm:$0xff]
        %v933 = vld [vmem:[#allocation2 + $0x1358] sm:$0xff]
        %v934 = vld [vmem:[#allocation2 + $0x1360] sm:$0xff]
        %v935 = vld [vmem:[#allocation2 + $0x1368] sm:$0xff]
        %v936 = vld [vmem:[#allocation2 + $0x1370] sm:$0xff]
        %v937 = vld [vmem:[#allocation2 + $0x1378] sm:$0xff]
        %v938 = vld [vmem:[#allocation2 + $0x1380] sm:$0xff]
        %v939 = vld [vmem:[#allocation2 + $0x1388] sm:$0xff]
        %v940 = vld [vmem:[#allocation2 + $0x1390] sm:$0xff]
        %v941 = vld [vmem:[#allocation2 + $0x1398] sm:$0xff]
        %v942 = vld [vmem:[#allocation2 + $0x13a0] sm:$0xff]
        %v943 = vld [vmem:[#allocation2 + $0x13a8] sm:$0xff]
        %v944 = vld [vmem:[#allocation2 + $0x13b0] sm:$0xff]
        %v945 = vld [vmem:[#allocation2 + $0x13b8] sm:$0xff]
        %v946 = vld [vmem:[#allocation2 + $0x13c0] sm:$0xff]
        %v947 = vld [vmem:[#allocation2 + $0x13c8] sm:$0xff]
        %v948 = vld [vmem:[#allocation2 + $0x13d0] sm:$0xff]
        %v949 = vld [vmem:[#allocation2 + $0x13d8] sm:$0xff]
        %v950 = vld [vmem:[#allocation2 + $0x13e0] sm:$0xff]
        %v951 = vld [vmem:[#allocation2 + $0x13e8] sm:$0xff]
        %v952 = vld [vmem:[#allocation2 + $0x13f0] sm:$0xff]
        %v953 = vld [vmem:[#allocation2 + $0x13f8] sm:$0xff]
        %v954 = vld [vmem:[#allocation2 + $0x1400] sm:$0xff]
        %v955 = vld [vmem:[#allocation2 + $0x1408] sm:$0xff]
        %v956 = vld [vmem:[#allocation2 + $0x1410] sm:$0xff]
        %v957 = vld [vmem:[#allocation2 + $0x1418] sm:$0xff]
        %v958 = vld [vmem:[#allocation2 + $0x1420] sm:$0xff]
        %v959 = vld [vmem:[#allocation2 + $0x1428] sm:$0xff]
        %v960 = vld [vmem:[#allocation2 + $0x1430] sm:$0xff]
        %v961 = vld [vmem:[#allocation2 + $0x1438] sm:$0xff]
        %v962 = vld [vmem:[#allocation2 + $0x1440] sm:$0xff]
        %v963 = vld [vmem:[#allocation2 + $0x1448] sm:$0xff]
        %v964 = vld [vmem:[#allocation2 + $0x1450] sm:$0xff]
        %v965 = vld [vmem:[#allocation2 + $0x1458] sm:$0xff]
        %v966 = vld [vmem:[#allocation2 + $0x1460] sm:$0xff]
        %v967 = vld [vmem:[#allocation2 + $0x1468] sm:$0xff]
        %v968 = vld [vmem:[#allocation2 + $0x1470] sm:$0xff]
        %v969 = vld [vmem:[#allocation2 + $0x1478] sm:$0xff]
        %v970 = vld [vmem:[#allocation2 + $0x1480] sm:$0xff]
        %v971 = vld [vmem:[#allocation2 + $0x1488] sm:$0xff]
        %v972 = vld [vmem:[#allocation2 + $0x1490] sm:$0xff]
        %v973 = vld [vmem:[#allocation2 + $0x1498] sm:$0xff]
        %v974 = vld [vmem:[#allocation2 + $0x14a0] sm:$0xff]
        %v975 = vld [vmem:[#allocation2 + $0x14a8] sm:$0xff]
        %v976 = vld [vmem:[#allocation2 + $0x14b0] sm:$0xff]
        %v977 = vld [vmem:[#allocation2 + $0x14b8] sm:$0xff]
        %v978 = vld [vmem:[#allocation2 + $0x14c0] sm:$0xff]
        %v979 = vld [vmem:[#allocation2 + $0x14c8] sm:$0xff]
        %v980 = vld [vmem:[#allocation2 + $0x14d0] sm:$0xff]
        %v981 = vld [vmem:[#allocation2 + $0x14d8] sm:$0xff]
        %v982 = vld [vmem:[#allocation2 + $0x14e0] sm:$0xff]
        %v983 = vld [vmem:[#allocation2 + $0x14e8] sm:$0xff]
        %v984 = vld [vmem:[#allocation2 + $0x14f0] sm:$0xff]
        %v985 = vld [vmem:[#allocation2 + $0x14f8] sm:$0xff]
        %v986 = vld [vmem:[#allocation2 + $0x1500] sm:$0xff]
        %v987 = vld [vmem:[#allocation2 + $0x1508] sm:$0xff]
        %v988 = vld [vmem:[#allocation2 + $0x1510] sm:$0xff]
        %v989 = vld [vmem:[#allocation2 + $0x1518] sm:$0xff]
        %v990 = vld [vmem:[#allocation2 + $0x1520] sm:$0xff]
        %v991 = vld [vmem:[#allocation2 + $0x1528] sm:$0xff]
        %v992 = vld [vmem:[#allocation2 + $0x1530] sm:$0xff]
        %v993 = vld [vmem:[#allocation2 + $0x1538] sm:$0xff]
        %v994 = vld [vmem:[#allocation2 + $0x1540] sm:$0xff]
        %v995 = vld [vmem:[#allocation2 + $0x1548] sm:$0xff]
        %v996 = vld [vmem:[#allocation2 + $0x1550] sm:$0xff]
        %v997 = vld [vmem:[#allocation2 + $0x1558] sm:$0xff]
        %v998 = vld [vmem:[#allocation2 + $0x1560] sm:$0xff]
        %v999 = vld [vmem:[#allocation2 + $0x1568] sm:$0xff]
        %v1000 = vld [vmem:[#allocation2 + $0x1570] sm:$0xff]
        %v1001 = vld [vmem:[#allocation2 + $0x1578] sm:$0xff]
        %v1002 = vld [vmem:[#allocation2 + $0x1580] sm:$0xff]
        %v1003 = vld [vmem:[#allocation2 + $0x1588] sm:$0xff]
        %v1004 = vld [vmem:[#allocation2 + $0x1590] sm:$0xff]
        %v1005 = vld [vmem:[#allocation2 + $0x1598] sm:$0xff]
        %v1006 = vld [vmem:[#allocation2 + $0x15a0] sm:$0xff]
        %v1007 = vld [vmem:[#allocation2 + $0x15a8] sm:$0xff]
        %v1008 = vld [vmem:[#allocation2 + $0x15b0] sm:$0xff]
        %v1009 = vld [vmem:[#allocation2 + $0x15b8] sm:$0xff]
        %v1010 = vld [vmem:[#allocation2 + $0x15c0] sm:$0xff]
        %v1011 = vld [vmem:[#allocation2 + $0x15c8] sm:$0xff]
        %v1012 = vld [vmem:[#allocation2 + $0x15d0] sm:$0xff]
        %v1013 = vld [vmem:[#allocation2 + $0x15d8] sm:$0xff]
        %v1014 = vld [vmem:[#allocation2 + $0x15e0] sm:$0xff]
        %v1015 = vld [vmem:[#allocation2 + $0x15e8] sm:$0xff]
        %v1016 = vld [vmem:[#allocation2 + $0x15f0] sm:$0xff]
        %v1017 = vld [vmem:[#allocation2 + $0x15f8] sm:$0xff]
        %v1018 = vld [vmem:[#allocation2 + $0x1600] sm:$0xff]
        %v1019 = vld [vmem:[#allocation2 + $0x1608] sm:$0xff]
        %v1020 = vld [vmem:[#allocation2 + $0x1610] sm:$0xff]
        %v1021 = vld [vmem:[#allocation2 + $0x1618] sm:$0xff]
        %v1022 = vld [vmem:[#allocation2 + $0x1620] sm:$0xff]
        %v1023 = vld [vmem:[#allocation2 + $0x1628] sm:$0xff]
        %v1024 = vld [vmem:[#allocation2 + $0x1630] sm:$0xff]
        %v1025 = vld [vmem:[#allocation2 + $0x1638] sm:$0xff]
        %v1026 = vld [vmem:[#allocation2 + $0x1640] sm:$0xff]
        %v1027 = vld [vmem:[#allocation2 + $0x1648] sm:$0xff]
        %v1028 = vld [vmem:[#allocation2 + $0x1650] sm:$0xff]
        %v1029 = vld [vmem:[#allocation2 + $0x1658] sm:$0xff]
        %v1030 = vld [vmem:[#allocation2 + $0x1660] sm:$0xff]
        %v1031 = vld [vmem:[#allocation2 + $0x1668] sm:$0xff]
        %v1032 = vld [vmem:[#allocation2 + $0x1670] sm:$0xff]
        %v1033 = vld [vmem:[#allocation2 + $0x1678] sm:$0xff]
        %v1034 = vld [vmem:[#allocation2 + $0x1680] sm:$0xff]
        %v1035 = vld [vmem:[#allocation2 + $0x1688] sm:$0xff]
        %v1036 = vld [vmem:[#allocation2 + $0x1690] sm:$0xff]
        %v1037 = vld [vmem:[#allocation2 + $0x1698] sm:$0xff]
        %v1038 = vld [vmem:[#allocation2 + $0x16a0] sm:$0xff]
        %v1039 = vld [vmem:[#allocation2 + $0x16a8] sm:$0xff]
        %v1040 = vld [vmem:[#allocation2 + $0x16b0] sm:$0xff]
        %v1041 = vld [vmem:[#allocation2 + $0x16b8] sm:$0xff]
        %v1042 = vld [vmem:[#allocation2 + $0x16c0] sm:$0xff]
        %v1043 = vld [vmem:[#allocation2 + $0x16c8] sm:$0xff]
        %v1044 = vld [vmem:[#allocation2 + $0x16d0] sm:$0xff]
        %v1045 = vld [vmem:[#allocation2 + $0x16d8] sm:$0xff]
        %v1046 = vld [vmem:[#allocation2 + $0x16e0] sm:$0xff]
        %v1047 = vld [vmem:[#allocation2 + $0x16e8] sm:$0xff]
        %v1048 = vld [vmem:[#allocation2 + $0x16f0] sm:$0xff]
        %v1049 = vld [vmem:[#allocation2 + $0x16f8] sm:$0xff]
        %v1050 = vld [vmem:[#allocation2 + $0x1700] sm:$0xff]
        %v1051 = vld [vmem:[#allocation2 + $0x1708] sm:$0xff]
        %v1052 = vld [vmem:[#allocation2 + $0x1710] sm:$0xff]
        %v1053 = vld [vmem:[#allocation2 + $0x1718] sm:$0xff]
        %v1054 = vld [vmem:[#allocation2 + $0x1720] sm:$0xff]
        %v1055 = vld [vmem:[#allocation2 + $0x1728] sm:$0xff]
        %v1056 = vld [vmem:[#allocation2 + $0x1730] sm:$0xff]
        %v1057 = vld [vmem:[#allocation2 + $0x1738] sm:$0xff]
        %v1058 = vld [vmem:[#allocation2 + $0x1740] sm:$0xff]
        %v1059 = vld [vmem:[#allocation2 + $0x1748] sm:$0xff]
        %v1060 = vld [vmem:[#allocation2 + $0x1750] sm:$0xff]
        %v1061 = vld [vmem:[#allocation2 + $0x1758] sm:$0xff]
        %v1062 = vld [vmem:[#allocation2 + $0x1760] sm:$0xff]
        %v1063 = vld [vmem:[#allocation2 + $0x1768] sm:$0xff]
        %v1064 = vld [vmem:[#allocation2 + $0x1770] sm:$0xff]
        %v1065 = vld [vmem:[#allocation2 + $0x1778] sm:$0xff]
        %v1066 = vld [vmem:[#allocation2 + $0x1780] sm:$0xff]
        %v1067 = vld [vmem:[#allocation2 + $0x1788] sm:$0xff]
        %v1068 = vld [vmem:[#allocation2 + $0x1790] sm:$0xff]
        %v1069 = vld [vmem:[#allocation2 + $0x1798] sm:$0xff]
        %v1070 = vld [vmem:[#allocation2 + $0x17a0] sm:$0xff]
        %v1071 = vld [vmem:[#allocation2 + $0x17a8] sm:$0xff]
        %v1072 = vld [vmem:[#allocation2 + $0x17b0] sm:$0xff]
        %v1073 = vld [vmem:[#allocation2 + $0x17b8] sm:$0xff]
        %v1074 = vld [vmem:[#allocation2 + $0x17c0] sm:$0xff]
        %v1075 = vld [vmem:[#allocation2 + $0x17c8] sm:$0xff]
        %v1076 = vld [vmem:[#allocation2 + $0x17d0] sm:$0xff]
        %v1077 = vld [vmem:[#allocation2 + $0x17d8] sm:$0xff]
        %v1078 = vld [vmem:[#allocation2 + $0x17e0] sm:$0xff]
        %v1079 = vld [vmem:[#allocation2 + $0x17e8] sm:$0xff]
        %v1080 = vld [vmem:[#allocation2 + $0x17f0] sm:$0xff]
        %v1081 = vld [vmem:[#allocation2 + $0x17f8] sm:$0xff]
        %v1082 = vld [vmem:[#allocation2 + $0x1800] sm:$0xff]
        %v1083 = vld [vmem:[#allocation2 + $0x1808] sm:$0xff]
        %v1084 = vld [vmem:[#allocation2 + $0x1810] sm:$0xff]
        %v1085 = vld [vmem:[#allocation2 + $0x1818] sm:$0xff]
        %v1086 = vld [vmem:[#allocation2 + $0x1820] sm:$0xff]
        %v1087 = vld [vmem:[#allocation2 + $0x1828] sm:$0xff]
        %v1088 = vld [vmem:[#allocation2 + $0x1830] sm:$0xff]
        %v1089 = vld [vmem:[#allocation2 + $0x1838] sm:$0xff]
        %v1090 = vld [vmem:[#allocation2 + $0x1840] sm:$0xff]
        %v1091 = vld [vmem:[#allocation2 + $0x1848] sm:$0xff]
        %v1092 = vld [vmem:[#allocation2 + $0x1850] sm:$0xff]
        %v1093 = vld [vmem:[#allocation2 + $0x1858] sm:$0xff]
        %v1094 = vld [vmem:[#allocation2 + $0x1860] sm:$0xff]
        %v1095 = vld [vmem:[#allocation2 + $0x1868] sm:$0xff]
        %v1096 = vld [vmem:[#allocation2 + $0x1870] sm:$0xff]
        %v1097 = vld [vmem:[#allocation2 + $0x1878] sm:$0xff]
        %v1098 = vld [vmem:[#allocation2 + $0x1880] sm:$0xff]
        %v1099 = vld [vmem:[#allocation2 + $0x1888] sm:$0xff]
        %v1100 = vld [vmem:[#allocation2 + $0x1890] sm:$0xff]
        %v1101 = vld [vmem:[#allocation2 + $0x1898] sm:$0xff]
        %v1102 = vld [vmem:[#allocation2 + $0x18a0] sm:$0xff]
        %v1103 = vld [vmem:[#allocation2 + $0x18a8] sm:$0xff]
        %v1104 = vld [vmem:[#allocation2 + $0x18b0] sm:$0xff]
        %v1105 = vld [vmem:[#allocation2 + $0x18b8] sm:$0xff]
        %v1106 = vld [vmem:[#allocation2 + $0x18c0] sm:$0xff]
        %v1107 = vld [vmem:[#allocation2 + $0x18c8] sm:$0xff]
        %v1108 = vld [vmem:[#allocation2 + $0x18d0] sm:$0xff]
        %v1109 = vld [vmem:[#allocation2 + $0x18d8] sm:$0xff]
        %v1110 = vld [vmem:[#allocation2 + $0x18e0] sm:$0xff]
        %v1111 = vld [vmem:[#allocation2 + $0x18e8] sm:$0xff]
        %v1112 = vld [vmem:[#allocation2 + $0x18f0] sm:$0xff]
        %v1113 = vld [vmem:[#allocation2 + $0x18f8] sm:$0xff]
        %v1114 = vld [vmem:[#allocation2 + $0x1900] sm:$0xff]
        %v1115 = vld [vmem:[#allocation2 + $0x1908] sm:$0xff]
        %v1116 = vld [vmem:[#allocation2 + $0x1910] sm:$0xff]
        %v1117 = vld [vmem:[#allocation2 + $0x1918] sm:$0xff]
        %v1118 = vld [vmem:[#allocation2 + $0x1920] sm:$0xff]
        %v1119 = vld [vmem:[#allocation2 + $0x1928] sm:$0xff]
        %v1120 = vld [vmem:[#allocation2 + $0x1930] sm:$0xff]
        %v1121 = vld [vmem:[#allocation2 + $0x1938] sm:$0xff]
        %v1122 = vld [vmem:[#allocation2 + $0x1940] sm:$0xff]
        %v1123 = vld [vmem:[#allocation2 + $0x1948] sm:$0xff]
        %v1124 = vld [vmem:[#allocation2 + $0x1950] sm:$0xff]
        %v1125 = vld [vmem:[#allocation2 + $0x1958] sm:$0xff]
        %v1126 = vld [vmem:[#allocation2 + $0x1960] sm:$0xff]
        %v1127 = vld [vmem:[#allocation2 + $0x1968] sm:$0xff]
        %v1128 = vld [vmem:[#allocation2 + $0x1970] sm:$0xff]
        %v1129 = vld [vmem:[#allocation2 + $0x1978] sm:$0xff]
        %v1130 = vld [vmem:[#allocation2 + $0x1980] sm:$0xff]
        %v1131 = vld [vmem:[#allocation2 + $0x1988] sm:$0xff]
        %v1132 = vld [vmem:[#allocation2 + $0x1990] sm:$0xff]
        %v1133 = vld [vmem:[#allocation2 + $0x1998] sm:$0xff]
        %v1134 = vld [vmem:[#allocation2 + $0x19a0] sm:$0xff]
        %v1135 = vld [vmem:[#allocation2 + $0x19a8] sm:$0xff]
        %v1136 = vld [vmem:[#allocation2 + $0x19b0] sm:$0xff]
        %v1137 = vld [vmem:[#allocation2 + $0x19b8] sm:$0xff]
        %v1138 = vld [vmem:[#allocation2 + $0x19c0] sm:$0xff]
        %v1139 = vld [vmem:[#allocation2 + $0x19c8] sm:$0xff]
        %v1140 = vld [vmem:[#allocation2 + $0x19d0] sm:$0xff]
        %v1141 = vld [vmem:[#allocation2 + $0x19d8] sm:$0xff]
        %v1142 = vld [vmem:[#allocation2 + $0x19e0] sm:$0xff]
        %v1143 = vld [vmem:[#allocation2 + $0x19e8] sm:$0xff]
        %v1144 = vld [vmem:[#allocation2 + $0x19f0] sm:$0xff]
        %v1145 = vld [vmem:[#allocation2 + $0x19f8] sm:$0xff]
        %v1146 = vld [vmem:[#allocation2 + $0x1a00] sm:$0xff]
        %v1147 = vld [vmem:[#allocation2 + $0x1a08] sm:$0xff]
        %v1148 = vld [vmem:[#allocation2 + $0x1a10] sm:$0xff]
        %v1149 = vld [vmem:[#allocation2 + $0x1a18] sm:$0xff]
        %v1150 = vld [vmem:[#allocation2 + $0x1a20] sm:$0xff]
        %v1151 = vld [vmem:[#allocation2 + $0x1a28] sm:$0xff]
        %v1152 = vld [vmem:[#allocation2 + $0x1a30] sm:$0xff]
        %v1153 = vld [vmem:[#allocation2 + $0x1a38] sm:$0xff]
        %v1154 = vld [vmem:[#allocation2 + $0x1a40] sm:$0xff]
        %v1155 = vld [vmem:[#allocation2 + $0x1a48] sm:$0xff]
        %v1156 = vld [vmem:[#allocation2 + $0x1a50] sm:$0xff]
        %v1157 = vld [vmem:[#allocation2 + $0x1a58] sm:$0xff]
        %v1158 = vld [vmem:[#allocation2 + $0x1a60] sm:$0xff]
        %v1159 = vld [vmem:[#allocation2 + $0x1a68] sm:$0xff]
        %v1160 = vld [vmem:[#allocation2 + $0x1a70] sm:$0xff]
        %v1161 = vld [vmem:[#allocation2 + $0x1a78] sm:$0xff]
        %v1162 = vld [vmem:[#allocation2 + $0x1a80] sm:$0xff]
        %v1163 = vld [vmem:[#allocation2 + $0x1a88] sm:$0xff]
        %v1164 = vld [vmem:[#allocation2 + $0x1a90] sm:$0xff]
        %v1165 = vld [vmem:[#allocation2 + $0x1a98] sm:$0xff]
        %v1166 = vld [vmem:[#allocation2 + $0x1aa0] sm:$0xff]
        %v1167 = vld [vmem:[#allocation2 + $0x1aa8] sm:$0xff]
        %v1168 = vld [vmem:[#allocation2 + $0x1ab0] sm:$0xff]
        %v1169 = vld [vmem:[#allocation2 + $0x1ab8] sm:$0xff]
        %v1170 = vld [vmem:[#allocation2 + $0x1ac0] sm:$0xff]
        %v1171 = vld [vmem:[#allocation2 + $0x1ac8] sm:$0xff]
        %v1172 = vld [vmem:[#allocation2 + $0x1ad0] sm:$0xff]
        %v1173 = vld [vmem:[#allocation2 + $0x1ad8] sm:$0xff]
        %v1174 = vld [vmem:[#allocation2 + $0x1ae0] sm:$0xff]
        %v1175 = vld [vmem:[#allocation2 + $0x1ae8] sm:$0xff]
        %v1176 = vld [vmem:[#allocation2 + $0x1af0] sm:$0xff]
        %v1177 = vld [vmem:[#allocation2 + $0x1af8] sm:$0xff]
        %v1178 = vld [vmem:[#allocation2 + $0x1b00] sm:$0xff]
        %v1179 = vld [vmem:[#allocation2 + $0x1b08] sm:$0xff]
        %v1180 = vld [vmem:[#allocation2 + $0x1b10] sm:$0xff]
        %v1181 = vld [vmem:[#allocation2 + $0x1b18] sm:$0xff]
        %v1182 = vld [vmem:[#allocation2 + $0x1b20] sm:$0xff]
        %v1183 = vld [vmem:[#allocation2 + $0x1b28] sm:$0xff]
        %v1184 = vld [vmem:[#allocation2 + $0x1b30] sm:$0xff]
        %v1185 = vld [vmem:[#allocation2 + $0x1b38] sm:$0xff]
        %v1186 = vld [vmem:[#allocation2 + $0x1b40] sm:$0xff]
        %v1187 = vld [vmem:[#allocation2 + $0x1b48] sm:$0xff]
        %v1188 = vld [vmem:[#allocation2 + $0x1b50] sm:$0xff]
        %v1189 = vld [vmem:[#allocation2 + $0x1b58] sm:$0xff]
        %v1190 = vld [vmem:[#allocation2 + $0x1b60] sm:$0xff]
        %v1191 = vld [vmem:[#allocation2 + $0x1b68] sm:$0xff]
        %v1192 = vld [vmem:[#allocation2 + $0x1b70] sm:$0xff]
        %v1193 = vld [vmem:[#allocation2 + $0x1b78] sm:$0xff]
        %v1194 = vld [vmem:[#allocation2 + $0x1b80] sm:$0xff]
        %v1195 = vld [vmem:[#allocation2 + $0x1b88] sm:$0xff]
        %v1196 = vld [vmem:[#allocation2 + $0x1b90] sm:$0xff]
        %v1197 = vld [vmem:[#allocation2 + $0x1b98] sm:$0xff]
        %v1198 = vld [vmem:[#allocation2 + $0x1ba0] sm:$0xff]
        %v1199 = vld [vmem:[#allocation2 + $0x1ba8] sm:$0xff]
        %v1200 = vld [vmem:[#allocation2 + $0x1bb0] sm:$0xff]
        %v1201 = vld [vmem:[#allocation2 + $0x1bb8] sm:$0xff]
        %v1202 = vld [vmem:[#allocation2 + $0x1bc0] sm:$0xff]
        %v1203 = vld [vmem:[#allocation2 + $0x1bc8] sm:$0xff]
        %v1204 = vld [vmem:[#allocation2 + $0x1bd0] sm:$0xff]
        %v1205 = vld [vmem:[#allocation2 + $0x1bd8] sm:$0xff]
        %v1206 = vld [vmem:[#allocation2 + $0x1be0] sm:$0xff]
        %v1207 = vld [vmem:[#allocation2 + $0x1be8] sm:$0xff]
        %v1208 = vld [vmem:[#allocation2 + $0x1bf0] sm:$0xff]
        %v1209 = vld [vmem:[#allocation2 + $0x1bf8] sm:$0xff]
        %v1210 = vld [vmem:[#allocation4] sm:$0xff]
        %v1212 = vlaneseq
        %v1213 = vshrl.u32 %v1212, 7
        %v1214 = vsub.s32 0, %v1213
        %v1215 = vrot.slane %v1210, %v1214
        %v1216 = vlaneseq
        %v1217 = vshrl.u32 %v1216, 7
        %v1218 = vsub.s32 1, %v1217
        %v1219 = vrot.slane %v1210, %v1218
        %v1220 = vlaneseq
        %v1221 = vshrl.u32 %v1220, 7
        %v1222 = vsub.s32 2, %v1221
        %v1223 = vrot.slane %v1210, %v1222
        %v1224 = vlaneseq
        %v1225 = vshrl.u32 %v1224, 7
        %v1226 = vsub.s32 3, %v1225
        %v1227 = vrot.slane %v1210, %v1226
        %v1228 = vlaneseq
        %v1229 = vshrl.u32 %v1228, 7
        %v1230 = vsub.s32 4, %v1229
        %v1231 = vrot.slane %v1210, %v1230
        %v1232 = vlaneseq
        %v1233 = vshrl.u32 %v1232, 7
        %v1234 = vsub.s32 5, %v1233
        %v1235 = vrot.slane %v1210, %v1234
        %v1236 = vlaneseq
        %v1237 = vshrl.u32 %v1236, 7
        %v1238 = vsub.s32 6, %v1237
        %v1239 = vrot.slane %v1210, %v1238
        %v1240 = vlaneseq
        %v1241 = vshrl.u32 %v1240, 7
        %v1242 = vsub.s32 7, %v1241
        %v1243 = vrot.slane %v1210, %v1242
        %1252 = vmatprep.subr.mxu0 %v435
        %1253 = vmatpush1.msra.mxu0 %v434
        %1254 = vmatprep.subr.mxu0 %v427
        %1255 = vmatpush1.msra.mxu0 %v426
        %1256 = vmatprep.subr.mxu0 %v419
        %1257 = vmatpush1.msra.mxu0 %v418
        %1258 = vmatprep.subr.mxu0 %v411
        %1259 = vmatpush1.msra.mxu0 %v410
        %1260 = vmatprep.subr.mxu0 %v403
        %1261 = vmatpush1.msra.mxu0 %v402
        %1262 = vmatprep.subr.mxu0 %v395
        %1263 = vmatpush1.msra.mxu0 %v394
        %1264 = vmatprep.subr.mxu0 %v387
        %1265 = vmatpush1.msra.mxu0 %v386
        %1266 = vmatprep.subr.mxu0 %v379
        %1267 = vmatpush1.msra.mxu0 %v378
        %1268 = vmatprep.subr.mxu0 %v371
        %1269 = vmatpush1.msra.mxu0 %v370
        %1270 = vmatprep.subr.mxu0 %v363
        %1271 = vmatpush1.msra.mxu0 %v362
        %1272 = vmatprep.subr.mxu0 %v355
        %1273 = vmatpush1.msra.mxu0 %v354
        %1274 = vmatprep.subr.mxu0 %v347
        %1275 = vmatpush1.msra.mxu0 %v346
        %1276 = vmatprep.subr.mxu0 %v339
        %1277 = vmatpush1.msra.mxu0 %v338
        %1278 = vmatprep.subr.mxu0 %v331
        %1279 = vmatpush1.msra.mxu0 %v330
        %1280 = vmatprep.subr.mxu0 %v323
        %1281 = vmatpush1.msra.mxu0 %v322
        %1282 = vmatprep.subr.mxu0 %v315
        %1283 = vmatpush1.msra.mxu0 %v314
        %1284 = vmatprep.subr.mxu0 %v563
        %1285 = vmatpush2.msra.mxu0 %v562
        %1286 = vmatprep.subr.mxu0 %v555
        %1287 = vmatpush2.msra.mxu0 %v554
        %1288 = vmatprep.subr.mxu0 %v547
        %1289 = vmatpush2.msra.mxu0 %v546
        %1290 = vmatprep.subr.mxu0 %v539
        %1291 = vmatpush2.msra.mxu0 %v538
        %1292 = vmatprep.subr.mxu0 %v531
        %1293 = vmatpush2.msra.mxu0 %v530
        %1294 = vmatprep.subr.mxu0 %v523
        %1295 = vmatpush2.msra.mxu0 %v522
        %1296 = vmatprep.subr.mxu0 %v515
        %1297 = vmatpush2.msra.mxu0 %v514
        %1298 = vmatprep.subr.mxu0 %v507
        %1299 = vmatpush2.msra.mxu0 %v506
        %1300 = vmatprep.subr.mxu0 %v499
        %1301 = vmatpush2.msra.mxu0 %v498
        %1302 = vmatprep.subr.mxu0 %v491
        %1303 = vmatpush2.msra.mxu0 %v490
        %1304 = vmatprep.subr.mxu0 %v483
        %1305 = vmatpush2.msra.mxu0 %v482
        %1306 = vmatprep.subr.mxu0 %v475
        %1307 = vmatpush2.msra.mxu0 %v474
        %1308 = vmatprep.subr.mxu0 %v467
        %1309 = vmatpush2.msra.mxu0 %v466
        %1310 = vmatprep.subr.mxu0 %v459
        %1311 = vmatpush2.msra.mxu0 %v458
        %1312 = vmatprep.subr.mxu0 %v451
        %1313 = vmatpush2.msra.mxu0 %v450
        %1314 = vmatprep.subr.mxu0 %v443
        %1315 = vmatpush2.msra.mxu0 %v442
        %1316 = vmatprep.mubr.f32.mxu0 %v287
        %1317 = vmatmul.mubr.f32.gmra.mxu0 %v286
        %v1318 = vpop.f32.mrf.mxu0
        %v1319 = vadd.f32 %v1215, %v1318
        %v1320 = vpop.f32.mrf.mxu0
        %v1321 = vadd.f32 %v1219, %v1320
        %1322 = vmatprep.mubr.f32.mxu0 %v294
        %1323 = vmatmul.mubr.f32.gmra.mxu0 %v293
        %v1324 = vpop.f32.mrf.mxu0
        %v1325 = vadd.f32 %v1215, %v1324
        %v1326 = vpop.f32.mrf.mxu0
        %v1327 = vadd.f32 %v1219, %v1326
        %1328 = vmatprep.mubr.f32.mxu0 %v301
        %1329 = vmatmul.mubr.f32.gmra.mxu0 %v300
        %v1330 = vpop.f32.mrf.mxu0
        %v1331 = vadd.f32 %v1215, %v1330
        %v1332 = vpop.f32.mrf.mxu0
        %v1333 = vadd.f32 %v1219, %v1332
        %1334 = vmatprep.mubr.f32.mxu0 %v308
        %1335 = vmatmul.mubr.f32.gmra.mxu0 %v307
        %v1336 = vpop.f32.mrf.mxu0
        %v1337 = vadd.f32 %v1215, %v1336
        %v1338 = vpop.f32.mrf.mxu0
        %v1339 = vadd.f32 %v1219, %v1338
        %1340 = vdwg.mxu0
        %1341 = vmatprep.subr.mxu0 %v691
        %1342 = vmatpush1.msra.mxu0 %v690
        %1343 = vmatprep.subr.mxu0 %v683
        %1344 = vmatpush1.msra.mxu0 %v682
        %1345 = vmatprep.subr.mxu0 %v675
        %1346 = vmatpush1.msra.mxu0 %v674
        %1347 = vmatprep.subr.mxu0 %v667
        %1348 = vmatpush1.msra.mxu0 %v666
        %1349 = vmatprep.subr.mxu0 %v659
        %1350 = vmatpush1.msra.mxu0 %v658
        %1351 = vmatprep.subr.mxu0 %v651
        %1352 = vmatpush1.msra.mxu0 %v650
        %1353 = vmatprep.subr.mxu0 %v643
        %1354 = vmatpush1.msra.mxu0 %v642
        %1355 = vmatprep.subr.mxu0 %v635
        %1356 = vmatpush1.msra.mxu0 %v634
        %1357 = vmatprep.subr.mxu0 %v627
        %1358 = vmatpush1.msra.mxu0 %v626
        %1359 = vmatprep.subr.mxu0 %v619
        %1360 = vmatpush1.msra.mxu0 %v618
        %1361 = vmatprep.subr.mxu0 %v611
        %1362 = vmatpush1.msra.mxu0 %v610
        %1363 = vmatprep.subr.mxu0 %v603
        %1364 = vmatpush1.msra.mxu0 %v602
        %1365 = vmatprep.subr.mxu0 %v595
        %1366 = vmatpush1.msra.mxu0 %v594
        %1367 = vmatprep.subr.mxu0 %v587
        %1368 = vmatpush1.msra.mxu0 %v586
        %1369 = vmatprep.subr.mxu0 %v579
        %1370 = vmatpush1.msra.mxu0 %v578
        %1371 = vmatprep.subr.mxu0 %v571
        %1372 = vmatpush1.msra.mxu0 %v570
        %1373 = vmatprep.subr.mxu0 %v819
        %1374 = vmatpush2.msra.mxu0 %v818
        %1375 = vmatprep.subr.mxu0 %v811
        %1376 = vmatpush2.msra.mxu0 %v810
        %1377 = vmatprep.subr.mxu0 %v803
        %1378 = vmatpush2.msra.mxu0 %v802
        %1379 = vmatprep.subr.mxu0 %v795
        %1380 = vmatpush2.msra.mxu0 %v794
        %1381 = vmatprep.subr.mxu0 %v787
        %1382 = vmatpush2.msra.mxu0 %v786
        %1383 = vmatprep.subr.mxu0 %v779
        %1384 = vmatpush2.msra.mxu0 %v778
        %1385 = vmatprep.subr.mxu0 %v771
        %1386 = vmatpush2.msra.mxu0 %v770
        %1387 = vmatprep.subr.mxu0 %v763
        %1388 = vmatpush2.msra.mxu0 %v762
        %1389 = vmatprep.subr.mxu0 %v755
        %1390 = vmatpush2.msra.mxu0 %v754
        %1391 = vmatprep.subr.mxu0 %v747
        %1392 = vmatpush2.msra.mxu0 %v746
        %1393 = vmatprep.subr.mxu0 %v739
        %1394 = vmatpush2.msra.mxu0 %v738
        %1395 = vmatprep.subr.mxu0 %v731
        %1396 = vmatpush2.msra.mxu0 %v730
        %1397 = vmatprep.subr.mxu0 %v723
        %1398 = vmatpush2.msra.mxu0 %v722
        %1399 = vmatprep.subr.mxu0 %v715
        %1400 = vmatpush2.msra.mxu0 %v714
        %1401 = vmatprep.subr.mxu0 %v707
        %1402 = vmatpush2.msra.mxu0 %v706
        %1403 = vmatprep.subr.mxu0 %v699
        %1404 = vmatpush2.msra.mxu0 %v698
        %1405 = vmatprep.mubr.f32.mxu0 %v289
        %1406 = vmatmul.mubr.f32.gmra.mxu0 %v288
        %v1407 = vpop.f32.mrf.mxu0
        %v1408 = vadd.f32 %v1319, %v1407
        %v1409 = vpop.f32.mrf.mxu0
        %v1410 = vadd.f32 %v1321, %v1409
        %1411 = vmatprep.mubr.f32.mxu0 %v296
        %1412 = vmatmul.mubr.f32.gmra.mxu0 %v295
        %v1413 = vpop.f32.mrf.mxu0
        %v1414 = vadd.f32 %v1325, %v1413
        %v1415 = vpop.f32.mrf.mxu0
        %v1416 = vadd.f32 %v1327, %v1415
        %1417 = vmatprep.mubr.f32.mxu0 %v303
        %1418 = vmatmul.mubr.f32.gmra.mxu0 %v302
        %v1419 = vpop.f32.mrf.mxu0
        %v1420 = vadd.f32 %v1331, %v1419
        %v1421 = vpop.f32.mrf.mxu0
        %v1422 = vadd.f32 %v1333, %v1421
        %1423 = vmatprep.mubr.f32.mxu0 %v310
        %1424 = vmatmul.mubr.f32.gmra.mxu0 %v309
        %v1425 = vpop.f32.mrf.mxu0
        %v1426 = vadd.f32 %v1337, %v1425
        %v1427 = vpop.f32.mrf.mxu0
        %v1428 = vadd.f32 %v1339, %v1427
        %1429 = vdwg.mxu0
        %1430 = vmatprep.subr.mxu0 %v947
        %1431 = vmatpush1.msra.mxu0 %v946
        %1432 = vmatprep.subr.mxu0 %v939
        %1433 = vmatpush1.msra.mxu0 %v938
        %1434 = vmatprep.subr.mxu0 %v931
        %1435 = vmatpush1.msra.mxu0 %v930
        %1436 = vmatprep.subr.mxu0 %v923
        %1437 = vmatpush1.msra.mxu0 %v922
        %1438 = vmatprep.subr.mxu0 %v915
        %1439 = vmatpush1.msra.mxu0 %v914
        %1440 = vmatprep.subr.mxu0 %v907
        %1441 = vmatpush1.msra.mxu0 %v906
        %1442 = vmatprep.subr.mxu0 %v899
        %1443 = vmatpush1.msra.mxu0 %v898
        %1444 = vmatprep.subr.mxu0 %v891
        %1445 = vmatpush1.msra.mxu0 %v890
        %1446 = vmatprep.subr.mxu0 %v883
        %1447 = vmatpush1.msra.mxu0 %v882
        %1448 = vmatprep.subr.mxu0 %v875
        %1449 = vmatpush1.msra.mxu0 %v874
        %1450 = vmatprep.subr.mxu0 %v867
        %1451 = vmatpush1.msra.mxu0 %v866
        %1452 = vmatprep.subr.mxu0 %v859
        %1453 = vmatpush1.msra.mxu0 %v858
        %1454 = vmatprep.subr.mxu0 %v851
        %1455 = vmatpush1.msra.mxu0 %v850
        %1456 = vmatprep.subr.mxu0 %v843
        %1457 = vmatpush1.msra.mxu0 %v842
        %1458 = vmatprep.subr.mxu0 %v835
        %1459 = vmatpush1.msra.mxu0 %v834
        %1460 = vmatprep.subr.mxu0 %v827
        %1461 = vmatpush1.msra.mxu0 %v826
        %1462 = vmatprep.subr.mxu0 %v1075
        %1463 = vmatpush2.msra.mxu0 %v1074
        %1464 = vmatprep.subr.mxu0 %v1067
        %1465 = vmatpush2.msra.mxu0 %v1066
        %1466 = vmatprep.subr.mxu0 %v1059
        %1467 = vmatpush2.msra.mxu0 %v1058
        %1468 = vmatprep.subr.mxu0 %v1051
        %1469 = vmatpush2.msra.mxu0 %v1050
        %1470 = vmatprep.subr.mxu0 %v1043
        %1471 = vmatpush2.msra.mxu0 %v1042
        %1472 = vmatprep.subr.mxu0 %v1035
        %1473 = vmatpush2.msra.mxu0 %v1034
        %1474 = vmatprep.subr.mxu0 %v1027
        %1475 = vmatpush2.msra.mxu0 %v1026
        %1476 = vmatprep.subr.mxu0 %v1019
        %1477 = vmatpush2.msra.mxu0 %v1018
        %1478 = vmatprep.subr.mxu0 %v1011
        %1479 = vmatpush2.msra.mxu0 %v1010
        %1480 = vmatprep.subr.mxu0 %v1003
        %1481 = vmatpush2.msra.mxu0 %v1002
        %1482 = vmatprep.subr.mxu0 %v995
        %1483 = vmatpush2.msra.mxu0 %v994
        %1484 = vmatprep.subr.mxu0 %v987
        %1485 = vmatpush2.msra.mxu0 %v986
        %1486 = vmatprep.subr.mxu0 %v979
        %1487 = vmatpush2.msra.mxu0 %v978
        %1488 = vmatprep.subr.mxu0 %v971
        %1489 = vmatpush2.msra.mxu0 %v970
        %1490 = vmatprep.subr.mxu0 %v963
        %1491 = vmatpush2.msra.mxu0 %v962
        %1492 = vmatprep.subr.mxu0 %v955
        %1493 = vmatpush2.msra.mxu0 %v954
        %1494 = vmatprep.mubr.f32.mxu0 %v291
        %1495 = vmatmul.mubr.f32.gmra.mxu0 %v290
        %v1496 = vpop.f32.mrf.mxu0
        %v1497 = vadd.f32 %v1408, %v1496
        %v1498 = vpop.f32.mrf.mxu0
        %v1499 = vadd.f32 %v1410, %v1498
        %1500 = vmatprep.mubr.f32.mxu0 %v298
        %1501 = vmatmul.mubr.f32.gmra.mxu0 %v297
        %v1502 = vpop.f32.mrf.mxu0
        %v1503 = vadd.f32 %v1414, %v1502
        %v1504 = vpop.f32.mrf.mxu0
        %v1505 = vadd.f32 %v1416, %v1504
        %1506 = vmatprep.mubr.f32.mxu0 %v305
        %1507 = vmatmul.mubr.f32.gmra.mxu0 %v304
        %v1508 = vpop.f32.mrf.mxu0
        %v1509 = vadd.f32 %v1420, %v1508
        %v1510 = vpop.f32.mrf.mxu0
        %v1511 = vadd.f32 %v1422, %v1510
        %1512 = vmatprep.mubr.f32.mxu0 %v312
        %1513 = vmatmul.mubr.f32.gmra.mxu0 %v311
        %v1514 = vpop.f32.mrf.mxu0
        %v1515 = vadd.f32 %v1426, %v1514
        %v1516 = vpop.f32.mrf.mxu0
        %v1517 = vadd.f32 %v1428, %v1516
        %1518 = vdwg.mxu0
        %1519 = vmatprep.subr.mxu0 %v1203
        %1520 = vmatpush1.msra.mxu0 %v1202
        %1521 = vmatprep.subr.mxu0 %v1195
        %1522 = vmatpush1.msra.mxu0 %v1194
        %1523 = vmatprep.subr.mxu0 %v1187
        %1524 = vmatpush1.msra.mxu0 %v1186
        %1525 = vmatprep.subr.mxu0 %v1179
        %1526 = vmatpush1.msra.mxu0 %v1178
        %1527 = vmatprep.subr.mxu0 %v1171
        %1528 = vmatpush1.msra.mxu0 %v1170
        %1529 = vmatprep.subr.mxu0 %v1163
        %1530 = vmatpush1.msra.mxu0 %v1162
        %1531 = vmatprep.subr.mxu0 %v1155
        %1532 = vmatpush1.msra.mxu0 %v1154
        %1533 = vmatprep.subr.mxu0 %v1147
        %1534 = vmatpush1.msra.mxu0 %v1146
        %1535 = vmatprep.subr.mxu0 %v1139
        %1536 = vmatpush1.msra.mxu0 %v1138
        %1537 = vmatprep.subr.mxu0 %v1131
        %1538 = vmatpush1.msra.mxu0 %v1130
        %1539 = vmatprep.subr.mxu0 %v1123
        %1540 = vmatpush1.msra.mxu0 %v1122
        %1541 = vmatprep.subr.mxu0 %v1115
        %1542 = vmatpush1.msra.mxu0 %v1114
        %1543 = vmatprep.subr.mxu0 %v1107
        %1544 = vmatpush1.msra.mxu0 %v1106
        %1545 = vmatprep.subr.mxu0 %v1099
        %1546 = vmatpush1.msra.mxu0 %v1098
        %1547 = vmatprep.subr.mxu0 %v1091
        %1548 = vmatpush1.msra.mxu0 %v1090
        %1549 = vmatprep.subr.mxu0 %v1083
        %1550 = vmatpush1.msra.mxu0 %v1082
        %1551 = vmatprep.subr.mxu0 0.0
        %1552 = vmatpush2.msra.mxu0 0.0
        %1553 = vmatprep.subr.mxu0 0.0
        %1554 = vmatpush2.msra.mxu0 0.0
        %1555 = vmatprep.subr.mxu0 0.0
        %1556 = vmatpush2.msra.mxu0 0.0
        %1557 = vmatprep.subr.mxu0 0.0
        %1558 = vmatpush2.msra.mxu0 0.0
        %1559 = vmatprep.subr.mxu0 0.0
        %1560 = vmatpush2.msra.mxu0 0.0
        %1561 = vmatprep.subr.mxu0 0.0
        %1562 = vmatpush2.msra.mxu0 0.0
        %1563 = vmatprep.subr.mxu0 0.0
        %1564 = vmatpush2.msra.mxu0 0.0
        %1565 = vmatprep.subr.mxu0 0.0
        %1566 = vmatpush2.msra.mxu0 0.0
        %1567 = vmatprep.subr.mxu0 0.0
        %1568 = vmatpush2.msra.mxu0 0.0
        %1569 = vmatprep.subr.mxu0 0.0
        %1570 = vmatpush2.msra.mxu0 0.0
        %1571 = vmatprep.subr.mxu0 0.0
        %1572 = vmatpush2.msra.mxu0 0.0
        %1573 = vmatprep.subr.mxu0 0.0
        %1574 = vmatpush2.msra.mxu0 0.0
        %1575 = vmatprep.subr.mxu0 0.0
        %1576 = vmatpush2.msra.mxu0 0.0
        %1577 = vmatprep.subr.mxu0 0.0
        %1578 = vmatpush2.msra.mxu0 0.0
        %1579 = vmatprep.subr.mxu0 0.0
        %1580 = vmatpush2.msra.mxu0 0.0
        %1581 = vmatprep.subr.mxu0 0.0
        %1582 = vmatpush2.msra.mxu0 0.0
        %1583 = vmatprep.mubr.f32.mxu0 0.0
        %1584 = vmatmul.mubr.f32.gmra.mxu0 %v292
        %v1585 = vpop.f32.mrf.mxu0
        %v1586 = vadd.f32 %v1497, %v1585
        %v1587 = vpop.f32.mrf.mxu0
        %v1588 = vadd.f32 %v1499, %v1587
        %1589 = vmatprep.mubr.f32.mxu0 0.0
        %1590 = vmatmul.mubr.f32.gmra.mxu0 %v299
        %v1591 = vpop.f32.mrf.mxu0
        %v1592 = vadd.f32 %v1503, %v1591
        %v1593 = vpop.f32.mrf.mxu0
        %v1594 = vadd.f32 %v1505, %v1593
        %1595 = vmatprep.mubr.f32.mxu0 0.0
        %1596 = vmatmul.mubr.f32.gmra.mxu0 %v306
        %v1597 = vpop.f32.mrf.mxu0
        %v1598 = vadd.f32 %v1509, %v1597
        %v1599 = vpop.f32.mrf.mxu0
        %v1600 = vadd.f32 %v1511, %v1599
        %1601 = vmatprep.mubr.f32.mxu0 0.0
        %1602 = vmatmul.mubr.f32.gmra.mxu0 %v313
        %v1603 = vpop.f32.mrf.mxu0
        %v1604 = vadd.f32 %v1515, %v1603
        %v1605 = vpop.f32.mrf.mxu0
        %v1606 = vadd.f32 %v1517, %v1605
        %1607 = vdwg.mxu0
        %1608 = vmatprep.subr.mxu0 %v437
        %1609 = vmatpush1.msra.mxu0 %v436
        %1610 = vmatprep.subr.mxu0 %v429
        %1611 = vmatpush1.msra.mxu0 %v428
        %1612 = vmatprep.subr.mxu0 %v421
        %1613 = vmatpush1.msra.mxu0 %v420
        %1614 = vmatprep.subr.mxu0 %v413
        %1615 = vmatpush1.msra.mxu0 %v412
        %1616 = vmatprep.subr.mxu0 %v405
        %1617 = vmatpush1.msra.mxu0 %v404
        %1618 = vmatprep.subr.mxu0 %v397
        %1619 = vmatpush1.msra.mxu0 %v396
        %1620 = vmatprep.subr.mxu0 %v389
        %1621 = vmatpush1.msra.mxu0 %v388
        %1622 = vmatprep.subr.mxu0 %v381
        %1623 = vmatpush1.msra.mxu0 %v380
        %1624 = vmatprep.subr.mxu0 %v373
        %1625 = vmatpush1.msra.mxu0 %v372
        %1626 = vmatprep.subr.mxu0 %v365
        %1627 = vmatpush1.msra.mxu0 %v364
        %1628 = vmatprep.subr.mxu0 %v357
        %1629 = vmatpush1.msra.mxu0 %v356
        %1630 = vmatprep.subr.mxu0 %v349
        %1631 = vmatpush1.msra.mxu0 %v348
        %1632 = vmatprep.subr.mxu0 %v341
        %1633 = vmatpush1.msra.mxu0 %v340
        %1634 = vmatprep.subr.mxu0 %v333
        %1635 = vmatpush1.msra.mxu0 %v332
        %1636 = vmatprep.subr.mxu0 %v325
        %1637 = vmatpush1.msra.mxu0 %v324
        %1638 = vmatprep.subr.mxu0 %v317
        %1639 = vmatpush1.msra.mxu0 %v316
        %1640 = vmatprep.subr.mxu0 %v565
        %1641 = vmatpush2.msra.mxu0 %v564
        %1642 = vmatprep.subr.mxu0 %v557
        %1643 = vmatpush2.msra.mxu0 %v556
        %1644 = vmatprep.subr.mxu0 %v549
        %1645 = vmatpush2.msra.mxu0 %v548
        %1646 = vmatprep.subr.mxu0 %v541
        %1647 = vmatpush2.msra.mxu0 %v540
        %1648 = vmatprep.subr.mxu0 %v533
        %1649 = vmatpush2.msra.mxu0 %v532
        %1650 = vmatprep.subr.mxu0 %v525
        %1651 = vmatpush2.msra.mxu0 %v524
        %1652 = vmatprep.subr.mxu0 %v517
        %1653 = vmatpush2.msra.mxu0 %v516
        %1654 = vmatprep.subr.mxu0 %v509
        %1655 = vmatpush2.msra.mxu0 %v508
        %1656 = vmatprep.subr.mxu0 %v501
        %1657 = vmatpush2.msra.mxu0 %v500
        %1658 = vmatprep.subr.mxu0 %v493
        %1659 = vmatpush2.msra.mxu0 %v492
        %1660 = vmatprep.subr.mxu0 %v485
        %1661 = vmatpush2.msra.mxu0 %v484
        %1662 = vmatprep.subr.mxu0 %v477
        %1663 = vmatpush2.msra.mxu0 %v476
        %1664 = vmatprep.subr.mxu0 %v469
        %1665 = vmatpush2.msra.mxu0 %v468
        %1666 = vmatprep.subr.mxu0 %v461
        %1667 = vmatpush2.msra.mxu0 %v460
        %1668 = vmatprep.subr.mxu0 %v453
        %1669 = vmatpush2.msra.mxu0 %v452
        %1670 = vmatprep.subr.mxu0 %v445
        %1671 = vmatpush2.msra.mxu0 %v444
        %1672 = vmatprep.mubr.f32.mxu0 %v287
        %1673 = vmatmul.mubr.f32.gmra.mxu0 %v286
        %v1674 = vpop.f32.mrf.mxu0
        %v1675 = vadd.f32 %v1223, %v1674
        %v1676 = vpop.f32.mrf.mxu0
        %v1677 = vadd.f32 %v1227, %v1676
        %1678 = vmatprep.mubr.f32.mxu0 %v294
        %1679 = vmatmul.mubr.f32.gmra.mxu0 %v293
        %v1680 = vpop.f32.mrf.mxu0
        %v1681 = vadd.f32 %v1223, %v1680
        %v1682 = vpop.f32.mrf.mxu0
        %v1683 = vadd.f32 %v1227, %v1682
        %1684 = vmatprep.mubr.f32.mxu0 %v301
        %1685 = vmatmul.mubr.f32.gmra.mxu0 %v300
        %v1686 = vpop.f32.mrf.mxu0
        %v1687 = vadd.f32 %v1223, %v1686
        %v1688 = vpop.f32.mrf.mxu0
        %v1689 = vadd.f32 %v1227, %v1688
        %1690 = vmatprep.mubr.f32.mxu0 %v308
        %1691 = vmatmul.mubr.f32.gmra.mxu0 %v307
        %v1692 = vpop.f32.mrf.mxu0
        %v1693 = vadd.f32 %v1223, %v1692
        %v1694 = vpop.f32.mrf.mxu0
        %v1695 = vadd.f32 %v1227, %v1694
        %1696 = vdwg.mxu0
        %1697 = vmatprep.subr.mxu0 %v693
        %1698 = vmatpush1.msra.mxu0 %v692
        %1699 = vmatprep.subr.mxu0 %v685
        %1700 = vmatpush1.msra.mxu0 %v684
        %1701 = vmatprep.subr.mxu0 %v677
        %1702 = vmatpush1.msra.mxu0 %v676
        %1703 = vmatprep.subr.mxu0 %v669
        %1704 = vmatpush1.msra.mxu0 %v668
        %1705 = vmatprep.subr.mxu0 %v661
        %1706 = vmatpush1.msra.mxu0 %v660
        %1707 = vmatprep.subr.mxu0 %v653
        %1708 = vmatpush1.msra.mxu0 %v652
        %1709 = vmatprep.subr.mxu0 %v645
        %1710 = vmatpush1.msra.mxu0 %v644
        %1711 = vmatprep.subr.mxu0 %v637
        %1712 = vmatpush1.msra.mxu0 %v636
        %1713 = vmatprep.subr.mxu0 %v629
        %1714 = vmatpush1.msra.mxu0 %v628
        %1715 = vmatprep.subr.mxu0 %v621
        %1716 = vmatpush1.msra.mxu0 %v620
        %1717 = vmatprep.subr.mxu0 %v613
        %1718 = vmatpush1.msra.mxu0 %v612
        %1719 = vmatprep.subr.mxu0 %v605
        %1720 = vmatpush1.msra.mxu0 %v604
        %1721 = vmatprep.subr.mxu0 %v597
        %1722 = vmatpush1.msra.mxu0 %v596
        %1723 = vmatprep.subr.mxu0 %v589
        %1724 = vmatpush1.msra.mxu0 %v588
        %1725 = vmatprep.subr.mxu0 %v581
        %1726 = vmatpush1.msra.mxu0 %v580
        %1727 = vmatprep.subr.mxu0 %v573
        %1728 = vmatpush1.msra.mxu0 %v572
        %1729 = vmatprep.subr.mxu0 %v821
        %1730 = vmatpush2.msra.mxu0 %v820
        %1731 = vmatprep.subr.mxu0 %v813
        %1732 = vmatpush2.msra.mxu0 %v812
        %1733 = vmatprep.subr.mxu0 %v805
        %1734 = vmatpush2.msra.mxu0 %v804
        %1735 = vmatprep.subr.mxu0 %v797
        %1736 = vmatpush2.msra.mxu0 %v796
        %1737 = vmatprep.subr.mxu0 %v789
        %1738 = vmatpush2.msra.mxu0 %v788
        %1739 = vmatprep.subr.mxu0 %v781
        %1740 = vmatpush2.msra.mxu0 %v780
        %1741 = vmatprep.subr.mxu0 %v773
        %1742 = vmatpush2.msra.mxu0 %v772
        %1743 = vmatprep.subr.mxu0 %v765
        %1744 = vmatpush2.msra.mxu0 %v764
        %1745 = vmatprep.subr.mxu0 %v757
        %1746 = vmatpush2.msra.mxu0 %v756
        %1747 = vmatprep.subr.mxu0 %v749
        %1748 = vmatpush2.msra.mxu0 %v748
        %1749 = vmatprep.subr.mxu0 %v741
        %1750 = vmatpush2.msra.mxu0 %v740
        %1751 = vmatprep.subr.mxu0 %v733
        %1752 = vmatpush2.msra.mxu0 %v732
        %1753 = vmatprep.subr.mxu0 %v725
        %1754 = vmatpush2.msra.mxu0 %v724
        %1755 = vmatprep.subr.mxu0 %v717
        %1756 = vmatpush2.msra.mxu0 %v716
        %1757 = vmatprep.subr.mxu0 %v709
        %1758 = vmatpush2.msra.mxu0 %v708
        %1759 = vmatprep.subr.mxu0 %v701
        %1760 = vmatpush2.msra.mxu0 %v700
        %1761 = vmatprep.mubr.f32.mxu0 %v289
        %1762 = vmatmul.mubr.f32.gmra.mxu0 %v288
        %v1763 = vpop.f32.mrf.mxu0
        %v1764 = vadd.f32 %v1675, %v1763
        %v1765 = vpop.f32.mrf.mxu0
        %v1766 = vadd.f32 %v1677, %v1765
        %1767 = vmatprep.mubr.f32.mxu0 %v296
        %1768 = vmatmul.mubr.f32.gmra.mxu0 %v295
        %v1769 = vpop.f32.mrf.mxu0
        %v1770 = vadd.f32 %v1681, %v1769
        %v1771 = vpop.f32.mrf.mxu0
        %v1772 = vadd.f32 %v1683, %v1771
        %1773 = vmatprep.mubr.f32.mxu0 %v303
        %1774 = vmatmul.mubr.f32.gmra.mxu0 %v302
        %v1775 = vpop.f32.mrf.mxu0
        %v1776 = vadd.f32 %v1687, %v1775
        %v1777 = vpop.f32.mrf.mxu0
        %v1778 = vadd.f32 %v1689, %v1777
        %1779 = vmatprep.mubr.f32.mxu0 %v310
        %1780 = vmatmul.mubr.f32.gmra.mxu0 %v309
        %v1781 = vpop.f32.mrf.mxu0
        %v1782 = vadd.f32 %v1693, %v1781
        %v1783 = vpop.f32.mrf.mxu0
        %v1784 = vadd.f32 %v1695, %v1783
        %1785 = vdwg.mxu0
        %1786 = vmatprep.subr.mxu0 %v949
        %1787 = vmatpush1.msra.mxu0 %v948
        %1788 = vmatprep.subr.mxu0 %v941
        %1789 = vmatpush1.msra.mxu0 %v940
        %1790 = vmatprep.subr.mxu0 %v933
        %1791 = vmatpush1.msra.mxu0 %v932
        %1792 = vmatprep.subr.mxu0 %v925
        %1793 = vmatpush1.msra.mxu0 %v924
        %1794 = vmatprep.subr.mxu0 %v917
        %1795 = vmatpush1.msra.mxu0 %v916
        %1796 = vmatprep.subr.mxu0 %v909
        %1797 = vmatpush1.msra.mxu0 %v908
        %1798 = vmatprep.subr.mxu0 %v901
        %1799 = vmatpush1.msra.mxu0 %v900
        %1800 = vmatprep.subr.mxu0 %v893
        %1801 = vmatpush1.msra.mxu0 %v892
        %1802 = vmatprep.subr.mxu0 %v885
        %1803 = vmatpush1.msra.mxu0 %v884
        %1804 = vmatprep.subr.mxu0 %v877
        %1805 = vmatpush1.msra.mxu0 %v876
        %1806 = vmatprep.subr.mxu0 %v869
        %1807 = vmatpush1.msra.mxu0 %v868
        %1808 = vmatprep.subr.mxu0 %v861
        %1809 = vmatpush1.msra.mxu0 %v860
        %1810 = vmatprep.subr.mxu0 %v853
        %1811 = vmatpush1.msra.mxu0 %v852
        %1812 = vmatprep.subr.mxu0 %v845
        %1813 = vmatpush1.msra.mxu0 %v844
        %1814 = vmatprep.subr.mxu0 %v837
        %1815 = vmatpush1.msra.mxu0 %v836
        %1816 = vmatprep.subr.mxu0 %v829
        %1817 = vmatpush1.msra.mxu0 %v828
        %1818 = vmatprep.subr.mxu0 %v1077
        %1819 = vmatpush2.msra.mxu0 %v1076
        %1820 = vmatprep.subr.mxu0 %v1069
        %1821 = vmatpush2.msra.mxu0 %v1068
        %1822 = vmatprep.subr.mxu0 %v1061
        %1823 = vmatpush2.msra.mxu0 %v1060
        %1824 = vmatprep.subr.mxu0 %v1053
        %1825 = vmatpush2.msra.mxu0 %v1052
        %1826 = vmatprep.subr.mxu0 %v1045
        %1827 = vmatpush2.msra.mxu0 %v1044
        %1828 = vmatprep.subr.mxu0 %v1037
        %1829 = vmatpush2.msra.mxu0 %v1036
        %1830 = vmatprep.subr.mxu0 %v1029
        %1831 = vmatpush2.msra.mxu0 %v1028
        %1832 = vmatprep.subr.mxu0 %v1021
        %1833 = vmatpush2.msra.mxu0 %v1020
        %1834 = vmatprep.subr.mxu0 %v1013
        %1835 = vmatpush2.msra.mxu0 %v1012
        %1836 = vmatprep.subr.mxu0 %v1005
        %1837 = vmatpush2.msra.mxu0 %v1004
        %1838 = vmatprep.subr.mxu0 %v997
        %1839 = vmatpush2.msra.mxu0 %v996
        %1840 = vmatprep.subr.mxu0 %v989
        %1841 = vmatpush2.msra.mxu0 %v988
        %1842 = vmatprep.subr.mxu0 %v981
        %1843 = vmatpush2.msra.mxu0 %v980
        %1844 = vmatprep.subr.mxu0 %v973
        %1845 = vmatpush2.msra.mxu0 %v972
        %1846 = vmatprep.subr.mxu0 %v965
        %1847 = vmatpush2.msra.mxu0 %v964
        %1848 = vmatprep.subr.mxu0 %v957
        %1849 = vmatpush2.msra.mxu0 %v956
        %1850 = vmatprep.mubr.f32.mxu0 %v291
        %1851 = vmatmul.mubr.f32.gmra.mxu0 %v290
        %v1852 = vpop.f32.mrf.mxu0
        %v1853 = vadd.f32 %v1764, %v1852
        %v1854 = vpop.f32.mrf.mxu0
        %v1855 = vadd.f32 %v1766, %v1854
        %1856 = vmatprep.mubr.f32.mxu0 %v298
        %1857 = vmatmul.mubr.f32.gmra.mxu0 %v297
        %v1858 = vpop.f32.mrf.mxu0
        %v1859 = vadd.f32 %v1770, %v1858
        %v1860 = vpop.f32.mrf.mxu0
        %v1861 = vadd.f32 %v1772, %v1860
        %1862 = vmatprep.mubr.f32.mxu0 %v305
        %1863 = vmatmul.mubr.f32.gmra.mxu0 %v304
        %v1864 = vpop.f32.mrf.mxu0
        %v1865 = vadd.f32 %v1776, %v1864
        %v1866 = vpop.f32.mrf.mxu0
        %v1867 = vadd.f32 %v1778, %v1866
        %1868 = vmatprep.mubr.f32.mxu0 %v312
        %1869 = vmatmul.mubr.f32.gmra.mxu0 %v311
        %v1870 = vpop.f32.mrf.mxu0
        %v1871 = vadd.f32 %v1782, %v1870
        %v1872 = vpop.f32.mrf.mxu0
        %v1873 = vadd.f32 %v1784, %v1872
        %1874 = vdwg.mxu0
        %1875 = vmatprep.subr.mxu0 %v1205
        %1876 = vmatpush1.msra.mxu0 %v1204
        %1877 = vmatprep.subr.mxu0 %v1197
        %1878 = vmatpush1.msra.mxu0 %v1196
        %1879 = vmatprep.subr.mxu0 %v1189
        %1880 = vmatpush1.msra.mxu0 %v1188
        %1881 = vmatprep.subr.mxu0 %v1181
        %1882 = vmatpush1.msra.mxu0 %v1180
        %1883 = vmatprep.subr.mxu0 %v1173
        %1884 = vmatpush1.msra.mxu0 %v1172
        %1885 = vmatprep.subr.mxu0 %v1165
        %1886 = vmatpush1.msra.mxu0 %v1164
        %1887 = vmatprep.subr.mxu0 %v1157
        %1888 = vmatpush1.msra.mxu0 %v1156
        %1889 = vmatprep.subr.mxu0 %v1149
        %1890 = vmatpush1.msra.mxu0 %v1148
        %1891 = vmatprep.subr.mxu0 %v1141
        %1892 = vmatpush1.msra.mxu0 %v1140
        %1893 = vmatprep.subr.mxu0 %v1133
        %1894 = vmatpush1.msra.mxu0 %v1132
        %1895 = vmatprep.subr.mxu0 %v1125
        %1896 = vmatpush1.msra.mxu0 %v1124
        %1897 = vmatprep.subr.mxu0 %v1117
        %1898 = vmatpush1.msra.mxu0 %v1116
        %1899 = vmatprep.subr.mxu0 %v1109
        %1900 = vmatpush1.msra.mxu0 %v1108
        %1901 = vmatprep.subr.mxu0 %v1101
        %1902 = vmatpush1.msra.mxu0 %v1100
        %1903 = vmatprep.subr.mxu0 %v1093
        %1904 = vmatpush1.msra.mxu0 %v1092
        %1905 = vmatprep.subr.mxu0 %v1085
        %1906 = vmatpush1.msra.mxu0 %v1084
        %1907 = vmatprep.subr.mxu0 0.0
        %1908 = vmatpush2.msra.mxu0 0.0
        %1909 = vmatprep.subr.mxu0 0.0
        %1910 = vmatpush2.msra.mxu0 0.0
        %1911 = vmatprep.subr.mxu0 0.0
        %1912 = vmatpush2.msra.mxu0 0.0
        %1913 = vmatprep.subr.mxu0 0.0
        %1914 = vmatpush2.msra.mxu0 0.0
        %1915 = vmatprep.subr.mxu0 0.0
        %1916 = vmatpush2.msra.mxu0 0.0
        %1917 = vmatprep.subr.mxu0 0.0
        %1918 = vmatpush2.msra.mxu0 0.0
        %1919 = vmatprep.subr.mxu0 0.0
        %1920 = vmatpush2.msra.mxu0 0.0
        %1921 = vmatprep.subr.mxu0 0.0
        %1922 = vmatpush2.msra.mxu0 0.0
        %1923 = vmatprep.subr.mxu0 0.0
        %1924 = vmatpush2.msra.mxu0 0.0
        %1925 = vmatprep.subr.mxu0 0.0
        %1926 = vmatpush2.msra.mxu0 0.0
        %1927 = vmatprep.subr.mxu0 0.0
        %1928 = vmatpush2.msra.mxu0 0.0
        %1929 = vmatprep.subr.mxu0 0.0
        %1930 = vmatpush2.msra.mxu0 0.0
        %1931 = vmatprep.subr.mxu0 0.0
        %1932 = vmatpush2.msra.mxu0 0.0
        %1933 = vmatprep.subr.mxu0 0.0
        %1934 = vmatpush2.msra.mxu0 0.0
        %1935 = vmatprep.subr.mxu0 0.0
        %1936 = vmatpush2.msra.mxu0 0.0
        %1937 = vmatprep.subr.mxu0 0.0
        %1938 = vmatpush2.msra.mxu0 0.0
        %1939 = vmatprep.mubr.f32.mxu0 0.0
        %1940 = vmatmul.mubr.f32.gmra.mxu0 %v292
        %v1941 = vpop.f32.mrf.mxu0
        %v1942 = vadd.f32 %v1853, %v1941
        %v1943 = vpop.f32.mrf.mxu0
        %v1944 = vadd.f32 %v1855, %v1943
        %1945 = vmatprep.mubr.f32.mxu0 0.0
        %1946 = vmatmul.mubr.f32.gmra.mxu0 %v299
        %v1947 = vpop.f32.mrf.mxu0
        %v1948 = vadd.f32 %v1859, %v1947
        %v1949 = vpop.f32.mrf.mxu0
        %v1950 = vadd.f32 %v1861, %v1949
        %1951 = vmatprep.mubr.f32.mxu0 0.0
        %1952 = vmatmul.mubr.f32.gmra.mxu0 %v306
        %v1953 = vpop.f32.mrf.mxu0
        %v1954 = vadd.f32 %v1865, %v1953
        %v1955 = vpop.f32.mrf.mxu0
        %v1956 = vadd.f32 %v1867, %v1955
        %1957 = vmatprep.mubr.f32.mxu0 0.0
        %1958 = vmatmul.mubr.f32.gmra.mxu0 %v313
        %v1959 = vpop.f32.mrf.mxu0
        %v1960 = vadd.f32 %v1871, %v1959
        %v1961 = vpop.f32.mrf.mxu0
        %v1962 = vadd.f32 %v1873, %v1961
        %1963 = vdwg.mxu0
        %1964 = vmatprep.subr.mxu0 %v439
        %1965 = vmatpush1.msra.mxu0 %v438
        %1966 = vmatprep.subr.mxu0 %v431
        %1967 = vmatpush1.msra.mxu0 %v430
        %1968 = vmatprep.subr.mxu0 %v423
        %1969 = vmatpush1.msra.mxu0 %v422
        %1970 = vmatprep.subr.mxu0 %v415
        %1971 = vmatpush1.msra.mxu0 %v414
        %1972 = vmatprep.subr.mxu0 %v407
        %1973 = vmatpush1.msra.mxu0 %v406
        %1974 = vmatprep.subr.mxu0 %v399
        %1975 = vmatpush1.msra.mxu0 %v398
        %1976 = vmatprep.subr.mxu0 %v391
        %1977 = vmatpush1.msra.mxu0 %v390
        %1978 = vmatprep.subr.mxu0 %v383
        %1979 = vmatpush1.msra.mxu0 %v382
        %1980 = vmatprep.subr.mxu0 %v375
        %1981 = vmatpush1.msra.mxu0 %v374
        %1982 = vmatprep.subr.mxu0 %v367
        %1983 = vmatpush1.msra.mxu0 %v366
        %1984 = vmatprep.subr.mxu0 %v359
        %1985 = vmatpush1.msra.mxu0 %v358
        %1986 = vmatprep.subr.mxu0 %v351
        %1987 = vmatpush1.msra.mxu0 %v350
        %1988 = vmatprep.subr.mxu0 %v343
        %1989 = vmatpush1.msra.mxu0 %v342
        %1990 = vmatprep.subr.mxu0 %v335
        %1991 = vmatpush1.msra.mxu0 %v334
        %1992 = vmatprep.subr.mxu0 %v327
        %1993 = vmatpush1.msra.mxu0 %v326
        %1994 = vmatprep.subr.mxu0 %v319
        %1995 = vmatpush1.msra.mxu0 %v318
        %1996 = vmatprep.subr.mxu0 %v567
        %1997 = vmatpush2.msra.mxu0 %v566
        %1998 = vmatprep.subr.mxu0 %v559
        %1999 = vmatpush2.msra.mxu0 %v558
        %2000 = vmatprep.subr.mxu0 %v551
        %2001 = vmatpush2.msra.mxu0 %v550
        %2002 = vmatprep.subr.mxu0 %v543
        %2003 = vmatpush2.msra.mxu0 %v542
        %2004 = vmatprep.subr.mxu0 %v535
        %2005 = vmatpush2.msra.mxu0 %v534
        %2006 = vmatprep.subr.mxu0 %v527
        %2007 = vmatpush2.msra.mxu0 %v526
        %2008 = vmatprep.subr.mxu0 %v519
        %2009 = vmatpush2.msra.mxu0 %v518
        %2010 = vmatprep.subr.mxu0 %v511
        %2011 = vmatpush2.msra.mxu0 %v510
        %2012 = vmatprep.subr.mxu0 %v503
        %2013 = vmatpush2.msra.mxu0 %v502
        %2014 = vmatprep.subr.mxu0 %v495
        %2015 = vmatpush2.msra.mxu0 %v494
        %2016 = vmatprep.subr.mxu0 %v487
        %2017 = vmatpush2.msra.mxu0 %v486
        %2018 = vmatprep.subr.mxu0 %v479
        %2019 = vmatpush2.msra.mxu0 %v478
        %2020 = vmatprep.subr.mxu0 %v471
        %2021 = vmatpush2.msra.mxu0 %v470
        %2022 = vmatprep.subr.mxu0 %v463
        %2023 = vmatpush2.msra.mxu0 %v462
        %2024 = vmatprep.subr.mxu0 %v455
        %2025 = vmatpush2.msra.mxu0 %v454
        %2026 = vmatprep.subr.mxu0 %v447
        %2027 = vmatpush2.msra.mxu0 %v446
        %2028 = vmatprep.mubr.f32.mxu0 %v287
        %2029 = vmatmul.mubr.f32.gmra.mxu0 %v286
        %v2030 = vpop.f32.mrf.mxu0
        %v2031 = vadd.f32 %v1231, %v2030
        %v2032 = vpop.f32.mrf.mxu0
        %v2033 = vadd.f32 %v1235, %v2032
        %2034 = vmatprep.mubr.f32.mxu0 %v294
        %2035 = vmatmul.mubr.f32.gmra.mxu0 %v293
        %v2036 = vpop.f32.mrf.mxu0
        %v2037 = vadd.f32 %v1231, %v2036
        %v2038 = vpop.f32.mrf.mxu0
        %v2039 = vadd.f32 %v1235, %v2038
        %2040 = vmatprep.mubr.f32.mxu0 %v301
        %2041 = vmatmul.mubr.f32.gmra.mxu0 %v300
        %v2042 = vpop.f32.mrf.mxu0
        %v2043 = vadd.f32 %v1231, %v2042
        %v2044 = vpop.f32.mrf.mxu0
        %v2045 = vadd.f32 %v1235, %v2044
        %2046 = vmatprep.mubr.f32.mxu0 %v308
        %2047 = vmatmul.mubr.f32.gmra.mxu0 %v307
        %v2048 = vpop.f32.mrf.mxu0
        %v2049 = vadd.f32 %v1231, %v2048
        %v2050 = vpop.f32.mrf.mxu0
        %v2051 = vadd.f32 %v1235, %v2050
        %2052 = vdwg.mxu0
        %2053 = vmatprep.subr.mxu0 %v695
        %2054 = vmatpush1.msra.mxu0 %v694
        %2055 = vmatprep.subr.mxu0 %v687
        %2056 = vmatpush1.msra.mxu0 %v686
        %2057 = vmatprep.subr.mxu0 %v679
        %2058 = vmatpush1.msra.mxu0 %v678
        %2059 = vmatprep.subr.mxu0 %v671
        %2060 = vmatpush1.msra.mxu0 %v670
        %2061 = vmatprep.subr.mxu0 %v663
        %2062 = vmatpush1.msra.mxu0 %v662
        %2063 = vmatprep.subr.mxu0 %v655
        %2064 = vmatpush1.msra.mxu0 %v654
        %2065 = vmatprep.subr.mxu0 %v647
        %2066 = vmatpush1.msra.mxu0 %v646
        %2067 = vmatprep.subr.mxu0 %v639
        %2068 = vmatpush1.msra.mxu0 %v638
        %2069 = vmatprep.subr.mxu0 %v631
        %2070 = vmatpush1.msra.mxu0 %v630
        %2071 = vmatprep.subr.mxu0 %v623
        %2072 = vmatpush1.msra.mxu0 %v622
        %2073 = vmatprep.subr.mxu0 %v615
        %2074 = vmatpush1.msra.mxu0 %v614
        %2075 = vmatprep.subr.mxu0 %v607
        %2076 = vmatpush1.msra.mxu0 %v606
        %2077 = vmatprep.subr.mxu0 %v599
        %2078 = vmatpush1.msra.mxu0 %v598
        %2079 = vmatprep.subr.mxu0 %v591
        %2080 = vmatpush1.msra.mxu0 %v590
        %2081 = vmatprep.subr.mxu0 %v583
        %2082 = vmatpush1.msra.mxu0 %v582
        %2083 = vmatprep.subr.mxu0 %v575
        %2084 = vmatpush1.msra.mxu0 %v574
        %2085 = vmatprep.subr.mxu0 %v823
        %2086 = vmatpush2.msra.mxu0 %v822
        %2087 = vmatprep.subr.mxu0 %v815
        %2088 = vmatpush2.msra.mxu0 %v814
        %2089 = vmatprep.subr.mxu0 %v807
        %2090 = vmatpush2.msra.mxu0 %v806
        %2091 = vmatprep.subr.mxu0 %v799
        %2092 = vmatpush2.msra.mxu0 %v798
        %2093 = vmatprep.subr.mxu0 %v791
        %2094 = vmatpush2.msra.mxu0 %v790
        %2095 = vmatprep.subr.mxu0 %v783
        %2096 = vmatpush2.msra.mxu0 %v782
        %2097 = vmatprep.subr.mxu0 %v775
        %2098 = vmatpush2.msra.mxu0 %v774
        %2099 = vmatprep.subr.mxu0 %v767
        %2100 = vmatpush2.msra.mxu0 %v766
        %2101 = vmatprep.subr.mxu0 %v759
        %2102 = vmatpush2.msra.mxu0 %v758
        %2103 = vmatprep.subr.mxu0 %v751
        %2104 = vmatpush2.msra.mxu0 %v750
        %2105 = vmatprep.subr.mxu0 %v743
        %2106 = vmatpush2.msra.mxu0 %v742
        %2107 = vmatprep.subr.mxu0 %v735
        %2108 = vmatpush2.msra.mxu0 %v734
        %2109 = vmatprep.subr.mxu0 %v727
        %2110 = vmatpush2.msra.mxu0 %v726
        %2111 = vmatprep.subr.mxu0 %v719
        %2112 = vmatpush2.msra.mxu0 %v718
        %2113 = vmatprep.subr.mxu0 %v711
        %2114 = vmatpush2.msra.mxu0 %v710
        %2115 = vmatprep.subr.mxu0 %v703
        %2116 = vmatpush2.msra.mxu0 %v702
        %2117 = vmatprep.mubr.f32.mxu0 %v289
        %2118 = vmatmul.mubr.f32.gmra.mxu0 %v288
        %v2119 = vpop.f32.mrf.mxu0
        %v2120 = vadd.f32 %v2031, %v2119
        %v2121 = vpop.f32.mrf.mxu0
        %v2122 = vadd.f32 %v2033, %v2121
        %2123 = vmatprep.mubr.f32.mxu0 %v296
        %2124 = vmatmul.mubr.f32.gmra.mxu0 %v295
        %v2125 = vpop.f32.mrf.mxu0
        %v2126 = vadd.f32 %v2037, %v2125
        %v2127 = vpop.f32.mrf.mxu0
        %v2128 = vadd.f32 %v2039, %v2127
        %2129 = vmatprep.mubr.f32.mxu0 %v303
        %2130 = vmatmul.mubr.f32.gmra.mxu0 %v302
        %v2131 = vpop.f32.mrf.mxu0
        %v2132 = vadd.f32 %v2043, %v2131
        %v2133 = vpop.f32.mrf.mxu0
        %v2134 = vadd.f32 %v2045, %v2133
        %2135 = vmatprep.mubr.f32.mxu0 %v310
        %2136 = vmatmul.mubr.f32.gmra.mxu0 %v309
        %v2137 = vpop.f32.mrf.mxu0
        %v2138 = vadd.f32 %v2049, %v2137
        %v2139 = vpop.f32.mrf.mxu0
        %v2140 = vadd.f32 %v2051, %v2139
        %2141 = vdwg.mxu0
        %2142 = vmatprep.subr.mxu0 %v951
        %2143 = vmatpush1.msra.mxu0 %v950
        %2144 = vmatprep.subr.mxu0 %v943
        %2145 = vmatpush1.msra.mxu0 %v942
        %2146 = vmatprep.subr.mxu0 %v935
        %2147 = vmatpush1.msra.mxu0 %v934
        %2148 = vmatprep.subr.mxu0 %v927
        %2149 = vmatpush1.msra.mxu0 %v926
        %2150 = vmatprep.subr.mxu0 %v919
        %2151 = vmatpush1.msra.mxu0 %v918
        %2152 = vmatprep.subr.mxu0 %v911
        %2153 = vmatpush1.msra.mxu0 %v910
        %2154 = vmatprep.subr.mxu0 %v903
        %2155 = vmatpush1.msra.mxu0 %v902
        %2156 = vmatprep.subr.mxu0 %v895
        %2157 = vmatpush1.msra.mxu0 %v894
        %2158 = vmatprep.subr.mxu0 %v887
        %2159 = vmatpush1.msra.mxu0 %v886
        %2160 = vmatprep.subr.mxu0 %v879
        %2161 = vmatpush1.msra.mxu0 %v878
        %2162 = vmatprep.subr.mxu0 %v871
        %2163 = vmatpush1.msra.mxu0 %v870
        %2164 = vmatprep.subr.mxu0 %v863
        %2165 = vmatpush1.msra.mxu0 %v862
        %2166 = vmatprep.subr.mxu0 %v855
        %2167 = vmatpush1.msra.mxu0 %v854
        %2168 = vmatprep.subr.mxu0 %v847
        %2169 = vmatpush1.msra.mxu0 %v846
        %2170 = vmatprep.subr.mxu0 %v839
        %2171 = vmatpush1.msra.mxu0 %v838
        %2172 = vmatprep.subr.mxu0 %v831
        %2173 = vmatpush1.msra.mxu0 %v830
        %2174 = vmatprep.subr.mxu0 %v1079
        %2175 = vmatpush2.msra.mxu0 %v1078
        %2176 = vmatprep.subr.mxu0 %v1071
        %2177 = vmatpush2.msra.mxu0 %v1070
        %2178 = vmatprep.subr.mxu0 %v1063
        %2179 = vmatpush2.msra.mxu0 %v1062
        %2180 = vmatprep.subr.mxu0 %v1055
        %2181 = vmatpush2.msra.mxu0 %v1054
        %2182 = vmatprep.subr.mxu0 %v1047
        %2183 = vmatpush2.msra.mxu0 %v1046
        %2184 = vmatprep.subr.mxu0 %v1039
        %2185 = vmatpush2.msra.mxu0 %v1038
        %2186 = vmatprep.subr.mxu0 %v1031
        %2187 = vmatpush2.msra.mxu0 %v1030
        %2188 = vmatprep.subr.mxu0 %v1023
        %2189 = vmatpush2.msra.mxu0 %v1022
        %2190 = vmatprep.subr.mxu0 %v1015
        %2191 = vmatpush2.msra.mxu0 %v1014
        %2192 = vmatprep.subr.mxu0 %v1007
        %2193 = vmatpush2.msra.mxu0 %v1006
        %2194 = vmatprep.subr.mxu0 %v999
        %2195 = vmatpush2.msra.mxu0 %v998
        %2196 = vmatprep.subr.mxu0 %v991
        %2197 = vmatpush2.msra.mxu0 %v990
        %2198 = vmatprep.subr.mxu0 %v983
        %2199 = vmatpush2.msra.mxu0 %v982
        %2200 = vmatprep.subr.mxu0 %v975
        %2201 = vmatpush2.msra.mxu0 %v974
        %2202 = vmatprep.subr.mxu0 %v967
        %2203 = vmatpush2.msra.mxu0 %v966
        %2204 = vmatprep.subr.mxu0 %v959
        %2205 = vmatpush2.msra.mxu0 %v958
        %2206 = vmatprep.mubr.f32.mxu0 %v291
        %2207 = vmatmul.mubr.f32.gmra.mxu0 %v290
        %v2208 = vpop.f32.mrf.mxu0
        %v2209 = vadd.f32 %v2120, %v2208
        %v2210 = vpop.f32.mrf.mxu0
        %v2211 = vadd.f32 %v2122, %v2210
        %2212 = vmatprep.mubr.f32.mxu0 %v298
        %2213 = vmatmul.mubr.f32.gmra.mxu0 %v297
        %v2214 = vpop.f32.mrf.mxu0
        %v2215 = vadd.f32 %v2126, %v2214
        %v2216 = vpop.f32.mrf.mxu0
        %v2217 = vadd.f32 %v2128, %v2216
        %2218 = vmatprep.mubr.f32.mxu0 %v305
        %2219 = vmatmul.mubr.f32.gmra.mxu0 %v304
        %v2220 = vpop.f32.mrf.mxu0
        %v2221 = vadd.f32 %v2132, %v2220
        %v2222 = vpop.f32.mrf.mxu0
        %v2223 = vadd.f32 %v2134, %v2222
        %2224 = vmatprep.mubr.f32.mxu0 %v312
        %2225 = vmatmul.mubr.f32.gmra.mxu0 %v311
        %v2226 = vpop.f32.mrf.mxu0
        %v2227 = vadd.f32 %v2138, %v2226
        %v2228 = vpop.f32.mrf.mxu0
        %v2229 = vadd.f32 %v2140, %v2228
        %2230 = vdwg.mxu0
        %2231 = vmatprep.subr.mxu0 %v1207
        %2232 = vmatpush1.msra.mxu0 %v1206
        %2233 = vmatprep.subr.mxu0 %v1199
        %2234 = vmatpush1.msra.mxu0 %v1198
        %2235 = vmatprep.subr.mxu0 %v1191
        %2236 = vmatpush1.msra.mxu0 %v1190
        %2237 = vmatprep.subr.mxu0 %v1183
        %2238 = vmatpush1.msra.mxu0 %v1182
        %2239 = vmatprep.subr.mxu0 %v1175
        %2240 = vmatpush1.msra.mxu0 %v1174
        %2241 = vmatprep.subr.mxu0 %v1167
        %2242 = vmatpush1.msra.mxu0 %v1166
        %2243 = vmatprep.subr.mxu0 %v1159
        %2244 = vmatpush1.msra.mxu0 %v1158
        %2245 = vmatprep.subr.mxu0 %v1151
        %2246 = vmatpush1.msra.mxu0 %v1150
        %2247 = vmatprep.subr.mxu0 %v1143
        %2248 = vmatpush1.msra.mxu0 %v1142
        %2249 = vmatprep.subr.mxu0 %v1135
        %2250 = vmatpush1.msra.mxu0 %v1134
        %2251 = vmatprep.subr.mxu0 %v1127
        %2252 = vmatpush1.msra.mxu0 %v1126
        %2253 = vmatprep.subr.mxu0 %v1119
        %2254 = vmatpush1.msra.mxu0 %v1118
        %2255 = vmatprep.subr.mxu0 %v1111
        %2256 = vmatpush1.msra.mxu0 %v1110
        %2257 = vmatprep.subr.mxu0 %v1103
        %2258 = vmatpush1.msra.mxu0 %v1102
        %2259 = vmatprep.subr.mxu0 %v1095
        %2260 = vmatpush1.msra.mxu0 %v1094
        %2261 = vmatprep.subr.mxu0 %v1087
        %2262 = vmatpush1.msra.mxu0 %v1086
        %2263 = vmatprep.subr.mxu0 0.0
        %2264 = vmatpush2.msra.mxu0 0.0
        %2265 = vmatprep.subr.mxu0 0.0
        %2266 = vmatpush2.msra.mxu0 0.0
        %2267 = vmatprep.subr.mxu0 0.0
        %2268 = vmatpush2.msra.mxu0 0.0
        %2269 = vmatprep.subr.mxu0 0.0
        %2270 = vmatpush2.msra.mxu0 0.0
        %2271 = vmatprep.subr.mxu0 0.0
        %2272 = vmatpush2.msra.mxu0 0.0
        %2273 = vmatprep.subr.mxu0 0.0
        %2274 = vmatpush2.msra.mxu0 0.0
        %2275 = vmatprep.subr.mxu0 0.0
        %2276 = vmatpush2.msra.mxu0 0.0
        %2277 = vmatprep.subr.mxu0 0.0
        %2278 = vmatpush2.msra.mxu0 0.0
        %2279 = vmatprep.subr.mxu0 0.0
        %2280 = vmatpush2.msra.mxu0 0.0
        %2281 = vmatprep.subr.mxu0 0.0
        %2282 = vmatpush2.msra.mxu0 0.0
        %2283 = vmatprep.subr.mxu0 0.0
        %2284 = vmatpush2.msra.mxu0 0.0
        %2285 = vmatprep.subr.mxu0 0.0
        %2286 = vmatpush2.msra.mxu0 0.0
        %2287 = vmatprep.subr.mxu0 0.0
        %2288 = vmatpush2.msra.mxu0 0.0
        %2289 = vmatprep.subr.mxu0 0.0
        %2290 = vmatpush2.msra.mxu0 0.0
        %2291 = vmatprep.subr.mxu0 0.0
        %2292 = vmatpush2.msra.mxu0 0.0
        %2293 = vmatprep.subr.mxu0 0.0
        %2294 = vmatpush2.msra.mxu0 0.0
        %2295 = vmatprep.mubr.f32.mxu0 0.0
        %2296 = vmatmul.mubr.f32.gmra.mxu0 %v292
        %v2297 = vpop.f32.mrf.mxu0
        %v2298 = vadd.f32 %v2209, %v2297
        %v2299 = vpop.f32.mrf.mxu0
        %v2300 = vadd.f32 %v2211, %v2299
        %2301 = vmatprep.mubr.f32.mxu0 0.0
        %2302 = vmatmul.mubr.f32.gmra.mxu0 %v299
        %v2303 = vpop.f32.mrf.mxu0
        %v2304 = vadd.f32 %v2215, %v2303
        %v2305 = vpop.f32.mrf.mxu0
        %v2306 = vadd.f32 %v2217, %v2305
        %2307 = vmatprep.mubr.f32.mxu0 0.0
        %2308 = vmatmul.mubr.f32.gmra.mxu0 %v306
        %v2309 = vpop.f32.mrf.mxu0
        %v2310 = vadd.f32 %v2221, %v2309
        %v2311 = vpop.f32.mrf.mxu0
        %v2312 = vadd.f32 %v2223, %v2311
        %2313 = vmatprep.mubr.f32.mxu0 0.0
        %2314 = vmatmul.mubr.f32.gmra.mxu0 %v313
        %v2315 = vpop.f32.mrf.mxu0
        %v2316 = vadd.f32 %v2227, %v2315
        %v2317 = vpop.f32.mrf.mxu0
        %v2318 = vadd.f32 %v2229, %v2317
        %2319 = vdwg.mxu0
        %2320 = vmatprep.subr.mxu0 %v441
        %2321 = vmatpush1.msra.mxu0 %v440
        %2322 = vmatprep.subr.mxu0 %v433
        %2323 = vmatpush1.msra.mxu0 %v432
        %2324 = vmatprep.subr.mxu0 %v425
        %2325 = vmatpush1.msra.mxu0 %v424
        %2326 = vmatprep.subr.mxu0 %v417
        %2327 = vmatpush1.msra.mxu0 %v416
        %2328 = vmatprep.subr.mxu0 %v409
        %2329 = vmatpush1.msra.mxu0 %v408
        %2330 = vmatprep.subr.mxu0 %v401
        %2331 = vmatpush1.msra.mxu0 %v400
        %2332 = vmatprep.subr.mxu0 %v393
        %2333 = vmatpush1.msra.mxu0 %v392
        %2334 = vmatprep.subr.mxu0 %v385
        %2335 = vmatpush1.msra.mxu0 %v384
        %2336 = vmatprep.subr.mxu0 %v377
        %2337 = vmatpush1.msra.mxu0 %v376
        %2338 = vmatprep.subr.mxu0 %v369
        %2339 = vmatpush1.msra.mxu0 %v368
        %2340 = vmatprep.subr.mxu0 %v361
        %2341 = vmatpush1.msra.mxu0 %v360
        %2342 = vmatprep.subr.mxu0 %v353
        %2343 = vmatpush1.msra.mxu0 %v352
        %2344 = vmatprep.subr.mxu0 %v345
        %2345 = vmatpush1.msra.mxu0 %v344
        %2346 = vmatprep.subr.mxu0 %v337
        %2347 = vmatpush1.msra.mxu0 %v336
        %2348 = vmatprep.subr.mxu0 %v329
        %2349 = vmatpush1.msra.mxu0 %v328
        %2350 = vmatprep.subr.mxu0 %v321
        %2351 = vmatpush1.msra.mxu0 %v320
        %2352 = vmatprep.subr.mxu0 %v569
        %2353 = vmatpush2.msra.mxu0 %v568
        %2354 = vmatprep.subr.mxu0 %v561
        %2355 = vmatpush2.msra.mxu0 %v560
        %2356 = vmatprep.subr.mxu0 %v553
        %2357 = vmatpush2.msra.mxu0 %v552
        %2358 = vmatprep.subr.mxu0 %v545
        %2359 = vmatpush2.msra.mxu0 %v544
        %2360 = vmatprep.subr.mxu0 %v537
        %2361 = vmatpush2.msra.mxu0 %v536
        %2362 = vmatprep.subr.mxu0 %v529
        %2363 = vmatpush2.msra.mxu0 %v528
        %2364 = vmatprep.subr.mxu0 %v521
        %2365 = vmatpush2.msra.mxu0 %v520
        %2366 = vmatprep.subr.mxu0 %v513
        %2367 = vmatpush2.msra.mxu0 %v512
        %2368 = vmatprep.subr.mxu0 %v505
        %2369 = vmatpush2.msra.mxu0 %v504
        %2370 = vmatprep.subr.mxu0 %v497
        %2371 = vmatpush2.msra.mxu0 %v496
        %2372 = vmatprep.subr.mxu0 %v489
        %2373 = vmatpush2.msra.mxu0 %v488
        %2374 = vmatprep.subr.mxu0 %v481
        %2375 = vmatpush2.msra.mxu0 %v480
        %2376 = vmatprep.subr.mxu0 %v473
        %2377 = vmatpush2.msra.mxu0 %v472
        %2378 = vmatprep.subr.mxu0 %v465
        %2379 = vmatpush2.msra.mxu0 %v464
        %2380 = vmatprep.subr.mxu0 %v457
        %2381 = vmatpush2.msra.mxu0 %v456
        %2382 = vmatprep.subr.mxu0 %v449
        %2383 = vmatpush2.msra.mxu0 %v448
        %2384 = vmatprep.mubr.f32.mxu0 %v287
        %2385 = vmatmul.mubr.f32.gmra.mxu0 %v286
        %v2386 = vpop.f32.mrf.mxu0
        %v2387 = vadd.f32 %v1239, %v2386
        %v2388 = vpop.f32.mrf.mxu0
        %v2389 = vadd.f32 %v1243, %v2388
        %2390 = vmatprep.mubr.f32.mxu0 %v294
        %2391 = vmatmul.mubr.f32.gmra.mxu0 %v293
        %v2392 = vpop.f32.mrf.mxu0
        %v2393 = vadd.f32 %v1239, %v2392
        %v2394 = vpop.f32.mrf.mxu0
        %v2395 = vadd.f32 %v1243, %v2394
        %2396 = vmatprep.mubr.f32.mxu0 %v301
        %2397 = vmatmul.mubr.f32.gmra.mxu0 %v300
        %v2398 = vpop.f32.mrf.mxu0
        %v2399 = vadd.f32 %v1239, %v2398
        %v2400 = vpop.f32.mrf.mxu0
        %v2401 = vadd.f32 %v1243, %v2400
        %2402 = vmatprep.mubr.f32.mxu0 %v308
        %2403 = vmatmul.mubr.f32.gmra.mxu0 %v307
        %v2404 = vpop.f32.mrf.mxu0
        %v2405 = vadd.f32 %v1239, %v2404
        %v2406 = vpop.f32.mrf.mxu0
        %v2407 = vadd.f32 %v1243, %v2406
        %2408 = vdwg.mxu0
        %2409 = vmatprep.subr.mxu0 %v697
        %2410 = vmatpush1.msra.mxu0 %v696
        %2411 = vmatprep.subr.mxu0 %v689
        %2412 = vmatpush1.msra.mxu0 %v688
        %2413 = vmatprep.subr.mxu0 %v681
        %2414 = vmatpush1.msra.mxu0 %v680
        %2415 = vmatprep.subr.mxu0 %v673
        %2416 = vmatpush1.msra.mxu0 %v672
        %2417 = vmatprep.subr.mxu0 %v665
        %2418 = vmatpush1.msra.mxu0 %v664
        %2419 = vmatprep.subr.mxu0 %v657
        %2420 = vmatpush1.msra.mxu0 %v656
        %2421 = vmatprep.subr.mxu0 %v649
        %2422 = vmatpush1.msra.mxu0 %v648
        %2423 = vmatprep.subr.mxu0 %v641
        %2424 = vmatpush1.msra.mxu0 %v640
        %2425 = vmatprep.subr.mxu0 %v633
        %2426 = vmatpush1.msra.mxu0 %v632
        %2427 = vmatprep.subr.mxu0 %v625
        %2428 = vmatpush1.msra.mxu0 %v624
        %2429 = vmatprep.subr.mxu0 %v617
        %2430 = vmatpush1.msra.mxu0 %v616
        %2431 = vmatprep.subr.mxu0 %v609
        %2432 = vmatpush1.msra.mxu0 %v608
        %2433 = vmatprep.subr.mxu0 %v601
        %2434 = vmatpush1.msra.mxu0 %v600
        %2435 = vmatprep.subr.mxu0 %v593
        %2436 = vmatpush1.msra.mxu0 %v592
        %2437 = vmatprep.subr.mxu0 %v585
        %2438 = vmatpush1.msra.mxu0 %v584
        %2439 = vmatprep.subr.mxu0 %v577
        %2440 = vmatpush1.msra.mxu0 %v576
        %2441 = vmatprep.subr.mxu0 %v825
        %2442 = vmatpush2.msra.mxu0 %v824
        %2443 = vmatprep.subr.mxu0 %v817
        %2444 = vmatpush2.msra.mxu0 %v816
        %2445 = vmatprep.subr.mxu0 %v809
        %2446 = vmatpush2.msra.mxu0 %v808
        %2447 = vmatprep.subr.mxu0 %v801
        %2448 = vmatpush2.msra.mxu0 %v800
        %2449 = vmatprep.subr.mxu0 %v793
        %2450 = vmatpush2.msra.mxu0 %v792
        %2451 = vmatprep.subr.mxu0 %v785
        %2452 = vmatpush2.msra.mxu0 %v784
        %2453 = vmatprep.subr.mxu0 %v777
        %2454 = vmatpush2.msra.mxu0 %v776
        %2455 = vmatprep.subr.mxu0 %v769
        %2456 = vmatpush2.msra.mxu0 %v768
        %2457 = vmatprep.subr.mxu0 %v761
        %2458 = vmatpush2.msra.mxu0 %v760
        %2459 = vmatprep.subr.mxu0 %v753
        %2460 = vmatpush2.msra.mxu0 %v752
        %2461 = vmatprep.subr.mxu0 %v745
        %2462 = vmatpush2.msra.mxu0 %v744
        %2463 = vmatprep.subr.mxu0 %v737
        %2464 = vmatpush2.msra.mxu0 %v736
        %2465 = vmatprep.subr.mxu0 %v729
        %2466 = vmatpush2.msra.mxu0 %v728
        %2467 = vmatprep.subr.mxu0 %v721
        %2468 = vmatpush2.msra.mxu0 %v720
        %2469 = vmatprep.subr.mxu0 %v713
        %2470 = vmatpush2.msra.mxu0 %v712
        %2471 = vmatprep.subr.mxu0 %v705
        %2472 = vmatpush2.msra.mxu0 %v704
        %2473 = vmatprep.mubr.f32.mxu0 %v289
        %2474 = vmatmul.mubr.f32.gmra.mxu0 %v288
        %v2475 = vpop.f32.mrf.mxu0
        %v2476 = vadd.f32 %v2387, %v2475
        %v2477 = vpop.f32.mrf.mxu0
        %v2478 = vadd.f32 %v2389, %v2477
        %2479 = vmatprep.mubr.f32.mxu0 %v296
        %2480 = vmatmul.mubr.f32.gmra.mxu0 %v295
        %v2481 = vpop.f32.mrf.mxu0
        %v2482 = vadd.f32 %v2393, %v2481
        %v2483 = vpop.f32.mrf.mxu0
        %v2484 = vadd.f32 %v2395, %v2483
        %2485 = vmatprep.mubr.f32.mxu0 %v303
        %2486 = vmatmul.mubr.f32.gmra.mxu0 %v302
        %v2487 = vpop.f32.mrf.mxu0
        %v2488 = vadd.f32 %v2399, %v2487
        %v2489 = vpop.f32.mrf.mxu0
        %v2490 = vadd.f32 %v2401, %v2489
        %2491 = vmatprep.mubr.f32.mxu0 %v310
        %2492 = vmatmul.mubr.f32.gmra.mxu0 %v309
        %v2493 = vpop.f32.mrf.mxu0
        %v2494 = vadd.f32 %v2405, %v2493
        %v2495 = vpop.f32.mrf.mxu0
        %v2496 = vadd.f32 %v2407, %v2495
        %2497 = vdwg.mxu0
        %2498 = vmatprep.subr.mxu0 %v953
        %2499 = vmatpush1.msra.mxu0 %v952
        %2500 = vmatprep.subr.mxu0 %v945
        %2501 = vmatpush1.msra.mxu0 %v944
        %2502 = vmatprep.subr.mxu0 %v937
        %2503 = vmatpush1.msra.mxu0 %v936
        %2504 = vmatprep.subr.mxu0 %v929
        %2505 = vmatpush1.msra.mxu0 %v928
        %2506 = vmatprep.subr.mxu0 %v921
        %2507 = vmatpush1.msra.mxu0 %v920
        %2508 = vmatprep.subr.mxu0 %v913
        %2509 = vmatpush1.msra.mxu0 %v912
        %2510 = vmatprep.subr.mxu0 %v905
        %2511 = vmatpush1.msra.mxu0 %v904
        %2512 = vmatprep.subr.mxu0 %v897
        %2513 = vmatpush1.msra.mxu0 %v896
        %2514 = vmatprep.subr.mxu0 %v889
        %2515 = vmatpush1.msra.mxu0 %v888
        %2516 = vmatprep.subr.mxu0 %v881
        %2517 = vmatpush1.msra.mxu0 %v880
        %2518 = vmatprep.subr.mxu0 %v873
        %2519 = vmatpush1.msra.mxu0 %v872
        %2520 = vmatprep.subr.mxu0 %v865
        %2521 = vmatpush1.msra.mxu0 %v864
        %2522 = vmatprep.subr.mxu0 %v857
        %2523 = vmatpush1.msra.mxu0 %v856
        %2524 = vmatprep.subr.mxu0 %v849
        %2525 = vmatpush1.msra.mxu0 %v848
        %2526 = vmatprep.subr.mxu0 %v841
        %2527 = vmatpush1.msra.mxu0 %v840
        %2528 = vmatprep.subr.mxu0 %v833
        %2529 = vmatpush1.msra.mxu0 %v832
        %2530 = vmatprep.subr.mxu0 %v1081
        %2531 = vmatpush2.msra.mxu0 %v1080
        %2532 = vmatprep.subr.mxu0 %v1073
        %2533 = vmatpush2.msra.mxu0 %v1072
        %2534 = vmatprep.subr.mxu0 %v1065
        %2535 = vmatpush2.msra.mxu0 %v1064
        %2536 = vmatprep.subr.mxu0 %v1057
        %2537 = vmatpush2.msra.mxu0 %v1056
        %2538 = vmatprep.subr.mxu0 %v1049
        %2539 = vmatpush2.msra.mxu0 %v1048
        %2540 = vmatprep.subr.mxu0 %v1041
        %2541 = vmatpush2.msra.mxu0 %v1040
        %2542 = vmatprep.subr.mxu0 %v1033
        %2543 = vmatpush2.msra.mxu0 %v1032
        %2544 = vmatprep.subr.mxu0 %v1025
        %2545 = vmatpush2.msra.mxu0 %v1024
        %2546 = vmatprep.subr.mxu0 %v1017
        %2547 = vmatpush2.msra.mxu0 %v1016
        %2548 = vmatprep.subr.mxu0 %v1009
        %2549 = vmatpush2.msra.mxu0 %v1008
        %2550 = vmatprep.subr.mxu0 %v1001
        %2551 = vmatpush2.msra.mxu0 %v1000
        %2552 = vmatprep.subr.mxu0 %v993
        %2553 = vmatpush2.msra.mxu0 %v992
        %2554 = vmatprep.subr.mxu0 %v985
        %2555 = vmatpush2.msra.mxu0 %v984
        %2556 = vmatprep.subr.mxu0 %v977
        %2557 = vmatpush2.msra.mxu0 %v976
        %2558 = vmatprep.subr.mxu0 %v969
        %2559 = vmatpush2.msra.mxu0 %v968
        %2560 = vmatprep.subr.mxu0 %v961
        %2561 = vmatpush2.msra.mxu0 %v960
        %2562 = vmatprep.mubr.f32.mxu0 %v291
        %2563 = vmatmul.mubr.f32.gmra.mxu0 %v290
        %v2564 = vpop.f32.mrf.mxu0
        %v2565 = vadd.f32 %v2476, %v2564
        %v2566 = vpop.f32.mrf.mxu0
        %v2567 = vadd.f32 %v2478, %v2566
        %2568 = vmatprep.mubr.f32.mxu0 %v298
        %2569 = vmatmul.mubr.f32.gmra.mxu0 %v297
        %v2570 = vpop.f32.mrf.mxu0
        %v2571 = vadd.f32 %v2482, %v2570
        %v2572 = vpop.f32.mrf.mxu0
        %v2573 = vadd.f32 %v2484, %v2572
        %2574 = vmatprep.mubr.f32.mxu0 %v305
        %2575 = vmatmul.mubr.f32.gmra.mxu0 %v304
        %v2576 = vpop.f32.mrf.mxu0
        %v2577 = vadd.f32 %v2488, %v2576
        %v2578 = vpop.f32.mrf.mxu0
        %v2579 = vadd.f32 %v2490, %v2578
        %2580 = vmatprep.mubr.f32.mxu0 %v312
        %2581 = vmatmul.mubr.f32.gmra.mxu0 %v311
        %v2582 = vpop.f32.mrf.mxu0
        %v2583 = vadd.f32 %v2494, %v2582
        %v2584 = vpop.f32.mrf.mxu0
        %v2585 = vadd.f32 %v2496, %v2584
        %2586 = vdwg.mxu0
        %2587 = vmatprep.subr.mxu0 %v1209
        %2588 = vmatpush1.msra.mxu0 %v1208
        %2589 = vmatprep.subr.mxu0 %v1201
        %2590 = vmatpush1.msra.mxu0 %v1200
        %2591 = vmatprep.subr.mxu0 %v1193
        %2592 = vmatpush1.msra.mxu0 %v1192
        %2593 = vmatprep.subr.mxu0 %v1185
        %2594 = vmatpush1.msra.mxu0 %v1184
        %2595 = vmatprep.subr.mxu0 %v1177
        %2596 = vmatpush1.msra.mxu0 %v1176
        %2597 = vmatprep.subr.mxu0 %v1169
        %2598 = vmatpush1.msra.mxu0 %v1168
        %2599 = vmatprep.subr.mxu0 %v1161
        %2600 = vmatpush1.msra.mxu0 %v1160
        %2601 = vmatprep.subr.mxu0 %v1153
        %2602 = vmatpush1.msra.mxu0 %v1152
        %2603 = vmatprep.subr.mxu0 %v1145
        %2604 = vmatpush1.msra.mxu0 %v1144
        %2605 = vmatprep.subr.mxu0 %v1137
        %2606 = vmatpush1.msra.mxu0 %v1136
        %2607 = vmatprep.subr.mxu0 %v1129
        %2608 = vmatpush1.msra.mxu0 %v1128
        %2609 = vmatprep.subr.mxu0 %v1121
        %2610 = vmatpush1.msra.mxu0 %v1120
        %2611 = vmatprep.subr.mxu0 %v1113
        %2612 = vmatpush1.msra.mxu0 %v1112
        %2613 = vmatprep.subr.mxu0 %v1105
        %2614 = vmatpush1.msra.mxu0 %v1104
        %2615 = vmatprep.subr.mxu0 %v1097
        %2616 = vmatpush1.msra.mxu0 %v1096
        %2617 = vmatprep.subr.mxu0 %v1089
        %2618 = vmatpush1.msra.mxu0 %v1088
        %2619 = vmatprep.subr.mxu0 0.0
        %2620 = vmatpush2.msra.mxu0 0.0
        %2621 = vmatprep.subr.mxu0 0.0
        %2622 = vmatpush2.msra.mxu0 0.0
        %2623 = vmatprep.subr.mxu0 0.0
        %2624 = vmatpush2.msra.mxu0 0.0
        %2625 = vmatprep.subr.mxu0 0.0
        %2626 = vmatpush2.msra.mxu0 0.0
        %2627 = vmatprep.subr.mxu0 0.0
        %2628 = vmatpush2.msra.mxu0 0.0
        %2629 = vmatprep.subr.mxu0 0.0
        %2630 = vmatpush2.msra.mxu0 0.0
        %2631 = vmatprep.subr.mxu0 0.0
        %2632 = vmatpush2.msra.mxu0 0.0
        %2633 = vmatprep.subr.mxu0 0.0
        %2634 = vmatpush2.msra.mxu0 0.0
        %2635 = vmatprep.subr.mxu0 0.0
        %2636 = vmatpush2.msra.mxu0 0.0
        %2637 = vmatprep.subr.mxu0 0.0
        %2638 = vmatpush2.msra.mxu0 0.0
        %2639 = vmatprep.subr.mxu0 0.0
        %2640 = vmatpush2.msra.mxu0 0.0
        %2641 = vmatprep.subr.mxu0 0.0
        %2642 = vmatpush2.msra.mxu0 0.0
        %2643 = vmatprep.subr.mxu0 0.0
        %2644 = vmatpush2.msra.mxu0 0.0
        %2645 = vmatprep.subr.mxu0 0.0
        %2646 = vmatpush2.msra.mxu0 0.0
        %2647 = vmatprep.subr.mxu0 0.0
        %2648 = vmatpush2.msra.mxu0 0.0
        %2649 = vmatprep.subr.mxu0 0.0
        %2650 = vmatpush2.msra.mxu0 0.0
        %2651 = vmatprep.mubr.f32.mxu0 0.0
        %2652 = vmatmul.mubr.f32.gmra.mxu0 %v292
        %v2653 = vpop.f32.mrf.mxu0
        %v2654 = vadd.f32 %v2565, %v2653
        %v2655 = vpop.f32.mrf.mxu0
        %v2656 = vadd.f32 %v2567, %v2655
        %2657 = vmatprep.mubr.f32.mxu0 0.0
        %2658 = vmatmul.mubr.f32.gmra.mxu0 %v299
        %v2659 = vpop.f32.mrf.mxu0
        %v2660 = vadd.f32 %v2571, %v2659
        %v2661 = vpop.f32.mrf.mxu0
        %v2662 = vadd.f32 %v2573, %v2661
        %2663 = vmatprep.mubr.f32.mxu0 0.0
        %2664 = vmatmul.mubr.f32.gmra.mxu0 %v306
        %v2665 = vpop.f32.mrf.mxu0
        %v2666 = vadd.f32 %v2577, %v2665
        %v2667 = vpop.f32.mrf.mxu0
        %v2668 = vadd.f32 %v2579, %v2667
        %2669 = vmatprep.mubr.f32.mxu0 0.0
        %2670 = vmatmul.mubr.f32.gmra.mxu0 %v313
        %v2671 = vpop.f32.mrf.mxu0
        %v2672 = vadd.f32 %v2583, %v2671
        %v2673 = vpop.f32.mrf.mxu0
        %v2674 = vadd.f32 %v2585, %v2673
        %2675 = vdwg.mxu0
        %v2676 = vmax.f32 %v1586, 0.0
        %v2677 = vmax.f32 %v1588, 0.0
        %v2678 = vmax.f32 %v1942, 0.0
        %v2679 = vmax.f32 %v1944, 0.0
        %v2680 = vmax.f32 %v2298, 0.0
        %v2681 = vmax.f32 %v2300, 0.0
        %v2682 = vmax.f32 %v2654, 0.0
        %v2683 = vmax.f32 %v2656, 0.0
        %v2684 = vmax.f32 %v1592, 0.0
        %v2685 = vmax.f32 %v1594, 0.0
        %v2686 = vmax.f32 %v1948, 0.0
        %v2687 = vmax.f32 %v1950, 0.0
        %v2688 = vmax.f32 %v2304, 0.0
        %v2689 = vmax.f32 %v2306, 0.0
        %v2690 = vmax.f32 %v2660, 0.0
        %v2691 = vmax.f32 %v2662, 0.0
        %v2692 = vmax.f32 %v1598, 0.0
        %v2693 = vmax.f32 %v1600, 0.0
        %v2694 = vmax.f32 %v1954, 0.0
        %v2695 = vmax.f32 %v1956, 0.0
        %v2696 = vmax.f32 %v2310, 0.0
        %v2697 = vmax.f32 %v2312, 0.0
        %v2698 = vmax.f32 %v2666, 0.0
        %v2699 = vmax.f32 %v2668, 0.0
        %v2700 = vmax.f32 %v1604, 0.0
        %v2701 = vmax.f32 %v1606, 0.0
        %v2702 = vmax.f32 %v1960, 0.0
        %v2703 = vmax.f32 %v1962, 0.0
        %v2704 = vmax.f32 %v2316, 0.0
        %v2705 = vmax.f32 %v2318, 0.0
        %v2706 = vmax.f32 %v2672, 0.0
        %v2707 = vmax.f32 %v2674, 0.0
        %v2708 = vld [vmem:[#allocation6] sm:$0xff]
        %v2709 = vld [vmem:[#allocation6 + $0x8] sm:$0xff]
        %v2710 = vld [vmem:[#allocation6 + $0x10] sm:$0xff]
        %v2711 = vld [vmem:[#allocation6 + $0x18] sm:$0xff]
        %v2712 = vld [vmem:[#allocation6 + $0x20] sm:$0xff]
        %v2713 = vld [vmem:[#allocation6 + $0x28] sm:$0xff]
        %v2714 = vld [vmem:[#allocation6 + $0x30] sm:$0xff]
        %v2715 = vld [vmem:[#allocation6 + $0x38] sm:$0xff]
        %v2716 = vld [vmem:[#allocation6 + $0x40] sm:$0xff]
        %v2717 = vld [vmem:[#allocation6 + $0x48] sm:$0xff]
        %v2718 = vld [vmem:[#allocation6 + $0x50] sm:$0xff]
        %v2719 = vld [vmem:[#allocation6 + $0x58] sm:$0xff]
        %v2720 = vld [vmem:[#allocation6 + $0x60] sm:$0xff]
        %v2721 = vld [vmem:[#allocation6 + $0x68] sm:$0xff]
        %v2722 = vld [vmem:[#allocation6 + $0x70] sm:$0xff]
        %v2723 = vld [vmem:[#allocation6 + $0x78] sm:$0xff]
        %v2724 = vld [vmem:[#allocation6 + $0x80] sm:$0xff]
        %v2725 = vld [vmem:[#allocation6 + $0x88] sm:$0xff]
        %v2726 = vld [vmem:[#allocation6 + $0x90] sm:$0xff]
        %v2727 = vld [vmem:[#allocation6 + $0x98] sm:$0xff]
        %v2728 = vld [vmem:[#allocation6 + $0xa0] sm:$0xff]
        %v2729 = vld [vmem:[#allocation6 + $0xa8] sm:$0xff]
        %v2730 = vld [vmem:[#allocation6 + $0xb0] sm:$0xff]
        %v2731 = vld [vmem:[#allocation6 + $0xb8] sm:$0xff]
        %v2732 = vld [vmem:[#allocation6 + $0xc0] sm:$0xff]
        %v2733 = vld [vmem:[#allocation6 + $0xc8] sm:$0xff]
        %v2734 = vld [vmem:[#allocation6 + $0xd0] sm:$0xff]
        %v2735 = vld [vmem:[#allocation6 + $0xd8] sm:$0xff]
        %v2736 = vld [vmem:[#allocation6 + $0xe0] sm:$0xff]
        %v2737 = vld [vmem:[#allocation6 + $0xe8] sm:$0xff]
        %v2738 = vld [vmem:[#allocation6 + $0xf0] sm:$0xff]
        %v2739 = vld [vmem:[#allocation6 + $0xf8] sm:$0xff]
        %v2740 = vld [vmem:[#allocation6 + $0x100] sm:$0xff]
        %v2741 = vld [vmem:[#allocation6 + $0x108] sm:$0xff]
        %v2742 = vld [vmem:[#allocation6 + $0x110] sm:$0xff]
        %v2743 = vld [vmem:[#allocation6 + $0x118] sm:$0xff]
        %v2744 = vld [vmem:[#allocation6 + $0x120] sm:$0xff]
        %v2745 = vld [vmem:[#allocation6 + $0x128] sm:$0xff]
        %v2746 = vld [vmem:[#allocation6 + $0x130] sm:$0xff]
        %v2747 = vld [vmem:[#allocation6 + $0x138] sm:$0xff]
        %v2748 = vld [vmem:[#allocation6 + $0x140] sm:$0xff]
        %v2749 = vld [vmem:[#allocation6 + $0x148] sm:$0xff]
        %v2750 = vld [vmem:[#allocation6 + $0x150] sm:$0xff]
        %v2751 = vld [vmem:[#allocation6 + $0x158] sm:$0xff]
        %v2752 = vld [vmem:[#allocation6 + $0x160] sm:$0xff]
        %v2753 = vld [vmem:[#allocation6 + $0x168] sm:$0xff]
        %v2754 = vld [vmem:[#allocation6 + $0x170] sm:$0xff]
        %v2755 = vld [vmem:[#allocation6 + $0x178] sm:$0xff]
        %v2756 = vld [vmem:[#allocation6 + $0x180] sm:$0xff]
        %v2757 = vld [vmem:[#allocation6 + $0x188] sm:$0xff]
        %v2758 = vld [vmem:[#allocation6 + $0x190] sm:$0xff]
        %v2759 = vld [vmem:[#allocation6 + $0x198] sm:$0xff]
        %v2760 = vld [vmem:[#allocation6 + $0x1a0] sm:$0xff]
        %v2761 = vld [vmem:[#allocation6 + $0x1a8] sm:$0xff]
        %v2762 = vld [vmem:[#allocation6 + $0x1b0] sm:$0xff]
        %v2763 = vld [vmem:[#allocation6 + $0x1b8] sm:$0xff]
        %v2764 = vld [vmem:[#allocation6 + $0x1c0] sm:$0xff]
        %v2765 = vld [vmem:[#allocation6 + $0x1c8] sm:$0xff]
        %v2766 = vld [vmem:[#allocation6 + $0x1d0] sm:$0xff]
        %v2767 = vld [vmem:[#allocation6 + $0x1d8] sm:$0xff]
        %v2768 = vld [vmem:[#allocation6 + $0x1e0] sm:$0xff]
        %v2769 = vld [vmem:[#allocation6 + $0x1e8] sm:$0xff]
        %v2770 = vld [vmem:[#allocation6 + $0x1f0] sm:$0xff]
        %v2771 = vld [vmem:[#allocation6 + $0x1f8] sm:$0xff]
        %v2772 = vld [vmem:[#allocation6 + $0x200] sm:$0xff]
        %v2773 = vld [vmem:[#allocation6 + $0x208] sm:$0xff]
        %v2774 = vld [vmem:[#allocation6 + $0x210] sm:$0xff]
        %v2775 = vld [vmem:[#allocation6 + $0x218] sm:$0xff]
        %v2776 = vld [vmem:[#allocation6 + $0x220] sm:$0xff]
        %v2777 = vld [vmem:[#allocation6 + $0x228] sm:$0xff]
        %v2778 = vld [vmem:[#allocation6 + $0x230] sm:$0xff]
        %v2779 = vld [vmem:[#allocation6 + $0x238] sm:$0xff]
        %v2780 = vld [vmem:[#allocation6 + $0x240] sm:$0xff]
        %v2781 = vld [vmem:[#allocation6 + $0x248] sm:$0xff]
        %v2782 = vld [vmem:[#allocation6 + $0x250] sm:$0xff]
        %v2783 = vld [vmem:[#allocation6 + $0x258] sm:$0xff]
        %v2784 = vld [vmem:[#allocation6 + $0x260] sm:$0xff]
        %v2785 = vld [vmem:[#allocation6 + $0x268] sm:$0xff]
        %v2786 = vld [vmem:[#allocation6 + $0x270] sm:$0xff]
        %v2787 = vld [vmem:[#allocation6 + $0x278] sm:$0xff]
        %v2788 = vld [vmem:[#allocation6 + $0x280] sm:$0xff]
        %v2789 = vld [vmem:[#allocation6 + $0x288] sm:$0xff]
        %v2790 = vld [vmem:[#allocation6 + $0x290] sm:$0xff]
        %v2791 = vld [vmem:[#allocation6 + $0x298] sm:$0xff]
        %v2792 = vld [vmem:[#allocation6 + $0x2a0] sm:$0xff]
        %v2793 = vld [vmem:[#allocation6 + $0x2a8] sm:$0xff]
        %v2794 = vld [vmem:[#allocation6 + $0x2b0] sm:$0xff]
        %v2795 = vld [vmem:[#allocation6 + $0x2b8] sm:$0xff]
        %v2796 = vld [vmem:[#allocation6 + $0x2c0] sm:$0xff]
        %v2797 = vld [vmem:[#allocation6 + $0x2c8] sm:$0xff]
        %v2798 = vld [vmem:[#allocation6 + $0x2d0] sm:$0xff]
        %v2799 = vld [vmem:[#allocation6 + $0x2d8] sm:$0xff]
        %v2800 = vld [vmem:[#allocation6 + $0x2e0] sm:$0xff]
        %v2801 = vld [vmem:[#allocation6 + $0x2e8] sm:$0xff]
        %v2802 = vld [vmem:[#allocation6 + $0x2f0] sm:$0xff]
        %v2803 = vld [vmem:[#allocation6 + $0x2f8] sm:$0xff]
        %v2804 = vld [vmem:[#allocation6 + $0x300] sm:$0xff]
        %v2805 = vld [vmem:[#allocation6 + $0x308] sm:$0xff]
        %v2806 = vld [vmem:[#allocation6 + $0x310] sm:$0xff]
        %v2807 = vld [vmem:[#allocation6 + $0x318] sm:$0xff]
        %v2808 = vld [vmem:[#allocation6 + $0x320] sm:$0xff]
        %v2809 = vld [vmem:[#allocation6 + $0x328] sm:$0xff]
        %v2810 = vld [vmem:[#allocation6 + $0x330] sm:$0xff]
        %v2811 = vld [vmem:[#allocation6 + $0x338] sm:$0xff]
        %v2812 = vld [vmem:[#allocation6 + $0x340] sm:$0xff]
        %v2813 = vld [vmem:[#allocation6 + $0x348] sm:$0xff]
        %v2814 = vld [vmem:[#allocation6 + $0x350] sm:$0xff]
        %v2815 = vld [vmem:[#allocation6 + $0x358] sm:$0xff]
        %v2816 = vld [vmem:[#allocation6 + $0x360] sm:$0xff]
        %v2817 = vld [vmem:[#allocation6 + $0x368] sm:$0xff]
        %v2818 = vld [vmem:[#allocation6 + $0x370] sm:$0xff]
        %v2819 = vld [vmem:[#allocation6 + $0x378] sm:$0xff]
        %v2820 = vld [vmem:[#allocation6 + $0x380] sm:$0xff]
        %v2821 = vld [vmem:[#allocation6 + $0x388] sm:$0xff]
        %v2822 = vld [vmem:[#allocation6 + $0x390] sm:$0xff]
        %v2823 = vld [vmem:[#allocation6 + $0x398] sm:$0xff]
        %v2824 = vld [vmem:[#allocation6 + $0x3a0] sm:$0xff]
        %v2825 = vld [vmem:[#allocation6 + $0x3a8] sm:$0xff]
        %v2826 = vld [vmem:[#allocation6 + $0x3b0] sm:$0xff]
        %v2827 = vld [vmem:[#allocation6 + $0x3b8] sm:$0xff]
        %v2828 = vld [vmem:[#allocation6 + $0x3c0] sm:$0xff]
        %v2829 = vld [vmem:[#allocation6 + $0x3c8] sm:$0xff]
        %v2830 = vld [vmem:[#allocation6 + $0x3d0] sm:$0xff]
        %v2831 = vld [vmem:[#allocation6 + $0x3d8] sm:$0xff]
        %v2832 = vld [vmem:[#allocation6 + $0x3e0] sm:$0xff]
        %v2833 = vld [vmem:[#allocation6 + $0x3e8] sm:$0xff]
        %v2834 = vld [vmem:[#allocation6 + $0x3f0] sm:$0xff]
        %v2835 = vld [vmem:[#allocation6 + $0x3f8] sm:$0xff]
        %v2836 = vld [vmem:[#allocation7] sm:$0x1]
        %v2838 = vlaneseq
        %v2839 = vshrl.u32 %v2838, 7
        %v2840 = vsub.s32 0, %v2839
        %v2841 = vrot.slane %v2836, %v2840
        %2843 = vmatprep.subr.mxu0 0.0
        %2844 = vmatpush1.msra.mxu0 %v2723
        %2845 = vmatprep.subr.mxu0 0.0
        %2846 = vmatpush1.msra.mxu0 %v2722
        %2847 = vmatprep.subr.mxu0 0.0
        %2848 = vmatpush1.msra.mxu0 %v2721
        %2849 = vmatprep.subr.mxu0 0.0
        %2850 = vmatpush1.msra.mxu0 %v2720
        %2851 = vmatprep.subr.mxu0 0.0
        %2852 = vmatpush1.msra.mxu0 %v2719
        %2853 = vmatprep.subr.mxu0 0.0
        %2854 = vmatpush1.msra.mxu0 %v2718
        %2855 = vmatprep.subr.mxu0 0.0
        %2856 = vmatpush1.msra.mxu0 %v2717
        %2857 = vmatprep.subr.mxu0 0.0
        %2858 = vmatpush1.msra.mxu0 %v2716
        %2859 = vmatprep.subr.mxu0 0.0
        %2860 = vmatpush1.msra.mxu0 %v2715
        %2861 = vmatprep.subr.mxu0 0.0
        %2862 = vmatpush1.msra.mxu0 %v2714
        %2863 = vmatprep.subr.mxu0 0.0
        %2864 = vmatpush1.msra.mxu0 %v2713
        %2865 = vmatprep.subr.mxu0 0.0
        %2866 = vmatpush1.msra.mxu0 %v2712
        %2867 = vmatprep.subr.mxu0 0.0
        %2868 = vmatpush1.msra.mxu0 %v2711
        %2869 = vmatprep.subr.mxu0 0.0
        %2870 = vmatpush1.msra.mxu0 %v2710
        %2871 = vmatprep.subr.mxu0 0.0
        %2872 = vmatpush1.msra.mxu0 %v2709
        %2873 = vmatprep.subr.mxu0 0.0
        %2874 = vmatpush1.msra.mxu0 %v2708
        %2875 = vmatprep.subr.mxu0 0.0
        %2876 = vmatpush2.msra.mxu0 %v2739
        %2877 = vmatprep.subr.mxu0 0.0
        %2878 = vmatpush2.msra.mxu0 %v2738
        %2879 = vmatprep.subr.mxu0 0.0
        %2880 = vmatpush2.msra.mxu0 %v2737
        %2881 = vmatprep.subr.mxu0 0.0
        %2882 = vmatpush2.msra.mxu0 %v2736
        %2883 = vmatprep.subr.mxu0 0.0
        %2884 = vmatpush2.msra.mxu0 %v2735
        %2885 = vmatprep.subr.mxu0 0.0
        %2886 = vmatpush2.msra.mxu0 %v2734
        %2887 = vmatprep.subr.mxu0 0.0
        %2888 = vmatpush2.msra.mxu0 %v2733
        %2889 = vmatprep.subr.mxu0 0.0
        %2890 = vmatpush2.msra.mxu0 %v2732
        %2891 = vmatprep.subr.mxu0 0.0
        %2892 = vmatpush2.msra.mxu0 %v2731
        %2893 = vmatprep.subr.mxu0 0.0
        %2894 = vmatpush2.msra.mxu0 %v2730
        %2895 = vmatprep.subr.mxu0 0.0
        %2896 = vmatpush2.msra.mxu0 %v2729
        %2897 = vmatprep.subr.mxu0 0.0
        %2898 = vmatpush2.msra.mxu0 %v2728
        %2899 = vmatprep.subr.mxu0 0.0
        %2900 = vmatpush2.msra.mxu0 %v2727
        %2901 = vmatprep.subr.mxu0 0.0
        %2902 = vmatpush2.msra.mxu0 %v2726
        %2903 = vmatprep.subr.mxu0 0.0
        %2904 = vmatpush2.msra.mxu0 %v2725
        %2905 = vmatprep.subr.mxu0 0.0
        %2906 = vmatpush2.msra.mxu0 %v2724
        %2907 = vmatprep.mubr.f32.mxu0 %v2677
        %2908 = vmatmul.mubr.f32.gmra.mxu0 %v2676
        %v2909 = vpop.f32.mrf.mxu0
        %v2910 = vadd.f32 %v2841, %v2909
        %v2911 = vpop.f32.mrf.mxu0
        %2912 = vmatprep.mubr.f32.mxu0 %v2685
        %2913 = vmatmul.mubr.f32.gmra.mxu0 %v2684
        %v2914 = vpop.f32.mrf.mxu0
        %v2915 = vadd.f32 %v2841, %v2914
        %v2916 = vpop.f32.mrf.mxu0
        %2917 = vmatprep.mubr.f32.mxu0 %v2693
        %2918 = vmatmul.mubr.f32.gmra.mxu0 %v2692
        %v2919 = vpop.f32.mrf.mxu0
        %v2920 = vadd.f32 %v2841, %v2919
        %v2921 = vpop.f32.mrf.mxu0
        %2922 = vmatprep.mubr.f32.mxu0 %v2701
        %2923 = vmatmul.mubr.f32.gmra.mxu0 %v2700
        %v2924 = vpop.f32.mrf.mxu0
        %v2925 = vadd.f32 %v2841, %v2924
        %v2926 = vpop.f32.mrf.mxu0
        %2927 = vdwg.mxu0
        %2928 = vmatprep.subr.mxu0 0.0
        %2929 = vmatpush1.msra.mxu0 %v2755
        %2930 = vmatprep.subr.mxu0 0.0
        %2931 = vmatpush1.msra.mxu0 %v2754
        %2932 = vmatprep.subr.mxu0 0.0
        %2933 = vmatpush1.msra.mxu0 %v2753
        %2934 = vmatprep.subr.mxu0 0.0
        %2935 = vmatpush1.msra.mxu0 %v2752
        %2936 = vmatprep.subr.mxu0 0.0
        %2937 = vmatpush1.msra.mxu0 %v2751
        %2938 = vmatprep.subr.mxu0 0.0
        %2939 = vmatpush1.msra.mxu0 %v2750
        %2940 = vmatprep.subr.mxu0 0.0
        %2941 = vmatpush1.msra.mxu0 %v2749
        %2942 = vmatprep.subr.mxu0 0.0
        %2943 = vmatpush1.msra.mxu0 %v2748
        %2944 = vmatprep.subr.mxu0 0.0
        %2945 = vmatpush1.msra.mxu0 %v2747
        %2946 = vmatprep.subr.mxu0 0.0
        %2947 = vmatpush1.msra.mxu0 %v2746
        %2948 = vmatprep.subr.mxu0 0.0
        %2949 = vmatpush1.msra.mxu0 %v2745
        %2950 = vmatprep.subr.mxu0 0.0
        %2951 = vmatpush1.msra.mxu0 %v2744
        %2952 = vmatprep.subr.mxu0 0.0
        %2953 = vmatpush1.msra.mxu0 %v2743
        %2954 = vmatprep.subr.mxu0 0.0
        %2955 = vmatpush1.msra.mxu0 %v2742
        %2956 = vmatprep.subr.mxu0 0.0
        %2957 = vmatpush1.msra.mxu0 %v2741
        %2958 = vmatprep.subr.mxu0 0.0
        %2959 = vmatpush1.msra.mxu0 %v2740
        %2960 = vmatprep.subr.mxu0 0.0
        %2961 = vmatpush2.msra.mxu0 %v2771
        %2962 = vmatprep.subr.mxu0 0.0
        %2963 = vmatpush2.msra.mxu0 %v2770
        %2964 = vmatprep.subr.mxu0 0.0
        %2965 = vmatpush2.msra.mxu0 %v2769
        %2966 = vmatprep.subr.mxu0 0.0
        %2967 = vmatpush2.msra.mxu0 %v2768
        %2968 = vmatprep.subr.mxu0 0.0
        %2969 = vmatpush2.msra.mxu0 %v2767
        %2970 = vmatprep.subr.mxu0 0.0
        %2971 = vmatpush2.msra.mxu0 %v2766
        %2972 = vmatprep.subr.mxu0 0.0
        %2973 = vmatpush2.msra.mxu0 %v2765
        %2974 = vmatprep.subr.mxu0 0.0
        %2975 = vmatpush2.msra.mxu0 %v2764
        %2976 = vmatprep.subr.mxu0 0.0
        %2977 = vmatpush2.msra.mxu0 %v2763
        %2978 = vmatprep.subr.mxu0 0.0
        %2979 = vmatpush2.msra.mxu0 %v2762
        %2980 = vmatprep.subr.mxu0 0.0
        %2981 = vmatpush2.msra.mxu0 %v2761
        %2982 = vmatprep.subr.mxu0 0.0
        %2983 = vmatpush2.msra.mxu0 %v2760
        %2984 = vmatprep.subr.mxu0 0.0
        %2985 = vmatpush2.msra.mxu0 %v2759
        %2986 = vmatprep.subr.mxu0 0.0
        %2987 = vmatpush2.msra.mxu0 %v2758
        %2988 = vmatprep.subr.mxu0 0.0
        %2989 = vmatpush2.msra.mxu0 %v2757
        %2990 = vmatprep.subr.mxu0 0.0
        %2991 = vmatpush2.msra.mxu0 %v2756
        %2992 = vmatprep.mubr.f32.mxu0 %v2679
        %2993 = vmatmul.mubr.f32.gmra.mxu0 %v2678
        %v2994 = vpop.f32.mrf.mxu0
        %v2995 = vadd.f32 %v2910, %v2994
        %v2996 = vpop.f32.mrf.mxu0
        %2997 = vmatprep.mubr.f32.mxu0 %v2687
        %2998 = vmatmul.mubr.f32.gmra.mxu0 %v2686
        %v2999 = vpop.f32.mrf.mxu0
        %v3000 = vadd.f32 %v2915, %v2999
        %v3001 = vpop.f32.mrf.mxu0
        %3002 = vmatprep.mubr.f32.mxu0 %v2695
        %3003 = vmatmul.mubr.f32.gmra.mxu0 %v2694
        %v3004 = vpop.f32.mrf.mxu0
        %v3005 = vadd.f32 %v2920, %v3004
        %v3006 = vpop.f32.mrf.mxu0
        %3007 = vmatprep.mubr.f32.mxu0 %v2703
        %3008 = vmatmul.mubr.f32.gmra.mxu0 %v2702
        %v3009 = vpop.f32.mrf.mxu0
        %v3010 = vadd.f32 %v2925, %v3009
        %v3011 = vpop.f32.mrf.mxu0
        %3012 = vdwg.mxu0
        %3013 = vmatprep.subr.mxu0 0.0
        %3014 = vmatpush1.msra.mxu0 %v2787
        %3015 = vmatprep.subr.mxu0 0.0
        %3016 = vmatpush1.msra.mxu0 %v2786
        %3017 = vmatprep.subr.mxu0 0.0
        %3018 = vmatpush1.msra.mxu0 %v2785
        %3019 = vmatprep.subr.mxu0 0.0
        %3020 = vmatpush1.msra.mxu0 %v2784
        %3021 = vmatprep.subr.mxu0 0.0
        %3022 = vmatpush1.msra.mxu0 %v2783
        %3023 = vmatprep.subr.mxu0 0.0
        %3024 = vmatpush1.msra.mxu0 %v2782
        %3025 = vmatprep.subr.mxu0 0.0
        %3026 = vmatpush1.msra.mxu0 %v2781
        %3027 = vmatprep.subr.mxu0 0.0
        %3028 = vmatpush1.msra.mxu0 %v2780
        %3029 = vmatprep.subr.mxu0 0.0
        %3030 = vmatpush1.msra.mxu0 %v2779
        %3031 = vmatprep.subr.mxu0 0.0
        %3032 = vmatpush1.msra.mxu0 %v2778
        %3033 = vmatprep.subr.mxu0 0.0
        %3034 = vmatpush1.msra.mxu0 %v2777
        %3035 = vmatprep.subr.mxu0 0.0
        %3036 = vmatpush1.msra.mxu0 %v2776
        %3037 = vmatprep.subr.mxu0 0.0
        %3038 = vmatpush1.msra.mxu0 %v2775
        %3039 = vmatprep.subr.mxu0 0.0
        %3040 = vmatpush1.msra.mxu0 %v2774
        %3041 = vmatprep.subr.mxu0 0.0
        %3042 = vmatpush1.msra.mxu0 %v2773
        %3043 = vmatprep.subr.mxu0 0.0
        %3044 = vmatpush1.msra.mxu0 %v2772
        %3045 = vmatprep.subr.mxu0 0.0
        %3046 = vmatpush2.msra.mxu0 %v2803
        %3047 = vmatprep.subr.mxu0 0.0
        %3048 = vmatpush2.msra.mxu0 %v2802
        %3049 = vmatprep.subr.mxu0 0.0
        %3050 = vmatpush2.msra.mxu0 %v2801
        %3051 = vmatprep.subr.mxu0 0.0
        %3052 = vmatpush2.msra.mxu0 %v2800
        %3053 = vmatprep.subr.mxu0 0.0
        %3054 = vmatpush2.msra.mxu0 %v2799
        %3055 = vmatprep.subr.mxu0 0.0
        %3056 = vmatpush2.msra.mxu0 %v2798
        %3057 = vmatprep.subr.mxu0 0.0
        %3058 = vmatpush2.msra.mxu0 %v2797
        %3059 = vmatprep.subr.mxu0 0.0
        %3060 = vmatpush2.msra.mxu0 %v2796
        %3061 = vmatprep.subr.mxu0 0.0
        %3062 = vmatpush2.msra.mxu0 %v2795
        %3063 = vmatprep.subr.mxu0 0.0
        %3064 = vmatpush2.msra.mxu0 %v2794
        %3065 = vmatprep.subr.mxu0 0.0
        %3066 = vmatpush2.msra.mxu0 %v2793
        %3067 = vmatprep.subr.mxu0 0.0
        %3068 = vmatpush2.msra.mxu0 %v2792
        %3069 = vmatprep.subr.mxu0 0.0
        %3070 = vmatpush2.msra.mxu0 %v2791
        %3071 = vmatprep.subr.mxu0 0.0
        %3072 = vmatpush2.msra.mxu0 %v2790
        %3073 = vmatprep.subr.mxu0 0.0
        %3074 = vmatpush2.msra.mxu0 %v2789
        %3075 = vmatprep.subr.mxu0 0.0
        %3076 = vmatpush2.msra.mxu0 %v2788
        %3077 = vmatprep.mubr.f32.mxu0 %v2681
        %3078 = vmatmul.mubr.f32.gmra.mxu0 %v2680
        %v3079 = vpop.f32.mrf.mxu0
        %v3080 = vadd.f32 %v2995, %v3079
        %v3081 = vpop.f32.mrf.mxu0
        %3082 = vmatprep.mubr.f32.mxu0 %v2689
        %3083 = vmatmul.mubr.f32.gmra.mxu0 %v2688
        %v3084 = vpop.f32.mrf.mxu0
        %v3085 = vadd.f32 %v3000, %v3084
        %v3086 = vpop.f32.mrf.mxu0
        %3087 = vmatprep.mubr.f32.mxu0 %v2697
        %3088 = vmatmul.mubr.f32.gmra.mxu0 %v2696
        %v3089 = vpop.f32.mrf.mxu0
        %v3090 = vadd.f32 %v3005, %v3089
        %v3091 = vpop.f32.mrf.mxu0
        %3092 = vmatprep.mubr.f32.mxu0 %v2705
        %3093 = vmatmul.mubr.f32.gmra.mxu0 %v2704
        %v3094 = vpop.f32.mrf.mxu0
        %v3095 = vadd.f32 %v3010, %v3094
        %v3096 = vpop.f32.mrf.mxu0
        %3097 = vdwg.mxu0
        %3098 = vmatprep.subr.mxu0 0.0
        %3099 = vmatpush1.msra.mxu0 %v2819
        %3100 = vmatprep.subr.mxu0 0.0
        %3101 = vmatpush1.msra.mxu0 %v2818
        %3102 = vmatprep.subr.mxu0 0.0
        %3103 = vmatpush1.msra.mxu0 %v2817
        %3104 = vmatprep.subr.mxu0 0.0
        %3105 = vmatpush1.msra.mxu0 %v2816
        %3106 = vmatprep.subr.mxu0 0.0
        %3107 = vmatpush1.msra.mxu0 %v2815
        %3108 = vmatprep.subr.mxu0 0.0
        %3109 = vmatpush1.msra.mxu0 %v2814
        %3110 = vmatprep.subr.mxu0 0.0
        %3111 = vmatpush1.msra.mxu0 %v2813
        %3112 = vmatprep.subr.mxu0 0.0
        %3113 = vmatpush1.msra.mxu0 %v2812
        %3114 = vmatprep.subr.mxu0 0.0
        %3115 = vmatpush1.msra.mxu0 %v2811
        %3116 = vmatprep.subr.mxu0 0.0
        %3117 = vmatpush1.msra.mxu0 %v2810
        %3118 = vmatprep.subr.mxu0 0.0
        %3119 = vmatpush1.msra.mxu0 %v2809
        %3120 = vmatprep.subr.mxu0 0.0
        %3121 = vmatpush1.msra.mxu0 %v2808
        %3122 = vmatprep.subr.mxu0 0.0
        %3123 = vmatpush1.msra.mxu0 %v2807
        %3124 = vmatprep.subr.mxu0 0.0
        %3125 = vmatpush1.msra.mxu0 %v2806
        %3126 = vmatprep.subr.mxu0 0.0
        %3127 = vmatpush1.msra.mxu0 %v2805
        %3128 = vmatprep.subr.mxu0 0.0
        %3129 = vmatpush1.msra.mxu0 %v2804
        %3130 = vmatprep.subr.mxu0 0.0
        %3131 = vmatpush2.msra.mxu0 %v2835
        %3132 = vmatprep.subr.mxu0 0.0
        %3133 = vmatpush2.msra.mxu0 %v2834
        %3134 = vmatprep.subr.mxu0 0.0
        %3135 = vmatpush2.msra.mxu0 %v2833
        %3136 = vmatprep.subr.mxu0 0.0
        %3137 = vmatpush2.msra.mxu0 %v2832
        %3138 = vmatprep.subr.mxu0 0.0
        %3139 = vmatpush2.msra.mxu0 %v2831
        %3140 = vmatprep.subr.mxu0 0.0
        %3141 = vmatpush2.msra.mxu0 %v2830
        %3142 = vmatprep.subr.mxu0 0.0
        %3143 = vmatpush2.msra.mxu0 %v2829
        %3144 = vmatprep.subr.mxu0 0.0
        %3145 = vmatpush2.msra.mxu0 %v2828
        %3146 = vmatprep.subr.mxu0 0.0
        %3147 = vmatpush2.msra.mxu0 %v2827
        %3148 = vmatprep.subr.mxu0 0.0
        %3149 = vmatpush2.msra.mxu0 %v2826
        %3150 = vmatprep.subr.mxu0 0.0
        %3151 = vmatpush2.msra.mxu0 %v2825
        %3152 = vmatprep.subr.mxu0 0.0
        %3153 = vmatpush2.msra.mxu0 %v2824
        %3154 = vmatprep.subr.mxu0 0.0
        %3155 = vmatpush2.msra.mxu0 %v2823
        %3156 = vmatprep.subr.mxu0 0.0
        %3157 = vmatpush2.msra.mxu0 %v2822
        %3158 = vmatprep.subr.mxu0 0.0
        %3159 = vmatpush2.msra.mxu0 %v2821
        %3160 = vmatprep.subr.mxu0 0.0
        %3161 = vmatpush2.msra.mxu0 %v2820
        %3162 = vmatprep.mubr.f32.mxu0 %v2683
        %3163 = vmatmul.mubr.f32.gmra.mxu0 %v2682
        %v3164 = vpop.f32.mrf.mxu0
        %v3165 = vadd.f32 %v3080, %v3164
        %v3166 = vpop.f32.mrf.mxu0
        %3167 = vmatprep.mubr.f32.mxu0 %v2691
        %3168 = vmatmul.mubr.f32.gmra.mxu0 %v2690
        %v3169 = vpop.f32.mrf.mxu0
        %v3170 = vadd.f32 %v3085, %v3169
        %v3171 = vpop.f32.mrf.mxu0
        %3172 = vmatprep.mubr.f32.mxu0 %v2699
        %3173 = vmatmul.mubr.f32.gmra.mxu0 %v2698
        %v3174 = vpop.f32.mrf.mxu0
        %v3175 = vadd.f32 %v3090, %v3174
        %v3176 = vpop.f32.mrf.mxu0
        %3177 = vmatprep.mubr.f32.mxu0 %v2707
        %3178 = vmatmul.mubr.f32.gmra.mxu0 %v2706
        %v3179 = vpop.f32.mrf.mxu0
        %v3180 = vadd.f32 %v3095, %v3179
        %v3181 = vpop.f32.mrf.mxu0
        %3182 = vdwg.mxu0
        %3183 = vst [vmem:[%s284] sm:$0xff] %v3165
        %3184 = vst [vmem:[%s284 + $0x8] sm:$0xff] %v3170
        %3185 = vst [vmem:[%s284 + $0x10] sm:$0xff] %v3175
        %3186 = vst [vmem:[%s284 + $0x18] sm:$0xff] %v3180
        %s3187 = smul.u32 4, %s19
        %p3188 = scmp.lt.s32.totalorder %s3187, 7
        %s3189 = scalar_select %p3188, %s3187, 7
        %s3190 = smul.addr %s3189, 8
        %s3191 = scalar_lea.vmem %s5, %s3190
        // Predicated region
        $region57: #{mlp_forward.1} parent=39 // pred_check
          %p3192 = pneg %p147
        $region58: #{mlp_forward.1} parent=39 // pred_check_branch
          %3194 = sbr.rel (%p3192) target = $region60
        $region59: #{mlp_forward.1} parent=39 // pred_region
          %s3195 = smul.u32 4, %s19
        $region60: #{mlp_forward.1} parent=39 // pred_fallthru
          _
      $region40: #{mlp_forward.1} parent=5 // pred_fallthru
        _
      %p3196 = scmp.le.s32.totalorder 2, %s14
      // Predicated region
      $region61: #{mlp_forward.1} parent=5 // pred_check
        %p3197 = pneg %p3196
      $region62: #{mlp_forward.1} parent=5 // pred_check_branch
        %3199 = sbr.rel (%p3197) target = $region64
      $region63: #{mlp_forward.1} parent=5 // pred_region
        %s3200 = ssub.s32 %s14, 2
        // Predicated region
        $region65: #{mlp_forward.1} parent=63 // pred_check
          %p3201 = pneg %p153
        $region66: #{mlp_forward.1} parent=63 // pred_check_branch
          %3203 = sbr.rel (%p3201) target = $region68
        $region67: #{mlp_forward.1} parent=63 // pred_region
          %s3204 = smul.u32 4, %s20
          %p3205 = scmp.lt.s32.totalorder %s3204, 7
          %s3206 = scalar_select %p3205, %s3204, 7
          %s3207 = smul.addr %s3206, 8
          %s3208 = scalar_lea.vmem %s5, %s3207
        $region68: #{mlp_forward.1} parent=63 // pred_fallthru
          _
      $region64: #{mlp_forward.1} parent=5 // pred_fallthru
        _
    $region6: #{mlp_forward.1} parent=1 // loop_footer
      %s18 = sadd.s32 1, %s14
    $region7: #{mlp_forward.1} parent=1 // loop_footer_branch
      %13 = sbr.rel target = $region3
    $region8: #{mlp_forward.1} parent=1 // loop_exit
      _
    %3209 = vsyncpa [#allocation3], 1
    %s3210 = scalar_lea.sflag [#allocation3], 1
    %3211 = vsyncpa %s3210, 1
    %3212 = vsyncpa [#allocation5], 1
    %3213 = vsyncpa [#allocation8], 1

// kernel: mlp_forward.1
$region0: #{mlp_forward.1}
  #allocation0 [shape = 'u32[]', space=smem, size = 0x4, offset = 0x4, fixed_abs, tag = 'smem constant byte address 0x4 - core index']
  #allocation1 [shape = 'u32[144,128]{1,0:T(1,128)}', space=vmem, size = 0x12000, scoped, tag = 'internal scratch']
  %s0 = inlined_call_operand.vmem [shape: f32[64,896], index: 0, kind: input, shape index: {}]
  %s1 = inlined_call_operand.hbm [shape: f32[896,1024], index: 1, kind: input, shape index: {}]
  %s2 = inlined_call_operand.hbm [shape: f32[1,1024], index: 2, kind: input, shape index: {}]
  %s3 = inlined_call_operand.hbm [shape: f32[1024,128], index: 3, kind: input, shape index: {}]
  %s4 = inlined_call_operand.hbm [shape: f32[1,128], index: 4, kind: input, shape index: {}]
  %s5 = inlined_call_operand.vmem [shape: f32[64,128], index: 5, kind: output, shape index: {}]
  %s6 = sld [smem:[#allocation0]]
  $region69: #{mlp_forward.1} parent=0
    _
  %s8 = ssub.s32 1, %s6
  %s9 = scalar_select 0, %s8, %s6
  $region1: #{mlp_forward.1} parent=0
    #allocation2 [shape = 'u8[3670016]{0}', space=vmem, size = 0x380000, scoped, tag = 'input window, operand 1, single buffered']
    #allocation3 [shape = 's32[2]{0}', space=sflag, size = 0x8, scoped, tag = 'scoped memory for mlp_forward.1']
    #allocation4 [shape = 'u8[4096]{0}', space=vmem, size = 0x1000, scoped, tag = 'input window, operand 2, single buffered']
    #allocation5 [shape = 's32[1]{0}', space=sflag, size = 0x4, scoped, tag = 'scoped memory for mlp_forward.1']
    #allocation6 [shape = 'u8[524288]{0}', space=vmem, size = 0x80000, scoped, tag = 'input window, operand 3, single buffered']
    #allocation7 [shape = 'u8[512]{0}', space=vmem, size = 0x400, scoped, tag = 'input window, operand 4, single buffered']
    #allocation8 [shape = 's32[1]{0}', space=sflag, size = 0x4, scoped, tag = 'scoped memory for mlp_forward.1']
    %10 = vsyncpa [#allocation3], 0
    %11 = vsyncpa [#allocation5], 0
    %12 = vsyncpa [#allocation8], 0
    loop: start=0, step=1, limit=4
    $region2: #{mlp_forward.1} parent=1 // loop_pre_header
      _
    $region3: #{mlp_forward.1} parent=1 // loop_header
      %s14 = sphi 0, %s18
      %p15 = scmp.ge.s32.totalorder %s14, 4
      %s24 = sphi 0, %s26
      %s27 = sphi 0, %s24
      %s28 = sphi 0, %s27
      %s44 = sphi 0, %s28
      %s48 = sphi 0, %s48
      %s50 = sphi 0, %s48
      %s51 = sphi 0, %s50
      %s65 = sphi 0, %s51
      %s69 = sphi 0, %s69
      %s71 = sphi 0, %s69
      %s72 = sphi 0, %s71
      %s86 = sphi 0, %s72
      %s90 = sphi 0, %s90
      %s92 = sphi 0, %s90
      %s93 = sphi 0, %s92
      %s107 = sphi 0, %s93
      %s111 = sphi 0, %s111
      %s113 = sphi 0, %s111
      %s114 = sphi 0, %s113
      %s128 = sphi 0, %s114
      %s134 = sphi 0, %s136
      %s137 = sphi 0, %s134
      %s138 = sphi 0, %s137
      %s154 = sphi 0, %s138
    $region4: #{mlp_forward.1} parent=1 // loop_header_branch
      %17 = sbr.rel (%p15) target = $region8
    $region5: #{mlp_forward.1} parent=1 // loop_body
      %s19 = ssub.s32 %s14, 1
      %s20 = ssub.s32 %s14, 2
      %s21 = sadd.s32 %s14, 1
      %s22 = ssub.s32 %s14, %s21
      %p23 = scmp.eq.s32.totalorder %s22, 0
      %s25 = sadd.s32 %s24, 1
      %s26 = scalar_select %p23, %s24, %s25
      %p29 = pneg %p23
      %p30 = scmp.eq.s32.totalorder %s14, 1
      %p31 = por %p29, %p30
      %p32 = scmp.ne.s32.totalorder %s24, %s27
      %p33 = scmp.eq.s32.totalorder %s14, 0
      %p34 = por %p32, %p33
      %p35 = scmp.ne.s32.totalorder %s24, %s27
      %p36 = scmp.eq.s32.totalorder %s19, 1
      %p37 = por %p35, %p36
      %p38 = scmp.ne.s32.totalorder %s27, %s28
      %p39 = scmp.eq.s32.totalorder %s19, 0
      %p40 = por %p38, %p39
      %p41 = scmp.ne.s32.totalorder %s27, %s28
      %p42 = scmp.eq.s32.totalorder %s20, 1
      %p43 = por %p41, %p42
      %p45 = scmp.ne.s32.totalorder %s28, %s44
      %p46 = scmp.eq.s32.totalorder %s20, 0
      %p47 = por %p45, %p46
      %s49 = sadd.s32 %s48, 1
      %p52 = scmp.eq.s32.totalorder %s14, 1
      %p53 = scmp.ne.s32.totalorder %s48, %s50
      %p54 = scmp.eq.s32.totalorder %s14, 0
      %p55 = por %p53, %p54
      %p56 = scmp.ne.s32.totalorder %s48, %s50
      %p57 = scmp.eq.s32.totalorder %s19, 1
      %p58 = por %p56, %p57
      %p59 = scmp.ne.s32.totalorder %s50, %s51
      %p60 = scmp.eq.s32.totalorder %s19, 0
      %p61 = por %p59, %p60
      %p62 = scmp.ne.s32.totalorder %s50, %s51
      %p63 = scmp.eq.s32.totalorder %s20, 1
      %p64 = por %p62, %p63
      %p66 = scmp.ne.s32.totalorder %s51, %s65
      %p67 = scmp.eq.s32.totalorder %s20, 0
      %p68 = por %p66, %p67
      %s70 = sadd.s32 %s69, 1
      %p73 = scmp.eq.s32.totalorder %s14, 1
      %p74 = scmp.ne.s32.totalorder %s69, %s71
      %p75 = scmp.eq.s32.totalorder %s14, 0
      %p76 = por %p74, %p75
      %p77 = scmp.ne.s32.totalorder %s69, %s71
      %p78 = scmp.eq.s32.totalorder %s19, 1
      %p79 = por %p77, %p78
      %p80 = scmp.ne.s32.totalorder %s71, %s72
      %p81 = scmp.eq.s32.totalorder %s19, 0
      %p82 = por %p80, %p81
      %p83 = scmp.ne.s32.totalorder %s71, %s72
      %p84 = scmp.eq.s32.totalorder %s20, 1
      %p85 = por %p83, %p84
      %p87 = scmp.ne.s32.totalorder %s72, %s86
      %p88 = scmp.eq.s32.totalorder %s20, 0
      %p89 = por %p87, %p88
      %s91 = sadd.s32 %s90, 1
      %p94 = scmp.eq.s32.totalorder %s14, 1
      %p95 = scmp.ne.s32.totalorder %s90, %s92
      %p96 = scmp.eq.s32.totalorder %s14, 0
      %p97 = por %p95, %p96
      %p98 = scmp.ne.s32.totalorder %s90, %s92
      %p99 = scmp.eq.s32.totalorder %s19, 1
      %p100 = por %p98, %p99
      %p101 = scmp.ne.s32.totalorder %s92, %s93
      %p102 = scmp.eq.s32.totalorder %s19, 0
      %p103 = por %p101, %p102
      %p104 = scmp.ne.s32.totalorder %s92, %s93
      %p105 = scmp.eq.s32.totalorder %s20, 1
      %p106 = por %p104, %p105
      %p108 = scmp.ne.s32.totalorder %s93, %s107
      %p109 = scmp.eq.s32.totalorder %s20, 0
      %p110 = por %p108, %p109
      %s112 = sadd.s32 %s111, 1
      %p115 = scmp.eq.s32.totalorder %s14, 1
      %p116 = scmp.ne.s32.totalorder %s111, %s113
      %p117 = scmp.eq.s32.totalorder %s14, 0
      %p118 = por %p116, %p117
      %p119 = scmp.ne.s32.totalorder %s111, %s113
      %p120 = scmp.eq.s32.totalorder %s19, 1
      %p121 = por %p119, %p120
      %p122 = scmp.ne.s32.totalorder %s113, %s114
      %p123 = scmp.eq.s32.totalorder %s19, 0
      %p124 = por %p122, %p123
      %p125 = scmp.ne.s32.totalorder %s113, %s114
      %p126 = scmp.eq.s32.totalorder %s20, 1
      %p127 = por %p125, %p126
      %p129 = scmp.ne.s32.totalorder %s114, %s128
      %p130 = scmp.eq.s32.totalorder %s20, 0
      %p131 = por %p129, %p130
      %s132 = ssub.s32 %s14, %s21
      %p133 = scmp.eq.s32.totalorder %s132, 0
      %s135 = sadd.s32 %s134, 1
      %s136 = scalar_select %p133, %s134, %s135
      %p139 = pneg %p133
      %p140 = scmp.eq.s32.totalorder %s14, 1
      %p141 = por %p139, %p140
      %p142 = scmp.ne.s32.totalorder %s134, %s137
      %p143 = scmp.eq.s32.totalorder %s14, 0
      %p144 = por %p142, %p143
      %p145 = scmp.ne.s32.totalorder %s134, %s137
      %p146 = scmp.eq.s32.totalorder %s19, 1
      %p147 = por %p145, %p146
      %p148 = scmp.ne.s32.totalorder %s137, %s138
      %p149 = scmp.eq.s32.totalorder %s19, 0
      %p150 = por %p148, %p149
      %p151 = scmp.ne.s32.totalorder %s137, %s138
      %p152 = scmp.eq.s32.totalorder %s20, 1
      %p153 = por %p151, %p152
      %p155 = scmp.ne.s32.totalorder %s138, %s154
      %p156 = scmp.eq.s32.totalorder %s20, 0
      %p157 = por %p155, %p156
      %p158 = scmp.le.s32.totalorder 1, %s14
      %p159 = scmp.lt.s32.totalorder %s14, 3
      %p160 = pnand %p158, %p159
      %p161 = pneg %p160
      // Predicated region
      $region9: #{mlp_forward.1} parent=5 // pred_check
        _
      $region10: #{mlp_forward.1} parent=5 // pred_check_branch
        %163 = sbr.rel (%p160) target = $region12
      $region11: #{mlp_forward.1} parent=5 // pred_region
        %s164 = ssub.s32 %s14, 1
        // Predicated region
        $region13: #{mlp_forward.1} parent=11 // pred_check
          %p165 = pneg %p61
        $region14: #{mlp_forward.1} parent=11 // pred_check_branch
          %167 = sbr.rel (%p165) target = $region16
        $region15: #{mlp_forward.1} parent=11 // pred_region
          %s169 = ssub.s32 114688, 114688
          %170 = vsyncadd [#allocation3], %s169
          %s171 = sshll.u32 [#allocation2], 4
          %s172 = int_to_ptr.vmem [resolvable:$true] %s171
          %177 = dma.hbm_to_vmem [thread:$0]  %s1, 114688, %s172, [#allocation3], 1024, 1024, 64
        $region16: #{mlp_forward.1} parent=11 // pred_fallthru
          _
        // Predicated region
        $region17: #{mlp_forward.1} parent=11 // pred_check
          %p178 = pneg %p82
        $region18: #{mlp_forward.1} parent=11 // pred_check_branch
          %180 = sbr.rel (%p178) target = $region20
        $region19: #{mlp_forward.1} parent=11 // pred_region
          %s182 = ssub.s32 128, 128
          %183 = vsyncadd [#allocation5], %s182
          %s185 = sshll.u32 [#allocation4], 4
          %s186 = int_to_ptr.vmem [resolvable:$true] %s185
          %188 = dma.hbm_to_vmem [thread:$0]  %s2, 128, %s186, [#allocation5]
        $region20: #{mlp_forward.1} parent=11 // pred_fallthru
          _
        // Predicated region
        $region21: #{mlp_forward.1} parent=11 // pred_check
          %p189 = pneg %p103
        $region22: #{mlp_forward.1} parent=11 // pred_check_branch
          %191 = sbr.rel (%p189) target = $region24
        $region23: #{mlp_forward.1} parent=11 // pred_region
          %s193 = ssub.s32 16384, 16384
          %194 = vsyncadd [#allocation5], %s193
          %s195 = sshll.u32 [#allocation6], 4
          %s196 = int_to_ptr.vmem [resolvable:$true] %s195
          %201 = dma.hbm_to_vmem [thread:$0]  %s3, 16384, %s196, [#allocation5], 128, 128, 8
        $region24: #{mlp_forward.1} parent=11 // pred_fallthru
          _
        // Predicated region
        $region25: #{mlp_forward.1} parent=11 // pred_check
          %p202 = pneg %p124
        $region26: #{mlp_forward.1} parent=11 // pred_check_branch
          %204 = sbr.rel (%p202) target = $region28
        $region27: #{mlp_forward.1} parent=11 // pred_region
          %s206 = ssub.s32 16, 16
          %207 = vsyncadd [#allocation8], %s206
          %s209 = sshll.u32 [#allocation7], 4
          %s210 = int_to_ptr.vmem [resolvable:$true] %s209
          %212 = dma.hbm_to_vmem [thread:$0]  %s4, 16, %s210, [#allocation8]
        $region28: #{mlp_forward.1} parent=11 // pred_fallthru
          _
      $region12: #{mlp_forward.1} parent=5 // pred_fallthru
        _
      %p213 = scmp.lt.s32.totalorder %s14, 2
      // Predicated region
      $region29: #{mlp_forward.1} parent=5 // pred_check
        %p214 = pneg %p213
      $region30: #{mlp_forward.1} parent=5 // pred_check_branch
        %216 = sbr.rel (%p214) target = $region32
      $region31: #{mlp_forward.1} parent=5 // pred_region
        // Predicated region
        $region33: #{mlp_forward.1} parent=31 // pred_check
          %p217 = pneg %p34
        $region34: #{mlp_forward.1} parent=31 // pred_check_branch
          %219 = sbr.rel (%p217) target = $region36
        $region35: #{mlp_forward.1} parent=31 // pred_region
          %s220 = smul.u32 4, %s14
          %p221 = scmp.lt.s32.totalorder %s220, 7
          %s222 = scalar_select %p221, %s220, 7
          %s223 = smul.addr %s222, 7
          %s224 = smul.addr %s223, 8
          %s225 = scalar_lea.vmem %s0, %s224
          %s226 = smul.u32 4, %s14
        $region36: #{mlp_forward.1} parent=31 // pred_fallthru
          _
      $region32: #{mlp_forward.1} parent=5 // pred_fallthru
        _
      %p227 = scmp.le.s32.totalorder 1, %s14
      %p228 = scmp.lt.s32.totalorder %s14, 3
      %p229 = pnand %p227, %p228
      %p230 = pneg %p229
      // Predicated region
      $region37: #{mlp_forward.1} parent=5 // pred_check
        _
      $region38: #{mlp_forward.1} parent=5 // pred_check_branch
        %232 = sbr.rel (%p229) target = $region40
      $region39: #{mlp_forward.1} parent=5 // pred_region
        %s233 = ssub.s32 %s14, 1
        // Predicated region
        $region41: #{mlp_forward.1} parent=39 // pred_check
          %p234 = pneg %p61
        $region42: #{mlp_forward.1} parent=39 // pred_check_branch
          %236 = sbr.rel (%p234) target = $region44
        $region43: #{mlp_forward.1} parent=39 // pred_region
          %237 = dma.done [#allocation3], 114688
        $region44: #{mlp_forward.1} parent=39 // pred_fallthru
          _
        // Predicated region
        $region45: #{mlp_forward.1} parent=39 // pred_check
          %p238 = pneg %p82
        $region46: #{mlp_forward.1} parent=39 // pred_check_branch
          %240 = sbr.rel (%p238) target = $region48
        $region47: #{mlp_forward.1} parent=39 // pred_region
          %241 = dma.done [#allocation5], 128
        $region48: #{mlp_forward.1} parent=39 // pred_fallthru
          _
        // Predicated region
        $region49: #{mlp_forward.1} parent=39 // pred_check
          %p242 = pneg %p103
        $region50: #{mlp_forward.1} parent=39 // pred_check_branch
          %244 = sbr.rel (%p242) target = $region52
        $region51: #{mlp_forward.1} parent=39 // pred_region
          %245 = dma.done [#allocation5], 16384
        $region52: #{mlp_forward.1} parent=39 // pred_fallthru
          _
        // Predicated region
        $region53: #{mlp_forward.1} parent=39 // pred_check
          %p246 = pneg %p124
        $region54: #{mlp_forward.1} parent=39 // pred_check_branch
          %248 = sbr.rel (%p246) target = $region56
        $region55: #{mlp_forward.1} parent=39 // pred_region
          %249 = dma.done [#allocation8], 16
        $region56: #{mlp_forward.1} parent=39 // pred_fallthru
          _
        %s250 = smul.u32 4, %s19
        %p251 = scmp.lt.s32.totalorder %s250, 7
        %s252 = scalar_select %p251, %s250, 7
        %s253 = smul.addr %s252, 7
        %s254 = smul.addr %s253, 8
        %s255 = scalar_lea.vmem %s0, %s254
        %p256 = pneg %p40
        %p257 = pneg %p37
        %p258 = pneg %p61
        %p259 = pneg %p58
        %p260 = pneg %p82
        %p261 = pneg %p79
        %p262 = pneg %p103
        %p263 = pneg %p100
        %p264 = pneg %p124
        %p265 = pneg %p121
        %p266 = pneg %p150
        %p267 = pneg %p147
        %s268 = smul.u32 4, %s19
        %p269 = scmp.lt.s32.totalorder %s268, 7
        %s270 = scalar_select %p269, %s268, 7
        %s271 = smul.addr %s270, 8
        %s272 = scalar_lea.vmem %s5, %s271
        %s273 = smul.u32 4, %s19
        %p274 = scmp.lt.s32.totalorder %s273, 7
        %s275 = scalar_select %p274, %s273, 7
        %s276 = smul.addr %s275, 7
        %s277 = smul.addr %s276, 8
        %s278 = scalar_lea.vmem %s0, %s277
        %s279 = smul.u32 4, %s19
        %s280 = smul.u32 4, %s19
        %p281 = scmp.lt.s32.totalorder %s280, 7
        %s282 = scalar_select %p281, %s280, 7
        %s283 = smul.addr %s282, 8
        %s284 = scalar_lea.vmem %s5, %s283
        %s285 = smul.u32 4, %s19
        %v286 = vld [vmem:[%s278] sm:$0xff]
        %v287 = vld [vmem:[%s278 + $0x8] sm:$0xff]
        %v288 = vld [vmem:[%s278 + $0x10] sm:$0xff]
        %v289 = vld [vmem:[%s278 + $0x18] sm:$0xff]
        %v290 = vld [vmem:[%s278 + $0x20] sm:$0xff]
        %v291 = vld [vmem:[%s278 + $0x28] sm:$0xff]
        %v292 = vld [vmem:[%s278 + $0x30] sm:$0xff]
        %v293 = vld [vmem:[%s278 + $0x38] sm:$0xff]
        %v294 = vld [vmem:[%s278 + $0x40] sm:$0xff]
        %v295 = vld [vmem:[%s278 + $0x48] sm:$0xff]
        %v296 = vld [vmem:[%s278 + $0x50] sm:$0xff]
        %v297 = vld [vmem:[%s278 + $0x58] sm:$0xff]
        %v298 = vld [vmem:[%s278 + $0x60] sm:$0xff]
        %v299 = vld [vmem:[%s278 + $0x68] sm:$0xff]
        %v300 = vld [vmem:[%s278 + $0x70] sm:$0xff]
        %v301 = vld [vmem:[%s278 + $0x78] sm:$0xff]
        %v302 = vld [vmem:[%s278 + $0x80] sm:$0xff]
        %v303 = vld [vmem:[%s278 + $0x88] sm:$0xff]
        %v304 = vld [vmem:[%s278 + $0x90] sm:$0xff]
        %v305 = vld [vmem:[%s278 + $0x98] sm:$0xff]
        %v306 = vld [vmem:[%s278 + $0xa0] sm:$0xff]
        %v307 = vld [vmem:[%s278 + $0xa8] sm:$0xff]
        %v308 = vld [vmem:[%s278 + $0xb0] sm:$0xff]
        %v309 = vld [vmem:[%s278 + $0xb8] sm:$0xff]
        %v310 = vld [vmem:[%s278 + $0xc0] sm:$0xff]
        %v311 = vld [vmem:[%s278 + $0xc8] sm:$0xff]
        %v312 = vld [vmem:[%s278 + $0xd0] sm:$0xff]
        %v313 = vld [vmem:[%s278 + $0xd8] sm:$0xff]
        %v314 = vld [vmem:[#allocation2] sm:$0xff]
        %v315 = vld [vmem:[#allocation2 + $0x8] sm:$0xff]
        %v316 = vld [vmem:[#allocation2 + $0x10] sm:$0xff]
        %v317 = vld [vmem:[#allocation2 + $0x18] sm:$0xff]
        %v318 = vld [vmem:[#allocation2 + $0x20] sm:$0xff]
        %v319 = vld [vmem:[#allocation2 + $0x28] sm:$0xff]
        %v320 = vld [vmem:[#allocation2 + $0x30] sm:$0xff]
        %v321 = vld [vmem:[#allocation2 + $0x38] sm:$0xff]
        %v322 = vld [vmem:[#allocation2 + $0x40] sm:$0xff]
        %v323 = vld [vmem:[#allocation2 + $0x48] sm:$0xff]
        %v324 = vld [vmem:[#allocation2 + $0x50] sm:$0xff]
        %v325 = vld [vmem:[#allocation2 + $0x58] sm:$0xff]
        %v326 = vld [vmem:[#allocation2 + $0x60] sm:$0xff]
        %v327 = vld [vmem:[#allocation2 + $0x68] sm:$0xff]
        %v328 = vld [vmem:[#allocation2 + $0x70] sm:$0xff]
        %v329 = vld [vmem:[#allocation2 + $0x78] sm:$0xff]
        %v330 = vld [vmem:[#allocation2 + $0x80] sm:$0xff]
        %v331 = vld [vmem:[#allocation2 + $0x88] sm:$0xff]
        %v332 = vld [vmem:[#allocation2 + $0x90] sm:$0xff]
        %v333 = vld [vmem:[#allocation2 + $0x98] sm:$0xff]
        %v334 = vld [vmem:[#allocation2 + $0xa0] sm:$0xff]
        %v335 = vld [vmem:[#allocation2 + $0xa8] sm:$0xff]
        %v336 = vld [vmem:[#allocation2 + $0xb0] sm:$0xff]
        %v337 = vld [vmem:[#allocation2 + $0xb8] sm:$0xff]
        %v338 = vld [vmem:[#allocation2 + $0xc0] sm:$0xff]
        %v339 = vld [vmem:[#allocation2 + $0xc8] sm:$0xff]
        %v340 = vld [vmem:[#allocation2 + $0xd0] sm:$0xff]
        %v341 = vld [vmem:[#allocation2 + $0xd8] sm:$0xff]
        %v342 = vld [vmem:[#allocation2 + $0xe0] sm:$0xff]
        %v343 = vld [vmem:[#allocation2 + $0xe8] sm:$0xff]
        %v344 = vld [vmem:[#allocation2 + $0xf0] sm:$0xff]
        %v345 = vld [vmem:[#allocation2 + $0xf8] sm:$0xff]
        %v346 = vld [vmem:[#allocation2 + $0x100] sm:$0xff]
        %v347 = vld [vmem:[#allocation2 + $0x108] sm:$0xff]
        %v348 = vld [vmem:[#allocation2 + $0x110] sm:$0xff]
        %v349 = vld [vmem:[#allocation2 + $0x118] sm:$0xff]
        %v350 = vld [vmem:[#allocation2 + $0x120] sm:$0xff]
        %v351 = vld [vmem:[#allocation2 + $0x128] sm:$0xff]
        %v352 = vld [vmem:[#allocation2 + $0x130] sm:$0xff]
        %v353 = vld [vmem:[#allocation2 + $0x138] sm:$0xff]
        %v354 = vld [vmem:[#allocation2 + $0x140] sm:$0xff]
        %v355 = vld [vmem:[#allocation2 + $0x148] sm:$0xff]
        %v356 = vld [vmem:[#allocation2 + $0x150] sm:$0xff]
        %v357 = vld [vmem:[#allocation2 + $0x158] sm:$0xff]
        %v358 = vld [vmem:[#allocation2 + $0x160] sm:$0xff]
        %v359 = vld [vmem:[#allocation2 + $0x168] sm:$0xff]
        %v360 = vld [vmem:[#allocation2 + $0x170] sm:$0xff]
        %v361 = vld [vmem:[#allocation2 + $0x178] sm:$0xff]
        %v362 = vld [vmem:[#allocation2 + $0x180] sm:$0xff]
        %v363 = vld [vmem:[#allocation2 + $0x188] sm:$0xff]
        %v364 = vld [vmem:[#allocation2 + $0x190] sm:$0xff]
        %v365 = vld [vmem:[#allocation2 + $0x198] sm:$0xff]
        %v366 = vld [vmem:[#allocation2 + $0x1a0] sm:$0xff]
        %v367 = vld [vmem:[#allocation2 + $0x1a8] sm:$0xff]
        %v368 = vld [vmem:[#allocation2 + $0x1b0] sm:$0xff]
        %v369 = vld [vmem:[#allocation2 + $0x1b8] sm:$0xff]
        %v370 = vld [vmem:[#allocation2 + $0x1c0] sm:$0xff]
        %v371 = vld [vmem:[#allocation2 + $0x1c8] sm:$0xff]
        %v372 = vld [vmem:[#allocation2 + $0x1d0] sm:$0xff]
        %v373 = vld [vmem:[#allocation2 + $0x1d8] sm:$0xff]
        %v374 = vld [vmem:[#allocation2 + $0x1e0] sm:$0xff]
        %v375 = vld [vmem:[#allocation2 + $0x1e8] sm:$0xff]
        %v376 = vld [vmem:[#allocation2 + $0x1f0] sm:$0xff]
        %v377 = vld [vmem:[#allocation2 + $0x1f8] sm:$0xff]
        %v378 = vld [vmem:[#allocation2 + $0x200] sm:$0xff]
        %v379 = vld [vmem:[#allocation2 + $0x208] sm:$0xff]
        %v380 = vld [vmem:[#allocation2 + $0x210] sm:$0xff]
        %v381 = vld [vmem:[#allocation2 + $0x218] sm:$0xff]
        %v382 = vld [vmem:[#allocation2 + $0x220] sm:$0xff]
        %v383 = vld [vmem:[#allocation2 + $0x228] sm:$0xff]
        %v384 = vld [vmem:[#allocation2 + $0x230] sm:$0xff]
        %v385 = vld [vmem:[#allocation2 + $0x238] sm:$0xff]
        %v386 = vld [vmem:[#allocation2 + $0x240] sm:$0xff]
        %v387 = vld [vmem:[#allocation2 + $0x248] sm:$0xff]
        %v388 = vld [vmem:[#allocation2 + $0x250] sm:$0xff]
        %v389 = vld [vmem:[#allocation2 + $0x258] sm:$0xff]
        %v390 = vld [vmem:[#allocation2 + $0x260] sm:$0xff]
        %v391 = vld [vmem:[#allocation2 + $0x268] sm:$0xff]
        %v392 = vld [vmem:[#allocation2 + $0x270] sm:$0xff]
        %v393 = vld [vmem:[#allocation2 + $0x278] sm:$0xff]
        %v394 = vld [vmem:[#allocation2 + $0x280] sm:$0xff]
        %v395 = vld [vmem:[#allocation2 + $0x288] sm:$0xff]
        %v396 = vld [vmem:[#allocation2 + $0x290] sm:$0xff]
        %v397 = vld [vmem:[#allocation2 + $0x298] sm:$0xff]
        %v398 = vld [vmem:[#allocation2 + $0x2a0] sm:$0xff]
        %v399 = vld [vmem:[#allocation2 + $0x2a8] sm:$0xff]
        %v400 = vld [vmem:[#allocation2 + $0x2b0] sm:$0xff]
        %v401 = vld [vmem:[#allocation2 + $0x2b8] sm:$0xff]
        %v402 = vld [vmem:[#allocation2 + $0x2c0] sm:$0xff]
        %v403 = vld [vmem:[#allocation2 + $0x2c8] sm:$0xff]
        %v404 = vld [vmem:[#allocation2 + $0x2d0] sm:$0xff]
        %v405 = vld [vmem:[#allocation2 + $0x2d8] sm:$0xff]
        %v406 = vld [vmem:[#allocation2 + $0x2e0] sm:$0xff]
        %v407 = vld [vmem:[#allocation2 + $0x2e8] sm:$0xff]
        %v408 = vld [vmem:[#allocation2 + $0x2f0] sm:$0xff]
        %v409 = vld [vmem:[#allocation2 + $0x2f8] sm:$0xff]
        %v410 = vld [vmem:[#allocation2 + $0x300] sm:$0xff]
        %v411 = vld [vmem:[#allocation2 + $0x308] sm:$0xff]
        %v412 = vld [vmem:[#allocation2 + $0x310] sm:$0xff]
        %v413 = vld [vmem:[#allocation2 + $0x318] sm:$0xff]
        %v414 = vld [vmem:[#allocation2 + $0x320] sm:$0xff]
        %v415 = vld [vmem:[#allocation2 + $0x328] sm:$0xff]
        %v416 = vld [vmem:[#allocation2 + $0x330] sm:$0xff]
        %v417 = vld [vmem:[#allocation2 + $0x338] sm:$0xff]
        %v418 = vld [vmem:[#allocation2 + $0x340] sm:$0xff]
        %v419 = vld [vmem:[#allocation2 + $0x348] sm:$0xff]
        %v420 = vld [vmem:[#allocation2 + $0x350] sm:$0xff]
        %v421 = vld [vmem:[#allocation2 + $0x358] sm:$0xff]
        %v422 = vld [vmem:[#allocation2 + $0x360] sm:$0xff]
        %v423 = vld [vmem:[#allocation2 + $0x368] sm:$0xff]
        %v424 = vld [vmem:[#allocation2 + $0x370] sm:$0xff]
        %v425 = vld [vmem:[#allocation2 + $0x378] sm:$0xff]
        %v426 = vld [vmem:[#allocation2 + $0x380] sm:$0xff]
        %v427 = vld [vmem:[#allocation2 + $0x388] sm:$0xff]
        %v428 = vld [vmem:[#allocation2 + $0x390] sm:$0xff]
        %v429 = vld [vmem:[#allocation2 + $0x398] sm:$0xff]
        %v430 = vld [vmem:[#allocation2 + $0x3a0] sm:$0xff]
        %v431 = vld [vmem:[#allocation2 + $0x3a8] sm:$0xff]
        %v432 = vld [vmem:[#allocation2 + $0x3b0] sm:$0xff]
        %v433 = vld [vmem:[#allocation2 + $0x3b8] sm:$0xff]
        %v434 = vld [vmem:[#allocation2 + $0x3c0] sm:$0xff]
        %v435 = vld [vmem:[#allocation2 + $0x3c8] sm:$0xff]
        %v436 = vld [vmem:[#allocation2 + $0x3d0] sm:$0xff]
        %v437 = vld [vmem:[#allocation2 + $0x3d8] sm:$0xff]
        %v438 = vld [vmem:[#allocation2 + $0x3e0] sm:$0xff]
        %v439 = vld [vmem:[#allocation2 + $0x3e8] sm:$0xff]
        %v440 = vld [vmem:[#allocation2 + $0x3f0] sm:$0xff]
        %v441 = vld [vmem:[#allocation2 + $0x3f8] sm:$0xff]
        %v442 = vld [vmem:[#allocation2 + $0x400] sm:$0xff]
        %v443 = vld [vmem:[#allocation2 + $0x408] sm:$0xff]
        %v444 = vld [vmem:[#allocation2 + $0x410] sm:$0xff]
        %v445 = vld [vmem:[#allocation2 + $0x418] sm:$0xff]
        %v446 = vld [vmem:[#allocation2 + $0x420] sm:$0xff]
        %v447 = vld [vmem:[#allocation2 + $0x428] sm:$0xff]
        %v448 = vld [vmem:[#allocation2 + $0x430] sm:$0xff]
        %v449 = vld [vmem:[#allocation2 + $0x438] sm:$0xff]
        %v450 = vld [vmem:[#allocation2 + $0x440] sm:$0xff]
        %v451 = vld [vmem:[#allocation2 + $0x448] sm:$0xff]
        %v452 = vld [vmem:[#allocation2 + $0x450] sm:$0xff]
        %v453 = vld [vmem:[#allocation2 + $0x458] sm:$0xff]
        %v454 = vld [vmem:[#allocation2 + $0x460] sm:$0xff]
        %v455 = vld [vmem:[#allocation2 + $0x468] sm:$0xff]
        %v456 = vld [vmem:[#allocation2 + $0x470] sm:$0xff]
        %v457 = vld [vmem:[#allocation2 + $0x478] sm:$0xff]
        %v458 = vld [vmem:[#allocation2 + $0x480] sm:$0xff]
        %v459 = vld [vmem:[#allocation2 + $0x488] sm:$0xff]
        %v460 = vld [vmem:[#allocation2 + $0x490] sm:$0xff]
        %v461 = vld [vmem:[#allocation2 + $0x498] sm:$0xff]
        %v462 = vld [vmem:[#allocation2 + $0x4a0] sm:$0xff]
        %v463 = vld [vmem:[#allocation2 + $0x4a8] sm:$0xff]
        %v464 = vld [vmem:[#allocation2 + $0x4b0] sm:$0xff]
        %v465 = vld [vmem:[#allocation2 + $0x4b8] sm:$0xff]
        %v466 = vld [vmem:[#allocation2 + $0x4c0] sm:$0xff]
        %v467 = vld [vmem:[#allocation2 + $0x4c8] sm:$0xff]
        %v468 = vld [vmem:[#allocation2 + $0x4d0] sm:$0xff]
        %v469 = vld [vmem:[#allocation2 + $0x4d8] sm:$0xff]
        %v470 = vld [vmem:[#allocation2 + $0x4e0] sm:$0xff]
        %v471 = vld [vmem:[#allocation2 + $0x4e8] sm:$0xff]
        %v472 = vld [vmem:[#allocation2 + $0x4f0] sm:$0xff]
        %v473 = vld [vmem:[#allocation2 + $0x4f8] sm:$0xff]
        %v474 = vld [vmem:[#allocation2 + $0x500] sm:$0xff]
        %v475 = vld [vmem:[#allocation2 + $0x508] sm:$0xff]
        %v476 = vld [vmem:[#allocation2 + $0x510] sm:$0xff]
        %v477 = vld [vmem:[#allocation2 + $0x518] sm:$0xff]
        %v478 = vld [vmem:[#allocation2 + $0x520] sm:$0xff]
        %v479 = vld [vmem:[#allocation2 + $0x528] sm:$0xff]
        %v480 = vld [vmem:[#allocation2 + $0x530] sm:$0xff]
        %v481 = vld [vmem:[#allocation2 + $0x538] sm:$0xff]
        %v482 = vld [vmem:[#allocation2 + $0x540] sm:$0xff]
        %v483 = vld [vmem:[#allocation2 + $0x548] sm:$0xff]
        %v484 = vld [vmem:[#allocation2 + $0x550] sm:$0xff]
        %v485 = vld [vmem:[#allocation2 + $0x558] sm:$0xff]
        %v486 = vld [vmem:[#allocation2 + $0x560] sm:$0xff]
        %v487 = vld [vmem:[#allocation2 + $0x568] sm:$0xff]
        %v488 = vld [vmem:[#allocation2 + $0x570] sm:$0xff]
        %v489 = vld [vmem:[#allocation2 + $0x578] sm:$0xff]
        %v490 = vld [vmem:[#allocation2 + $0x580] sm:$0xff]
        %v491 = vld [vmem:[#allocation2 + $0x588] sm:$0xff]
        %v492 = vld [vmem:[#allocation2 + $0x590] sm:$0xff]
        %v493 = vld [vmem:[#allocation2 + $0x598] sm:$0xff]
        %v494 = vld [vmem:[#allocation2 + $0x5a0] sm:$0xff]
        %v495 = vld [vmem:[#allocation2 + $0x5a8] sm:$0xff]
        %v496 = vld [vmem:[#allocation2 + $0x5b0] sm:$0xff]
        %v497 = vld [vmem:[#allocation2 + $0x5b8] sm:$0xff]
        %v498 = vld [vmem:[#allocation2 + $0x5c0] sm:$0xff]
        %v499 = vld [vmem:[#allocation2 + $0x5c8] sm:$0xff]
        %v500 = vld [vmem:[#allocation2 + $0x5d0] sm:$0xff]
        %v501 = vld [vmem:[#allocation2 + $0x5d8] sm:$0xff]
        %v502 = vld [vmem:[#allocation2 + $0x5e0] sm:$0xff]
        %v503 = vld [vmem:[#allocation2 + $0x5e8] sm:$0xff]
        %v504 = vld [vmem:[#allocation2 + $0x5f0] sm:$0xff]
        %v505 = vld [vmem:[#allocation2 + $0x5f8] sm:$0xff]
        %v506 = vld [vmem:[#allocation2 + $0x600] sm:$0xff]
        %v507 = vld [vmem:[#allocation2 + $0x608] sm:$0xff]
        %v508 = vld [vmem:[#allocation2 + $0x610] sm:$0xff]
        %v509 = vld [vmem:[#allocation2 + $0x618] sm:$0xff]
        %v510 = vld [vmem:[#allocation2 + $0x620] sm:$0xff]
        %v511 = vld [vmem:[#allocation2 + $0x628] sm:$0xff]
        %v512 = vld [vmem:[#allocation2 + $0x630] sm:$0xff]
        %v513 = vld [vmem:[#allocation2 + $0x638] sm:$0xff]
        %v514 = vld [vmem:[#allocation2 + $0x640] sm:$0xff]
        %v515 = vld [vmem:[#allocation2 + $0x648] sm:$0xff]
        %v516 = vld [vmem:[#allocation2 + $0x650] sm:$0xff]
        %v517 = vld [vmem:[#allocation2 + $0x658] sm:$0xff]
        %v518 = vld [vmem:[#allocation2 + $0x660] sm:$0xff]
        %v519 = vld [vmem:[#allocation2 + $0x668] sm:$0xff]
        %v520 = vld [vmem:[#allocation2 + $0x670] sm:$0xff]
        %v521 = vld [vmem:[#allocation2 + $0x678] sm:$0xff]
        %v522 = vld [vmem:[#allocation2 + $0x680] sm:$0xff]
        %v523 = vld [vmem:[#allocation2 + $0x688] sm:$0xff]
        %v524 = vld [vmem:[#allocation2 + $0x690] sm:$0xff]
        %v525 = vld [vmem:[#allocation2 + $0x698] sm:$0xff]
        %v526 = vld [vmem:[#allocation2 + $0x6a0] sm:$0xff]
        %v527 = vld [vmem:[#allocation2 + $0x6a8] sm:$0xff]
        %v528 = vld [vmem:[#allocation2 + $0x6b0] sm:$0xff]
        %v529 = vld [vmem:[#allocation2 + $0x6b8] sm:$0xff]
        %v530 = vld [vmem:[#allocation2 + $0x6c0] sm:$0xff]
        %v531 = vld [vmem:[#allocation2 + $0x6c8] sm:$0xff]
        %v532 = vld [vmem:[#allocation2 + $0x6d0] sm:$0xff]
        %v533 = vld [vmem:[#allocation2 + $0x6d8] sm:$0xff]
        %v534 = vld [vmem:[#allocation2 + $0x6e0] sm:$0xff]
        %v535 = vld [vmem:[#allocation2 + $0x6e8] sm:$0xff]
        %v536 = vld [vmem:[#allocation2 + $0x6f0] sm:$0xff]
        %v537 = vld [vmem:[#allocation2 + $0x6f8] sm:$0xff]
        %v538 = vld [vmem:[#allocation2 + $0x700] sm:$0xff]
        %v539 = vld [vmem:[#allocation2 + $0x708] sm:$0xff]
        %v540 = vld [vmem:[#allocation2 + $0x710] sm:$0xff]
        %v541 = vld [vmem:[#allocation2 + $0x718] sm:$0xff]
        %v542 = vld [vmem:[#allocation2 + $0x720] sm:$0xff]
        %v543 = vld [vmem:[#allocation2 + $0x728] sm:$0xff]
        %v544 = vld [vmem:[#allocation2 + $0x730] sm:$0xff]
        %v545 = vld [vmem:[#allocation2 + $0x738] sm:$0xff]
        %v546 = vld [vmem:[#allocation2 + $0x740] sm:$0xff]
        %v547 = vld [vmem:[#allocation2 + $0x748] sm:$0xff]
        %v548 = vld [vmem:[#allocation2 + $0x750] sm:$0xff]
        %v549 = vld [vmem:[#allocation2 + $0x758] sm:$0xff]
        %v550 = vld [vmem:[#allocation2 + $0x760] sm:$0xff]
        %v551 = vld [vmem:[#allocation2 + $0x768] sm:$0xff]
        %v552 = vld [vmem:[#allocation2 + $0x770] sm:$0xff]
        %v553 = vld [vmem:[#allocation2 + $0x778] sm:$0xff]
        %v554 = vld [vmem:[#allocation2 + $0x780] sm:$0xff]
        %v555 = vld [vmem:[#allocation2 + $0x788] sm:$0xff]
        %v556 = vld [vmem:[#allocation2 + $0x790] sm:$0xff]
        %v557 = vld [vmem:[#allocation2 + $0x798] sm:$0xff]
        %v558 = vld [vmem:[#allocation2 + $0x7a0] sm:$0xff]
        %v559 = vld [vmem:[#allocation2 + $0x7a8] sm:$0xff]
        %v560 = vld [vmem:[#allocation2 + $0x7b0] sm:$0xff]
        %v561 = vld [vmem:[#allocation2 + $0x7b8] sm:$0xff]
        %v562 = vld [vmem:[#allocation2 + $0x7c0] sm:$0xff]
        %v563 = vld [vmem:[#allocation2 + $0x7c8] sm:$0xff]
        %v564 = vld [vmem:[#allocation2 + $0x7d0] sm:$0xff]
        %v565 = vld [vmem:[#allocation2 + $0x7d8] sm:$0xff]
        %v566 = vld [vmem:[#allocation2 + $0x7e0] sm:$0xff]
        %v567 = vld [vmem:[#allocation2 + $0x7e8] sm:$0xff]
        %v568 = vld [vmem:[#allocation2 + $0x7f0] sm:$0xff]
        %v569 = vld [vmem:[#allocation2 + $0x7f8] sm:$0xff]
        %v570 = vld [vmem:[#allocation2 + $0x800] sm:$0xff]
        %v571 = vld [vmem:[#allocation2 + $0x808] sm:$0xff]
        %v572 = vld [vmem:[#allocation2 + $0x810] sm:$0xff]
        %v573 = vld [vmem:[#allocation2 + $0x818] sm:$0xff]
        %v574 = vld [vmem:[#allocation2 + $0x820] sm:$0xff]
        %v575 = vld [vmem:[#allocation2 + $0x828] sm:$0xff]
        %v576 = vld [vmem:[#allocation2 + $0x830] sm:$0xff]
        %v577 = vld [vmem:[#allocation2 + $0x838] sm:$0xff]
        %v578 = vld [vmem:[#allocation2 + $0x840] sm:$0xff]
        %v579 = vld [vmem:[#allocation2 + $0x848] sm:$0xff]
        %v580 = vld [vmem:[#allocation2 + $0x850] sm:$0xff]
        %v581 = vld [vmem:[#allocation2 + $0x858] sm:$0xff]
        %v582 = vld [vmem:[#allocation2 + $0x860] sm:$0xff]
        %v583 = vld [vmem:[#allocation2 + $0x868] sm:$0xff]
        %v584 = vld [vmem:[#allocation2 + $0x870] sm:$0xff]
        %v585 = vld [vmem:[#allocation2 + $0x878] sm:$0xff]
        %v586 = vld [vmem:[#allocation2 + $0x880] sm:$0xff]
        %v587 = vld [vmem:[#allocation2 + $0x888] sm:$0xff]
        %v588 = vld [vmem:[#allocation2 + $0x890] sm:$0xff]
        %v589 = vld [vmem:[#allocation2 + $0x898] sm:$0xff]
        %v590 = vld [vmem:[#allocation2 + $0x8a0] sm:$0xff]
        %v591 = vld [vmem:[#allocation2 + $0x8a8] sm:$0xff]
        %v592 = vld [vmem:[#allocation2 + $0x8b0] sm:$0xff]
        %v593 = vld [vmem:[#allocation2 + $0x8b8] sm:$0xff]
        %v594 = vld [vmem:[#allocation2 + $0x8c0] sm:$0xff]
        %v595 = vld [vmem:[#allocation2 + $0x8c8] sm:$0xff]
        %v596 = vld [vmem:[#allocation2 + $0x8d0] sm:$0xff]
        %v597 = vld [vmem:[#allocation2 + $0x8d8] sm:$0xff]
        %v598 = vld [vmem:[#allocation2 + $0x8e0] sm:$0xff]
        %v599 = vld [vmem:[#allocation2 + $0x8e8] sm:$0xff]
        %v600 = vld [vmem:[#allocation2 + $0x8f0] sm:$0xff]
        %v601 = vld [vmem:[#allocation2 + $0x8f8] sm:$0xff]
        %v602 = vld [vmem:[#allocation2 + $0x900] sm:$0xff]
        %v603 = vld [vmem:[#allocation2 + $0x908] sm:$0xff]
        %v604 = vld [vmem:[#allocation2 + $0x910] sm:$0xff]
        %v605 = vld [vmem:[#allocation2 + $0x918] sm:$0xff]
        %v606 = vld [vmem:[#allocation2 + $0x920] sm:$0xff]
        %v607 = vld [vmem:[#allocation2 + $0x928] sm:$0xff]
        %v608 = vld [vmem:[#allocation2 + $0x930] sm:$0xff]
        %v609 = vld [vmem:[#allocation2 + $0x938] sm:$0xff]
        %v610 = vld [vmem:[#allocation2 + $0x940] sm:$0xff]
        %v611 = vld [vmem:[#allocation2 + $0x948] sm:$0xff]
        %v612 = vld [vmem:[#allocation2 + $0x950] sm:$0xff]
        %v613 = vld [vmem:[#allocation2 + $0x958] sm:$0xff]
        %v614 = vld [vmem:[#allocation2 + $0x960] sm:$0xff]
        %v615 = vld [vmem:[#allocation2 + $0x968] sm:$0xff]
        %v616 = vld [vmem:[#allocation2 + $0x970] sm:$0xff]
        %v617 = vld [vmem:[#allocation2 + $0x978] sm:$0xff]
        %v618 = vld [vmem:[#allocation2 + $0x980] sm:$0xff]
        %v619 = vld [vmem:[#allocation2 + $0x988] sm:$0xff]
        %v620 = vld [vmem:[#allocation2 + $0x990] sm:$0xff]
        %v621 = vld [vmem:[#allocation2 + $0x998] sm:$0xff]
        %v622 = vld [vmem:[#allocation2 + $0x9a0] sm:$0xff]
        %v623 = vld [vmem:[#allocation2 + $0x9a8] sm:$0xff]
        %v624 = vld [vmem:[#allocation2 + $0x9b0] sm:$0xff]
        %v625 = vld [vmem:[#allocation2 + $0x9b8] sm:$0xff]
        %v626 = vld [vmem:[#allocation2 + $0x9c0] sm:$0xff]
        %v627 = vld [vmem:[#allocation2 + $0x9c8] sm:$0xff]
        %v628 = vld [vmem:[#allocation2 + $0x9d0] sm:$0xff]
        %v629 = vld [vmem:[#allocation2 + $0x9d8] sm:$0xff]
        %v630 = vld [vmem:[#allocation2 + $0x9e0] sm:$0xff]
        %v631 = vld [vmem:[#allocation2 + $0x9e8] sm:$0xff]
        %v632 = vld [vmem:[#allocation2 + $0x9f0] sm:$0xff]
        %v633 = vld [vmem:[#allocation2 + $0x9f8] sm:$0xff]
        %v634 = vld [vmem:[#allocation2 + $0xa00] sm:$0xff]
        %v635 = vld [vmem:[#allocation2 + $0xa08] sm:$0xff]
        %v636 = vld [vmem:[#allocation2 + $0xa10] sm:$0xff]
        %v637 = vld [vmem:[#allocation2 + $0xa18] sm:$0xff]
        %v638 = vld [vmem:[#allocation2 + $0xa20] sm:$0xff]
        %v639 = vld [vmem:[#allocation2 + $0xa28] sm:$0xff]
        %v640 = vld [vmem:[#allocation2 + $0xa30] sm:$0xff]
        %v641 = vld [vmem:[#allocation2 + $0xa38] sm:$0xff]
        %v642 = vld [vmem:[#allocation2 + $0xa40] sm:$0xff]
        %v643 = vld [vmem:[#allocation2 + $0xa48] sm:$0xff]
        %v644 = vld [vmem:[#allocation2 + $0xa50] sm:$0xff]
        %v645 = vld [vmem:[#allocation2 + $0xa58] sm:$0xff]
        %v646 = vld [vmem:[#allocation2 + $0xa60] sm:$0xff]
        %v647 = vld [vmem:[#allocation2 + $0xa68] sm:$0xff]
        %v648 = vld [vmem:[#allocation2 + $0xa70] sm:$0xff]
        %v649 = vld [vmem:[#allocation2 + $0xa78] sm:$0xff]
        %v650 = vld [vmem:[#allocation2 + $0xa80] sm:$0xff]
        %v651 = vld [vmem:[#allocation2 + $0xa88] sm:$0xff]
        %v652 = vld [vmem:[#allocation2 + $0xa90] sm:$0xff]
        %v653 = vld [vmem:[#allocation2 + $0xa98] sm:$0xff]
        %v654 = vld [vmem:[#allocation2 + $0xaa0] sm:$0xff]
        %v655 = vld [vmem:[#allocation2 + $0xaa8] sm:$0xff]
        %v656 = vld [vmem:[#allocation2 + $0xab0] sm:$0xff]
        %v657 = vld [vmem:[#allocation2 + $0xab8] sm:$0xff]
        %v658 = vld [vmem:[#allocation2 + $0xac0] sm:$0xff]
        %v659 = vld [vmem:[#allocation2 + $0xac8] sm:$0xff]
        %v660 = vld [vmem:[#allocation2 + $0xad0] sm:$0xff]
        %v661 = vld [vmem:[#allocation2 + $0xad8] sm:$0xff]
        %v662 = vld [vmem:[#allocation2 + $0xae0] sm:$0xff]
        %v663 = vld [vmem:[#allocation2 + $0xae8] sm:$0xff]
        %v664 = vld [vmem:[#allocation2 + $0xaf0] sm:$0xff]
        %v665 = vld [vmem:[#allocation2 + $0xaf8] sm:$0xff]
        %v666 = vld [vmem:[#allocation2 + $0xb00] sm:$0xff]
        %v667 = vld [vmem:[#allocation2 + $0xb08] sm:$0xff]
        %v668 = vld [vmem:[#allocation2 + $0xb10] sm:$0xff]
        %v669 = vld [vmem:[#allocation2 + $0xb18] sm:$0xff]
        %v670 = vld [vmem:[#allocation2 + $0xb20] sm:$0xff]
        %v671 = vld [vmem:[#allocation2 + $0xb28] sm:$0xff]
        %v672 = vld [vmem:[#allocation2 + $0xb30] sm:$0xff]
        %v673 = vld [vmem:[#allocation2 + $0xb38] sm:$0xff]
        %v674 = vld [vmem:[#allocation2 + $0xb40] sm:$0xff]
        %v675 = vld [vmem:[#allocation2 + $0xb48] sm:$0xff]
        %v676 = vld [vmem:[#allocation2 + $0xb50] sm:$0xff]
        %v677 = vld [vmem:[#allocation2 + $0xb58] sm:$0xff]
        %v678 = vld [vmem:[#allocation2 + $0xb60] sm:$0xff]
        %v679 = vld [vmem:[#allocation2 + $0xb68] sm:$0xff]
        %v680 = vld [vmem:[#allocation2 + $0xb70] sm:$0xff]
        %v681 = vld [vmem:[#allocation2 + $0xb78] sm:$0xff]
        %v682 = vld [vmem:[#allocation2 + $0xb80] sm:$0xff]
        %v683 = vld [vmem:[#allocation2 + $0xb88] sm:$0xff]
        %v684 = vld [vmem:[#allocation2 + $0xb90] sm:$0xff]
        %v685 = vld [vmem:[#allocation2 + $0xb98] sm:$0xff]
        %v686 = vld [vmem:[#allocation2 + $0xba0] sm:$0xff]
        %v687 = vld [vmem:[#allocation2 + $0xba8] sm:$0xff]
        %v688 = vld [vmem:[#allocation2 + $0xbb0] sm:$0xff]
        %v689 = vld [vmem:[#allocation2 + $0xbb8] sm:$0xff]
        %v690 = vld [vmem:[#allocation2 + $0xbc0] sm:$0xff]
        %v691 = vld [vmem:[#allocation2 + $0xbc8] sm:$0xff]
        %v692 = vld [vmem:[#allocation2 + $0xbd0] sm:$0xff]
        %v693 = vld [vmem:[#allocation2 + $0xbd8] sm:$0xff]
        %v694 = vld [vmem:[#allocation2 + $0xbe0] sm:$0xff]
        %v695 = vld [vmem:[#allocation2 + $0xbe8] sm:$0xff]
        %v696 = vld [vmem:[#allocation2 + $0xbf0] sm:$0xff]
        %v697 = vld [vmem:[#allocation2 + $0xbf8] sm:$0xff]
        %v698 = vld [vmem:[#allocation2 + $0xc00] sm:$0xff]
        %v699 = vld [vmem:[#allocation2 + $0xc08] sm:$0xff]
        %v700 = vld [vmem:[#allocation2 + $0xc10] sm:$0xff]
        %v701 = vld [vmem:[#allocation2 + $0xc18] sm:$0xff]
        %v702 = vld [vmem:[#allocation2 + $0xc20] sm:$0xff]
        %v703 = vld [vmem:[#allocation2 + $0xc28] sm:$0xff]
        %v704 = vld [vmem:[#allocation2 + $0xc30] sm:$0xff]
        %v705 = vld [vmem:[#allocation2 + $0xc38] sm:$0xff]
        %v706 = vld [vmem:[#allocation2 + $0xc40] sm:$0xff]
        %v707 = vld [vmem:[#allocation2 + $0xc48] sm:$0xff]
        %v708 = vld [vmem:[#allocation2 + $0xc50] sm:$0xff]
        %v709 = vld [vmem:[#allocation2 + $0xc58] sm:$0xff]
        %v710 = vld [vmem:[#allocation2 + $0xc60] sm:$0xff]
        %v711 = vld [vmem:[#allocation2 + $0xc68] sm:$0xff]
        %v712 = vld [vmem:[#allocation2 + $0xc70] sm:$0xff]
        %v713 = vld [vmem:[#allocation2 + $0xc78] sm:$0xff]
        %v714 = vld [vmem:[#allocation2 + $0xc80] sm:$0xff]
        %v715 = vld [vmem:[#allocation2 + $0xc88] sm:$0xff]
        %v716 = vld [vmem:[#allocation2 + $0xc90] sm:$0xff]
        %v717 = vld [vmem:[#allocation2 + $0xc98] sm:$0xff]
        %v718 = vld [vmem:[#allocation2 + $0xca0] sm:$0xff]
        %v719 = vld [vmem:[#allocation2 + $0xca8] sm:$0xff]
        %v720 = vld [vmem:[#allocation2 + $0xcb0] sm:$0xff]
        %v721 = vld [vmem:[#allocation2 + $0xcb8] sm:$0xff]
        %v722 = vld [vmem:[#allocation2 + $0xcc0] sm:$0xff]
        %v723 = vld [vmem:[#allocation2 + $0xcc8] sm:$0xff]
        %v724 = vld [vmem:[#allocation2 + $0xcd0] sm:$0xff]
        %v725 = vld [vmem:[#allocation2 + $0xcd8] sm:$0xff]
        %v726 = vld [vmem:[#allocation2 + $0xce0] sm:$0xff]
        %v727 = vld [vmem:[#allocation2 + $0xce8] sm:$0xff]
        %v728 = vld [vmem:[#allocation2 + $0xcf0] sm:$0xff]
        %v729 = vld [vmem:[#allocation2 + $0xcf8] sm:$0xff]
        %v730 = vld [vmem:[#allocation2 + $0xd00] sm:$0xff]
        %v731 = vld [vmem:[#allocation2 + $0xd08] sm:$0xff]
        %v732 = vld [vmem:[#allocation2 + $0xd10] sm:$0xff]
        %v733 = vld [vmem:[#allocation2 + $0xd18] sm:$0xff]
        %v734 = vld [vmem:[#allocation2 + $0xd20] sm:$0xff]
        %v735 = vld [vmem:[#allocation2 + $0xd28] sm:$0xff]
        %v736 = vld [vmem:[#allocation2 + $0xd30] sm:$0xff]
        %v737 = vld [vmem:[#allocation2 + $0xd38] sm:$0xff]
        %v738 = vld [vmem:[#allocation2 + $0xd40] sm:$0xff]
        %v739 = vld [vmem:[#allocation2 + $0xd48] sm:$0xff]
        %v740 = vld [vmem:[#allocation2 + $0xd50] sm:$0xff]
        %v741 = vld [vmem:[#allocation2 + $0xd58] sm:$0xff]
        %v742 = vld [vmem:[#allocation2 + $0xd60] sm:$0xff]
        %v743 = vld [vmem:[#allocation2 + $0xd68] sm:$0xff]
        %v744 = vld [vmem:[#allocation2 + $0xd70] sm:$0xff]
        %v745 = vld [vmem:[#allocation2 + $0xd78] sm:$0xff]
        %v746 = vld [vmem:[#allocation2 + $0xd80] sm:$0xff]
        %v747 = vld [vmem:[#allocation2 + $0xd88] sm:$0xff]
        %v748 = vld [vmem:[#allocation2 + $0xd90] sm:$0xff]
        %v749 = vld [vmem:[#allocation2 + $0xd98] sm:$0xff]
        %v750 = vld [vmem:[#allocation2 + $0xda0] sm:$0xff]
        %v751 = vld [vmem:[#allocation2 + $0xda8] sm:$0xff]
        %v752 = vld [vmem:[#allocation2 + $0xdb0] sm:$0xff]
        %v753 = vld [vmem:[#allocation2 + $0xdb8] sm:$0xff]
        %v754 = vld [vmem:[#allocation2 + $0xdc0] sm:$0xff]
        %v755 = vld [vmem:[#allocation2 + $0xdc8] sm:$0xff]
        %v756 = vld [vmem:[#allocation2 + $0xdd0] sm:$0xff]
        %v757 = vld [vmem:[#allocation2 + $0xdd8] sm:$0xff]
        %v758 = vld [vmem:[#allocation2 + $0xde0] sm:$0xff]
        %v759 = vld [vmem:[#allocation2 + $0xde8] sm:$0xff]
        %v760 = vld [vmem:[#allocation2 + $0xdf0] sm:$0xff]
        %v761 = vld [vmem:[#allocation2 + $0xdf8] sm:$0xff]
        %v762 = vld [vmem:[#allocation2 + $0xe00] sm:$0xff]
        %v763 = vld [vmem:[#allocation2 + $0xe08] sm:$0xff]
        %v764 = vld [vmem:[#allocation2 + $0xe10] sm:$0xff]
        %v765 = vld [vmem:[#allocation2 + $0xe18] sm:$0xff]
        %v766 = vld [vmem:[#allocation2 + $0xe20] sm:$0xff]
        %v767 = vld [vmem:[#allocation2 + $0xe28] sm:$0xff]
        %v768 = vld [vmem:[#allocation2 + $0xe30] sm:$0xff]
        %v769 = vld [vmem:[#allocation2 + $0xe38] sm:$0xff]
        %v770 = vld [vmem:[#allocation2 + $0xe40] sm:$0xff]
        %v771 = vld [vmem:[#allocation2 + $0xe48] sm:$0xff]
        %v772 = vld [vmem:[#allocation2 + $0xe50] sm:$0xff]
        %v773 = vld [vmem:[#allocation2 + $0xe58] sm:$0xff]
        %v774 = vld [vmem:[#allocation2 + $0xe60] sm:$0xff]
        %v775 = vld [vmem:[#allocation2 + $0xe68] sm:$0xff]
        %v776 = vld [vmem:[#allocation2 + $0xe70] sm:$0xff]
        %v777 = vld [vmem:[#allocation2 + $0xe78] sm:$0xff]
        %v778 = vld [vmem:[#allocation2 + $0xe80] sm:$0xff]
        %v779 = vld [vmem:[#allocation2 + $0xe88] sm:$0xff]
        %v780 = vld [vmem:[#allocation2 + $0xe90] sm:$0xff]
        %v781 = vld [vmem:[#allocation2 + $0xe98] sm:$0xff]
        %v782 = vld [vmem:[#allocation2 + $0xea0] sm:$0xff]
        %v783 = vld [vmem:[#allocation2 + $0xea8] sm:$0xff]
        %v784 = vld [vmem:[#allocation2 + $0xeb0] sm:$0xff]
        %v785 = vld [vmem:[#allocation2 + $0xeb8] sm:$0xff]
        %v786 = vld [vmem:[#allocation2 + $0xec0] sm:$0xff]
        %v787 = vld [vmem:[#allocation2 + $0xec8] sm:$0xff]
        %v788 = vld [vmem:[#allocation2 + $0xed0] sm:$0xff]
        %v789 = vld [vmem:[#allocation2 + $0xed8] sm:$0xff]
        %v790 = vld [vmem:[#allocation2 + $0xee0] sm:$0xff]
        %v791 = vld [vmem:[#allocation2 + $0xee8] sm:$0xff]
        %v792 = vld [vmem:[#allocation2 + $0xef0] sm:$0xff]
        %v793 = vld [vmem:[#allocation2 + $0xef8] sm:$0xff]
        %v794 = vld [vmem:[#allocation2 + $0xf00] sm:$0xff]
        %v795 = vld [vmem:[#allocation2 + $0xf08] sm:$0xff]
        %v796 = vld [vmem:[#allocation2 + $0xf10] sm:$0xff]
        %v797 = vld [vmem:[#allocation2 + $0xf18] sm:$0xff]
        %v798 = vld [vmem:[#allocation2 + $0xf20] sm:$0xff]
        %v799 = vld [vmem:[#allocation2 + $0xf28] sm:$0xff]
        %v800 = vld [vmem:[#allocation2 + $0xf30] sm:$0xff]
        %v801 = vld [vmem:[#allocation2 + $0xf38] sm:$0xff]
        %v802 = vld [vmem:[#allocation2 + $0xf40] sm:$0xff]
        %v803 = vld [vmem:[#allocation2 + $0xf48] sm:$0xff]
        %v804 = vld [vmem:[#allocation2 + $0xf50] sm:$0xff]
        %v805 = vld [vmem:[#allocation2 + $0xf58] sm:$0xff]
        %v806 = vld [vmem:[#allocation2 + $0xf60] sm:$0xff]
        %v807 = vld [vmem:[#allocation2 + $0xf68] sm:$0xff]
        %v808 = vld [vmem:[#allocation2 + $0xf70] sm:$0xff]
        %v809 = vld [vmem:[#allocation2 + $0xf78] sm:$0xff]
        %v810 = vld [vmem:[#allocation2 + $0xf80] sm:$0xff]
        %v811 = vld [vmem:[#allocation2 + $0xf88] sm:$0xff]
        %v812 = vld [vmem:[#allocation2 + $0xf90] sm:$0xff]
        %v813 = vld [vmem:[#allocation2 + $0xf98] sm:$0xff]
        %v814 = vld [vmem:[#allocation2 + $0xfa0] sm:$0xff]
        %v815 = vld [vmem:[#allocation2 + $0xfa8] sm:$0xff]
        %v816 = vld [vmem:[#allocation2 + $0xfb0] sm:$0xff]
        %v817 = vld [vmem:[#allocation2 + $0xfb8] sm:$0xff]
        %v818 = vld [vmem:[#allocation2 + $0xfc0] sm:$0xff]
        %v819 = vld [vmem:[#allocation2 + $0xfc8] sm:$0xff]
        %v820 = vld [vmem:[#allocation2 + $0xfd0] sm:$0xff]
        %v821 = vld [vmem:[#allocation2 + $0xfd8] sm:$0xff]
        %v822 = vld [vmem:[#allocation2 + $0xfe0] sm:$0xff]
        %v823 = vld [vmem:[#allocation2 + $0xfe8] sm:$0xff]
        %v824 = vld [vmem:[#allocation2 + $0xff0] sm:$0xff]
        %v825 = vld [vmem:[#allocation2 + $0xff8] sm:$0xff]
        %v826 = vld [vmem:[#allocation2 + $0x1000] sm:$0xff]
        %v827 = vld [vmem:[#allocation2 + $0x1008] sm:$0xff]
        %v828 = vld [vmem:[#allocation2 + $0x1010] sm:$0xff]
        %v829 = vld [vmem:[#allocation2 + $0x1018] sm:$0xff]
        %v830 = vld [vmem:[#allocation2 + $0x1020] sm:$0xff]
        %v831 = vld [vmem:[#allocation2 + $0x1028] sm:$0xff]
        %v832 = vld [vmem:[#allocation2 + $0x1030] sm:$0xff]
        %v833 = vld [vmem:[#allocation2 + $0x1038] sm:$0xff]
        %v834 = vld [vmem:[#allocation2 + $0x1040] sm:$0xff]
        %v835 = vld [vmem:[#allocation2 + $0x1048] sm:$0xff]
        %v836 = vld [vmem:[#allocation2 + $0x1050] sm:$0xff]
        %v837 = vld [vmem:[#allocation2 + $0x1058] sm:$0xff]
        %v838 = vld [vmem:[#allocation2 + $0x1060] sm:$0xff]
        %v839 = vld [vmem:[#allocation2 + $0x1068] sm:$0xff]
        %v840 = vld [vmem:[#allocation2 + $0x1070] sm:$0xff]
        %v841 = vld [vmem:[#allocation2 + $0x1078] sm:$0xff]
        %v842 = vld [vmem:[#allocation2 + $0x1080] sm:$0xff]
        %v843 = vld [vmem:[#allocation2 + $0x1088] sm:$0xff]
        %v844 = vld [vmem:[#allocation2 + $0x1090] sm:$0xff]
        %v845 = vld [vmem:[#allocation2 + $0x1098] sm:$0xff]
        %v846 = vld [vmem:[#allocation2 + $0x10a0] sm:$0xff]
        %v847 = vld [vmem:[#allocation2 + $0x10a8] sm:$0xff]
        %v848 = vld [vmem:[#allocation2 + $0x10b0] sm:$0xff]
        %v849 = vld [vmem:[#allocation2 + $0x10b8] sm:$0xff]
        %v850 = vld [vmem:[#allocation2 + $0x10c0] sm:$0xff]
        %v851 = vld [vmem:[#allocation2 + $0x10c8] sm:$0xff]
        %v852 = vld [vmem:[#allocation2 + $0x10d0] sm:$0xff]
        %v853 = vld [vmem:[#allocation2 + $0x10d8] sm:$0xff]
        %v854 = vld [vmem:[#allocation2 + $0x10e0] sm:$0xff]
        %v855 = vld [vmem:[#allocation2 + $0x10e8] sm:$0xff]
        %v856 = vld [vmem:[#allocation2 + $0x10f0] sm:$0xff]
        %v857 = vld [vmem:[#allocation2 + $0x10f8] sm:$0xff]
        %v858 = vld [vmem:[#allocation2 + $0x1100] sm:$0xff]
        %v859 = vld [vmem:[#allocation2 + $0x1108] sm:$0xff]
        %v860 = vld [vmem:[#allocation2 + $0x1110] sm:$0xff]
        %v861 = vld [vmem:[#allocation2 + $0x1118] sm:$0xff]
        %v862 = vld [vmem:[#allocation2 + $0x1120] sm:$0xff]
        %v863 = vld [vmem:[#allocation2 + $0x1128] sm:$0xff]
        %v864 = vld [vmem:[#allocation2 + $0x1130] sm:$0xff]
        %v865 = vld [vmem:[#allocation2 + $0x1138] sm:$0xff]
        %v866 = vld [vmem:[#allocation2 + $0x1140] sm:$0xff]
        %v867 = vld [vmem:[#allocation2 + $0x1148] sm:$0xff]
        %v868 = vld [vmem:[#allocation2 + $0x1150] sm:$0xff]
        %v869 = vld [vmem:[#allocation2 + $0x1158] sm:$0xff]
        %v870 = vld [vmem:[#allocation2 + $0x1160] sm:$0xff]
        %v871 = vld [vmem:[#allocation2 + $0x1168] sm:$0xff]
        %v872 = vld [vmem:[#allocation2 + $0x1170] sm:$0xff]
        %v873 = vld [vmem:[#allocation2 + $0x1178] sm:$0xff]
        %v874 = vld [vmem:[#allocation2 + $0x1180] sm:$0xff]
        %v875 = vld [vmem:[#allocation2 + $0x1188] sm:$0xff]
        %v876 = vld [vmem:[#allocation2 + $0x1190] sm:$0xff]
        %v877 = vld [vmem:[#allocation2 + $0x1198] sm:$0xff]
        %v878 = vld [vmem:[#allocation2 + $0x11a0] sm:$0xff]
        %v879 = vld [vmem:[#allocation2 + $0x11a8] sm:$0xff]
        %v880 = vld [vmem:[#allocation2 + $0x11b0] sm:$0xff]
        %v881 = vld [vmem:[#allocation2 + $0x11b8] sm:$0xff]
        %v882 = vld [vmem:[#allocation2 + $0x11c0] sm:$0xff]
        %v883 = vld [vmem:[#allocation2 + $0x11c8] sm:$0xff]
        %v884 = vld [vmem:[#allocation2 + $0x11d0] sm:$0xff]
        %v885 = vld [vmem:[#allocation2 + $0x11d8] sm:$0xff]
        %v886 = vld [vmem:[#allocation2 + $0x11e0] sm:$0xff]
        %v887 = vld [vmem:[#allocation2 + $0x11e8] sm:$0xff]
        %v888 = vld [vmem:[#allocation2 + $0x11f0] sm:$0xff]
        %v889 = vld [vmem:[#allocation2 + $0x11f8] sm:$0xff]
        %v890 = vld [vmem:[#allocation2 + $0x1200] sm:$0xff]
        %v891 = vld [vmem:[#allocation2 + $0x1208] sm:$0xff]
        %v892 = vld [vmem:[#allocation2 + $0x1210] sm:$0xff]
        %v893 = vld [vmem:[#allocation2 + $0x1218] sm:$0xff]
        %v894 = vld [vmem:[#allocation2 + $0x1220] sm:$0xff]
        %v895 = vld [vmem:[#allocation2 + $0x1228] sm:$0xff]
        %v896 = vld [vmem:[#allocation2 + $0x1230] sm:$0xff]
        %v897 = vld [vmem:[#allocation2 + $0x1238] sm:$0xff]
        %v898 = vld [vmem:[#allocation2 + $0x1240] sm:$0xff]
        %v899 = vld [vmem:[#allocation2 + $0x1248] sm:$0xff]
        %v900 = vld [vmem:[#allocation2 + $0x1250] sm:$0xff]
        %v901 = vld [vmem:[#allocation2 + $0x1258] sm:$0xff]
        %v902 = vld [vmem:[#allocation2 + $0x1260] sm:$0xff]
        %v903 = vld [vmem:[#allocation2 + $0x1268] sm:$0xff]
        %v904 = vld [vmem:[#allocation2 + $0x1270] sm:$0xff]
        %v905 = vld [vmem:[#allocation2 + $0x1278] sm:$0xff]
        %v906 = vld [vmem:[#allocation2 + $0x1280] sm:$0xff]
        %v907 = vld [vmem:[#allocation2 + $0x1288] sm:$0xff]
        %v908 = vld [vmem:[#allocation2 + $0x1290] sm:$0xff]
        %v909 = vld [vmem:[#allocation2 + $0x1298] sm:$0xff]
        %v910 = vld [vmem:[#allocation2 + $0x12a0] sm:$0xff]
        %v911 = vld [vmem:[#allocation2 + $0x12a8] sm:$0xff]
        %v912 = vld [vmem:[#allocation2 + $0x12b0] sm:$0xff]
        %v913 = vld [vmem:[#allocation2 + $0x12b8] sm:$0xff]
        %v914 = vld [vmem:[#allocation2 + $0x12c0] sm:$0xff]
        %v915 = vld [vmem:[#allocation2 + $0x12c8] sm:$0xff]
        %v916 = vld [vmem:[#allocation2 + $0x12d0] sm:$0xff]
        %v917 = vld [vmem:[#allocation2 + $0x12d8] sm:$0xff]
        %v918 = vld [vmem:[#allocation2 + $0x12e0] sm:$0xff]
        %v919 = vld [vmem:[#allocation2 + $0x12e8] sm:$0xff]
        %v920 = vld [vmem:[#allocation2 + $0x12f0] sm:$0xff]
        %v921 = vld [vmem:[#allocation2 + $0x12f8] sm:$0xff]
        %v922 = vld [vmem:[#allocation2 + $0x1300] sm:$0xff]
        %v923 = vld [vmem:[#allocation2 + $0x1308] sm:$0xff]
        %v924 = vld [vmem:[#allocation2 + $0x1310] sm:$0xff]
        %v925 = vld [vmem:[#allocation2 + $0x1318] sm:$0xff]
        %v926 = vld [vmem:[#allocation2 + $0x1320] sm:$0xff]
        %v927 = vld [vmem:[#allocation2 + $0x1328] sm:$0xff]
        %v928 = vld [vmem:[#allocation2 + $0x1330] sm:$0xff]
        %v929 = vld [vmem:[#allocation2 + $0x1338] sm:$0xff]
        %v930 = vld [vmem:[#allocation2 + $0x1340] sm:$0xff]
        %v931 = vld [vmem:[#allocation2 + $0x1348] sm:$0xff]
        %v932 = vld [vmem:[#allocation2 + $0x1350] sm:$0xff]
        %v933 = vld [vmem:[#allocation2 + $0x1358] sm:$0xff]
        %v934 = vld [vmem:[#allocation2 + $0x1360] sm:$0xff]
        %v935 = vld [vmem:[#allocation2 + $0x1368] sm:$0xff]
        %v936 = vld [vmem:[#allocation2 + $0x1370] sm:$0xff]
        %v937 = vld [vmem:[#allocation2 + $0x1378] sm:$0xff]
        %v938 = vld [vmem:[#allocation2 + $0x1380] sm:$0xff]
        %v939 = vld [vmem:[#allocation2 + $0x1388] sm:$0xff]
        %v940 = vld [vmem:[#allocation2 + $0x1390] sm:$0xff]
        %v941 = vld [vmem:[#allocation2 + $0x1398] sm:$0xff]
        %v942 = vld [vmem:[#allocation2 + $0x13a0] sm:$0xff]
        %v943 = vld [vmem:[#allocation2 + $0x13a8] sm:$0xff]
        %v944 = vld [vmem:[#allocation2 + $0x13b0] sm:$0xff]
        %v945 = vld [vmem:[#allocation2 + $0x13b8] sm:$0xff]
        %v946 = vld [vmem:[#allocation2 + $0x13c0] sm:$0xff]
        %v947 = vld [vmem:[#allocation2 + $0x13c8] sm:$0xff]
        %v948 = vld [vmem:[#allocation2 + $0x13d0] sm:$0xff]
        %v949 = vld [vmem:[#allocation2 + $0x13d8] sm:$0xff]
        %v950 = vld [vmem:[#allocation2 + $0x13e0] sm:$0xff]
        %v951 = vld [vmem:[#allocation2 + $0x13e8] sm:$0xff]
        %v952 = vld [vmem:[#allocation2 + $0x13f0] sm:$0xff]
        %v953 = vld [vmem:[#allocation2 + $0x13f8] sm:$0xff]
        %v954 = vld [vmem:[#allocation2 + $0x1400] sm:$0xff]
        %v955 = vld [vmem:[#allocation2 + $0x1408] sm:$0xff]
        %v956 = vld [vmem:[#allocation2 + $0x1410] sm:$0xff]
        %v957 = vld [vmem:[#allocation2 + $0x1418] sm:$0xff]
        %v958 = vld [vmem:[#allocation2 + $0x1420] sm:$0xff]
        %v959 = vld [vmem:[#allocation2 + $0x1428] sm:$0xff]
        %v960 = vld [vmem:[#allocation2 + $0x1430] sm:$0xff]
        %v961 = vld [vmem:[#allocation2 + $0x1438] sm:$0xff]
        %v962 = vld [vmem:[#allocation2 + $0x1440] sm:$0xff]
        %v963 = vld [vmem:[#allocation2 + $0x1448] sm:$0xff]
        %v964 = vld [vmem:[#allocation2 + $0x1450] sm:$0xff]
        %v965 = vld [vmem:[#allocation2 + $0x1458] sm:$0xff]
        %v966 = vld [vmem:[#allocation2 + $0x1460] sm:$0xff]
        %v967 = vld [vmem:[#allocation2 + $0x1468] sm:$0xff]
        %v968 = vld [vmem:[#allocation2 + $0x1470] sm:$0xff]
        %v969 = vld [vmem:[#allocation2 + $0x1478] sm:$0xff]
        %v970 = vld [vmem:[#allocation2 + $0x1480] sm:$0xff]
        %v971 = vld [vmem:[#allocation2 + $0x1488] sm:$0xff]
        %v972 = vld [vmem:[#allocation2 + $0x1490] sm:$0xff]
        %v973 = vld [vmem:[#allocation2 + $0x1498] sm:$0xff]
        %v974 = vld [vmem:[#allocation2 + $0x14a0] sm:$0xff]
        %v975 = vld [vmem:[#allocation2 + $0x14a8] sm:$0xff]
        %v976 = vld [vmem:[#allocation2 + $0x14b0] sm:$0xff]
        %v977 = vld [vmem:[#allocation2 + $0x14b8] sm:$0xff]
        %v978 = vld [vmem:[#allocation2 + $0x14c0] sm:$0xff]
        %v979 = vld [vmem:[#allocation2 + $0x14c8] sm:$0xff]
        %v980 = vld [vmem:[#allocation2 + $0x14d0] sm:$0xff]
        %v981 = vld [vmem:[#allocation2 + $0x14d8] sm:$0xff]
        %v982 = vld [vmem:[#allocation2 + $0x14e0] sm:$0xff]
        %v983 = vld [vmem:[#allocation2 + $0x14e8] sm:$0xff]
        %v984 = vld [vmem:[#allocation2 + $0x14f0] sm:$0xff]
        %v985 = vld [vmem:[#allocation2 + $0x14f8] sm:$0xff]
        %v986 = vld [vmem:[#allocation2 + $0x1500] sm:$0xff]
        %v987 = vld [vmem:[#allocation2 + $0x1508] sm:$0xff]
        %v988 = vld [vmem:[#allocation2 + $0x1510] sm:$0xff]
        %v989 = vld [vmem:[#allocation2 + $0x1518] sm:$0xff]
        %v990 = vld [vmem:[#allocation2 + $0x1520] sm:$0xff]
        %v991 = vld [vmem:[#allocation2 + $0x1528] sm:$0xff]
        %v992 = vld [vmem:[#allocation2 + $0x1530] sm:$0xff]
        %v993 = vld [vmem:[#allocation2 + $0x1538] sm:$0xff]
        %v994 = vld [vmem:[#allocation2 + $0x1540] sm:$0xff]
        %v995 = vld [vmem:[#allocation2 + $0x1548] sm:$0xff]
        %v996 = vld [vmem:[#allocation2 + $0x1550] sm:$0xff]
        %v997 = vld [vmem:[#allocation2 + $0x1558] sm:$0xff]
        %v998 = vld [vmem:[#allocation2 + $0x1560] sm:$0xff]
        %v999 = vld [vmem:[#allocation2 + $0x1568] sm:$0xff]
        %v1000 = vld [vmem:[#allocation2 + $0x1570] sm:$0xff]
        %v1001 = vld [vmem:[#allocation2 + $0x1578] sm:$0xff]
        %v1002 = vld [vmem:[#allocation2 + $0x1580] sm:$0xff]
        %v1003 = vld [vmem:[#allocation2 + $0x1588] sm:$0xff]
        %v1004 = vld [vmem:[#allocation2 + $0x1590] sm:$0xff]
        %v1005 = vld [vmem:[#allocation2 + $0x1598] sm:$0xff]
        %v1006 = vld [vmem:[#allocation2 + $0x15a0] sm:$0xff]
        %v1007 = vld [vmem:[#allocation2 + $0x15a8] sm:$0xff]
        %v1008 = vld [vmem:[#allocation2 + $0x15b0] sm:$0xff]
        %v1009 = vld [vmem:[#allocation2 + $0x15b8] sm:$0xff]
        %v1010 = vld [vmem:[#allocation2 + $0x15c0] sm:$0xff]
        %v1011 = vld [vmem:[#allocation2 + $0x15c8] sm:$0xff]
        %v1012 = vld [vmem:[#allocation2 + $0x15d0] sm:$0xff]
        %v1013 = vld [vmem:[#allocation2 + $0x15d8] sm:$0xff]
        %v1014 = vld [vmem:[#allocation2 + $0x15e0] sm:$0xff]
        %v1015 = vld [vmem:[#allocation2 + $0x15e8] sm:$0xff]
        %v1016 = vld [vmem:[#allocation2 + $0x15f0] sm:$0xff]
        %v1017 = vld [vmem:[#allocation2 + $0x15f8] sm:$0xff]
        %v1018 = vld [vmem:[#allocation2 + $0x1600] sm:$0xff]
        %v1019 = vld [vmem:[#allocation2 + $0x1608] sm:$0xff]
        %v1020 = vld [vmem:[#allocation2 + $0x1610] sm:$0xff]
        %v1021 = vld [vmem:[#allocation2 + $0x1618] sm:$0xff]
        %v1022 = vld [vmem:[#allocation2 + $0x1620] sm:$0xff]
        %v1023 = vld [vmem:[#allocation2 + $0x1628] sm:$0xff]
        %v1024 = vld [vmem:[#allocation2 + $0x1630] sm:$0xff]
        %v1025 = vld [vmem:[#allocation2 + $0x1638] sm:$0xff]
        %v1026 = vld [vmem:[#allocation2 + $0x1640] sm:$0xff]
        %v1027 = vld [vmem:[#allocation2 + $0x1648] sm:$0xff]
        %v1028 = vld [vmem:[#allocation2 + $0x1650] sm:$0xff]
        %v1029 = vld [vmem:[#allocation2 + $0x1658] sm:$0xff]
        %v1030 = vld [vmem:[#allocation2 + $0x1660] sm:$0xff]
        %v1031 = vld [vmem:[#allocation2 + $0x1668] sm:$0xff]
        %v1032 = vld [vmem:[#allocation2 + $0x1670] sm:$0xff]
        %v1033 = vld [vmem:[#allocation2 + $0x1678] sm:$0xff]
        %v1034 = vld [vmem:[#allocation2 + $0x1680] sm:$0xff]
        %v1035 = vld [vmem:[#allocation2 + $0x1688] sm:$0xff]
        %v1036 = vld [vmem:[#allocation2 + $0x1690] sm:$0xff]
        %v1037 = vld [vmem:[#allocation2 + $0x1698] sm:$0xff]
        %v1038 = vld [vmem:[#allocation2 + $0x16a0] sm:$0xff]
        %v1039 = vld [vmem:[#allocation2 + $0x16a8] sm:$0xff]
        %v1040 = vld [vmem:[#allocation2 + $0x16b0] sm:$0xff]
        %v1041 = vld [vmem:[#allocation2 + $0x16b8] sm:$0xff]
        %v1042 = vld [vmem:[#allocation2 + $0x16c0] sm:$0xff]
        %v1043 = vld [vmem:[#allocation2 + $0x16c8] sm:$0xff]
        %v1044 = vld [vmem:[#allocation2 + $0x16d0] sm:$0xff]
        %v1045 = vld [vmem:[#allocation2 + $0x16d8] sm:$0xff]
        %v1046 = vld [vmem:[#allocation2 + $0x16e0] sm:$0xff]
        %v1047 = vld [vmem:[#allocation2 + $0x16e8] sm:$0xff]
        %v1048 = vld [vmem:[#allocation2 + $0x16f0] sm:$0xff]
        %v1049 = vld [vmem:[#allocation2 + $0x16f8] sm:$0xff]
        %v1050 = vld [vmem:[#allocation2 + $0x1700] sm:$0xff]
        %v1051 = vld [vmem:[#allocation2 + $0x1708] sm:$0xff]
        %v1052 = vld [vmem:[#allocation2 + $0x1710] sm:$0xff]
        %v1053 = vld [vmem:[#allocation2 + $0x1718] sm:$0xff]
        %v1054 = vld [vmem:[#allocation2 + $0x1720] sm:$0xff]
        %v1055 = vld [vmem:[#allocation2 + $0x1728] sm:$0xff]
        %v1056 = vld [vmem:[#allocation2 + $0x1730] sm:$0xff]
        %v1057 = vld [vmem:[#allocation2 + $0x1738] sm:$0xff]
        %v1058 = vld [vmem:[#allocation2 + $0x1740] sm:$0xff]
        %v1059 = vld [vmem:[#allocation2 + $0x1748] sm:$0xff]
        %v1060 = vld [vmem:[#allocation2 + $0x1750] sm:$0xff]
        %v1061 = vld [vmem:[#allocation2 + $0x1758] sm:$0xff]
        %v1062 = vld [vmem:[#allocation2 + $0x1760] sm:$0xff]
        %v1063 = vld [vmem:[#allocation2 + $0x1768] sm:$0xff]
        %v1064 = vld [vmem:[#allocation2 + $0x1770] sm:$0xff]
        %v1065 = vld [vmem:[#allocation2 + $0x1778] sm:$0xff]
        %v1066 = vld [vmem:[#allocation2 + $0x1780] sm:$0xff]
        %v1067 = vld [vmem:[#allocation2 + $0x1788] sm:$0xff]
        %v1068 = vld [vmem:[#allocation2 + $0x1790] sm:$0xff]
        %v1069 = vld [vmem:[#allocation2 + $0x1798] sm:$0xff]
        %v1070 = vld [vmem:[#allocation2 + $0x17a0] sm:$0xff]
        %v1071 = vld [vmem:[#allocation2 + $0x17a8] sm:$0xff]
        %v1072 = vld [vmem:[#allocation2 + $0x17b0] sm:$0xff]
        %v1073 = vld [vmem:[#allocation2 + $0x17b8] sm:$0xff]
        %v1074 = vld [vmem:[#allocation2 + $0x17c0] sm:$0xff]
        %v1075 = vld [vmem:[#allocation2 + $0x17c8] sm:$0xff]
        %v1076 = vld [vmem:[#allocation2 + $0x17d0] sm:$0xff]
        %v1077 = vld [vmem:[#allocation2 + $0x17d8] sm:$0xff]
        %v1078 = vld [vmem:[#allocation2 + $0x17e0] sm:$0xff]
        %v1079 = vld [vmem:[#allocation2 + $0x17e8] sm:$0xff]
        %v1080 = vld [vmem:[#allocation2 + $0x17f0] sm:$0xff]
        %v1081 = vld [vmem:[#allocation2 + $0x17f8] sm:$0xff]
        %v1082 = vld [vmem:[#allocation2 + $0x1800] sm:$0xff]
        %v1083 = vld [vmem:[#allocation2 + $0x1808] sm:$0xff]
        %v1084 = vld [vmem:[#allocation2 + $0x1810] sm:$0xff]
        %v1085 = vld [vmem:[#allocation2 + $0x1818] sm:$0xff]
        %v1086 = vld [vmem:[#allocation2 + $0x1820] sm:$0xff]
        %v1087 = vld [vmem:[#allocation2 + $0x1828] sm:$0xff]
        %v1088 = vld [vmem:[#allocation2 + $0x1830] sm:$0xff]
        %v1089 = vld [vmem:[#allocation2 + $0x1838] sm:$0xff]
        %v1090 = vld [vmem:[#allocation2 + $0x1840] sm:$0xff]
        %v1091 = vld [vmem:[#allocation2 + $0x1848] sm:$0xff]
        %v1092 = vld [vmem:[#allocation2 + $0x1850] sm:$0xff]
        %v1093 = vld [vmem:[#allocation2 + $0x1858] sm:$0xff]
        %v1094 = vld [vmem:[#allocation2 + $0x1860] sm:$0xff]
        %v1095 = vld [vmem:[#allocation2 + $0x1868] sm:$0xff]
        %v1096 = vld [vmem:[#allocation2 + $0x1870] sm:$0xff]
        %v1097 = vld [vmem:[#allocation2 + $0x1878] sm:$0xff]
        %v1098 = vld [vmem:[#allocation2 + $0x1880] sm:$0xff]
        %v1099 = vld [vmem:[#allocation2 + $0x1888] sm:$0xff]
        %v1100 = vld [vmem:[#allocation2 + $0x1890] sm:$0xff]
        %v1101 = vld [vmem:[#allocation2 + $0x1898] sm:$0xff]
        %v1102 = vld [vmem:[#allocation2 + $0x18a0] sm:$0xff]
        %v1103 = vld [vmem:[#allocation2 + $0x18a8] sm:$0xff]
        %v1104 = vld [vmem:[#allocation2 + $0x18b0] sm:$0xff]
        %v1105 = vld [vmem:[#allocation2 + $0x18b8] sm:$0xff]
        %v1106 = vld [vmem:[#allocation2 + $0x18c0] sm:$0xff]
        %v1107 = vld [vmem:[#allocation2 + $0x18c8] sm:$0xff]
        %v1108 = vld [vmem:[#allocation2 + $0x18d0] sm:$0xff]
        %v1109 = vld [vmem:[#allocation2 + $0x18d8] sm:$0xff]
        %v1110 = vld [vmem:[#allocation2 + $0x18e0] sm:$0xff]
        %v1111 = vld [vmem:[#allocation2 + $0x18e8] sm:$0xff]
        %v1112 = vld [vmem:[#allocation2 + $0x18f0] sm:$0xff]
        %v1113 = vld [vmem:[#allocation2 + $0x18f8] sm:$0xff]
        %v1114 = vld [vmem:[#allocation2 + $0x1900] sm:$0xff]
        %v1115 = vld [vmem:[#allocation2 + $0x1908] sm:$0xff]
        %v1116 = vld [vmem:[#allocation2 + $0x1910] sm:$0xff]
        %v1117 = vld [vmem:[#allocation2 + $0x1918] sm:$0xff]
        %v1118 = vld [vmem:[#allocation2 + $0x1920] sm:$0xff]
        %v1119 = vld [vmem:[#allocation2 + $0x1928] sm:$0xff]
        %v1120 = vld [vmem:[#allocation2 + $0x1930] sm:$0xff]
        %v1121 = vld [vmem:[#allocation2 + $0x1938] sm:$0xff]
        %v1122 = vld [vmem:[#allocation2 + $0x1940] sm:$0xff]
        %v1123 = vld [vmem:[#allocation2 + $0x1948] sm:$0xff]
        %v1124 = vld [vmem:[#allocation2 + $0x1950] sm:$0xff]
        %v1125 = vld [vmem:[#allocation2 + $0x1958] sm:$0xff]
        %v1126 = vld [vmem:[#allocation2 + $0x1960] sm:$0xff]
        %v1127 = vld [vmem:[#allocation2 + $0x1968] sm:$0xff]
        %v1128 = vld [vmem:[#allocation2 + $0x1970] sm:$0xff]
        %v1129 = vld [vmem:[#allocation2 + $0x1978] sm:$0xff]
        %v1130 = vld [vmem:[#allocation2 + $0x1980] sm:$0xff]
        %v1131 = vld [vmem:[#allocation2 + $0x1988] sm:$0xff]
        %v1132 = vld [vmem:[#allocation2 + $0x1990] sm:$0xff]
        %v1133 = vld [vmem:[#allocation2 + $0x1998] sm:$0xff]
        %v1134 = vld [vmem:[#allocation2 + $0x19a0] sm:$0xff]
        %v1135 = vld [vmem:[#allocation2 + $0x19a8] sm:$0xff]
        %v1136 = vld [vmem:[#allocation2 + $0x19b0] sm:$0xff]
        %v1137 = vld [vmem:[#allocation2 + $0x19b8] sm:$0xff]
        %v1138 = vld [vmem:[#allocation2 + $0x19c0] sm:$0xff]
        %v1139 = vld [vmem:[#allocation2 + $0x19c8] sm:$0xff]
        %v1140 = vld [vmem:[#allocation2 + $0x19d0] sm:$0xff]
        %v1141 = vld [vmem:[#allocation2 + $0x19d8] sm:$0xff]
        %v1142 = vld [vmem:[#allocation2 + $0x19e0] sm:$0xff]
        %v1143 = vld [vmem:[#allocation2 + $0x19e8] sm:$0xff]
        %v1144 = vld [vmem:[#allocation2 + $0x19f0] sm:$0xff]
        %v1145 = vld [vmem:[#allocation2 + $0x19f8] sm:$0xff]
        %v1146 = vld [vmem:[#allocation2 + $0x1a00] sm:$0xff]
        %v1147 = vld [vmem:[#allocation2 + $0x1a08] sm:$0xff]
        %v1148 = vld [vmem:[#allocation2 + $0x1a10] sm:$0xff]
        %v1149 = vld [vmem:[#allocation2 + $0x1a18] sm:$0xff]
        %v1150 = vld [vmem:[#allocation2 + $0x1a20] sm:$0xff]
        %v1151 = vld [vmem:[#allocation2 + $0x1a28] sm:$0xff]
        %v1152 = vld [vmem:[#allocation2 + $0x1a30] sm:$0xff]
        %v1153 = vld [vmem:[#allocation2 + $0x1a38] sm:$0xff]
        %v1154 = vld [vmem:[#allocation2 + $0x1a40] sm:$0xff]
        %v1155 = vld [vmem:[#allocation2 + $0x1a48] sm:$0xff]
        %v1156 = vld [vmem:[#allocation2 + $0x1a50] sm:$0xff]
        %v1157 = vld [vmem:[#allocation2 + $0x1a58] sm:$0xff]
        %v1158 = vld [vmem:[#allocation2 + $0x1a60] sm:$0xff]
        %v1159 = vld [vmem:[#allocation2 + $0x1a68] sm:$0xff]
        %v1160 = vld [vmem:[#allocation2 + $0x1a70] sm:$0xff]
        %v1161 = vld [vmem:[#allocation2 + $0x1a78] sm:$0xff]
        %v1162 = vld [vmem:[#allocation2 + $0x1a80] sm:$0xff]
        %v1163 = vld [vmem:[#allocation2 + $0x1a88] sm:$0xff]
        %v1164 = vld [vmem:[#allocation2 + $0x1a90] sm:$0xff]
        %v1165 = vld [vmem:[#allocation2 + $0x1a98] sm:$0xff]
        %v1166 = vld [vmem:[#allocation2 + $0x1aa0] sm:$0xff]
        %v1167 = vld [vmem:[#allocation2 + $0x1aa8] sm:$0xff]
        %v1168 = vld [vmem:[#allocation2 + $0x1ab0] sm:$0xff]
        %v1169 = vld [vmem:[#allocation2 + $0x1ab8] sm:$0xff]
        %v1170 = vld [vmem:[#allocation2 + $0x1ac0] sm:$0xff]
        %v1171 = vld [vmem:[#allocation2 + $0x1ac8] sm:$0xff]
        %v1172 = vld [vmem:[#allocation2 + $0x1ad0] sm:$0xff]
        %v1173 = vld [vmem:[#allocation2 + $0x1ad8] sm:$0xff]
        %v1174 = vld [vmem:[#allocation2 + $0x1ae0] sm:$0xff]
        %v1175 = vld [vmem:[#allocation2 + $0x1ae8] sm:$0xff]
        %v1176 = vld [vmem:[#allocation2 + $0x1af0] sm:$0xff]
        %v1177 = vld [vmem:[#allocation2 + $0x1af8] sm:$0xff]
        %v1178 = vld [vmem:[#allocation2 + $0x1b00] sm:$0xff]
        %v1179 = vld [vmem:[#allocation2 + $0x1b08] sm:$0xff]
        %v1180 = vld [vmem:[#allocation2 + $0x1b10] sm:$0xff]
        %v1181 = vld [vmem:[#allocation2 + $0x1b18] sm:$0xff]
        %v1182 = vld [vmem:[#allocation2 + $0x1b20] sm:$0xff]
        %v1183 = vld [vmem:[#allocation2 + $0x1b28] sm:$0xff]
        %v1184 = vld [vmem:[#allocation2 + $0x1b30] sm:$0xff]
        %v1185 = vld [vmem:[#allocation2 + $0x1b38] sm:$0xff]
        %v1186 = vld [vmem:[#allocation2 + $0x1b40] sm:$0xff]
        %v1187 = vld [vmem:[#allocation2 + $0x1b48] sm:$0xff]
        %v1188 = vld [vmem:[#allocation2 + $0x1b50] sm:$0xff]
        %v1189 = vld [vmem:[#allocation2 + $0x1b58] sm:$0xff]
        %v1190 = vld [vmem:[#allocation2 + $0x1b60] sm:$0xff]
        %v1191 = vld [vmem:[#allocation2 + $0x1b68] sm:$0xff]
        %v1192 = vld [vmem:[#allocation2 + $0x1b70] sm:$0xff]
        %v1193 = vld [vmem:[#allocation2 + $0x1b78] sm:$0xff]
        %v1194 = vld [vmem:[#allocation2 + $0x1b80] sm:$0xff]
        %v1195 = vld [vmem:[#allocation2 + $0x1b88] sm:$0xff]
        %v1196 = vld [vmem:[#allocation2 + $0x1b90] sm:$0xff]
        %v1197 = vld [vmem:[#allocation2 + $0x1b98] sm:$0xff]
        %v1198 = vld [vmem:[#allocation2 + $0x1ba0] sm:$0xff]
        %v1199 = vld [vmem:[#allocation2 + $0x1ba8] sm:$0xff]
        %v1200 = vld [vmem:[#allocation2 + $0x1bb0] sm:$0xff]
        %v1201 = vld [vmem:[#allocation2 + $0x1bb8] sm:$0xff]
        %v1202 = vld [vmem:[#allocation2 + $0x1bc0] sm:$0xff]
        %v1203 = vld [vmem:[#allocation2 + $0x1bc8] sm:$0xff]
        %v1204 = vld [vmem:[#allocation2 + $0x1bd0] sm:$0xff]
        %v1205 = vld [vmem:[#allocation2 + $0x1bd8] sm:$0xff]
        %v1206 = vld [vmem:[#allocation2 + $0x1be0] sm:$0xff]
        %v1207 = vld [vmem:[#allocation2 + $0x1be8] sm:$0xff]
        %v1208 = vld [vmem:[#allocation2 + $0x1bf0] sm:$0xff]
        %v1209 = vld [vmem:[#allocation2 + $0x1bf8] sm:$0xff]
        %v1210 = vld [vmem:[#allocation4] sm:$0xff]
        %v1212 = vlaneseq
        %v1213 = vshrl.u32 %v1212, 7
        %v1214 = vsub.s32 0, %v1213
        %v1215 = vrot.slane %v1210, %v1214
        %v1216 = vlaneseq
        %v1217 = vshrl.u32 %v1216, 7
        %v1218 = vsub.s32 1, %v1217
        %v1219 = vrot.slane %v1210, %v1218
        %v1220 = vlaneseq
        %v1221 = vshrl.u32 %v1220, 7
        %v1222 = vsub.s32 2, %v1221
        %v1223 = vrot.slane %v1210, %v1222
        %v1224 = vlaneseq
        %v1225 = vshrl.u32 %v1224, 7
        %v1226 = vsub.s32 3, %v1225
        %v1227 = vrot.slane %v1210, %v1226
        %v1228 = vlaneseq
        %v1229 = vshrl.u32 %v1228, 7
        %v1230 = vsub.s32 4, %v1229
        %v1231 = vrot.slane %v1210, %v1230
        %v1232 = vlaneseq
        %v1233 = vshrl.u32 %v1232, 7
        %v1234 = vsub.s32 5, %v1233
        %v1235 = vrot.slane %v1210, %v1234
        %v1236 = vlaneseq
        %v1237 = vshrl.u32 %v1236, 7
        %v1238 = vsub.s32 6, %v1237
        %v1239 = vrot.slane %v1210, %v1238
        %v1240 = vlaneseq
        %v1241 = vshrl.u32 %v1240, 7
        %v1242 = vsub.s32 7, %v1241
        %v1243 = vrot.slane %v1210, %v1242
        %1252 = vmatprep.subr.mxu0 %v435
        %1253 = vmatpush1.msra.mxu0 %v434
        %1254 = vmatprep.subr.mxu0 %v427
        %1255 = vmatpush1.msra.mxu0 %v426
        %1256 = vmatprep.subr.mxu0 %v419
        %1257 = vmatpush1.msra.mxu0 %v418
        %1258 = vmatprep.subr.mxu0 %v411
        %1259 = vmatpush1.msra.mxu0 %v410
        %1260 = vmatprep.subr.mxu0 %v403
        %1261 = vmatpush1.msra.mxu0 %v402
        %1262 = vmatprep.subr.mxu0 %v395
        %1263 = vmatpush1.msra.mxu0 %v394
        %1264 = vmatprep.subr.mxu0 %v387
        %1265 = vmatpush1.msra.mxu0 %v386
        %1266 = vmatprep.subr.mxu0 %v379
        %1267 = vmatpush1.msra.mxu0 %v378
        %1268 = vmatprep.subr.mxu0 %v371
        %1269 = vmatpush1.msra.mxu0 %v370
        %1270 = vmatprep.subr.mxu0 %v363
        %1271 = vmatpush1.msra.mxu0 %v362
        %1272 = vmatprep.subr.mxu0 %v355
        %1273 = vmatpush1.msra.mxu0 %v354
        %1274 = vmatprep.subr.mxu0 %v347
        %1275 = vmatpush1.msra.mxu0 %v346
        %1276 = vmatprep.subr.mxu0 %v339
        %1277 = vmatpush1.msra.mxu0 %v338
        %1278 = vmatprep.subr.mxu0 %v331
        %1279 = vmatpush1.msra.mxu0 %v330
        %1280 = vmatprep.subr.mxu0 %v323
        %1281 = vmatpush1.msra.mxu0 %v322
        %1282 = vmatprep.subr.mxu0 %v315
        %1283 = vmatpush1.msra.mxu0 %v314
        %1284 = vmatprep.subr.mxu0 %v563
        %1285 = vmatpush2.msra.mxu0 %v562
        %1286 = vmatprep.subr.mxu0 %v555
        %1287 = vmatpush2.msra.mxu0 %v554
        %1288 = vmatprep.subr.mxu0 %v547
        %1289 = vmatpush2.msra.mxu0 %v546
        %1290 = vmatprep.subr.mxu0 %v539
        %1291 = vmatpush2.msra.mxu0 %v538
        %1292 = vmatprep.subr.mxu0 %v531
        %1293 = vmatpush2.msra.mxu0 %v530
        %1294 = vmatprep.subr.mxu0 %v523
        %1295 = vmatpush2.msra.mxu0 %v522
        %1296 = vmatprep.subr.mxu0 %v515
        %1297 = vmatpush2.msra.mxu0 %v514
        %1298 = vmatprep.subr.mxu0 %v507
        %1299 = vmatpush2.msra.mxu0 %v506
        %1300 = vmatprep.subr.mxu0 %v499
        %1301 = vmatpush2.msra.mxu0 %v498
        %1302 = vmatprep.subr.mxu0 %v491
        %1303 = vmatpush2.msra.mxu0 %v490
        %1304 = vmatprep.subr.mxu0 %v483
        %1305 = vmatpush2.msra.mxu0 %v482
        %1306 = vmatprep.subr.mxu0 %v475
        %1307 = vmatpush2.msra.mxu0 %v474
        %1308 = vmatprep.subr.mxu0 %v467
        %1309 = vmatpush2.msra.mxu0 %v466
        %1310 = vmatprep.subr.mxu0 %v459
        %1311 = vmatpush2.msra.mxu0 %v458
        %1312 = vmatprep.subr.mxu0 %v451
        %1313 = vmatpush2.msra.mxu0 %v450
        %1314 = vmatprep.subr.mxu0 %v443
        %1315 = vmatpush2.msra.mxu0 %v442
        %1316 = vmatprep.mubr.f32.mxu0 %v287
        %1317 = vmatmul.mubr.f32.gmra.mxu0 %v286
        %v1318 = vpop.f32.mrf.mxu0
        %v1319 = vadd.f32 %v1215, %v1318
        %v1320 = vpop.f32.mrf.mxu0
        %v1321 = vadd.f32 %v1219, %v1320
        %1322 = vmatprep.mubr.f32.mxu0 %v294
        %1323 = vmatmul.mubr.f32.gmra.mxu0 %v293
        %v1324 = vpop.f32.mrf.mxu0
        %v1325 = vadd.f32 %v1215, %v1324
        %v1326 = vpop.f32.mrf.mxu0
        %v1327 = vadd.f32 %v1219, %v1326
        %1328 = vmatprep.mubr.f32.mxu0 %v301
        %1329 = vmatmul.mubr.f32.gmra.mxu0 %v300
        %v1330 = vpop.f32.mrf.mxu0
        %v1331 = vadd.f32 %v1215, %v1330
        %v1332 = vpop.f32.mrf.mxu0
        %v1333 = vadd.f32 %v1219, %v1332
        %1334 = vmatprep.mubr.f32.mxu0 %v308
        %1335 = vmatmul.mubr.f32.gmra.mxu0 %v307
        %v1336 = vpop.f32.mrf.mxu0
        %v1337 = vadd.f32 %v1215, %v1336
        %v1338 = vpop.f32.mrf.mxu0
        %v1339 = vadd.f32 %v1219, %v1338
        %1340 = vdwg.mxu0
        %1341 = vmatprep.subr.mxu0 %v691
        %1342 = vmatpush1.msra.mxu0 %v690
        %1343 = vmatprep.subr.mxu0 %v683
        %1344 = vmatpush1.msra.mxu0 %v682
        %1345 = vmatprep.subr.mxu0 %v675
        %1346 = vmatpush1.msra.mxu0 %v674
        %1347 = vmatprep.subr.mxu0 %v667
        %1348 = vmatpush1.msra.mxu0 %v666
        %1349 = vmatprep.subr.mxu0 %v659
        %1350 = vmatpush1.msra.mxu0 %v658
        %1351 = vmatprep.subr.mxu0 %v651
        %1352 = vmatpush1.msra.mxu0 %v650
        %1353 = vmatprep.subr.mxu0 %v643
        %1354 = vmatpush1.msra.mxu0 %v642
        %1355 = vmatprep.subr.mxu0 %v635
        %1356 = vmatpush1.msra.mxu0 %v634
        %1357 = vmatprep.subr.mxu0 %v627
        %1358 = vmatpush1.msra.mxu0 %v626
        %1359 = vmatprep.subr.mxu0 %v619
        %1360 = vmatpush1.msra.mxu0 %v618
        %1361 = vmatprep.subr.mxu0 %v611
        %1362 = vmatpush1.msra.mxu0 %v610
        %1363 = vmatprep.subr.mxu0 %v603
        %1364 = vmatpush1.msra.mxu0 %v602
        %1365 = vmatprep.subr.mxu0 %v595
        %1366 = vmatpush1.msra.mxu0 %v594
        %1367 = vmatprep.subr.mxu0 %v587
        %1368 = vmatpush1.msra.mxu0 %v586
        %1369 = vmatprep.subr.mxu0 %v579
        %1370 = vmatpush1.msra.mxu0 %v578
        %1371 = vmatprep.subr.mxu0 %v571
        %1372 = vmatpush1.msra.mxu0 %v570
        %1373 = vmatprep.subr.mxu0 %v819
        %1374 = vmatpush2.msra.mxu0 %v818
        %1375 = vmatprep.subr.mxu0 %v811
        %1376 = vmatpush2.msra.mxu0 %v810
        %1377 = vmatprep.subr.mxu0 %v803
        %1378 = vmatpush2.msra.mxu0 %v802
        %1379 = vmatprep.subr.mxu0 %v795
        %1380 = vmatpush2.msra.mxu0 %v794
        %1381 = vmatprep.subr.mxu0 %v787
        %1382 = vmatpush2.msra.mxu0 %v786
        %1383 = vmatprep.subr.mxu0 %v779
        %1384 = vmatpush2.msra.mxu0 %v778
        %1385 = vmatprep.subr.mxu0 %v771
        %1386 = vmatpush2.msra.mxu0 %v770
        %1387 = vmatprep.subr.mxu0 %v763
        %1388 = vmatpush2.msra.mxu0 %v762
        %1389 = vmatprep.subr.mxu0 %v755
        %1390 = vmatpush2.msra.mxu0 %v754
        %1391 = vmatprep.subr.mxu0 %v747
        %1392 = vmatpush2.msra.mxu0 %v746
        %1393 = vmatprep.subr.mxu0 %v739
        %1394 = vmatpush2.msra.mxu0 %v738
        %1395 = vmatprep.subr.mxu0 %v731
        %1396 = vmatpush2.msra.mxu0 %v730
        %1397 = vmatprep.subr.mxu0 %v723
        %1398 = vmatpush2.msra.mxu0 %v722
        %1399 = vmatprep.subr.mxu0 %v715
        %1400 = vmatpush2.msra.mxu0 %v714
        %1401 = vmatprep.subr.mxu0 %v707
        %1402 = vmatpush2.msra.mxu0 %v706
        %1403 = vmatprep.subr.mxu0 %v699
        %1404 = vmatpush2.msra.mxu0 %v698
        %1405 = vmatprep.mubr.f32.mxu0 %v289
        %1406 = vmatmul.mubr.f32.gmra.mxu0 %v288
        %v1407 = vpop.f32.mrf.mxu0
        %v1408 = vadd.f32 %v1319, %v1407
        %v1409 = vpop.f32.mrf.mxu0
        %v1410 = vadd.f32 %v1321, %v1409
        %1411 = vmatprep.mubr.f32.mxu0 %v296
        %1412 = vmatmul.mubr.f32.gmra.mxu0 %v295
        %v1413 = vpop.f32.mrf.mxu0
        %v1414 = vadd.f32 %v1325, %v1413
        %v1415 = vpop.f32.mrf.mxu0
        %v1416 = vadd.f32 %v1327, %v1415
        %1417 = vmatprep.mubr.f32.mxu0 %v303
        %1418 = vmatmul.mubr.f32.gmra.mxu0 %v302
        %v1419 = vpop.f32.mrf.mxu0
        %v1420 = vadd.f32 %v1331, %v1419
        %v1421 = vpop.f32.mrf.mxu0
        %v1422 = vadd.f32 %v1333, %v1421
        %1423 = vmatprep.mubr.f32.mxu0 %v310
        %1424 = vmatmul.mubr.f32.gmra.mxu0 %v309
        %v1425 = vpop.f32.mrf.mxu0
        %v1426 = vadd.f32 %v1337, %v1425
        %v1427 = vpop.f32.mrf.mxu0
        %v1428 = vadd.f32 %v1339, %v1427
        %1429 = vdwg.mxu0
        %1430 = vmatprep.subr.mxu0 %v947
        %1431 = vmatpush1.msra.mxu0 %v946
        %1432 = vmatprep.subr.mxu0 %v939
        %1433 = vmatpush1.msra.mxu0 %v938
        %1434 = vmatprep.subr.mxu0 %v931
        %1435 = vmatpush1.msra.mxu0 %v930
        %1436 = vmatprep.subr.mxu0 %v923
        %1437 = vmatpush1.msra.mxu0 %v922
        %1438 = vmatprep.subr.mxu0 %v915
        %1439 = vmatpush1.msra.mxu0 %v914
        %1440 = vmatprep.subr.mxu0 %v907
        %1441 = vmatpush1.msra.mxu0 %v906
        %1442 = vmatprep.subr.mxu0 %v899
        %1443 = vmatpush1.msra.mxu0 %v898
        %1444 = vmatprep.subr.mxu0 %v891
        %1445 = vmatpush1.msra.mxu0 %v890
        %1446 = vmatprep.subr.mxu0 %v883
        %1447 = vmatpush1.msra.mxu0 %v882
        %1448 = vmatprep.subr.mxu0 %v875
        %1449 = vmatpush1.msra.mxu0 %v874
        %1450 = vmatprep.subr.mxu0 %v867
        %1451 = vmatpush1.msra.mxu0 %v866
        %1452 = vmatprep.subr.mxu0 %v859
        %1453 = vmatpush1.msra.mxu0 %v858
        %1454 = vmatprep.subr.mxu0 %v851
        %1455 = vmatpush1.msra.mxu0 %v850
        %1456 = vmatprep.subr.mxu0 %v843
        %1457 = vmatpush1.msra.mxu0 %v842
        %1458 = vmatprep.subr.mxu0 %v835
        %1459 = vmatpush1.msra.mxu0 %v834
        %1460 = vmatprep.subr.mxu0 %v827
        %1461 = vmatpush1.msra.mxu0 %v826
        %1462 = vmatprep.subr.mxu0 %v1075
        %1463 = vmatpush2.msra.mxu0 %v1074
        %1464 = vmatprep.subr.mxu0 %v1067
        %1465 = vmatpush2.msra.mxu0 %v1066
        %1466 = vmatprep.subr.mxu0 %v1059
        %1467 = vmatpush2.msra.mxu0 %v1058
        %1468 = vmatprep.subr.mxu0 %v1051
        %1469 = vmatpush2.msra.mxu0 %v1050
        %1470 = vmatprep.subr.mxu0 %v1043
        %1471 = vmatpush2.msra.mxu0 %v1042
        %1472 = vmatprep.subr.mxu0 %v1035
        %1473 = vmatpush2.msra.mxu0 %v1034
        %1474 = vmatprep.subr.mxu0 %v1027
        %1475 = vmatpush2.msra.mxu0 %v1026
        %1476 = vmatprep.subr.mxu0 %v1019
        %1477 = vmatpush2.msra.mxu0 %v1018
        %1478 = vmatprep.subr.mxu0 %v1011
        %1479 = vmatpush2.msra.mxu0 %v1010
        %1480 = vmatprep.subr.mxu0 %v1003
        %1481 = vmatpush2.msra.mxu0 %v1002
        %1482 = vmatprep.subr.mxu0 %v995
        %1483 = vmatpush2.msra.mxu0 %v994
        %1484 = vmatprep.subr.mxu0 %v987
        %1485 = vmatpush2.msra.mxu0 %v986
        %1486 = vmatprep.subr.mxu0 %v979
        %1487 = vmatpush2.msra.mxu0 %v978
        %1488 = vmatprep.subr.mxu0 %v971
        %1489 = vmatpush2.msra.mxu0 %v970
        %1490 = vmatprep.subr.mxu0 %v963
        %1491 = vmatpush2.msra.mxu0 %v962
        %1492 = vmatprep.subr.mxu0 %v955
        %1493 = vmatpush2.msra.mxu0 %v954
        %1494 = vmatprep.mubr.f32.mxu0 %v291
        %1495 = vmatmul.mubr.f32.gmra.mxu0 %v290
        %v1496 = vpop.f32.mrf.mxu0
        %v1497 = vadd.f32 %v1408, %v1496
        %v1498 = vpop.f32.mrf.mxu0
        %v1499 = vadd.f32 %v1410, %v1498
        %1500 = vmatprep.mubr.f32.mxu0 %v298
        %1501 = vmatmul.mubr.f32.gmra.mxu0 %v297
        %v1502 = vpop.f32.mrf.mxu0
        %v1503 = vadd.f32 %v1414, %v1502
        %v1504 = vpop.f32.mrf.mxu0
        %v1505 = vadd.f32 %v1416, %v1504
        %1506 = vmatprep.mubr.f32.mxu0 %v305
        %1507 = vmatmul.mubr.f32.gmra.mxu0 %v304
        %v1508 = vpop.f32.mrf.mxu0
        %v1509 = vadd.f32 %v1420, %v1508
        %v1510 = vpop.f32.mrf.mxu0
        %v1511 = vadd.f32 %v1422, %v1510
        %1512 = vmatprep.mubr.f32.mxu0 %v312
        %1513 = vmatmul.mubr.f32.gmra.mxu0 %v311
        %v1514 = vpop.f32.mrf.mxu0
        %v1515 = vadd.f32 %v1426, %v1514
        %v1516 = vpop.f32.mrf.mxu0
        %v1517 = vadd.f32 %v1428, %v1516
        %1518 = vdwg.mxu0
        %1519 = vmatprep.subr.mxu0 %v1203
        %1520 = vmatpush1.msra.mxu0 %v1202
        %1521 = vmatprep.subr.mxu0 %v1195
        %1522 = vmatpush1.msra.mxu0 %v1194
        %1523 = vmatprep.subr.mxu0 %v1187
        %1524 = vmatpush1.msra.mxu0 %v1186
        %1525 = vmatprep.subr.mxu0 %v1179
        %1526 = vmatpush1.msra.mxu0 %v1178
        %1527 = vmatprep.subr.mxu0 %v1171
        %1528 = vmatpush1.msra.mxu0 %v1170
        %1529 = vmatprep.subr.mxu0 %v1163
        %1530 = vmatpush1.msra.mxu0 %v1162
        %1531 = vmatprep.subr.mxu0 %v1155
        %1532 = vmatpush1.msra.mxu0 %v1154
        %1533 = vmatprep.subr.mxu0 %v1147
        %1534 = vmatpush1.msra.mxu0 %v1146
        %1535 = vmatprep.subr.mxu0 %v1139
        %1536 = vmatpush1.msra.mxu0 %v1138
        %1537 = vmatprep.subr.mxu0 %v1131
        %1538 = vmatpush1.msra.mxu0 %v1130
        %1539 = vmatprep.subr.mxu0 %v1123
        %1540 = vmatpush1.msra.mxu0 %v1122
        %1541 = vmatprep.subr.mxu0 %v1115
        %1542 = vmatpush1.msra.mxu0 %v1114
        %1543 = vmatprep.subr.mxu0 %v1107
        %1544 = vmatpush1.msra.mxu0 %v1106
        %1545 = vmatprep.subr.mxu0 %v1099
        %1546 = vmatpush1.msra.mxu0 %v1098
        %1547 = vmatprep.subr.mxu0 %v1091
        %1548 = vmatpush1.msra.mxu0 %v1090
        %1549 = vmatprep.subr.mxu0 %v1083
        %1550 = vmatpush1.msra.mxu0 %v1082
        %1551 = vmatprep.subr.mxu0 0.0
        %1552 = vmatpush2.msra.mxu0 0.0
        %1553 = vmatprep.subr.mxu0 0.0
        %1554 = vmatpush2.msra.mxu0 0.0
        %1555 = vmatprep.subr.mxu0 0.0
        %1556 = vmatpush2.msra.mxu0 0.0
        %1557 = vmatprep.subr.mxu0 0.0
        %1558 = vmatpush2.msra.mxu0 0.0
        %1559 = vmatprep.subr.mxu0 0.0
        %1560 = vmatpush2.msra.mxu0 0.0
        %1561 = vmatprep.subr.mxu0 0.0
        %1562 = vmatpush2.msra.mxu0 0.0
        %1563 = vmatprep.subr.mxu0 0.0
        %1564 = vmatpush2.msra.mxu0 0.0
        %1565 = vmatprep.subr.mxu0 0.0
        %1566 = vmatpush2.msra.mxu0 0.0
        %1567 = vmatprep.subr.mxu0 0.0
        %1568 = vmatpush2.msra.mxu0 0.0
        %1569 = vmatprep.subr.mxu0 0.0
        %1570 = vmatpush2.msra.mxu0 0.0
        %1571 = vmatprep.subr.mxu0 0.0
        %1572 = vmatpush2.msra.mxu0 0.0
        %1573 = vmatprep.subr.mxu0 0.0
        %1574 = vmatpush2.msra.mxu0 0.0
        %1575 = vmatprep.subr.mxu0 0.0
        %1576 = vmatpush2.msra.mxu0 0.0
        %1577 = vmatprep.subr.mxu0 0.0
        %1578 = vmatpush2.msra.mxu0 0.0
        %1579 = vmatprep.subr.mxu0 0.0
        %1580 = vmatpush2.msra.mxu0 0.0
        %1581 = vmatprep.subr.mxu0 0.0
        %1582 = vmatpush2.msra.mxu0 0.0
        %1583 = vmatprep.mubr.f32.mxu0 0.0
        %1584 = vmatmul.mubr.f32.gmra.mxu0 %v292
        %v1585 = vpop.f32.mrf.mxu0
        %v1586 = vadd.f32 %v1497, %v1585
        %v1587 = vpop.f32.mrf.mxu0
        %v1588 = vadd.f32 %v1499, %v1587
        %1589 = vmatprep.mubr.f32.mxu0 0.0
        %1590 = vmatmul.mubr.f32.gmra.mxu0 %v299
        %v1591 = vpop.f32.mrf.mxu0
        %v1592 = vadd.f32 %v1503, %v1591
        %v1593 = vpop.f32.mrf.mxu0
        %v1594 = vadd.f32 %v1505, %v1593
        %1595 = vmatprep.mubr.f32.mxu0 0.0
        %1596 = vmatmul.mubr.f32.gmra.mxu0 %v306
        %v1597 = vpop.f32.mrf.mxu0
        %v1598 = vadd.f32 %v1509, %v1597
        %v1599 = vpop.f32.mrf.mxu0
        %v1600 = vadd.f32 %v1511, %v1599
        %1601 = vmatprep.mubr.f32.mxu0 0.0
        %1602 = vmatmul.mubr.f32.gmra.mxu0 %v313
        %v1603 = vpop.f32.mrf.mxu0
        %v1604 = vadd.f32 %v1515, %v1603
        %v1605 = vpop.f32.mrf.mxu0
        %v1606 = vadd.f32 %v1517, %v1605
        %1607 = vdwg.mxu0
        %1608 = vmatprep.subr.mxu0 %v437
        %1609 = vmatpush1.msra.mxu0 %v436
        %1610 = vmatprep.subr.mxu0 %v429
        %1611 = vmatpush1.msra.mxu0 %v428
        %1612 = vmatprep.subr.mxu0 %v421
        %1613 = vmatpush1.msra.mxu0 %v420
        %1614 = vmatprep.subr.mxu0 %v413
        %1615 = vmatpush1.msra.mxu0 %v412
        %1616 = vmatprep.subr.mxu0 %v405
        %1617 = vmatpush1.msra.mxu0 %v404
        %1618 = vmatprep.subr.mxu0 %v397
        %1619 = vmatpush1.msra.mxu0 %v396
        %1620 = vmatprep.subr.mxu0 %v389
        %1621 = vmatpush1.msra.mxu0 %v388
        %1622 = vmatprep.subr.mxu0 %v381
        %1623 = vmatpush1.msra.mxu0 %v380
        %1624 = vmatprep.subr.mxu0 %v373
        %1625 = vmatpush1.msra.mxu0 %v372
        %1626 = vmatprep.subr.mxu0 %v365
        %1627 = vmatpush1.msra.mxu0 %v364
        %1628 = vmatprep.subr.mxu0 %v357
        %1629 = vmatpush1.msra.mxu0 %v356
        %1630 = vmatprep.subr.mxu0 %v349
        %1631 = vmatpush1.msra.mxu0 %v348
        %1632 = vmatprep.subr.mxu0 %v341
        %1633 = vmatpush1.msra.mxu0 %v340
        %1634 = vmatprep.subr.mxu0 %v333
        %1635 = vmatpush1.msra.mxu0 %v332
        %1636 = vmatprep.subr.mxu0 %v325
        %1637 = vmatpush1.msra.mxu0 %v324
        %1638 = vmatprep.subr.mxu0 %v317
        %1639 = vmatpush1.msra.mxu0 %v316
        %1640 = vmatprep.subr.mxu0 %v565
        %1641 = vmatpush2.msra.mxu0 %v564
        %1642 = vmatprep.subr.mxu0 %v557
        %1643 = vmatpush2.msra.mxu0 %v556
        %1644 = vmatprep.subr.mxu0 %v549
        %1645 = vmatpush2.msra.mxu0 %v548
        %1646 = vmatprep.subr.mxu0 %v541
        %1647 = vmatpush2.msra.mxu0 %v540
        %1648 = vmatprep.subr.mxu0 %v533
        %1649 = vmatpush2.msra.mxu0 %v532
        %1650 = vmatprep.subr.mxu0 %v525
        %1651 = vmatpush2.msra.mxu0 %v524
        %1652 = vmatprep.subr.mxu0 %v517
        %1653 = vmatpush2.msra.mxu0 %v516
        %1654 = vmatprep.subr.mxu0 %v509
        %1655 = vmatpush2.msra.mxu0 %v508
        %1656 = vmatprep.subr.mxu0 %v501
        %1657 = vmatpush2.msra.mxu0 %v500
        %1658 = vmatprep.subr.mxu0 %v493
        %1659 = vmatpush2.msra.mxu0 %v492
        %1660 = vmatprep.subr.mxu0 %v485
        %1661 = vmatpush2.msra.mxu0 %v484
        %1662 = vmatprep.subr.mxu0 %v477
        %1663 = vmatpush2.msra.mxu0 %v476
        %1664 = vmatprep.subr.mxu0 %v469
        %1665 = vmatpush2.msra.mxu0 %v468
        %1666 = vmatprep.subr.mxu0 %v461
        %1667 = vmatpush2.msra.mxu0 %v460
        %1668 = vmatprep.subr.mxu0 %v453
        %1669 = vmatpush2.msra.mxu0 %v452
        %1670 = vmatprep.subr.mxu0 %v445
        %1671 = vmatpush2.msra.mxu0 %v444
        %1672 = vmatprep.mubr.f32.mxu0 %v287
        %1673 = vmatmul.mubr.f32.gmra.mxu0 %v286
        %v1674 = vpop.f32.mrf.mxu0
        %v1675 = vadd.f32 %v1223, %v1674
        %v1676 = vpop.f32.mrf.mxu0
        %v1677 = vadd.f32 %v1227, %v1676
        %1678 = vmatprep.mubr.f32.mxu0 %v294
        %1679 = vmatmul.mubr.f32.gmra.mxu0 %v293
        %v1680 = vpop.f32.mrf.mxu0
        %v1681 = vadd.f32 %v1223, %v1680
        %v1682 = vpop.f32.mrf.mxu0
        %v1683 = vadd.f32 %v1227, %v1682
        %1684 = vmatprep.mubr.f32.mxu0 %v301
        %1685 = vmatmul.mubr.f32.gmra.mxu0 %v300
        %v1686 = vpop.f32.mrf.mxu0
        %v1687 = vadd.f32 %v1223, %v1686
        %v1688 = vpop.f32.mrf.mxu0
        %v1689 = vadd.f32 %v1227, %v1688
        %1690 = vmatprep.mubr.f32.mxu0 %v308
        %1691 = vmatmul.mubr.f32.gmra.mxu0 %v307
        %v1692 = vpop.f32.mrf.mxu0
        %v1693 = vadd.f32 %v1223, %v1692
        %v1694 = vpop.f32.mrf.mxu0
        %v1695 = vadd.f32 %v1227, %v1694
        %1696 = vdwg.mxu0
        %1697 = vmatprep.subr.mxu0 %v693
        %1698 = vmatpush1.msra.mxu0 %v692
        %1699 = vmatprep.subr.mxu0 %v685
        %1700 = vmatpush1.msra.mxu0 %v684
        %1701 = vmatprep.subr.mxu0 %v677
        %1702 = vmatpush1.msra.mxu0 %v676
        %1703 = vmatprep.subr.mxu0 %v669
        %1704 = vmatpush1.msra.mxu0 %v668
        %1705 = vmatprep.subr.mxu0 %v661
        %1706 = vmatpush1.msra.mxu0 %v660
        %1707 = vmatprep.subr.mxu0 %v653
        %1708 = vmatpush1.msra.mxu0 %v652
        %1709 = vmatprep.subr.mxu0 %v645
        %1710 = vmatpush1.msra.mxu0 %v644
        %1711 = vmatprep.subr.mxu0 %v637
        %1712 = vmatpush1.msra.mxu0 %v636
        %1713 = vmatprep.subr.mxu0 %v629
        %1714 = vmatpush1.msra.mxu0 %v628
        %1715 = vmatprep.subr.mxu0 %v621
        %1716 = vmatpush1.msra.mxu0 %v620
        %1717 = vmatprep.subr.mxu0 %v613
        %1718 = vmatpush1.msra.mxu0 %v612
        %1719 = vmatprep.subr.mxu0 %v605
        %1720 = vmatpush1.msra.mxu0 %v604
        %1721 = vmatprep.subr.mxu0 %v597
        %1722 = vmatpush1.msra.mxu0 %v596
        %1723 = vmatprep.subr.mxu0 %v589
        %1724 = vmatpush1.msra.mxu0 %v588
        %1725 = vmatprep.subr.mxu0 %v581
        %1726 = vmatpush1.msra.mxu0 %v580
        %1727 = vmatprep.subr.mxu0 %v573
        %1728 = vmatpush1.msra.mxu0 %v572
        %1729 = vmatprep.subr.mxu0 %v821
        %1730 = vmatpush2.msra.mxu0 %v820
        %1731 = vmatprep.subr.mxu0 %v813
        %1732 = vmatpush2.msra.mxu0 %v812
        %1733 = vmatprep.subr.mxu0 %v805
        %1734 = vmatpush2.msra.mxu0 %v804
        %1735 = vmatprep.subr.mxu0 %v797
        %1736 = vmatpush2.msra.mxu0 %v796
        %1737 = vmatprep.subr.mxu0 %v789
        %1738 = vmatpush2.msra.mxu0 %v788
        %1739 = vmatprep.subr.mxu0 %v781
        %1740 = vmatpush2.msra.mxu0 %v780
        %1741 = vmatprep.subr.mxu0 %v773
        %1742 = vmatpush2.msra.mxu0 %v772
        %1743 = vmatprep.subr.mxu0 %v765
        %1744 = vmatpush2.msra.mxu0 %v764
        %1745 = vmatprep.subr.mxu0 %v757
        %1746 = vmatpush2.msra.mxu0 %v756
        %1747 = vmatprep.subr.mxu0 %v749
        %1748 = vmatpush2.msra.mxu0 %v748
        %1749 = vmatprep.subr.mxu0 %v741
        %1750 = vmatpush2.msra.mxu0 %v740
        %1751 = vmatprep.subr.mxu0 %v733
        %1752 = vmatpush2.msra.mxu0 %v732
        %1753 = vmatprep.subr.mxu0 %v725
        %1754 = vmatpush2.msra.mxu0 %v724
        %1755 = vmatprep.subr.mxu0 %v717
        %1756 = vmatpush2.msra.mxu0 %v716
        %1757 = vmatprep.subr.mxu0 %v709
        %1758 = vmatpush2.msra.mxu0 %v708
        %1759 = vmatprep.subr.mxu0 %v701
        %1760 = vmatpush2.msra.mxu0 %v700
        %1761 = vmatprep.mubr.f32.mxu0 %v289
        %1762 = vmatmul.mubr.f32.gmra.mxu0 %v288
        %v1763 = vpop.f32.mrf.mxu0
        %v1764 = vadd.f32 %v1675, %v1763
        %v1765 = vpop.f32.mrf.mxu0
        %v1766 = vadd.f32 %v1677, %v1765
        %1767 = vmatprep.mubr.f32.mxu0 %v296
        %1768 = vmatmul.mubr.f32.gmra.mxu0 %v295
        %v1769 = vpop.f32.mrf.mxu0
        %v1770 = vadd.f32 %v1681, %v1769
        %v1771 = vpop.f32.mrf.mxu0
        %v1772 = vadd.f32 %v1683, %v1771
        %1773 = vmatprep.mubr.f32.mxu0 %v303
        %1774 = vmatmul.mubr.f32.gmra.mxu0 %v302
        %v1775 = vpop.f32.mrf.mxu0
        %v1776 = vadd.f32 %v1687, %v1775
        %v1777 = vpop.f32.mrf.mxu0
        %v1778 = vadd.f32 %v1689, %v1777
        %1779 = vmatprep.mubr.f32.mxu0 %v310
        %1780 = vmatmul.mubr.f32.gmra.mxu0 %v309
        %v1781 = vpop.f32.mrf.mxu0
        %v1782 = vadd.f32 %v1693, %v1781
        %v1783 = vpop.f32.mrf.mxu0
        %v1784 = vadd.f32 %v1695, %v1783
        %1785 = vdwg.mxu0
        %1786 = vmatprep.subr.mxu0 %v949
        %1787 = vmatpush1.msra.mxu0 %v948
        %1788 = vmatprep.subr.mxu0 %v941
        %1789 = vmatpush1.msra.mxu0 %v940
        %1790 = vmatprep.subr.mxu0 %v933
        %1791 = vmatpush1.msra.mxu0 %v932
        %1792 = vmatprep.subr.mxu0 %v925
        %1793 = vmatpush1.msra.mxu0 %v924
        %1794 = vmatprep.subr.mxu0 %v917
        %1795 = vmatpush1.msra.mxu0 %v916
        %1796 = vmatprep.subr.mxu0 %v909
        %1797 = vmatpush1.msra.mxu0 %v908
        %1798 = vmatprep.subr.mxu0 %v901
        %1799 = vmatpush1.msra.mxu0 %v900
        %1800 = vmatprep.subr.mxu0 %v893
        %1801 = vmatpush1.msra.mxu0 %v892
        %1802 = vmatprep.subr.mxu0 %v885
        %1803 = vmatpush1.msra.mxu0 %v884
        %1804 = vmatprep.subr.mxu0 %v877
        %1805 = vmatpush1.msra.mxu0 %v876
        %1806 = vmatprep.subr.mxu0 %v869
        %1807 = vmatpush1.msra.mxu0 %v868
        %1808 = vmatprep.subr.mxu0 %v861
        %1809 = vmatpush1.msra.mxu0 %v860
        %1810 = vmatprep.subr.mxu0 %v853
        %1811 = vmatpush1.msra.mxu0 %v852
        %1812 = vmatprep.subr.mxu0 %v845
        %1813 = vmatpush1.msra.mxu0 %v844
        %1814 = vmatprep.subr.mxu0 %v837
        %1815 = vmatpush1.msra.mxu0 %v836
        %1816 = vmatprep.subr.mxu0 %v829
        %1817 = vmatpush1.msra.mxu0 %v828
        %1818 = vmatprep.subr.mxu0 %v1077
        %1819 = vmatpush2.msra.mxu0 %v1076
        %1820 = vmatprep.subr.mxu0 %v1069
        %1821 = vmatpush2.msra.mxu0 %v1068
        %1822 = vmatprep.subr.mxu0 %v1061
        %1823 = vmatpush2.msra.mxu0 %v1060
        %1824 = vmatprep.subr.mxu0 %v1053
        %1825 = vmatpush2.msra.mxu0 %v1052
        %1826 = vmatprep.subr.mxu0 %v1045
        %1827 = vmatpush2.msra.mxu0 %v1044
        %1828 = vmatprep.subr.mxu0 %v1037
        %1829 = vmatpush2.msra.mxu0 %v1036
        %1830 = vmatprep.subr.mxu0 %v1029
        %1831 = vmatpush2.msra.mxu0 %v1028
        %1832 = vmatprep.subr.mxu0 %v1021
        %1833 = vmatpush2.msra.mxu0 %v1020
        %1834 = vmatprep.subr.mxu0 %v1013
        %1835 = vmatpush2.msra.mxu0 %v1012
        %1836 = vmatprep.subr.mxu0 %v1005
        %1837 = vmatpush2.msra.mxu0 %v1004
        %1838 = vmatprep.subr.mxu0 %v997
        %1839 = vmatpush2.msra.mxu0 %v996
        %1840 = vmatprep.subr.mxu0 %v989
        %1841 = vmatpush2.msra.mxu0 %v988
        %1842 = vmatprep.subr.mxu0 %v981
        %1843 = vmatpush2.msra.mxu0 %v980
        %1844 = vmatprep.subr.mxu0 %v973
        %1845 = vmatpush2.msra.mxu0 %v972
        %1846 = vmatprep.subr.mxu0 %v965
        %1847 = vmatpush2.msra.mxu0 %v964
        %1848 = vmatprep.subr.mxu0 %v957
        %1849 = vmatpush2.msra.mxu0 %v956
        %1850 = vmatprep.mubr.f32.mxu0 %v291
        %1851 = vmatmul.mubr.f32.gmra.mxu0 %v290
        %v1852 = vpop.f32.mrf.mxu0
        %v1853 = vadd.f32 %v1764, %v1852
        %v1854 = vpop.f32.mrf.mxu0
        %v1855 = vadd.f32 %v1766, %v1854
        %1856 = vmatprep.mubr.f32.mxu0 %v298
        %1857 = vmatmul.mubr.f32.gmra.mxu0 %v297
        %v1858 = vpop.f32.mrf.mxu0
        %v1859 = vadd.f32 %v1770, %v1858
        %v1860 = vpop.f32.mrf.mxu0
        %v1861 = vadd.f32 %v1772, %v1860
        %1862 = vmatprep.mubr.f32.mxu0 %v305
        %1863 = vmatmul.mubr.f32.gmra.mxu0 %v304
        %v1864 = vpop.f32.mrf.mxu0
        %v1865 = vadd.f32 %v1776, %v1864
        %v1866 = vpop.f32.mrf.mxu0
        %v1867 = vadd.f32 %v1778, %v1866
        %1868 = vmatprep.mubr.f32.mxu0 %v312
        %1869 = vmatmul.mubr.f32.gmra.mxu0 %v311
        %v1870 = vpop.f32.mrf.mxu0
        %v1871 = vadd.f32 %v1782, %v1870
        %v1872 = vpop.f32.mrf.mxu0
        %v1873 = vadd.f32 %v1784, %v1872
        %1874 = vdwg.mxu0
        %1875 = vmatprep.subr.mxu0 %v1205
        %1876 = vmatpush1.msra.mxu0 %v1204
        %1877 = vmatprep.subr.mxu0 %v1197
        %1878 = vmatpush1.msra.mxu0 %v1196
        %1879 = vmatprep.subr.mxu0 %v1189
        %1880 = vmatpush1.msra.mxu0 %v1188
        %1881 = vmatprep.subr.mxu0 %v1181
        %1882 = vmatpush1.msra.mxu0 %v1180
        %1883 = vmatprep.subr.mxu0 %v1173
        %1884 = vmatpush1.msra.mxu0 %v1172
        %1885 = vmatprep.subr.mxu0 %v1165
        %1886 = vmatpush1.msra.mxu0 %v1164
        %1887 = vmatprep.subr.mxu0 %v1157
        %1888 = vmatpush1.msra.mxu0 %v1156
        %1889 = vmatprep.subr.mxu0 %v1149
        %1890 = vmatpush1.msra.mxu0 %v1148
        %1891 = vmatprep.subr.mxu0 %v1141
        %1892 = vmatpush1.msra.mxu0 %v1140
        %1893 = vmatprep.subr.mxu0 %v1133
        %1894 = vmatpush1.msra.mxu0 %v1132
        %1895 = vmatprep.subr.mxu0 %v1125
        %1896 = vmatpush1.msra.mxu0 %v1124
        %1897 = vmatprep.subr.mxu0 %v1117
        %1898 = vmatpush1.msra.mxu0 %v1116
        %1899 = vmatprep.subr.mxu0 %v1109
        %1900 = vmatpush1.msra.mxu0 %v1108
        %1901 = vmatprep.subr.mxu0 %v1101
        %1902 = vmatpush1.msra.mxu0 %v1100
        %1903 = vmatprep.subr.mxu0 %v1093
        %1904 = vmatpush1.msra.mxu0 %v1092
        %1905 = vmatprep.subr.mxu0 %v1085
        %1906 = vmatpush1.msra.mxu0 %v1084
        %1907 = vmatprep.subr.mxu0 0.0
        %1908 = vmatpush2.msra.mxu0 0.0
        %1909 = vmatprep.subr.mxu0 0.0
        %1910 = vmatpush2.msra.mxu0 0.0
        %1911 = vmatprep.subr.mxu0 0.0
        %1912 = vmatpush2.msra.mxu0 0.0
        %1913 = vmatprep.subr.mxu0 0.0
        %1914 = vmatpush2.msra.mxu0 0.0
        %1915 = vmatprep.subr.mxu0 0.0
        %1916 = vmatpush2.msra.mxu0 0.0
        %1917 = vmatprep.subr.mxu0 0.0
        %1918 = vmatpush2.msra.mxu0 0.0
        %1919 = vmatprep.subr.mxu0 0.0
        %1920 = vmatpush2.msra.mxu0 0.0
        %1921 = vmatprep.subr.mxu0 0.0
        %1922 = vmatpush2.msra.mxu0 0.0
        %1923 = vmatprep.subr.mxu0 0.0
        %1924 = vmatpush2.msra.mxu0 0.0
        %1925 = vmatprep.subr.mxu0 0.0
        %1926 = vmatpush2.msra.mxu0 0.0
        %1927 = vmatprep.subr.mxu0 0.0
        %1928 = vmatpush2.msra.mxu0 0.0
        %1929 = vmatprep.subr.mxu0 0.0
        %1930 = vmatpush2.msra.mxu0 0.0
        %1931 = vmatprep.subr.mxu0 0.0
        %1932 = vmatpush2.msra.mxu0 0.0
        %1933 = vmatprep.subr.mxu0 0.0
        %1934 = vmatpush2.msra.mxu0 0.0
        %1935 = vmatprep.subr.mxu0 0.0
        %1936 = vmatpush2.msra.mxu0 0.0
        %1937 = vmatprep.subr.mxu0 0.0
        %1938 = vmatpush2.msra.mxu0 0.0
        %1939 = vmatprep.mubr.f32.mxu0 0.0
        %1940 = vmatmul.mubr.f32.gmra.mxu0 %v292
        %v1941 = vpop.f32.mrf.mxu0
        %v1942 = vadd.f32 %v1853, %v1941
        %v1943 = vpop.f32.mrf.mxu0
        %v1944 = vadd.f32 %v1855, %v1943
        %1945 = vmatprep.mubr.f32.mxu0 0.0
        %1946 = vmatmul.mubr.f32.gmra.mxu0 %v299
        %v1947 = vpop.f32.mrf.mxu0
        %v1948 = vadd.f32 %v1859, %v1947
        %v1949 = vpop.f32.mrf.mxu0
        %v1950 = vadd.f32 %v1861, %v1949
        %1951 = vmatprep.mubr.f32.mxu0 0.0
        %1952 = vmatmul.mubr.f32.gmra.mxu0 %v306
        %v1953 = vpop.f32.mrf.mxu0
        %v1954 = vadd.f32 %v1865, %v1953
        %v1955 = vpop.f32.mrf.mxu0
        %v1956 = vadd.f32 %v1867, %v1955
        %1957 = vmatprep.mubr.f32.mxu0 0.0
        %1958 = vmatmul.mubr.f32.gmra.mxu0 %v313
        %v1959 = vpop.f32.mrf.mxu0
        %v1960 = vadd.f32 %v1871, %v1959
        %v1961 = vpop.f32.mrf.mxu0
        %v1962 = vadd.f32 %v1873, %v1961
        %1963 = vdwg.mxu0
        %1964 = vmatprep.subr.mxu0 %v439
        %1965 = vmatpush1.msra.mxu0 %v438
        %1966 = vmatprep.subr.mxu0 %v431
        %1967 = vmatpush1.msra.mxu0 %v430
        %1968 = vmatprep.subr.mxu0 %v423
        %1969 = vmatpush1.msra.mxu0 %v422
        %1970 = vmatprep.subr.mxu0 %v415
        %1971 = vmatpush1.msra.mxu0 %v414
        %1972 = vmatprep.subr.mxu0 %v407
        %1973 = vmatpush1.msra.mxu0 %v406
        %1974 = vmatprep.subr.mxu0 %v399
        %1975 = vmatpush1.msra.mxu0 %v398
        %1976 = vmatprep.subr.mxu0 %v391
        %1977 = vmatpush1.msra.mxu0 %v390
        %1978 = vmatprep.subr.mxu0 %v383
        %1979 = vmatpush1.msra.mxu0 %v382
        %1980 = vmatprep.subr.mxu0 %v375
        %1981 = vmatpush1.msra.mxu0 %v374
        %1982 = vmatprep.subr.mxu0 %v367
        %1983 = vmatpush1.msra.mxu0 %v366
        %1984 = vmatprep.subr.mxu0 %v359
        %1985 = vmatpush1.msra.mxu0 %v358
        %1986 = vmatprep.subr.mxu0 %v351
        %1987 = vmatpush1.msra.mxu0 %v350
        %1988 = vmatprep.subr.mxu0 %v343
        %1989 = vmatpush1.msra.mxu0 %v342
        %1990 = vmatprep.subr.mxu0 %v335
        %1991 = vmatpush1.msra.mxu0 %v334
        %1992 = vmatprep.subr.mxu0 %v327
        %1993 = vmatpush1.msra.mxu0 %v326
        %1994 = vmatprep.subr.mxu0 %v319
        %1995 = vmatpush1.msra.mxu0 %v318
        %1996 = vmatprep.subr.mxu0 %v567
        %1997 = vmatpush2.msra.mxu0 %v566
        %1998 = vmatprep.subr.mxu0 %v559
        %1999 = vmatpush2.msra.mxu0 %v558
        %2000 = vmatprep.subr.mxu0 %v551
        %2001 = vmatpush2.msra.mxu0 %v550
        %2002 = vmatprep.subr.mxu0 %v543
        %2003 = vmatpush2.msra.mxu0 %v542
        %2004 = vmatprep.subr.mxu0 %v535
        %2005 = vmatpush2.msra.mxu0 %v534
        %2006 = vmatprep.subr.mxu0 %v527
        %2007 = vmatpush2.msra.mxu0 %v526
        %2008 = vmatprep.subr.mxu0 %v519
        %2009 = vmatpush2.msra.mxu0 %v518
        %2010 = vmatprep.subr.mxu0 %v511
        %2011 = vmatpush2.msra.mxu0 %v510
        %2012 = vmatprep.subr.mxu0 %v503
        %2013 = vmatpush2.msra.mxu0 %v502
        %2014 = vmatprep.subr.mxu0 %v495
        %2015 = vmatpush2.msra.mxu0 %v494
        %2016 = vmatprep.subr.mxu0 %v487
        %2017 = vmatpush2.msra.mxu0 %v486
        %2018 = vmatprep.subr.mxu0 %v479
        %2019 = vmatpush2.msra.mxu0 %v478
        %2020 = vmatprep.subr.mxu0 %v471
        %2021 = vmatpush2.msra.mxu0 %v470
        %2022 = vmatprep.subr.mxu0 %v463
        %2023 = vmatpush2.msra.mxu0 %v462
        %2024 = vmatprep.subr.mxu0 %v455
        %2025 = vmatpush2.msra.mxu0 %v454
        %2026 = vmatprep.subr.mxu0 %v447
        %2027 = vmatpush2.msra.mxu0 %v446
        %2028 = vmatprep.mubr.f32.mxu0 %v287
        %2029 = vmatmul.mubr.f32.gmra.mxu0 %v286
        %v2030 = vpop.f32.mrf.mxu0
        %v2031 = vadd.f32 %v1231, %v2030
        %v2032 = vpop.f32.mrf.mxu0
        %v2033 = vadd.f32 %v1235, %v2032
        %2034 = vmatprep.mubr.f32.mxu0 %v294
        %2035 = vmatmul.mubr.f32.gmra.mxu0 %v293
        %v2036 = vpop.f32.mrf.mxu0
        %v2037 = vadd.f32 %v1231, %v2036
        %v2038 = vpop.f32.mrf.mxu0
        %v2039 = vadd.f32 %v1235, %v2038
        %2040 = vmatprep.mubr.f32.mxu0 %v301
        %2041 = vmatmul.mubr.f32.gmra.mxu0 %v300
        %v2042 = vpop.f32.mrf.mxu0
        %v2043 = vadd.f32 %v1231, %v2042
        %v2044 = vpop.f32.mrf.mxu0
        %v2045 = vadd.f32 %v1235, %v2044
        %2046 = vmatprep.mubr.f32.mxu0 %v308
        %2047 = vmatmul.mubr.f32.gmra.mxu0 %v307
        %v2048 = vpop.f32.mrf.mxu0
        %v2049 = vadd.f32 %v1231, %v2048
        %v2050 = vpop.f32.mrf.mxu0
        %v2051 = vadd.f32 %v1235, %v2050
        %2052 = vdwg.mxu0
        %2053 = vmatprep.subr.mxu0 %v695
        %2054 = vmatpush1.msra.mxu0 %v694
        %2055 = vmatprep.subr.mxu0 %v687
        %2056 = vmatpush1.msra.mxu0 %v686
        %2057 = vmatprep.subr.mxu0 %v679
        %2058 = vmatpush1.msra.mxu0 %v678
        %2059 = vmatprep.subr.mxu0 %v671
        %2060 = vmatpush1.msra.mxu0 %v670
        %2061 = vmatprep.subr.mxu0 %v663
        %2062 = vmatpush1.msra.mxu0 %v662
        %2063 = vmatprep.subr.mxu0 %v655
        %2064 = vmatpush1.msra.mxu0 %v654
        %2065 = vmatprep.subr.mxu0 %v647
        %2066 = vmatpush1.msra.mxu0 %v646
        %2067 = vmatprep.subr.mxu0 %v639
        %2068 = vmatpush1.msra.mxu0 %v638
        %2069 = vmatprep.subr.mxu0 %v631
        %2070 = vmatpush1.msra.mxu0 %v630
        %2071 = vmatprep.subr.mxu0 %v623
        %2072 = vmatpush1.msra.mxu0 %v622
        %2073 = vmatprep.subr.mxu0 %v615
        %2074 = vmatpush1.msra.mxu0 %v614
        %2075 = vmatprep.subr.mxu0 %v607
        %2076 = vmatpush1.msra.mxu0 %v606
        %2077 = vmatprep.subr.mxu0 %v599
        %2078 = vmatpush1.msra.mxu0 %v598
        %2079 = vmatprep.subr.mxu0 %v591
        %2080 = vmatpush1.msra.mxu0 %v590
        %2081 = vmatprep.subr.mxu0 %v583
        %2082 = vmatpush1.msra.mxu0 %v582
        %2083 = vmatprep.subr.mxu0 %v575
        %2084 = vmatpush1.msra.mxu0 %v574
        %2085 = vmatprep.subr.mxu0 %v823
        %2086 = vmatpush2.msra.mxu0 %v822
        %2087 = vmatprep.subr.mxu0 %v815
        %2088 = vmatpush2.msra.mxu0 %v814
        %2089 = vmatprep.subr.mxu0 %v807
        %2090 = vmatpush2.msra.mxu0 %v806
        %2091 = vmatprep.subr.mxu0 %v799
        %2092 = vmatpush2.msra.mxu0 %v798
        %2093 = vmatprep.subr.mxu0 %v791
        %2094 = vmatpush2.msra.mxu0 %v790
        %2095 = vmatprep.subr.mxu0 %v783
        %2096 = vmatpush2.msra.mxu0 %v782
        %2097 = vmatprep.subr.mxu0 %v775
        %2098 = vmatpush2.msra.mxu0 %v774
        %2099 = vmatprep.subr.mxu0 %v767
        %2100 = vmatpush2.msra.mxu0 %v766
        %2101 = vmatprep.subr.mxu0 %v759
        %2102 = vmatpush2.msra.mxu0 %v758
        %2103 = vmatprep.subr.mxu0 %v751
        %2104 = vmatpush2.msra.mxu0 %v750
        %2105 = vmatprep.subr.mxu0 %v743
        %2106 = vmatpush2.msra.mxu0 %v742
        %2107 = vmatprep.subr.mxu0 %v735
        %2108 = vmatpush2.msra.mxu0 %v734
        %2109 = vmatprep.subr.mxu0 %v727
        %2110 = vmatpush2.msra.mxu0 %v726
        %2111 = vmatprep.subr.mxu0 %v719
        %2112 = vmatpush2.msra.mxu0 %v718
        %2113 = vmatprep.subr.mxu0 %v711
        %2114 = vmatpush2.msra.mxu0 %v710
        %2115 = vmatprep.subr.mxu0 %v703
        %2116 = vmatpush2.msra.mxu0 %v702
        %2117 = vmatprep.mubr.f32.mxu0 %v289
        %2118 = vmatmul.mubr.f32.gmra.mxu0 %v288
        %v2119 = vpop.f32.mrf.mxu0
        %v2120 = vadd.f32 %v2031, %v2119
        %v2121 = vpop.f32.mrf.mxu0
        %v2122 = vadd.f32 %v2033, %v2121
        %2123 = vmatprep.mubr.f32.mxu0 %v296
        %2124 = vmatmul.mubr.f32.gmra.mxu0 %v295
        %v2125 = vpop.f32.mrf.mxu0
        %v2126 = vadd.f32 %v2037, %v2125
        %v2127 = vpop.f32.mrf.mxu0
        %v2128 = vadd.f32 %v2039, %v2127
        %2129 = vmatprep.mubr.f32.mxu0 %v303
        %2130 = vmatmul.mubr.f32.gmra.mxu0 %v302
        %v2131 = vpop.f32.mrf.mxu0
        %v2132 = vadd.f32 %v2043, %v2131
        %v2133 = vpop.f32.mrf.mxu0
        %v2134 = vadd.f32 %v2045, %v2133
        %2135 = vmatprep.mubr.f32.mxu0 %v310
        %2136 = vmatmul.mubr.f32.gmra.mxu0 %v309
        %v2137 = vpop.f32.mrf.mxu0
        %v2138 = vadd.f32 %v2049, %v2137
        %v2139 = vpop.f32.mrf.mxu0
        %v2140 = vadd.f32 %v2051, %v2139
        %2141 = vdwg.mxu0
        %2142 = vmatprep.subr.mxu0 %v951
        %2143 = vmatpush1.msra.mxu0 %v950
        %2144 = vmatprep.subr.mxu0 %v943
        %2145 = vmatpush1.msra.mxu0 %v942
        %2146 = vmatprep.subr.mxu0 %v935
        %2147 = vmatpush1.msra.mxu0 %v934
        %2148 = vmatprep.subr.mxu0 %v927
        %2149 = vmatpush1.msra.mxu0 %v926
        %2150 = vmatprep.subr.mxu0 %v919
        %2151 = vmatpush1.msra.mxu0 %v918
        %2152 = vmatprep.subr.mxu0 %v911
        %2153 = vmatpush1.msra.mxu0 %v910
        %2154 = vmatprep.subr.mxu0 %v903
        %2155 = vmatpush1.msra.mxu0 %v902
        %2156 = vmatprep.subr.mxu0 %v895
        %2157 = vmatpush1.msra.mxu0 %v894
        %2158 = vmatprep.subr.mxu0 %v887
        %2159 = vmatpush1.msra.mxu0 %v886
        %2160 = vmatprep.subr.mxu0 %v879
        %2161 = vmatpush1.msra.mxu0 %v878
        %2162 = vmatprep.subr.mxu0 %v871
        %2163 = vmatpush1.msra.mxu0 %v870
        %2164 = vmatprep.subr.mxu0 %v863
        %2165 = vmatpush1.msra.mxu0 %v862
        %2166 = vmatprep.subr.mxu0 %v855
        %2167 = vmatpush1.msra.mxu0 %v854
        %2168 = vmatprep.subr.mxu0 %v847
        %2169 = vmatpush1.msra.mxu0 %v846
        %2170 = vmatprep.subr.mxu0 %v839
        %2171 = vmatpush1.msra.mxu0 %v838
        %2172 = vmatprep.subr.mxu0 %v831
        %2173 = vmatpush1.msra.mxu0 %v830
        %2174 = vmatprep.subr.mxu0 %v1079
        %2175 = vmatpush2.msra.mxu0 %v1078
        %2176 = vmatprep.subr.mxu0 %v1071
        %2177 = vmatpush2.msra.mxu0 %v1070
        %2178 = vmatprep.subr.mxu0 %v1063
        %2179 = vmatpush2.msra.mxu0 %v1062
        %2180 = vmatprep.subr.mxu0 %v1055
        %2181 = vmatpush2.msra.mxu0 %v1054
        %2182 = vmatprep.subr.mxu0 %v1047
        %2183 = vmatpush2.msra.mxu0 %v1046
        %2184 = vmatprep.subr.mxu0 %v1039
        %2185 = vmatpush2.msra.mxu0 %v1038
        %2186 = vmatprep.subr.mxu0 %v1031
        %2187 = vmatpush2.msra.mxu0 %v1030
        %2188 = vmatprep.subr.mxu0 %v1023
        %2189 = vmatpush2.msra.mxu0 %v1022
        %2190 = vmatprep.subr.mxu0 %v1015
        %2191 = vmatpush2.msra.mxu0 %v1014
        %2192 = vmatprep.subr.mxu0 %v1007
        %2193 = vmatpush2.msra.mxu0 %v1006
        %2194 = vmatprep.subr.mxu0 %v999
        %2195 = vmatpush2.msra.mxu0 %v998
        %2196 = vmatprep.subr.mxu0 %v991
        %2197 = vmatpush2.msra.mxu0 %v990
        %2198 = vmatprep.subr.mxu0 %v983
        %2199 = vmatpush2.msra.mxu0 %v982
        %2200 = vmatprep.subr.mxu0 %v975
        %2201 = vmatpush2.msra.mxu0 %v974
        %2202 = vmatprep.subr.mxu0 %v967
        %2203 = vmatpush2.msra.mxu0 %v966
        %2204 = vmatprep.subr.mxu0 %v959
        %2205 = vmatpush2.msra.mxu0 %v958
        %2206 = vmatprep.mubr.f32.mxu0 %v291
        %2207 = vmatmul.mubr.f32.gmra.mxu0 %v290
        %v2208 = vpop.f32.mrf.mxu0
        %v2209 = vadd.f32 %v2120, %v2208
        %v2210 = vpop.f32.mrf.mxu0
        %v2211 = vadd.f32 %v2122, %v2210
        %2212 = vmatprep.mubr.f32.mxu0 %v298
        %2213 = vmatmul.mubr.f32.gmra.mxu0 %v297
        %v2214 = vpop.f32.mrf.mxu0
        %v2215 = vadd.f32 %v2126, %v2214
        %v2216 = vpop.f32.mrf.mxu0
        %v2217 = vadd.f32 %v2128, %v2216
        %2218 = vmatprep.mubr.f32.mxu0 %v305
        %2219 = vmatmul.mubr.f32.gmra.mxu0 %v304
        %v2220 = vpop.f32.mrf.mxu0
        %v2221 = vadd.f32 %v2132, %v2220
        %v2222 = vpop.f32.mrf.mxu0
        %v2223 = vadd.f32 %v2134, %v2222
        %2224 = vmatprep.mubr.f32.mxu0 %v312
        %2225 = vmatmul.mubr.f32.gmra.mxu0 %v311
        %v2226 = vpop.f32.mrf.mxu0
        %v2227 = vadd.f32 %v2138, %v2226
        %v2228 = vpop.f32.mrf.mxu0
        %v2229 = vadd.f32 %v2140, %v2228
        %2230 = vdwg.mxu0
        %2231 = vmatprep.subr.mxu0 %v1207
        %2232 = vmatpush1.msra.mxu0 %v1206
        %2233 = vmatprep.subr.mxu0 %v1199
        %2234 = vmatpush1.msra.mxu0 %v1198
        %2235 = vmatprep.subr.mxu0 %v1191
        %2236 = vmatpush1.msra.mxu0 %v1190
        %2237 = vmatprep.subr.mxu0 %v1183
        %2238 = vmatpush1.msra.mxu0 %v1182
        %2239 = vmatprep.subr.mxu0 %v1175
        %2240 = vmatpush1.msra.mxu0 %v1174
        %2241 = vmatprep.subr.mxu0 %v1167
        %2242 = vmatpush1.msra.mxu0 %v1166
        %2243 = vmatprep.subr.mxu0 %v1159
        %2244 = vmatpush1.msra.mxu0 %v1158
        %2245 = vmatprep.subr.mxu0 %v1151
        %2246 = vmatpush1.msra.mxu0 %v1150
        %2247 = vmatprep.subr.mxu0 %v1143
        %2248 = vmatpush1.msra.mxu0 %v1142
        %2249 = vmatprep.subr.mxu0 %v1135
        %2250 = vmatpush1.msra.mxu0 %v1134
        %2251 = vmatprep.subr.mxu0 %v1127
        %2252 = vmatpush1.msra.mxu0 %v1126
        %2253 = vmatprep.subr.mxu0 %v1119
        %2254 = vmatpush1.msra.mxu0 %v1118
        %2255 = vmatprep.subr.mxu0 %v1111
        %2256 = vmatpush1.msra.mxu0 %v1110
        %2257 = vmatprep.subr.mxu0 %v1103
        %2258 = vmatpush1.msra.mxu0 %v1102
        %2259 = vmatprep.subr.mxu0 %v1095
        %2260 = vmatpush1.msra.mxu0 %v1094
        %2261 = vmatprep.subr.mxu0 %v1087
        %2262 = vmatpush1.msra.mxu0 %v1086
        %2263 = vmatprep.subr.mxu0 0.0
        %2264 = vmatpush2.msra.mxu0 0.0
        %2265 = vmatprep.subr.mxu0 0.0
        %2266 = vmatpush2.msra.mxu0 0.0
        %2267 = vmatprep.subr.mxu0 0.0
        %2268 = vmatpush2.msra.mxu0 0.0
        %2269 = vmatprep.subr.mxu0 0.0
        %2270 = vmatpush2.msra.mxu0 0.0
        %2271 = vmatprep.subr.mxu0 0.0
        %2272 = vmatpush2.msra.mxu0 0.0
        %2273 = vmatprep.subr.mxu0 0.0
        %2274 = vmatpush2.msra.mxu0 0.0
        %2275 = vmatprep.subr.mxu0 0.0
        %2276 = vmatpush2.msra.mxu0 0.0
        %2277 = vmatprep.subr.mxu0 0.0
        %2278 = vmatpush2.msra.mxu0 0.0
        %2279 = vmatprep.subr.mxu0 0.0
        %2280 = vmatpush2.msra.mxu0 0.0
        %2281 = vmatprep.subr.mxu0 0.0
        %2282 = vmatpush2.msra.mxu0 0.0
        %2283 = vmatprep.subr.mxu0 0.0
        %2284 = vmatpush2.msra.mxu0 0.0
        %2285 = vmatprep.subr.mxu0 0.0
        %2286 = vmatpush2.msra.mxu0 0.0
        %2287 = vmatprep.subr.mxu0 0.0
        %2288 = vmatpush2.msra.mxu0 0.0
        %2289 = vmatprep.subr.mxu0 0.0
        %2290 = vmatpush2.msra.mxu0 0.0
        %2291 = vmatprep.subr.mxu0 0.0
        %2292 = vmatpush2.msra.mxu0 0.0
        %2293 = vmatprep.subr.mxu0 0.0
        %2294 = vmatpush2.msra.mxu0 0.0
        %2295 = vmatprep.mubr.f32.mxu0 0.0
        %2296 = vmatmul.mubr.f32.gmra.mxu0 %v292
        %v2297 = vpop.f32.mrf.mxu0
        %v2298 = vadd.f32 %v2209, %v2297
        %v2299 = vpop.f32.mrf.mxu0
        %v2300 = vadd.f32 %v2211, %v2299
        %2301 = vmatprep.mubr.f32.mxu0 0.0
        %2302 = vmatmul.mubr.f32.gmra.mxu0 %v299
        %v2303 = vpop.f32.mrf.mxu0
        %v2304 = vadd.f32 %v2215, %v2303
        %v2305 = vpop.f32.mrf.mxu0
        %v2306 = vadd.f32 %v2217, %v2305
        %2307 = vmatprep.mubr.f32.mxu0 0.0
        %2308 = vmatmul.mubr.f32.gmra.mxu0 %v306
        %v2309 = vpop.f32.mrf.mxu0
        %v2310 = vadd.f32 %v2221, %v2309
        %v2311 = vpop.f32.mrf.mxu0
        %v2312 = vadd.f32 %v2223, %v2311
        %2313 = vmatprep.mubr.f32.mxu0 0.0
        %2314 = vmatmul.mubr.f32.gmra.mxu0 %v313
        %v2315 = vpop.f32.mrf.mxu0
        %v2316 = vadd.f32 %v2227, %v2315
        %v2317 = vpop.f32.mrf.mxu0
        %v2318 = vadd.f32 %v2229, %v2317
        %2319 = vdwg.mxu0
        %2320 = vmatprep.subr.mxu0 %v441
        %2321 = vmatpush1.msra.mxu0 %v440
        %2322 = vmatprep.subr.mxu0 %v433
        %2323 = vmatpush1.msra.mxu0 %v432
        %2324 = vmatprep.subr.mxu0 %v425
        %2325 = vmatpush1.msra.mxu0 %v424
        %2326 = vmatprep.subr.mxu0 %v417
        %2327 = vmatpush1.msra.mxu0 %v416
        %2328 = vmatprep.subr.mxu0 %v409
        %2329 = vmatpush1.msra.mxu0 %v408
        %2330 = vmatprep.subr.mxu0 %v401
        %2331 = vmatpush1.msra.mxu0 %v400
        %2332 = vmatprep.subr.mxu0 %v393
        %2333 = vmatpush1.msra.mxu0 %v392
        %2334 = vmatprep.subr.mxu0 %v385
        %2335 = vmatpush1.msra.mxu0 %v384
        %2336 = vmatprep.subr.mxu0 %v377
        %2337 = vmatpush1.msra.mxu0 %v376
        %2338 = vmatprep.subr.mxu0 %v369
        %2339 = vmatpush1.msra.mxu0 %v368
        %2340 = vmatprep.subr.mxu0 %v361
        %2341 = vmatpush1.msra.mxu0 %v360
        %2342 = vmatprep.subr.mxu0 %v353
        %2343 = vmatpush1.msra.mxu0 %v352
        %2344 = vmatprep.subr.mxu0 %v345
        %2345 = vmatpush1.msra.mxu0 %v344
        %2346 = vmatprep.subr.mxu0 %v337
        %2347 = vmatpush1.msra.mxu0 %v336
        %2348 = vmatprep.subr.mxu0 %v329
        %2349 = vmatpush1.msra.mxu0 %v328
        %2350 = vmatprep.subr.mxu0 %v321
        %2351 = vmatpush1.msra.mxu0 %v320
        %2352 = vmatprep.subr.mxu0 %v569
        %2353 = vmatpush2.msra.mxu0 %v568
        %2354 = vmatprep.subr.mxu0 %v561
        %2355 = vmatpush2.msra.mxu0 %v560
        %2356 = vmatprep.subr.mxu0 %v553
        %2357 = vmatpush2.msra.mxu0 %v552
        %2358 = vmatprep.subr.mxu0 %v545
        %2359 = vmatpush2.msra.mxu0 %v544
        %2360 = vmatprep.subr.mxu0 %v537
        %2361 = vmatpush2.msra.mxu0 %v536
        %2362 = vmatprep.subr.mxu0 %v529
        %2363 = vmatpush2.msra.mxu0 %v528
        %2364 = vmatprep.subr.mxu0 %v521
        %2365 = vmatpush2.msra.mxu0 %v520
        %2366 = vmatprep.subr.mxu0 %v513
        %2367 = vmatpush2.msra.mxu0 %v512
        %2368 = vmatprep.subr.mxu0 %v505
        %2369 = vmatpush2.msra.mxu0 %v504
        %2370 = vmatprep.subr.mxu0 %v497
        %2371 = vmatpush2.msra.mxu0 %v496
        %2372 = vmatprep.subr.mxu0 %v489
        %2373 = vmatpush2.msra.mxu0 %v488
        %2374 = vmatprep.subr.mxu0 %v481
        %2375 = vmatpush2.msra.mxu0 %v480
        %2376 = vmatprep.subr.mxu0 %v473
        %2377 = vmatpush2.msra.mxu0 %v472
        %2378 = vmatprep.subr.mxu0 %v465
        %2379 = vmatpush2.msra.mxu0 %v464
        %2380 = vmatprep.subr.mxu0 %v457
        %2381 = vmatpush2.msra.mxu0 %v456
        %2382 = vmatprep.subr.mxu0 %v449
        %2383 = vmatpush2.msra.mxu0 %v448
        %2384 = vmatprep.mubr.f32.mxu0 %v287
        %2385 = vmatmul.mubr.f32.gmra.mxu0 %v286
        %v2386 = vpop.f32.mrf.mxu0
        %v2387 = vadd.f32 %v1239, %v2386
        %v2388 = vpop.f32.mrf.mxu0
        %v2389 = vadd.f32 %v1243, %v2388
        %2390 = vmatprep.mubr.f32.mxu0 %v294
        %2391 = vmatmul.mubr.f32.gmra.mxu0 %v293
        %v2392 = vpop.f32.mrf.mxu0
        %v2393 = vadd.f32 %v1239, %v2392
        %v2394 = vpop.f32.mrf.mxu0
        %v2395 = vadd.f32 %v1243, %v2394
        %2396 = vmatprep.mubr.f32.mxu0 %v301
        %2397 = vmatmul.mubr.f32.gmra.mxu0 %v300
        %v2398 = vpop.f32.mrf.mxu0
        %v2399 = vadd.f32 %v1239, %v2398
        %v2400 = vpop.f32.mrf.mxu0
        %v2401 = vadd.f32 %v1243, %v2400
        %2402 = vmatprep.mubr.f32.mxu0 %v308
        %2403 = vmatmul.mubr.f32.gmra.mxu0 %v307
        %v2404 = vpop.f32.mrf.mxu0
        %v2405 = vadd.f32 %v1239, %v2404
        %v2406 = vpop.f32.mrf.mxu0
        %v2407 = vadd.f32 %v1243, %v2406
        %2408 = vdwg.mxu0
        %2409 = vmatprep.subr.mxu0 %v697
        %2410 = vmatpush1.msra.mxu0 %v696
        %2411 = vmatprep.subr.mxu0 %v689
        %2412 = vmatpush1.msra.mxu0 %v688
        %2413 = vmatprep.subr.mxu0 %v681
        %2414 = vmatpush1.msra.mxu0 %v680
        %2415 = vmatprep.subr.mxu0 %v673
        %2416 = vmatpush1.msra.mxu0 %v672
        %2417 = vmatprep.subr.mxu0 %v665
        %2418 = vmatpush1.msra.mxu0 %v664
        %2419 = vmatprep.subr.mxu0 %v657
        %2420 = vmatpush1.msra.mxu0 %v656
        %2421 = vmatprep.subr.mxu0 %v649
        %2422 = vmatpush1.msra.mxu0 %v648
        %2423 = vmatprep.subr.mxu0 %v641
        %2424 = vmatpush1.msra.mxu0 %v640
        %2425 = vmatprep.subr.mxu0 %v633
        %2426 = vmatpush1.msra.mxu0 %v632
        %2427 = vmatprep.subr.mxu0 %v625
        %2428 = vmatpush1.msra.mxu0 %v624
        %2429 = vmatprep.subr.mxu0 %v617
        %2430 = vmatpush1.msra.mxu0 %v616
        %2431 = vmatprep.subr.mxu0 %v609
        %2432 = vmatpush1.msra.mxu0 %v608
        %2433 = vmatprep.subr.mxu0 %v601
        %2434 = vmatpush1.msra.mxu0 %v600
        %2435 = vmatprep.subr.mxu0 %v593
        %2436 = vmatpush1.msra.mxu0 %v592
        %2437 = vmatprep.subr.mxu0 %v585
        %2438 = vmatpush1.msra.mxu0 %v584
        %2439 = vmatprep.subr.mxu0 %v577
        %2440 = vmatpush1.msra.mxu0 %v576
        %2441 = vmatprep.subr.mxu0 %v825
        %2442 = vmatpush2.msra.mxu0 %v824
        %2443 = vmatprep.subr.mxu0 %v817
        %2444 = vmatpush2.msra.mxu0 %v816
        %2445 = vmatprep.subr.mxu0 %v809
        %2446 = vmatpush2.msra.mxu0 %v808
        %2447 = vmatprep.subr.mxu0 %v801
        %2448 = vmatpush2.msra.mxu0 %v800
        %2449 = vmatprep.subr.mxu0 %v793
        %2450 = vmatpush2.msra.mxu0 %v792
        %2451 = vmatprep.subr.mxu0 %v785
        %2452 = vmatpush2.msra.mxu0 %v784
        %2453 = vmatprep.subr.mxu0 %v777
        %2454 = vmatpush2.msra.mxu0 %v776
        %2455 = vmatprep.subr.mxu0 %v769
        %2456 = vmatpush2.msra.mxu0 %v768
        %2457 = vmatprep.subr.mxu0 %v761
        %2458 = vmatpush2.msra.mxu0 %v760
        %2459 = vmatprep.subr.mxu0 %v753
        %2460 = vmatpush2.msra.mxu0 %v752
        %2461 = vmatprep.subr.mxu0 %v745
        %2462 = vmatpush2.msra.mxu0 %v744
        %2463 = vmatprep.subr.mxu0 %v737
        %2464 = vmatpush2.msra.mxu0 %v736
        %2465 = vmatprep.subr.mxu0 %v729
        %2466 = vmatpush2.msra.mxu0 %v728
        %2467 = vmatprep.subr.mxu0 %v721
        %2468 = vmatpush2.msra.mxu0 %v720
        %2469 = vmatprep.subr.mxu0 %v713
        %2470 = vmatpush2.msra.mxu0 %v712
        %2471 = vmatprep.subr.mxu0 %v705
        %2472 = vmatpush2.msra.mxu0 %v704
        %2473 = vmatprep.mubr.f32.mxu0 %v289
        %2474 = vmatmul.mubr.f32.gmra.mxu0 %v288
        %v2475 = vpop.f32.mrf.mxu0
        %v2476 = vadd.f32 %v2387, %v2475
        %v2477 = vpop.f32.mrf.mxu0
        %v2478 = vadd.f32 %v2389, %v2477
        %2479 = vmatprep.mubr.f32.mxu0 %v296
        %2480 = vmatmul.mubr.f32.gmra.mxu0 %v295
        %v2481 = vpop.f32.mrf.mxu0
        %v2482 = vadd.f32 %v2393, %v2481
        %v2483 = vpop.f32.mrf.mxu0
        %v2484 = vadd.f32 %v2395, %v2483
        %2485 = vmatprep.mubr.f32.mxu0 %v303
        %2486 = vmatmul.mubr.f32.gmra.mxu0 %v302
        %v2487 = vpop.f32.mrf.mxu0
        %v2488 = vadd.f32 %v2399, %v2487
        %v2489 = vpop.f32.mrf.mxu0
        %v2490 = vadd.f32 %v2401, %v2489
        %2491 = vmatprep.mubr.f32.mxu0 %v310
        %2492 = vmatmul.mubr.f32.gmra.mxu0 %v309
        %v2493 = vpop.f32.mrf.mxu0
        %v2494 = vadd.f32 %v2405, %v2493
        %v2495 = vpop.f32.mrf.mxu0
        %v2496 = vadd.f32 %v2407, %v2495
        %2497 = vdwg.mxu0
        %2498 = vmatprep.subr.mxu0 %v953
        %2499 = vmatpush1.msra.mxu0 %v952
        %2500 = vmatprep.subr.mxu0 %v945
        %2501 = vmatpush1.msra.mxu0 %v944
        %2502 = vmatprep.subr.mxu0 %v937
        %2503 = vmatpush1.msra.mxu0 %v936
        %2504 = vmatprep.subr.mxu0 %v929
        %2505 = vmatpush1.msra.mxu0 %v928
        %2506 = vmatprep.subr.mxu0 %v921
        %2507 = vmatpush1.msra.mxu0 %v920
        %2508 = vmatprep.subr.mxu0 %v913
        %2509 = vmatpush1.msra.mxu0 %v912
        %2510 = vmatprep.subr.mxu0 %v905
        %2511 = vmatpush1.msra.mxu0 %v904
        %2512 = vmatprep.subr.mxu0 %v897
        %2513 = vmatpush1.msra.mxu0 %v896
        %2514 = vmatprep.subr.mxu0 %v889
        %2515 = vmatpush1.msra.mxu0 %v888
        %2516 = vmatprep.subr.mxu0 %v881
        %2517 = vmatpush1.msra.mxu0 %v880
        %2518 = vmatprep.subr.mxu0 %v873
        %2519 = vmatpush1.msra.mxu0 %v872
        %2520 = vmatprep.subr.mxu0 %v865
        %2521 = vmatpush1.msra.mxu0 %v864
        %2522 = vmatprep.subr.mxu0 %v857
        %2523 = vmatpush1.msra.mxu0 %v856
        %2524 = vmatprep.subr.mxu0 %v849
        %2525 = vmatpush1.msra.mxu0 %v848
        %2526 = vmatprep.subr.mxu0 %v841
        %2527 = vmatpush1.msra.mxu0 %v840
        %2528 = vmatprep.subr.mxu0 %v833
        %2529 = vmatpush1.msra.mxu0 %v832
        %2530 = vmatprep.subr.mxu0 %v1081
        %2531 = vmatpush2.msra.mxu0 %v1080
        %2532 = vmatprep.subr.mxu0 %v1073
        %2533 = vmatpush2.msra.mxu0 %v1072
        %2534 = vmatprep.subr.mxu0 %v1065
        %2535 = vmatpush2.msra.mxu0 %v1064
        %2536 = vmatprep.subr.mxu0 %v1057
        %2537 = vmatpush2.msra.mxu0 %v1056
        %2538 = vmatprep.subr.mxu0 %v1049
        %2539 = vmatpush2.msra.mxu0 %v1048
        %2540 = vmatprep.subr.mxu0 %v1041
        %2541 = vmatpush2.msra.mxu0 %v1040
        %2542 = vmatprep.subr.mxu0 %v1033
        %2543 = vmatpush2.msra.mxu0 %v1032
        %2544 = vmatprep.subr.mxu0 %v1025
        %2545 = vmatpush2.msra.mxu0 %v1024
        %2546 = vmatprep.subr.mxu0 %v1017
        %2547 = vmatpush2.msra.mxu0 %v1016
        %2548 = vmatprep.subr.mxu0 %v1009
        %2549 = vmatpush2.msra.mxu0 %v1008
        %2550 = vmatprep.subr.mxu0 %v1001
        %2551 = vmatpush2.msra.mxu0 %v1000
        %2552 = vmatprep.subr.mxu0 %v993
        %2553 = vmatpush2.msra.mxu0 %v992
        %2554 = vmatprep.subr.mxu0 %v985
        %2555 = vmatpush2.msra.mxu0 %v984
        %2556 = vmatprep.subr.mxu0 %v977
        %2557 = vmatpush2.msra.mxu0 %v976
        %2558 = vmatprep.subr.mxu0 %v969
        %2559 = vmatpush2.msra.mxu0 %v968
        %2560 = vmatprep.subr.mxu0 %v961
        %2561 = vmatpush2.msra.mxu0 %v960
        %2562 = vmatprep.mubr.f32.mxu0 %v291
        %2563 = vmatmul.mubr.f32.gmra.mxu0 %v290
        %v2564 = vpop.f32.mrf.mxu0
        %v2565 = vadd.f32 %v2476, %v2564
        %v2566 = vpop.f32.mrf.mxu0
        %v2567 = vadd.f32 %v2478, %v2566
        %2568 = vmatprep.mubr.f32.mxu0 %v298
        %2569 = vmatmul.mubr.f32.gmra.mxu0 %v297
        %v2570 = vpop.f32.mrf.mxu0
        %v2571 = vadd.f32 %v2482, %v2570
        %v2572 = vpop.f32.mrf.mxu0
        %v2573 = vadd.f32 %v2484, %v2572
        %2574 = vmatprep.mubr.f32.mxu0 %v305
        %2575 = vmatmul.mubr.f32.gmra.mxu0 %v304
        %v2576 = vpop.f32.mrf.mxu0
        %v2577 = vadd.f32 %v2488, %v2576
        %v2578 = vpop.f32.mrf.mxu0
        %v2579 = vadd.f32 %v2490, %v2578
        %2580 = vmatprep.mubr.f32.mxu0 %v312
        %2581 = vmatmul.mubr.f32.gmra.mxu0 %v311
        %v2582 = vpop.f32.mrf.mxu0
        %v2583 = vadd.f32 %v2494, %v2582
        %v2584 = vpop.f32.mrf.mxu0
        %v2585 = vadd.f32 %v2496, %v2584
        %2586 = vdwg.mxu0
        %2587 = vmatprep.subr.mxu0 %v1209
        %2588 = vmatpush1.msra.mxu0 %v1208
        %2589 = vmatprep.subr.mxu0 %v1201
        %2590 = vmatpush1.msra.mxu0 %v1200
        %2591 = vmatprep.subr.mxu0 %v1193
        %2592 = vmatpush1.msra.mxu0 %v1192
        %2593 = vmatprep.subr.mxu0 %v1185
        %2594 = vmatpush1.msra.mxu0 %v1184
        %2595 = vmatprep.subr.mxu0 %v1177
        %2596 = vmatpush1.msra.mxu0 %v1176
        %2597 = vmatprep.subr.mxu0 %v1169
        %2598 = vmatpush1.msra.mxu0 %v1168
        %2599 = vmatprep.subr.mxu0 %v1161
        %2600 = vmatpush1.msra.mxu0 %v1160
        %2601 = vmatprep.subr.mxu0 %v1153
        %2602 = vmatpush1.msra.mxu0 %v1152
        %2603 = vmatprep.subr.mxu0 %v1145
        %2604 = vmatpush1.msra.mxu0 %v1144
        %2605 = vmatprep.subr.mxu0 %v1137
        %2606 = vmatpush1.msra.mxu0 %v1136
        %2607 = vmatprep.subr.mxu0 %v1129
        %2608 = vmatpush1.msra.mxu0 %v1128
        %2609 = vmatprep.subr.mxu0 %v1121
        %2610 = vmatpush1.msra.mxu0 %v1120
        %2611 = vmatprep.subr.mxu0 %v1113
        %2612 = vmatpush1.msra.mxu0 %v1112
        %2613 = vmatprep.subr.mxu0 %v1105
        %2614 = vmatpush1.msra.mxu0 %v1104
        %2615 = vmatprep.subr.mxu0 %v1097
        %2616 = vmatpush1.msra.mxu0 %v1096
        %2617 = vmatprep.subr.mxu0 %v1089
        %2618 = vmatpush1.msra.mxu0 %v1088
        %2619 = vmatprep.subr.mxu0 0.0
        %2620 = vmatpush2.msra.mxu0 0.0
        %2621 = vmatprep.subr.mxu0 0.0
        %2622 = vmatpush2.msra.mxu0 0.0
        %2623 = vmatprep.subr.mxu0 0.0
        %2624 = vmatpush2.msra.mxu0 0.0
        %2625 = vmatprep.subr.mxu0 0.0
        %2626 = vmatpush2.msra.mxu0 0.0
        %2627 = vmatprep.subr.mxu0 0.0
        %2628 = vmatpush2.msra.mxu0 0.0
        %2629 = vmatprep.subr.mxu0 0.0
        %2630 = vmatpush2.msra.mxu0 0.0
        %2631 = vmatprep.subr.mxu0 0.0
        %2632 = vmatpush2.msra.mxu0 0.0
        %2633 = vmatprep.subr.mxu0 0.0
        %2634 = vmatpush2.msra.mxu0 0.0
        %2635 = vmatprep.subr.mxu0 0.0
        %2636 = vmatpush2.msra.mxu0 0.0
        %2637 = vmatprep.subr.mxu0 0.0
        %2638 = vmatpush2.msra.mxu0 0.0
        %2639 = vmatprep.subr.mxu0 0.0
        %2640 = vmatpush2.msra.mxu0 0.0
        %2641 = vmatprep.subr.mxu0 0.0
        %2642 = vmatpush2.msra.mxu0 0.0
        %2643 = vmatprep.subr.mxu0 0.0
        %2644 = vmatpush2.msra.mxu0 0.0
        %2645 = vmatprep.subr.mxu0 0.0
        %2646 = vmatpush2.msra.mxu0 0.0
        %2647 = vmatprep.subr.mxu0 0.0
        %2648 = vmatpush2.msra.mxu0 0.0
        %2649 = vmatprep.subr.mxu0 0.0
        %2650 = vmatpush2.msra.mxu0 0.0
        %2651 = vmatprep.mubr.f32.mxu0 0.0
        %2652 = vmatmul.mubr.f32.gmra.mxu0 %v292
        %v2653 = vpop.f32.mrf.mxu0
        %v2654 = vadd.f32 %v2565, %v2653
        %v2655 = vpop.f32.mrf.mxu0
        %v2656 = vadd.f32 %v2567, %v2655
        %2657 = vmatprep.mubr.f32.mxu0 0.0
        %2658 = vmatmul.mubr.f32.gmra.mxu0 %v299
        %v2659 = vpop.f32.mrf.mxu0
        %v2660 = vadd.f32 %v2571, %v2659
        %v2661 = vpop.f32.mrf.mxu0
        %v2662 = vadd.f32 %v2573, %v2661
        %2663 = vmatprep.mubr.f32.mxu0 0.0
        %2664 = vmatmul.mubr.f32.gmra.mxu0 %v306
        %v2665 = vpop.f32.mrf.mxu0
        %v2666 = vadd.f32 %v2577, %v2665
        %v2667 = vpop.f32.mrf.mxu0
        %v2668 = vadd.f32 %v2579, %v2667
        %2669 = vmatprep.mubr.f32.mxu0 0.0
        %2670 = vmatmul.mubr.f32.gmra.mxu0 %v313
        %v2671 = vpop.f32.mrf.mxu0
        %v2672 = vadd.f32 %v2583, %v2671
        %v2673 = vpop.f32.mrf.mxu0
        %v2674 = vadd.f32 %v2585, %v2673
        %2675 = vdwg.mxu0
        %v2676 = vmax.f32 %v1586, 0.0
        %v2677 = vmax.f32 %v1588, 0.0
        %v2678 = vmax.f32 %v1942, 0.0
        %v2679 = vmax.f32 %v1944, 0.0
        %v2680 = vmax.f32 %v2298, 0.0
        %v2681 = vmax.f32 %v2300, 0.0
        %v2682 = vmax.f32 %v2654, 0.0
        %v2683 = vmax.f32 %v2656, 0.0
        %v2684 = vmax.f32 %v1592, 0.0
        %v2685 = vmax.f32 %v1594, 0.0
        %v2686 = vmax.f32 %v1948, 0.0
        %v2687 = vmax.f32 %v1950, 0.0
        %v2688 = vmax.f32 %v2304, 0.0
        %v2689 = vmax.f32 %v2306, 0.0
        %v2690 = vmax.f32 %v2660, 0.0
        %v2691 = vmax.f32 %v2662, 0.0
        %v2692 = vmax.f32 %v1598, 0.0
        %v2693 = vmax.f32 %v1600, 0.0
        %v2694 = vmax.f32 %v1954, 0.0
        %v2695 = vmax.f32 %v1956, 0.0
        %v2696 = vmax.f32 %v2310, 0.0
        %v2697 = vmax.f32 %v2312, 0.0
        %v2698 = vmax.f32 %v2666, 0.0
        %v2699 = vmax.f32 %v2668, 0.0
        %v2700 = vmax.f32 %v1604, 0.0
        %v2701 = vmax.f32 %v1606, 0.0
        %v2702 = vmax.f32 %v1960, 0.0
        %v2703 = vmax.f32 %v1962, 0.0
        %v2704 = vmax.f32 %v2316, 0.0
        %v2705 = vmax.f32 %v2318, 0.0
        %v2706 = vmax.f32 %v2672, 0.0
        %v2707 = vmax.f32 %v2674, 0.0
        %v2708 = vld [vmem:[#allocation6] sm:$0xff]
        %v2709 = vld [vmem:[#allocation6 + $0x8] sm:$0xff]
        %v2710 = vld [vmem:[#allocation6 + $0x10] sm:$0xff]
        %v2711 = vld [vmem:[#allocation6 + $0x18] sm:$0xff]
        %v2712 = vld [vmem:[#allocation6 + $0x20] sm:$0xff]
        %v2713 = vld [vmem:[#allocation6 + $0x28] sm:$0xff]
        %v2714 = vld [vmem:[#allocation6 + $0x30] sm:$0xff]
        %v2715 = vld [vmem:[#allocation6 + $0x38] sm:$0xff]
        %v2716 = vld [vmem:[#allocation6 + $0x40] sm:$0xff]
        %v2717 = vld [vmem:[#allocation6 + $0x48] sm:$0xff]
        %v2718 = vld [vmem:[#allocation6 + $0x50] sm:$0xff]
        %v2719 = vld [vmem:[#allocation6 + $0x58] sm:$0xff]
        %v2720 = vld [vmem:[#allocation6 + $0x60] sm:$0xff]
        %v2721 = vld [vmem:[#allocation6 + $0x68] sm:$0xff]
        %v2722 = vld [vmem:[#allocation6 + $0x70] sm:$0xff]
        %v2723 = vld [vmem:[#allocation6 + $0x78] sm:$0xff]
        %v2724 = vld [vmem:[#allocation6 + $0x80] sm:$0xff]
        %v2725 = vld [vmem:[#allocation6 + $0x88] sm:$0xff]
        %v2726 = vld [vmem:[#allocation6 + $0x90] sm:$0xff]
        %v2727 = vld [vmem:[#allocation6 + $0x98] sm:$0xff]
        %v2728 = vld [vmem:[#allocation6 + $0xa0] sm:$0xff]
        %v2729 = vld [vmem:[#allocation6 + $0xa8] sm:$0xff]
        %v2730 = vld [vmem:[#allocation6 + $0xb0] sm:$0xff]
        %v2731 = vld [vmem:[#allocation6 + $0xb8] sm:$0xff]
        %v2732 = vld [vmem:[#allocation6 + $0xc0] sm:$0xff]
        %v2733 = vld [vmem:[#allocation6 + $0xc8] sm:$0xff]
        %v2734 = vld [vmem:[#allocation6 + $0xd0] sm:$0xff]
        %v2735 = vld [vmem:[#allocation6 + $0xd8] sm:$0xff]
        %v2736 = vld [vmem:[#allocation6 + $0xe0] sm:$0xff]
        %v2737 = vld [vmem:[#allocation6 + $0xe8] sm:$0xff]
        %v2738 = vld [vmem:[#allocation6 + $0xf0] sm:$0xff]
        %v2739 = vld [vmem:[#allocation6 + $0xf8] sm:$0xff]
        %v2740 = vld [vmem:[#allocation6 + $0x100] sm:$0xff]
        %v2741 = vld [vmem:[#allocation6 + $0x108] sm:$0xff]
        %v2742 = vld [vmem:[#allocation6 + $0x110] sm:$0xff]
        %v2743 = vld [vmem:[#allocation6 + $0x118] sm:$0xff]
        %v2744 = vld [vmem:[#allocation6 + $0x120] sm:$0xff]
        %v2745 = vld [vmem:[#allocation6 + $0x128] sm:$0xff]
        %v2746 = vld [vmem:[#allocation6 + $0x130] sm:$0xff]
        %v2747 = vld [vmem:[#allocation6 + $0x138] sm:$0xff]
        %v2748 = vld [vmem:[#allocation6 + $0x140] sm:$0xff]
        %v2749 = vld [vmem:[#allocation6 + $0x148] sm:$0xff]
        %v2750 = vld [vmem:[#allocation6 + $0x150] sm:$0xff]
        %v2751 = vld [vmem:[#allocation6 + $0x158] sm:$0xff]
        %v2752 = vld [vmem:[#allocation6 + $0x160] sm:$0xff]
        %v2753 = vld [vmem:[#allocation6 + $0x168] sm:$0xff]
        %v2754 = vld [vmem:[#allocation6 + $0x170] sm:$0xff]
        %v2755 = vld [vmem:[#allocation6 + $0x178] sm:$0xff]
        %v2756 = vld [vmem:[#allocation6 + $0x180] sm:$0xff]
        %v2757 = vld [vmem:[#allocation6 + $0x188] sm:$0xff]
        %v2758 = vld [vmem:[#allocation6 + $0x190] sm:$0xff]
        %v2759 = vld [vmem:[#allocation6 + $0x198] sm:$0xff]
        %v2760 = vld [vmem:[#allocation6 + $0x1a0] sm:$0xff]
        %v2761 = vld [vmem:[#allocation6 + $0x1a8] sm:$0xff]
        %v2762 = vld [vmem:[#allocation6 + $0x1b0] sm:$0xff]
        %v2763 = vld [vmem:[#allocation6 + $0x1b8] sm:$0xff]
        %v2764 = vld [vmem:[#allocation6 + $0x1c0] sm:$0xff]
        %v2765 = vld [vmem:[#allocation6 + $0x1c8] sm:$0xff]
        %v2766 = vld [vmem:[#allocation6 + $0x1d0] sm:$0xff]
        %v2767 = vld [vmem:[#allocation6 + $0x1d8] sm:$0xff]
        %v2768 = vld [vmem:[#allocation6 + $0x1e0] sm:$0xff]
        %v2769 = vld [vmem:[#allocation6 + $0x1e8] sm:$0xff]
        %v2770 = vld [vmem:[#allocation6 + $0x1f0] sm:$0xff]
        %v2771 = vld [vmem:[#allocation6 + $0x1f8] sm:$0xff]
        %v2772 = vld [vmem:[#allocation6 + $0x200] sm:$0xff]
        %v2773 = vld [vmem:[#allocation6 + $0x208] sm:$0xff]
        %v2774 = vld [vmem:[#allocation6 + $0x210] sm:$0xff]
        %v2775 = vld [vmem:[#allocation6 + $0x218] sm:$0xff]
        %v2776 = vld [vmem:[#allocation6 + $0x220] sm:$0xff]
        %v2777 = vld [vmem:[#allocation6 + $0x228] sm:$0xff]
        %v2778 = vld [vmem:[#allocation6 + $0x230] sm:$0xff]
        %v2779 = vld [vmem:[#allocation6 + $0x238] sm:$0xff]
        %v2780 = vld [vmem:[#allocation6 + $0x240] sm:$0xff]
        %v2781 = vld [vmem:[#allocation6 + $0x248] sm:$0xff]
        %v2782 = vld [vmem:[#allocation6 + $0x250] sm:$0xff]
        %v2783 = vld [vmem:[#allocation6 + $0x258] sm:$0xff]
        %v2784 = vld [vmem:[#allocation6 + $0x260] sm:$0xff]
        %v2785 = vld [vmem:[#allocation6 + $0x268] sm:$0xff]
        %v2786 = vld [vmem:[#allocation6 + $0x270] sm:$0xff]
        %v2787 = vld [vmem:[#allocation6 + $0x278] sm:$0xff]
        %v2788 = vld [vmem:[#allocation6 + $0x280] sm:$0xff]
        %v2789 = vld [vmem:[#allocation6 + $0x288] sm:$0xff]
        %v2790 = vld [vmem:[#allocation6 + $0x290] sm:$0xff]
        %v2791 = vld [vmem:[#allocation6 + $0x298] sm:$0xff]
        %v2792 = vld [vmem:[#allocation6 + $0x2a0] sm:$0xff]
        %v2793 = vld [vmem:[#allocation6 + $0x2a8] sm:$0xff]
        %v2794 = vld [vmem:[#allocation6 + $0x2b0] sm:$0xff]
        %v2795 = vld [vmem:[#allocation6 + $0x2b8] sm:$0xff]
        %v2796 = vld [vmem:[#allocation6 + $0x2c0] sm:$0xff]
        %v2797 = vld [vmem:[#allocation6 + $0x2c8] sm:$0xff]
        %v2798 = vld [vmem:[#allocation6 + $0x2d0] sm:$0xff]
        %v2799 = vld [vmem:[#allocation6 + $0x2d8] sm:$0xff]
        %v2800 = vld [vmem:[#allocation6 + $0x2e0] sm:$0xff]
        %v2801 = vld [vmem:[#allocation6 + $0x2e8] sm:$0xff]
        %v2802 = vld [vmem:[#allocation6 + $0x2f0] sm:$0xff]
        %v2803 = vld [vmem:[#allocation6 + $0x2f8] sm:$0xff]
        %v2804 = vld [vmem:[#allocation6 + $0x300] sm:$0xff]
        %v2805 = vld [vmem:[#allocation6 + $0x308] sm:$0xff]
        %v2806 = vld [vmem:[#allocation6 + $0x310] sm:$0xff]
        %v2807 = vld [vmem:[#allocation6 + $0x318] sm:$0xff]
        %v2808 = vld [vmem:[#allocation6 + $0x320] sm:$0xff]
        %v2809 = vld [vmem:[#allocation6 + $0x328] sm:$0xff]
        %v2810 = vld [vmem:[#allocation6 + $0x330] sm:$0xff]
        %v2811 = vld [vmem:[#allocation6 + $0x338] sm:$0xff]
        %v2812 = vld [vmem:[#allocation6 + $0x340] sm:$0xff]
        %v2813 = vld [vmem:[#allocation6 + $0x348] sm:$0xff]
        %v2814 = vld [vmem:[#allocation6 + $0x350] sm:$0xff]
        %v2815 = vld [vmem:[#allocation6 + $0x358] sm:$0xff]
        %v2816 = vld [vmem:[#allocation6 + $0x360] sm:$0xff]
        %v2817 = vld [vmem:[#allocation6 + $0x368] sm:$0xff]
        %v2818 = vld [vmem:[#allocation6 + $0x370] sm:$0xff]
        %v2819 = vld [vmem:[#allocation6 + $0x378] sm:$0xff]
        %v2820 = vld [vmem:[#allocation6 + $0x380] sm:$0xff]
        %v2821 = vld [vmem:[#allocation6 + $0x388] sm:$0xff]
        %v2822 = vld [vmem:[#allocation6 + $0x390] sm:$0xff]
        %v2823 = vld [vmem:[#allocation6 + $0x398] sm:$0xff]
        %v2824 = vld [vmem:[#allocation6 + $0x3a0] sm:$0xff]
        %v2825 = vld [vmem:[#allocation6 + $0x3a8] sm:$0xff]
        %v2826 = vld [vmem:[#allocation6 + $0x3b0] sm:$0xff]
        %v2827 = vld [vmem:[#allocation6 + $0x3b8] sm:$0xff]
        %v2828 = vld [vmem:[#allocation6 + $0x3c0] sm:$0xff]
        %v2829 = vld [vmem:[#allocation6 + $0x3c8] sm:$0xff]
        %v2830 = vld [vmem:[#allocation6 + $0x3d0] sm:$0xff]
        %v2831 = vld [vmem:[#allocation6 + $0x3d8] sm:$0xff]
        %v2832 = vld [vmem:[#allocation6 + $0x3e0] sm:$0xff]
        %v2833 = vld [vmem:[#allocation6 + $0x3e8] sm:$0xff]
        %v2834 = vld [vmem:[#allocation6 + $0x3f0] sm:$0xff]
        %v2835 = vld [vmem:[#allocation6 + $0x3f8] sm:$0xff]
        %v2836 = vld [vmem:[#allocation7] sm:$0x1]
        %v2838 = vlaneseq
        %v2839 = vshrl.u32 %v2838, 7
        %v2840 = vsub.s32 0, %v2839
        %v2841 = vrot.slane %v2836, %v2840
        %2843 = vmatprep.subr.mxu0 0.0
        %2844 = vmatpush1.msra.mxu0 %v2723
        %2845 = vmatprep.subr.mxu0 0.0
        %2846 = vmatpush1.msra.mxu0 %v2722
        %2847 = vmatprep.subr.mxu0 0.0
        %2848 = vmatpush1.msra.mxu0 %v2721
        %2849 = vmatprep.subr.mxu0 0.0
        %2850 = vmatpush1.msra.mxu0 %v2720
        %2851 = vmatprep.subr.mxu0 0.0
        %2852 = vmatpush1.msra.mxu0 %v2719
        %2853 = vmatprep.subr.mxu0 0.0
        %2854 = vmatpush1.msra.mxu0 %v2718
        %2855 = vmatprep.subr.mxu0 0.0
        %2856 = vmatpush1.msra.mxu0 %v2717
        %2857 = vmatprep.subr.mxu0 0.0
        %2858 = vmatpush1.msra.mxu0 %v2716
        %2859 = vmatprep.subr.mxu0 0.0
        %2860 = vmatpush1.msra.mxu0 %v2715
        %2861 = vmatprep.subr.mxu0 0.0
        %2862 = vmatpush1.msra.mxu0 %v2714
        %2863 = vmatprep.subr.mxu0 0.0
        %2864 = vmatpush1.msra.mxu0 %v2713
        %2865 = vmatprep.subr.mxu0 0.0
        %2866 = vmatpush1.msra.mxu0 %v2712
        %2867 = vmatprep.subr.mxu0 0.0
        %2868 = vmatpush1.msra.mxu0 %v2711
        %2869 = vmatprep.subr.mxu0 0.0
        %2870 = vmatpush1.msra.mxu0 %v2710
        %2871 = vmatprep.subr.mxu0 0.0
        %2872 = vmatpush1.msra.mxu0 %v2709
        %2873 = vmatprep.subr.mxu0 0.0
        %2874 = vmatpush1.msra.mxu0 %v2708
        %2875 = vmatprep.subr.mxu0 0.0
        %2876 = vmatpush2.msra.mxu0 %v2739
        %2877 = vmatprep.subr.mxu0 0.0
        %2878 = vmatpush2.msra.mxu0 %v2738
        %2879 = vmatprep.subr.mxu0 0.0
        %2880 = vmatpush2.msra.mxu0 %v2737
        %2881 = vmatprep.subr.mxu0 0.0
        %2882 = vmatpush2.msra.mxu0 %v2736
        %2883 = vmatprep.subr.mxu0 0.0
        %2884 = vmatpush2.msra.mxu0 %v2735
        %2885 = vmatprep.subr.mxu0 0.0
        %2886 = vmatpush2.msra.mxu0 %v2734
        %2887 = vmatprep.subr.mxu0 0.0
        %2888 = vmatpush2.msra.mxu0 %v2733
        %2889 = vmatprep.subr.mxu0 0.0
        %2890 = vmatpush2.msra.mxu0 %v2732
        %2891 = vmatprep.subr.mxu0 0.0
        %2892 = vmatpush2.msra.mxu0 %v2731
        %2893 = vmatprep.subr.mxu0 0.0
        %2894 = vmatpush2.msra.mxu0 %v2730
        %2895 = vmatprep.subr.mxu0 0.0
        %2896 = vmatpush2.msra.mxu0 %v2729
        %2897 = vmatprep.subr.mxu0 0.0
        %2898 = vmatpush2.msra.mxu0 %v2728
        %2899 = vmatprep.subr.mxu0 0.0
        %2900 = vmatpush2.msra.mxu0 %v2727
        %2901 = vmatprep.subr.mxu0 0.0
        %2902 = vmatpush2.msra.mxu0 %v2726
        %2903 = vmatprep.subr.mxu0 0.0
        %2904 = vmatpush2.msra.mxu0 %v2725
        %2905 = vmatprep.subr.mxu0 0.0
        %2906 = vmatpush2.msra.mxu0 %v2724
        %2907 = vmatprep.mubr.f32.mxu0 %v2677
        %2908 = vmatmul.mubr.f32.gmra.mxu0 %v2676
        %v2909 = vpop.f32.mrf.mxu0
        %v2910 = vadd.f32 %v2841, %v2909
        %v2911 = vpop.f32.mrf.mxu0
        %2912 = vmatprep.mubr.f32.mxu0 %v2685
        %2913 = vmatmul.mubr.f32.gmra.mxu0 %v2684
        %v2914 = vpop.f32.mrf.mxu0
        %v2915 = vadd.f32 %v2841, %v2914
        %v2916 = vpop.f32.mrf.mxu0
        %2917 = vmatprep.mubr.f32.mxu0 %v2693
        %2918 = vmatmul.mubr.f32.gmra.mxu0 %v2692
        %v2919 = vpop.f32.mrf.mxu0
        %v2920 = vadd.f32 %v2841, %v2919
        %v2921 = vpop.f32.mrf.mxu0
        %2922 = vmatprep.mubr.f32.mxu0 %v2701
        %2923 = vmatmul.mubr.f32.gmra.mxu0 %v2700
        %v2924 = vpop.f32.mrf.mxu0
        %v2925 = vadd.f32 %v2841, %v2924
        %v2926 = vpop.f32.mrf.mxu0
        %2927 = vdwg.mxu0
        %2928 = vmatprep.subr.mxu0 0.0
        %2929 = vmatpush1.msra.mxu0 %v2755
        %2930 = vmatprep.subr.mxu0 0.0
        %2931 = vmatpush1.msra.mxu0 %v2754
        %2932 = vmatprep.subr.mxu0 0.0
        %2933 = vmatpush1.msra.mxu0 %v2753
        %2934 = vmatprep.subr.mxu0 0.0
        %2935 = vmatpush1.msra.mxu0 %v2752
        %2936 = vmatprep.subr.mxu0 0.0
        %2937 = vmatpush1.msra.mxu0 %v2751
        %2938 = vmatprep.subr.mxu0 0.0
        %2939 = vmatpush1.msra.mxu0 %v2750
        %2940 = vmatprep.subr.mxu0 0.0
        %2941 = vmatpush1.msra.mxu0 %v2749
        %2942 = vmatprep.subr.mxu0 0.0
        %2943 = vmatpush1.msra.mxu0 %v2748
        %2944 = vmatprep.subr.mxu0 0.0
        %2945 = vmatpush1.msra.mxu0 %v2747
        %2946 = vmatprep.subr.mxu0 0.0
        %2947 = vmatpush1.msra.mxu0 %v2746
        %2948 = vmatprep.subr.mxu0 0.0
        %2949 = vmatpush1.msra.mxu0 %v2745
        %2950 = vmatprep.subr.mxu0 0.0
        %2951 = vmatpush1.msra.mxu0 %v2744
        %2952 = vmatprep.subr.mxu0 0.0
        %2953 = vmatpush1.msra.mxu0 %v2743
        %2954 = vmatprep.subr.mxu0 0.0
        %2955 = vmatpush1.msra.mxu0 %v2742
        %2956 = vmatprep.subr.mxu0 0.0
        %2957 = vmatpush1.msra.mxu0 %v2741
        %2958 = vmatprep.subr.mxu0 0.0
        %2959 = vmatpush1.msra.mxu0 %v2740
        %2960 = vmatprep.subr.mxu0 0.0
        %2961 = vmatpush2.msra.mxu0 %v2771
        %2962 = vmatprep.subr.mxu0 0.0
        %2963 = vmatpush2.msra.mxu0 %v2770
        %2964 = vmatprep.subr.mxu0 0.0
        %2965 = vmatpush2.msra.mxu0 %v2769
        %2966 = vmatprep.subr.mxu0 0.0
        %2967 = vmatpush2.msra.mxu0 %v2768
        %2968 = vmatprep.subr.mxu0 0.0
        %2969 = vmatpush2.msra.mxu0 %v2767
        %2970 = vmatprep.subr.mxu0 0.0
        %2971 = vmatpush2.msra.mxu0 %v2766
        %2972 = vmatprep.subr.mxu0 0.0
        %2973 = vmatpush2.msra.mxu0 %v2765
        %2974 = vmatprep.subr.mxu0 0.0
        %2975 = vmatpush2.msra.mxu0 %v2764
        %2976 = vmatprep.subr.mxu0 0.0
        %2977 = vmatpush2.msra.mxu0 %v2763
        %2978 = vmatprep.subr.mxu0 0.0
        %2979 = vmatpush2.msra.mxu0 %v2762
        %2980 = vmatprep.subr.mxu0 0.0
        %2981 = vmatpush2.msra.mxu0 %v2761
        %2982 = vmatprep.subr.mxu0 0.0
        %2983 = vmatpush2.msra.mxu0 %v2760
        %2984 = vmatprep.subr.mxu0 0.0
        %2985 = vmatpush2.msra.mxu0 %v2759
        %2986 = vmatprep.subr.mxu0 0.0
        %2987 = vmatpush2.msra.mxu0 %v2758
        %2988 = vmatprep.subr.mxu0 0.0
        %2989 = vmatpush2.msra.mxu0 %v2757
        %2990 = vmatprep.subr.mxu0 0.0
        %2991 = vmatpush2.msra.mxu0 %v2756
        %2992 = vmatprep.mubr.f32.mxu0 %v2679
        %2993 = vmatmul.mubr.f32.gmra.mxu0 %v2678
        %v2994 = vpop.f32.mrf.mxu0
        %v2995 = vadd.f32 %v2910, %v2994
        %v2996 = vpop.f32.mrf.mxu0
        %2997 = vmatprep.mubr.f32.mxu0 %v2687
        %2998 = vmatmul.mubr.f32.gmra.mxu0 %v2686
        %v2999 = vpop.f32.mrf.mxu0
        %v3000 = vadd.f32 %v2915, %v2999
        %v3001 = vpop.f32.mrf.mxu0
        %3002 = vmatprep.mubr.f32.mxu0 %v2695
        %3003 = vmatmul.mubr.f32.gmra.mxu0 %v2694
        %v3004 = vpop.f32.mrf.mxu0
        %v3005 = vadd.f32 %v2920, %v3004
        %v3006 = vpop.f32.mrf.mxu0
        %3007 = vmatprep.mubr.f32.mxu0 %v2703
        %3008 = vmatmul.mubr.f32.gmra.mxu0 %v2702
        %v3009 = vpop.f32.mrf.mxu0
        %v3010 = vadd.f32 %v2925, %v3009
        %v3011 = vpop.f32.mrf.mxu0
        %3012 = vdwg.mxu0
        %3013 = vmatprep.subr.mxu0 0.0
        %3014 = vmatpush1.msra.mxu0 %v2787
        %3015 = vmatprep.subr.mxu0 0.0
        %3016 = vmatpush1.msra.mxu0 %v2786
        %3017 = vmatprep.subr.mxu0 0.0
        %3018 = vmatpush1.msra.mxu0 %v2785
        %3019 = vmatprep.subr.mxu0 0.0
        %3020 = vmatpush1.msra.mxu0 %v2784
        %3021 = vmatprep.subr.mxu0 0.0
        %3022 = vmatpush1.msra.mxu0 %v2783
        %3023 = vmatprep.subr.mxu0 0.0
        %3024 = vmatpush1.msra.mxu0 %v2782
        %3025 = vmatprep.subr.mxu0 0.0
        %3026 = vmatpush1.msra.mxu0 %v2781
        %3027 = vmatprep.subr.mxu0 0.0
        %3028 = vmatpush1.msra.mxu0 %v2780
        %3029 = vmatprep.subr.mxu0 0.0
        %3030 = vmatpush1.msra.mxu0 %v2779
        %3031 = vmatprep.subr.mxu0 0.0
        %3032 = vmatpush1.msra.mxu0 %v2778
        %3033 = vmatprep.subr.mxu0 0.0
        %3034 = vmatpush1.msra.mxu0 %v2777
        %3035 = vmatprep.subr.mxu0 0.0
        %3036 = vmatpush1.msra.mxu0 %v2776
        %3037 = vmatprep.subr.mxu0 0.0
        %3038 = vmatpush1.msra.mxu0 %v2775
        %3039 = vmatprep.subr.mxu0 0.0
        %3040 = vmatpush1.msra.mxu0 %v2774
        %3041 = vmatprep.subr.mxu0 0.0
        %3042 = vmatpush1.msra.mxu0 %v2773
        %3043 = vmatprep.subr.mxu0 0.0
        %3044 = vmatpush1.msra.mxu0 %v2772
        %3045 = vmatprep.subr.mxu0 0.0
        %3046 = vmatpush2.msra.mxu0 %v2803
        %3047 = vmatprep.subr.mxu0 0.0
        %3048 = vmatpush2.msra.mxu0 %v2802
        %3049 = vmatprep.subr.mxu0 0.0
        %3050 = vmatpush2.msra.mxu0 %v2801
        %3051 = vmatprep.subr.mxu0 0.0
        %3052 = vmatpush2.msra.mxu0 %v2800
        %3053 = vmatprep.subr.mxu0 0.0
        %3054 = vmatpush2.msra.mxu0 %v2799
        %3055 = vmatprep.subr.mxu0 0.0
        %3056 = vmatpush2.msra.mxu0 %v2798
        %3057 = vmatprep.subr.mxu0 0.0
        %3058 = vmatpush2.msra.mxu0 %v2797
        %3059 = vmatprep.subr.mxu0 0.0
        %3060 = vmatpush2.msra.mxu0 %v2796
        %3061 = vmatprep.subr.mxu0 0.0
        %3062 = vmatpush2.msra.mxu0 %v2795
        %3063 = vmatprep.subr.mxu0 0.0
        %3064 = vmatpush2.msra.mxu0 %v2794
        %3065 = vmatprep.subr.mxu0 0.0
        %3066 = vmatpush2.msra.mxu0 %v2793
        %3067 = vmatprep.subr.mxu0 0.0
        %3068 = vmatpush2.msra.mxu0 %v2792
        %3069 = vmatprep.subr.mxu0 0.0
        %3070 = vmatpush2.msra.mxu0 %v2791
        %3071 = vmatprep.subr.mxu0 0.0
        %3072 = vmatpush2.msra.mxu0 %v2790
        %3073 = vmatprep.subr.mxu0 0.0
        %3074 = vmatpush2.msra.mxu0 %v2789
        %3075 = vmatprep.subr.mxu0 0.0
        %3076 = vmatpush2.msra.mxu0 %v2788
        %3077 = vmatprep.mubr.f32.mxu0 %v2681
        %3078 = vmatmul.mubr.f32.gmra.mxu0 %v2680
        %v3079 = vpop.f32.mrf.mxu0
        %v3080 = vadd.f32 %v2995, %v3079
        %v3081 = vpop.f32.mrf.mxu0
        %3082 = vmatprep.mubr.f32.mxu0 %v2689
        %3083 = vmatmul.mubr.f32.gmra.mxu0 %v2688
        %v3084 = vpop.f32.mrf.mxu0
        %v3085 = vadd.f32 %v3000, %v3084
        %v3086 = vpop.f32.mrf.mxu0
        %3087 = vmatprep.mubr.f32.mxu0 %v2697
        %3088 = vmatmul.mubr.f32.gmra.mxu0 %v2696
        %v3089 = vpop.f32.mrf.mxu0
        %v3090 = vadd.f32 %v3005, %v3089
        %v3091 = vpop.f32.mrf.mxu0
        %3092 = vmatprep.mubr.f32.mxu0 %v2705
        %3093 = vmatmul.mubr.f32.gmra.mxu0 %v2704
        %v3094 = vpop.f32.mrf.mxu0
        %v3095 = vadd.f32 %v3010, %v3094
        %v3096 = vpop.f32.mrf.mxu0
        %3097 = vdwg.mxu0
        %3098 = vmatprep.subr.mxu0 0.0
        %3099 = vmatpush1.msra.mxu0 %v2819
        %3100 = vmatprep.subr.mxu0 0.0
        %3101 = vmatpush1.msra.mxu0 %v2818
        %3102 = vmatprep.subr.mxu0 0.0
        %3103 = vmatpush1.msra.mxu0 %v2817
        %3104 = vmatprep.subr.mxu0 0.0
        %3105 = vmatpush1.msra.mxu0 %v2816
        %3106 = vmatprep.subr.mxu0 0.0
        %3107 = vmatpush1.msra.mxu0 %v2815
        %3108 = vmatprep.subr.mxu0 0.0
        %3109 = vmatpush1.msra.mxu0 %v2814
        %3110 = vmatprep.subr.mxu0 0.0
        %3111 = vmatpush1.msra.mxu0 %v2813
        %3112 = vmatprep.subr.mxu0 0.0
        %3113 = vmatpush1.msra.mxu0 %v2812
        %3114 = vmatprep.subr.mxu0 0.0
        %3115 = vmatpush1.msra.mxu0 %v2811
        %3116 = vmatprep.subr.mxu0 0.0
        %3117 = vmatpush1.msra.mxu0 %v2810
        %3118 = vmatprep.subr.mxu0 0.0
        %3119 = vmatpush1.msra.mxu0 %v2809
        %3120 = vmatprep.subr.mxu0 0.0
        %3121 = vmatpush1.msra.mxu0 %v2808
        %3122 = vmatprep.subr.mxu0 0.0
        %3123 = vmatpush1.msra.mxu0 %v2807
        %3124 = vmatprep.subr.mxu0 0.0
        %3125 = vmatpush1.msra.mxu0 %v2806
        %3126 = vmatprep.subr.mxu0 0.0
        %3127 = vmatpush1.msra.mxu0 %v2805
        %3128 = vmatprep.subr.mxu0 0.0
        %3129 = vmatpush1.msra.mxu0 %v2804
        %3130 = vmatprep.subr.mxu0 0.0
        %3131 = vmatpush2.msra.mxu0 %v2835
        %3132 = vmatprep.subr.mxu0 0.0
        %3133 = vmatpush2.msra.mxu0 %v2834
        %3134 = vmatprep.subr.mxu0 0.0
        %3135 = vmatpush2.msra.mxu0 %v2833
        %3136 = vmatprep.subr.mxu0 0.0
        %3137 = vmatpush2.msra.mxu0 %v2832
        %3138 = vmatprep.subr.mxu0 0.0
        %3139 = vmatpush2.msra.mxu0 %v2831
        %3140 = vmatprep.subr.mxu0 0.0
        %3141 = vmatpush2.msra.mxu0 %v2830
        %3142 = vmatprep.subr.mxu0 0.0
        %3143 = vmatpush2.msra.mxu0 %v2829
        %3144 = vmatprep.subr.mxu0 0.0
        %3145 = vmatpush2.msra.mxu0 %v2828
        %3146 = vmatprep.subr.mxu0 0.0
        %3147 = vmatpush2.msra.mxu0 %v2827
        %3148 = vmatprep.subr.mxu0 0.0
        %3149 = vmatpush2.msra.mxu0 %v2826
        %3150 = vmatprep.subr.mxu0 0.0
        %3151 = vmatpush2.msra.mxu0 %v2825
        %3152 = vmatprep.subr.mxu0 0.0
        %3153 = vmatpush2.msra.mxu0 %v2824
        %3154 = vmatprep.subr.mxu0 0.0
        %3155 = vmatpush2.msra.mxu0 %v2823
        %3156 = vmatprep.subr.mxu0 0.0
        %3157 = vmatpush2.msra.mxu0 %v2822
        %3158 = vmatprep.subr.mxu0 0.0
        %3159 = vmatpush2.msra.mxu0 %v2821
        %3160 = vmatprep.subr.mxu0 0.0
        %3161 = vmatpush2.msra.mxu0 %v2820
        %3162 = vmatprep.mubr.f32.mxu0 %v2683
        %3163 = vmatmul.mubr.f32.gmra.mxu0 %v2682
        %v3164 = vpop.f32.mrf.mxu0
        %v3165 = vadd.f32 %v3080, %v3164
        %v3166 = vpop.f32.mrf.mxu0
        %3167 = vmatprep.mubr.f32.mxu0 %v2691
        %3168 = vmatmul.mubr.f32.gmra.mxu0 %v2690
        %v3169 = vpop.f32.mrf.mxu0
        %v3170 = vadd.f32 %v3085, %v3169
        %v3171 = vpop.f32.mrf.mxu0
        %3172 = vmatprep.mubr.f32.mxu0 %v2699
        %3173 = vmatmul.mubr.f32.gmra.mxu0 %v2698
        %v3174 = vpop.f32.mrf.mxu0
        %v3175 = vadd.f32 %v3090, %v3174
        %v3176 = vpop.f32.mrf.mxu0
        %3177 = vmatprep.mubr.f32.mxu0 %v2707
        %3178 = vmatmul.mubr.f32.gmra.mxu0 %v2706
        %v3179 = vpop.f32.mrf.mxu0
        %v3180 = vadd.f32 %v3095, %v3179
        %v3181 = vpop.f32.mrf.mxu0
        %3182 = vdwg.mxu0
        %3183 = vst [vmem:[%s284] sm:$0xff] %v3165
        %3184 = vst [vmem:[%s284 + $0x8] sm:$0xff] %v3170
        %3185 = vst [vmem:[%s284 + $0x10] sm:$0xff] %v3175
        %3186 = vst [vmem:[%s284 + $0x18] sm:$0xff] %v3180
        %s3187 = smul.u32 4, %s19
        %p3188 = scmp.lt.s32.totalorder %s3187, 7
        %s3189 = scalar_select %p3188, %s3187, 7
        %s3190 = smul.addr %s3189, 8
        %s3191 = scalar_lea.vmem %s5, %s3190
        // Predicated region
        $region57: #{mlp_forward.1} parent=39 // pred_check
          %p3192 = pneg %p147
        $region58: #{mlp_forward.1} parent=39 // pred_check_branch
          %3194 = sbr.rel (%p3192) target = $region60
        $region59: #{mlp_forward.1} parent=39 // pred_region
          %s3195 = smul.u32 4, %s19
        $region60: #{mlp_forward.1} parent=39 // pred_fallthru
          _
      $region40: #{mlp_forward.1} parent=5 // pred_fallthru
        _
      %p3196 = scmp.le.s32.totalorder 2, %s14
      // Predicated region
      $region61: #{mlp_forward.1} parent=5 // pred_check
        %p3197 = pneg %p3196
      $region62: #{mlp_forward.1} parent=5 // pred_check_branch
        %3199 = sbr.rel (%p3197) target = $region64
      $region63: #{mlp_forward.1} parent=5 // pred_region
        %s3200 = ssub.s32 %s14, 2
        // Predicated region
        $region65: #{mlp_forward.1} parent=63 // pred_check
          %p3201 = pneg %p153
        $region66: #{mlp_forward.1} parent=63 // pred_check_branch
          %3203 = sbr.rel (%p3201) target = $region68
        $region67: #{mlp_forward.1} parent=63 // pred_region
          %s3204 = smul.u32 4, %s20
          %p3205 = scmp.lt.s32.totalorder %s3204, 7
          %s3206 = scalar_select %p3205, %s3204, 7
          %s3207 = smul.addr %s3206, 8
          %s3208 = scalar_lea.vmem %s5, %s3207
        $region68: #{mlp_forward.1} parent=63 // pred_fallthru
          _
      $region64: #{mlp_forward.1} parent=5 // pred_fallthru
        _
    $region6: #{mlp_forward.1} parent=1 // loop_footer
      %s18 = sadd.s32 1, %s14
    $region7: #{mlp_forward.1} parent=1 // loop_footer_branch
      %13 = sbr.rel target = $region3
    $region8: #{mlp_forward.1} parent=1 // loop_exit
      _
    %3209 = vsyncpa [#allocation3], 1
    %s3210 = scalar_lea.sflag [#allocation3], 1
    %3211 = vsyncpa %s3210, 1
    %3212 = vsyncpa [#allocation5], 1
    %3213 = vsyncpa [#allocation8], 1

</llo_original>
